<compile_context>
chip_gen: v7x
topology: tpu7x:2x2x1
jax: 0.10.0
libtpu: 0.0.40
codegen_flags: <defaults>
</compile_context>

<pallas_src>
import jax
import jax.numpy as jnp
import numpy as np
from jax.experimental import pallas as pl
from jax.experimental.pallas import tpu as pltpu

EPS = 1e-5
LANE = 128


def preact_block_kernel(x_ref, g1_ref, b1_ref, w1_ref, g2_ref, b2_ref, w2_ref,
                        out_ref):
    n, hgt, wid, cp = x_ref.shape
    r = n * hgt * wid
    inv_r = 1.0 / r

    # Flat lane-dense activations: (N*H*W, Cp) with Cp = 128 (free reshape).
    x2 = x_ref[...].reshape(r, cp)

    # Spatial (i, j) coordinate of every flat row, used to mask conv taps that
    # fall outside the (implicitly zero-padded) image border.  Hoisted once.
    i_idx = jax.lax.broadcasted_iota(jnp.int32, (n, hgt, wid, cp), 1).reshape(r, cp)
    j_idx = jax.lax.broadcasted_iota(jnp.int32, (n, hgt, wid, cp), 2).reshape(r, cp)

    def bn_relu(t, g, b):
        # One-pass BN stats (sum + sum-of-squares), biased variance (PyTorch
        # training mode), clamped at 0 before rsqrt.
        s1 = jnp.sum(t, axis=0, keepdims=True)
        s2 = jnp.sum(t * t, axis=0, keepdims=True)
        mean = s1 * inv_r
        var = jnp.maximum(s2 * inv_r - mean * mean, 0.0)
        h = (t - mean) * jax.lax.rsqrt(var + EPS) * g + b
        return jnp.maximum(h, 0.0)                     # nn.ReLU

    def conv3x3(t, w_flat):
        # 3x3 / stride-1 / pad-1 conv as ONE im2col matmul:
        #   patches[:, ((di+1)*3+(dj+1))*Cp + c] = t[row + di*W + dj, c]
        # with out-of-image taps zeroed.  Row shifts use pltpu.roll (XLU slot),
        # border masks use the VPU, the concat is lane-tile aligned, and the
        # whole contraction is a single MXU matmul with K = 9*Cp.
        # NOTE: at production widths cast t / w_flat to bf16 here (keep f32
        # accumulation); kept f32 at this tiny shape for exactness.
        tj = {}
        for dj in (-1, 0, 1):
            if dj == 0:
                tj[dj] = t
            else:
                rolled = pltpu.roll(t, shift=(-dj) % r, axis=0)
                ok_j = (j_idx + dj >= 0) & (j_idx + dj < wid)
                tj[dj] = jnp.where(ok_j, rolled, 0.0)
        cols = []
        for di in (-1, 0, 1):                          # kh = di + 1
            ok_i = (i_idx + di >= 0) & (i_idx + di < hgt)
            for dj in (-1, 0, 1):                      # kw = dj + 1
                if di == 0:
                    cols.append(tj[dj])
                else:
                    shifted = pltpu.roll(tj[dj], shift=(-di * wid) % r, axis=0)
                    cols.append(jnp.where(ok_i, shifted, 0.0))
        patches = jnp.concatenate(cols, axis=1)        # (R, 9*Cp), lane-dense
        return jnp.dot(patches, w_flat, preferred_element_type=jnp.float32)

    # BN1 -> ReLU -> Conv3x3
    h1 = bn_relu(x2, g1_ref[...], b1_ref[...])
    y1 = conv3x3(h1, w1_ref[...])

    # BN2 -> ReLU -> Conv3x3
    h2 = bn_relu(y1, g2_ref[...], b2_ref[...])
    y2 = conv3x3(h2, w2_ref[...])

    # Residual add (subsample=False -> identity shortcut).  Lane-dense store.
    out_ref[...] = (y2 + x2).reshape(n, hgt, wid, cp)


def preact_resnet_block(x_nchw, params):
    """x_nchw: (N, C, H, W) float32. params: (g1, b1, w1_hwio, g2, b2, w2_hwio)."""
    g1, b1, w1, g2, b2, w2 = params
    x = jnp.transpose(x_nchw, (0, 2, 3, 1)).astype(jnp.float32)   # -> NHWC
    N, H, W, C = x.shape
    Cout = w1.shape[-1]
    # Identity shortcut of the subsample=False block requires Cin == Cout.
    assert Cout == C, "PreActResNetBlock(subsample=False) needs Cout == Cin"

    # Lane-dense repack: pad channels to a multiple of 128 so every vreg and
    # every store inside the kernel is a full 128-lane access.  Padded
    # channels stay exactly zero through BN/ReLU/conv/residual.
    Cp = ((max(C, Cout) + LANE - 1) // LANE) * LANE
    xp = jnp.pad(x, ((0, 0), (0, 0), (0, 0), (0, Cp - C)))
    g1p = jnp.pad(g1, ((0, 0), (0, Cp - C)), constant_values=1.0)
    b1p = jnp.pad(b1, ((0, 0), (0, Cp - C)))
    g2p = jnp.pad(g2, ((0, 0), (0, Cp - Cout)), constant_values=1.0)
    b2p = jnp.pad(b2, ((0, 0), (0, Cp - Cout)))
    w1p = jnp.pad(w1, ((0, 0), (0, 0), (0, Cp - C), (0, Cp - Cout)))
    w2p = jnp.pad(w2, ((0, 0), (0, 0), (0, Cp - Cout), (0, Cp - Cout)))
    # Flatten HWIO -> (9*Cp, Cp) matching the kernel's im2col column order
    # ((kh, kw, cin) row-major).
    w1f = w1p.reshape(9 * Cp, Cp)
    w2f = w2p.reshape(9 * Cp, Cp)

    def full(shp):
        return pl.BlockSpec(shp, lambda i, _nd=len(shp): (0,) * _nd)

    out_nhwc_p = pl.pallas_call(
        preact_block_kernel,
        out_shape=jax.ShapeDtypeStruct((N, H, W, Cp), jnp.float32),
        grid=(1,),
        in_specs=[full(xp.shape), full(g1p.shape), full(b1p.shape), full(w1f.shape),
                  full(g2p.shape), full(b2p.shape), full(w2f.shape)],
        out_specs=full((N, H, W, Cp)),
        compiler_params=pltpu.CompilerParams(
            dimension_semantics=("arbitrary",),
            vmem_limit_bytes=32 * 1024 * 1024),
    )(xp, g1p, b1p, w1f, g2p, b2p, w2f)

    # Strip channel padding, back to NCHW.
    return jnp.transpose(out_nhwc_p[..., :C], (0, 3, 1, 2))


def reference(x_nchw, params):
    # Pure-JAX reference (lax conv) for correctness checking.
    g1, b1, w1, g2, b2, w2 = params
    x = jnp.transpose(x_nchw, (0, 2, 3, 1)).astype(jnp.float32)

    def bn_relu(t, g, b):
        m = jnp.mean(t, axis=(0, 1, 2), keepdims=True)
        v = jnp.mean((t - m) ** 2, axis=(0, 1, 2), keepdims=True)
        return jnp.maximum((t - m) * jax.lax.rsqrt(v + EPS) * g.reshape(1, 1, 1, -1)
                           + b.reshape(1, 1, 1, -1), 0.0)

    def conv(t, w):
        return jax.lax.conv_general_dilated(
            t, w, window_strides=(1, 1), padding="SAME",
            dimension_numbers=("NHWC", "HWIO", "NHWC"))

    h = conv(bn_relu(x, g1, b1), w1)
    z = conv(bn_relu(h, g2, b2), w2)
    return jnp.transpose(z + x, (0, 3, 1, 2))


def init_params(key, cin, cout):
    k1, k2, k3, k4, k5, k6 = jax.random.split(key, 6)
    # BN affine params stored as (1, C) for the flat in-kernel layout.
    g1 = (1.0 + 0.1 * jax.random.normal(k1, (1, cin))).astype(jnp.float32)
    b1 = (0.1 * jax.random.normal(k2, (1, cin))).astype(jnp.float32)
    g2 = (1.0 + 0.1 * jax.random.normal(k3, (1, cout))).astype(jnp.float32)
    b2 = (0.1 * jax.random.normal(k4, (1, cout))).astype(jnp.float32)
    # Conv weights: PyTorch (Cout, Cin, 3, 3) -> HWIO (3, 3, Cin, Cout).
    w1_oihw = 0.1 * jax.random.normal(k5, (cout, cin, 3, 3), jnp.float32)
    w2_oihw = 0.1 * jax.random.normal(k6, (cout, cout, 3, 3), jnp.float32)
    w1 = jnp.transpose(w1_oihw, (2, 3, 1, 0))
    w2 = jnp.transpose(w2_oihw, (2, 3, 1, 0))
    return (g1, b1, w1, g2, b2, w2)


if __name__ == "__main__":
    key = jax.random.PRNGKey(0)
    kx, kp = jax.random.split(key)

    N, C, H, W = 2, 4, 16, 16          # input_features = 4, subsample=False
    x = jax.random.normal(kx, (N, C, H, W), jnp.float32)
    params = init_params(kp, C, C)

    out = jax.block_until_ready(preact_resnet_block(x, params))
    ref = jax.block_until_ready(reference(x, params))

    assert out.shape == (N, C, H, W) and out.dtype == jnp.float32
    np.testing.assert_allclose(np.asarray(out), np.asarray(ref), atol=1e-4, rtol=1e-4)

    print("KERNEL_OK")
</pallas_src>

<mosaic_0001>
module attributes {stable_mosaic.version = 11 : i64} {
  func.func @preact_block_kernel(%arg0: i32, %arg1: memref<2x16x16x128xf32, #tpu.memory_space<vmem>>, %arg2: memref<1x128xf32, #tpu.memory_space<vmem>>, %arg3: memref<1x128xf32, #tpu.memory_space<vmem>>, %arg4: memref<1152x128xf32, #tpu.memory_space<vmem>>, %arg5: memref<1x128xf32, #tpu.memory_space<vmem>>, %arg6: memref<1x128xf32, #tpu.memory_space<vmem>>, %arg7: memref<1152x128xf32, #tpu.memory_space<vmem>>, %arg8: memref<2x16x16x128xf32, #tpu.memory_space<vmem>>) attributes {dimension_semantics = [#tpu.dimension_semantics<arbitrary>], iteration_bounds = array<i64: 1>, scalar_prefetch = 0 : i64, scratch_operands = 0 : i64, tpu.core_type = #tpu.core_type<tc>, window_params = [{pipeline_mode = #tpu.pipeline_mode<synchronous>, transform_indices = @transform_0, window_bounds = array<i64: 2, 16, 16, 128>}, {pipeline_mode = #tpu.pipeline_mode<synchronous>, transform_indices = @transform_1, window_bounds = array<i64: 1, 128>}, {pipeline_mode = #tpu.pipeline_mode<synchronous>, transform_indices = @transform_2, window_bounds = array<i64: 1, 128>}, {pipeline_mode = #tpu.pipeline_mode<synchronous>, transform_indices = @transform_3, window_bounds = array<i64: 1152, 128>}, {pipeline_mode = #tpu.pipeline_mode<synchronous>, transform_indices = @transform_4, window_bounds = array<i64: 1, 128>}, {pipeline_mode = #tpu.pipeline_mode<synchronous>, transform_indices = @transform_5, window_bounds = array<i64: 1, 128>}, {pipeline_mode = #tpu.pipeline_mode<synchronous>, transform_indices = @transform_6, window_bounds = array<i64: 1152, 128>}, {pipeline_mode = #tpu.pipeline_mode<synchronous>, transform_indices = @transform_7, window_bounds = array<i64: 2, 16, 16, 128>}]} {
    %c0 = arith.constant 0 : index
    %c0_0 = arith.constant 0 : index
    %c0_1 = arith.constant 0 : index
    %c0_2 = arith.constant 0 : index
    %0 = vector.load %arg1[%c0, %c0_0, %c0_1, %c0_2] : memref<2x16x16x128xf32, #tpu.memory_space<vmem>>, vector<2x16x16x128xf32>
    %1 = vector.shape_cast %0 : vector<2x16x16x128xf32> to vector<512x128xf32>
    %2 = tpu.iota {dimensions = array<i32: 1>} : vector<2x16x16x128xi32>
    %3 = vector.shape_cast %2 : vector<2x16x16x128xi32> to vector<512x128xi32>
    %4 = tpu.iota {dimensions = array<i32: 2>} : vector<2x16x16x128xi32>
    %5 = vector.shape_cast %4 : vector<2x16x16x128xi32> to vector<512x128xi32>
    %c0_3 = arith.constant 0 : index
    %c0_4 = arith.constant 0 : index
    %6 = vector.load %arg2[%c0_3, %c0_4] : memref<1x128xf32, #tpu.memory_space<vmem>>, vector<1x128xf32>
    %c0_5 = arith.constant 0 : index
    %c0_6 = arith.constant 0 : index
    %7 = vector.load %arg3[%c0_5, %c0_6] : memref<1x128xf32, #tpu.memory_space<vmem>>, vector<1x128xf32>
    %cst = arith.constant dense<0.000000e+00> : vector<128xf32>
    %8 = vector.multi_reduction <add>, %1, %cst [0] : vector<512x128xf32> to vector<128xf32>
    %9 = vector.shape_cast %8 : vector<128xf32> to vector<1x128xf32>
    %10 = arith.mulf %1, %1 : vector<512x128xf32>
    %cst_7 = arith.constant dense<0.000000e+00> : vector<128xf32>
    %11 = vector.multi_reduction <add>, %10, %cst_7 [0] : vector<512x128xf32> to vector<128xf32>
    %12 = vector.shape_cast %11 : vector<128xf32> to vector<1x128xf32>
    %cst_8 = arith.constant 0.001953125 : f32
    %13 = vector.broadcast %cst_8 : f32 to vector<1x128xf32>
    %14 = arith.mulf %9, %13 : vector<1x128xf32>
    %cst_9 = arith.constant 0.001953125 : f32
    %15 = vector.broadcast %cst_9 : f32 to vector<1x128xf32>
    %16 = arith.mulf %12, %15 : vector<1x128xf32>
    %17 = arith.mulf %14, %14 : vector<1x128xf32>
    %18 = arith.subf %16, %17 : vector<1x128xf32>
    %cst_10 = arith.constant 0.000000e+00 : f32
    %19 = vector.broadcast %cst_10 : f32 to vector<1x128xf32>
    %20 = arith.maximumf %18, %19 : vector<1x128xf32>
    %21 = vector.broadcast %14 : vector<1x128xf32> to vector<512x128xf32>
    %22 = arith.subf %1, %21 : vector<512x128xf32>
    %cst_11 = arith.constant 9.99999974E-6 : f32
    %23 = vector.broadcast %cst_11 : f32 to vector<1x128xf32>
    %24 = arith.addf %20, %23 : vector<1x128xf32>
    %25 = math.rsqrt %24 : vector<1x128xf32>
    %26 = vector.broadcast %25 : vector<1x128xf32> to vector<512x128xf32>
    %27 = arith.mulf %22, %26 : vector<512x128xf32>
    %28 = vector.broadcast %6 : vector<1x128xf32> to vector<512x128xf32>
    %29 = arith.mulf %27, %28 : vector<512x128xf32>
    %30 = vector.broadcast %7 : vector<1x128xf32> to vector<512x128xf32>
    %31 = arith.addf %29, %30 : vector<512x128xf32>
    %cst_12 = arith.constant 0.000000e+00 : f32
    %32 = vector.broadcast %cst_12 : f32 to vector<512x128xf32>
    %33 = arith.maximumf %31, %32 : vector<512x128xf32>
    %c0_13 = arith.constant 0 : index
    %c0_14 = arith.constant 0 : index
    %34 = vector.load %arg4[%c0_13, %c0_14] : memref<1152x128xf32, #tpu.memory_space<vmem>>, vector<1152x128xf32>
    %c1_i32 = arith.constant 1 : i32
    %35 = tpu.dynamic_rotate %33 by %c1_i32 dim 0 : vector<512x128xf32>, i32 -> vector<512x128xf32>
    %c-1_i32 = arith.constant -1 : i32
    %36 = vector.broadcast %c-1_i32 : i32 to vector<512x128xi32>
    %37 = arith.addi %5, %36 : vector<512x128xi32>
    %c0_i32 = arith.constant 0 : i32
    %38 = vector.broadcast %c0_i32 : i32 to vector<512x128xi32>
    %39 = arith.cmpi sge, %37, %38 : vector<512x128xi32>
    %c-1_i32_15 = arith.constant -1 : i32
    %40 = vector.broadcast %c-1_i32_15 : i32 to vector<512x128xi32>
    %41 = arith.addi %5, %40 : vector<512x128xi32>
    %c16_i32 = arith.constant 16 : i32
    %42 = vector.broadcast %c16_i32 : i32 to vector<512x128xi32>
    %43 = arith.cmpi slt, %41, %42 : vector<512x128xi32>
    %44 = arith.andi %39, %43 : vector<512x128xi1>
    %cst_16 = arith.constant 0.000000e+00 : f32
    %45 = vector.broadcast %cst_16 : f32 to vector<512x128xf32>
    %46 = arith.select %44, %35, %45 : vector<512x128xi1>, vector<512x128xf32>
    %c511_i32 = arith.constant 511 : i32
    %47 = tpu.dynamic_rotate %33 by %c511_i32 dim 0 : vector<512x128xf32>, i32 -> vector<512x128xf32>
    %c1_i32_17 = arith.constant 1 : i32
    %48 = vector.broadcast %c1_i32_17 : i32 to vector<512x128xi32>
    %49 = arith.addi %5, %48 : vector<512x128xi32>
    %c0_i32_18 = arith.constant 0 : i32
    %50 = vector.broadcast %c0_i32_18 : i32 to vector<512x128xi32>
    %51 = arith.cmpi sge, %49, %50 : vector<512x128xi32>
    %c1_i32_19 = arith.constant 1 : i32
    %52 = vector.broadcast %c1_i32_19 : i32 to vector<512x128xi32>
    %53 = arith.addi %5, %52 : vector<512x128xi32>
    %c16_i32_20 = arith.constant 16 : i32
    %54 = vector.broadcast %c16_i32_20 : i32 to vector<512x128xi32>
    %55 = arith.cmpi slt, %53, %54 : vector<512x128xi32>
    %56 = arith.andi %51, %55 : vector<512x128xi1>
    %cst_21 = arith.constant 0.000000e+00 : f32
    %57 = vector.broadcast %cst_21 : f32 to vector<512x128xf32>
    %58 = arith.select %56, %47, %57 : vector<512x128xi1>, vector<512x128xf32>
    %c-1_i32_22 = arith.constant -1 : i32
    %59 = vector.broadcast %c-1_i32_22 : i32 to vector<512x128xi32>
    %60 = arith.addi %3, %59 : vector<512x128xi32>
    %c0_i32_23 = arith.constant 0 : i32
    %61 = vector.broadcast %c0_i32_23 : i32 to vector<512x128xi32>
    %62 = arith.cmpi sge, %60, %61 : vector<512x128xi32>
    %c-1_i32_24 = arith.constant -1 : i32
    %63 = vector.broadcast %c-1_i32_24 : i32 to vector<512x128xi32>
    %64 = arith.addi %3, %63 : vector<512x128xi32>
    %c16_i32_25 = arith.constant 16 : i32
    %65 = vector.broadcast %c16_i32_25 : i32 to vector<512x128xi32>
    %66 = arith.cmpi slt, %64, %65 : vector<512x128xi32>
    %67 = arith.andi %62, %66 : vector<512x128xi1>
    %c16_i32_26 = arith.constant 16 : i32
    %68 = tpu.dynamic_rotate %46 by %c16_i32_26 dim 0 : vector<512x128xf32>, i32 -> vector<512x128xf32>
    %cst_27 = arith.constant 0.000000e+00 : f32
    %69 = vector.broadcast %cst_27 : f32 to vector<512x128xf32>
    %70 = arith.select %67, %68, %69 : vector<512x128xi1>, vector<512x128xf32>
    %c16_i32_28 = arith.constant 16 : i32
    %71 = tpu.dynamic_rotate %33 by %c16_i32_28 dim 0 : vector<512x128xf32>, i32 -> vector<512x128xf32>
    %cst_29 = arith.constant 0.000000e+00 : f32
    %72 = vector.broadcast %cst_29 : f32 to vector<512x128xf32>
    %73 = arith.select %67, %71, %72 : vector<512x128xi1>, vector<512x128xf32>
    %c16_i32_30 = arith.constant 16 : i32
    %74 = tpu.dynamic_rotate %58 by %c16_i32_30 dim 0 : vector<512x128xf32>, i32 -> vector<512x128xf32>
    %cst_31 = arith.constant 0.000000e+00 : f32
    %75 = vector.broadcast %cst_31 : f32 to vector<512x128xf32>
    %76 = arith.select %67, %74, %75 : vector<512x128xi1>, vector<512x128xf32>
    %c1_i32_32 = arith.constant 1 : i32
    %77 = vector.broadcast %c1_i32_32 : i32 to vector<512x128xi32>
    %78 = arith.addi %3, %77 : vector<512x128xi32>
    %c0_i32_33 = arith.constant 0 : i32
    %79 = vector.broadcast %c0_i32_33 : i32 to vector<512x128xi32>
    %80 = arith.cmpi sge, %78, %79 : vector<512x128xi32>
    %c1_i32_34 = arith.constant 1 : i32
    %81 = vector.broadcast %c1_i32_34 : i32 to vector<512x128xi32>
    %82 = arith.addi %3, %81 : vector<512x128xi32>
    %c16_i32_35 = arith.constant 16 : i32
    %83 = vector.broadcast %c16_i32_35 : i32 to vector<512x128xi32>
    %84 = arith.cmpi slt, %82, %83 : vector<512x128xi32>
    %85 = arith.andi %80, %84 : vector<512x128xi1>
    %c496_i32 = arith.constant 496 : i32
    %86 = tpu.dynamic_rotate %46 by %c496_i32 dim 0 : vector<512x128xf32>, i32 -> vector<512x128xf32>
    %cst_36 = arith.constant 0.000000e+00 : f32
    %87 = vector.broadcast %cst_36 : f32 to vector<512x128xf32>
    %88 = arith.select %85, %86, %87 : vector<512x128xi1>, vector<512x128xf32>
    %c496_i32_37 = arith.constant 496 : i32
    %89 = tpu.dynamic_rotate %33 by %c496_i32_37 dim 0 : vector<512x128xf32>, i32 -> vector<512x128xf32>
    %cst_38 = arith.constant 0.000000e+00 : f32
    %90 = vector.broadcast %cst_38 : f32 to vector<512x128xf32>
    %91 = arith.select %85, %89, %90 : vector<512x128xi1>, vector<512x128xf32>
    %c496_i32_39 = arith.constant 496 : i32
    %92 = tpu.dynamic_rotate %58 by %c496_i32_39 dim 0 : vector<512x128xf32>, i32 -> vector<512x128xf32>
    %cst_40 = arith.constant 0.000000e+00 : f32
    %93 = vector.broadcast %cst_40 : f32 to vector<512x128xf32>
    %94 = arith.select %85, %92, %93 : vector<512x128xi1>, vector<512x128xf32>
    %95 = tpu.concatenate %70, %73, %76, %46, %33, %58, %88, %91, %94 in 1 : vector<512x128xf32>, vector<512x128xf32>, vector<512x128xf32>, vector<512x128xf32>, vector<512x128xf32>, vector<512x128xf32>, vector<512x128xf32>, vector<512x128xf32>, vector<512x128xf32> -> vector<512x1152xf32>
    %cst_41 = arith.constant dense<0.000000e+00> : vector<512x128xf32>
    %96 = tpu.matmul %95, %34, %cst_41 {dimension_numbers = #tpu.dot_dimension_numbers<[1], [0], [0], [1], [0, 0, 1, 1], [], []>} : vector<512x1152xf32>, vector<1152x128xf32>, vector<512x128xf32> -> vector<512x128xf32>
    %c0_42 = arith.constant 0 : index
    %c0_43 = arith.constant 0 : index
    %97 = vector.load %arg5[%c0_42, %c0_43] : memref<1x128xf32, #tpu.memory_space<vmem>>, vector<1x128xf32>
    %c0_44 = arith.constant 0 : index
    %c0_45 = arith.constant 0 : index
    %98 = vector.load %arg6[%c0_44, %c0_45] : memref<1x128xf32, #tpu.memory_space<vmem>>, vector<1x128xf32>
    %cst_46 = arith.constant dense<0.000000e+00> : vector<128xf32>
    %99 = vector.multi_reduction <add>, %96, %cst_46 [0] : vector<512x128xf32> to vector<128xf32>
    %100 = vector.shape_cast %99 : vector<128xf32> to vector<1x128xf32>
    %101 = arith.mulf %96, %96 : vector<512x128xf32>
    %cst_47 = arith.constant dense<0.000000e+00> : vector<128xf32>
    %102 = vector.multi_reduction <add>, %101, %cst_47 [0] : vector<512x128xf32> to vector<128xf32>
    %103 = vector.shape_cast %102 : vector<128xf32> to vector<1x128xf32>
    %cst_48 = arith.constant 0.001953125 : f32
    %104 = vector.broadcast %cst_48 : f32 to vector<1x128xf32>
    %105 = arith.mulf %100, %104 : vector<1x128xf32>
    %cst_49 = arith.constant 0.001953125 : f32
    %106 = vector.broadcast %cst_49 : f32 to vector<1x128xf32>
    %107 = arith.mulf %103, %106 : vector<1x128xf32>
    %108 = arith.mulf %105, %105 : vector<1x128xf32>
    %109 = arith.subf %107, %108 : vector<1x128xf32>
    %cst_50 = arith.constant 0.000000e+00 : f32
    %110 = vector.broadcast %cst_50 : f32 to vector<1x128xf32>
    %111 = arith.maximumf %109, %110 : vector<1x128xf32>
    %112 = vector.broadcast %105 : vector<1x128xf32> to vector<512x128xf32>
    %113 = arith.subf %96, %112 : vector<512x128xf32>
    %cst_51 = arith.constant 9.99999974E-6 : f32
    %114 = vector.broadcast %cst_51 : f32 to vector<1x128xf32>
    %115 = arith.addf %111, %114 : vector<1x128xf32>
    %116 = math.rsqrt %115 : vector<1x128xf32>
    %117 = vector.broadcast %116 : vector<1x128xf32> to vector<512x128xf32>
    %118 = arith.mulf %113, %117 : vector<512x128xf32>
    %119 = vector.broadcast %97 : vector<1x128xf32> to vector<512x128xf32>
    %120 = arith.mulf %118, %119 : vector<512x128xf32>
    %121 = vector.broadcast %98 : vector<1x128xf32> to vector<512x128xf32>
    %122 = arith.addf %120, %121 : vector<512x128xf32>
    %cst_52 = arith.constant 0.000000e+00 : f32
    %123 = vector.broadcast %cst_52 : f32 to vector<512x128xf32>
    %124 = arith.maximumf %122, %123 : vector<512x128xf32>
    %c0_53 = arith.constant 0 : index
    %c0_54 = arith.constant 0 : index
    %125 = vector.load %arg7[%c0_53, %c0_54] : memref<1152x128xf32, #tpu.memory_space<vmem>>, vector<1152x128xf32>
    %c1_i32_55 = arith.constant 1 : i32
    %126 = tpu.dynamic_rotate %124 by %c1_i32_55 dim 0 : vector<512x128xf32>, i32 -> vector<512x128xf32>
    %c-1_i32_56 = arith.constant -1 : i32
    %127 = vector.broadcast %c-1_i32_56 : i32 to vector<512x128xi32>
    %128 = arith.addi %5, %127 : vector<512x128xi32>
    %c0_i32_57 = arith.constant 0 : i32
    %129 = vector.broadcast %c0_i32_57 : i32 to vector<512x128xi32>
    %130 = arith.cmpi sge, %128, %129 : vector<512x128xi32>
    %c-1_i32_58 = arith.constant -1 : i32
    %131 = vector.broadcast %c-1_i32_58 : i32 to vector<512x128xi32>
    %132 = arith.addi %5, %131 : vector<512x128xi32>
    %c16_i32_59 = arith.constant 16 : i32
    %133 = vector.broadcast %c16_i32_59 : i32 to vector<512x128xi32>
    %134 = arith.cmpi slt, %132, %133 : vector<512x128xi32>
    %135 = arith.andi %130, %134 : vector<512x128xi1>
    %cst_60 = arith.constant 0.000000e+00 : f32
    %136 = vector.broadcast %cst_60 : f32 to vector<512x128xf32>
    %137 = arith.select %135, %126, %136 : vector<512x128xi1>, vector<512x128xf32>
    %c511_i32_61 = arith.constant 511 : i32
    %138 = tpu.dynamic_rotate %124 by %c511_i32_61 dim 0 : vector<512x128xf32>, i32 -> vector<512x128xf32>
    %c1_i32_62 = arith.constant 1 : i32
    %139 = vector.broadcast %c1_i32_62 : i32 to vector<512x128xi32>
    %140 = arith.addi %5, %139 : vector<512x128xi32>
    %c0_i32_63 = arith.constant 0 : i32
    %141 = vector.broadcast %c0_i32_63 : i32 to vector<512x128xi32>
    %142 = arith.cmpi sge, %140, %141 : vector<512x128xi32>
    %c1_i32_64 = arith.constant 1 : i32
    %143 = vector.broadcast %c1_i32_64 : i32 to vector<512x128xi32>
    %144 = arith.addi %5, %143 : vector<512x128xi32>
    %c16_i32_65 = arith.constant 16 : i32
    %145 = vector.broadcast %c16_i32_65 : i32 to vector<512x128xi32>
    %146 = arith.cmpi slt, %144, %145 : vector<512x128xi32>
    %147 = arith.andi %142, %146 : vector<512x128xi1>
    %cst_66 = arith.constant 0.000000e+00 : f32
    %148 = vector.broadcast %cst_66 : f32 to vector<512x128xf32>
    %149 = arith.select %147, %138, %148 : vector<512x128xi1>, vector<512x128xf32>
    %c-1_i32_67 = arith.constant -1 : i32
    %150 = vector.broadcast %c-1_i32_67 : i32 to vector<512x128xi32>
    %151 = arith.addi %3, %150 : vector<512x128xi32>
    %c0_i32_68 = arith.constant 0 : i32
    %152 = vector.broadcast %c0_i32_68 : i32 to vector<512x128xi32>
    %153 = arith.cmpi sge, %151, %152 : vector<512x128xi32>
    %c-1_i32_69 = arith.constant -1 : i32
    %154 = vector.broadcast %c-1_i32_69 : i32 to vector<512x128xi32>
    %155 = arith.addi %3, %154 : vector<512x128xi32>
    %c16_i32_70 = arith.constant 16 : i32
    %156 = vector.broadcast %c16_i32_70 : i32 to vector<512x128xi32>
    %157 = arith.cmpi slt, %155, %156 : vector<512x128xi32>
    %158 = arith.andi %153, %157 : vector<512x128xi1>
    %c16_i32_71 = arith.constant 16 : i32
    %159 = tpu.dynamic_rotate %137 by %c16_i32_71 dim 0 : vector<512x128xf32>, i32 -> vector<512x128xf32>
    %cst_72 = arith.constant 0.000000e+00 : f32
    %160 = vector.broadcast %cst_72 : f32 to vector<512x128xf32>
    %161 = arith.select %158, %159, %160 : vector<512x128xi1>, vector<512x128xf32>
    %c16_i32_73 = arith.constant 16 : i32
    %162 = tpu.dynamic_rotate %124 by %c16_i32_73 dim 0 : vector<512x128xf32>, i32 -> vector<512x128xf32>
    %cst_74 = arith.constant 0.000000e+00 : f32
    %163 = vector.broadcast %cst_74 : f32 to vector<512x128xf32>
    %164 = arith.select %158, %162, %163 : vector<512x128xi1>, vector<512x128xf32>
    %c16_i32_75 = arith.constant 16 : i32
    %165 = tpu.dynamic_rotate %149 by %c16_i32_75 dim 0 : vector<512x128xf32>, i32 -> vector<512x128xf32>
    %cst_76 = arith.constant 0.000000e+00 : f32
    %166 = vector.broadcast %cst_76 : f32 to vector<512x128xf32>
    %167 = arith.select %158, %165, %166 : vector<512x128xi1>, vector<512x128xf32>
    %c1_i32_77 = arith.constant 1 : i32
    %168 = vector.broadcast %c1_i32_77 : i32 to vector<512x128xi32>
    %169 = arith.addi %3, %168 : vector<512x128xi32>
    %c0_i32_78 = arith.constant 0 : i32
    %170 = vector.broadcast %c0_i32_78 : i32 to vector<512x128xi32>
    %171 = arith.cmpi sge, %169, %170 : vector<512x128xi32>
    %c1_i32_79 = arith.constant 1 : i32
    %172 = vector.broadcast %c1_i32_79 : i32 to vector<512x128xi32>
    %173 = arith.addi %3, %172 : vector<512x128xi32>
    %c16_i32_80 = arith.constant 16 : i32
    %174 = vector.broadcast %c16_i32_80 : i32 to vector<512x128xi32>
    %175 = arith.cmpi slt, %173, %174 : vector<512x128xi32>
    %176 = arith.andi %171, %175 : vector<512x128xi1>
    %c496_i32_81 = arith.constant 496 : i32
    %177 = tpu.dynamic_rotate %137 by %c496_i32_81 dim 0 : vector<512x128xf32>, i32 -> vector<512x128xf32>
    %cst_82 = arith.constant 0.000000e+00 : f32
    %178 = vector.broadcast %cst_82 : f32 to vector<512x128xf32>
    %179 = arith.select %176, %177, %178 : vector<512x128xi1>, vector<512x128xf32>
    %c496_i32_83 = arith.constant 496 : i32
    %180 = tpu.dynamic_rotate %124 by %c496_i32_83 dim 0 : vector<512x128xf32>, i32 -> vector<512x128xf32>
    %cst_84 = arith.constant 0.000000e+00 : f32
    %181 = vector.broadcast %cst_84 : f32 to vector<512x128xf32>
    %182 = arith.select %176, %180, %181 : vector<512x128xi1>, vector<512x128xf32>
    %c496_i32_85 = arith.constant 496 : i32
    %183 = tpu.dynamic_rotate %149 by %c496_i32_85 dim 0 : vector<512x128xf32>, i32 -> vector<512x128xf32>
    %cst_86 = arith.constant 0.000000e+00 : f32
    %184 = vector.broadcast %cst_86 : f32 to vector<512x128xf32>
    %185 = arith.select %176, %183, %184 : vector<512x128xi1>, vector<512x128xf32>
    %186 = tpu.concatenate %161, %164, %167, %137, %124, %149, %179, %182, %185 in 1 : vector<512x128xf32>, vector<512x128xf32>, vector<512x128xf32>, vector<512x128xf32>, vector<512x128xf32>, vector<512x128xf32>, vector<512x128xf32>, vector<512x128xf32>, vector<512x128xf32> -> vector<512x1152xf32>
    %cst_87 = arith.constant dense<0.000000e+00> : vector<512x128xf32>
    %187 = tpu.matmul %186, %125, %cst_87 {dimension_numbers = #tpu.dot_dimension_numbers<[1], [0], [0], [1], [0, 0, 1, 1], [], []>} : vector<512x1152xf32>, vector<1152x128xf32>, vector<512x128xf32> -> vector<512x128xf32>
    %188 = arith.addf %187, %1 : vector<512x128xf32>
    %189 = vector.shape_cast %188 : vector<512x128xf32> to vector<2x16x16x128xf32>
    %c0_88 = arith.constant 0 : index
    %c0_89 = arith.constant 0 : index
    %c0_90 = arith.constant 0 : index
    %c0_91 = arith.constant 0 : index
    %190 = vector.load %arg8[%c0_88, %c0_89, %c0_90, %c0_91] : memref<2x16x16x128xf32, #tpu.memory_space<vmem>>, vector<2x16x16x128xf32>
    tpu.vector_store %arg8[%c0_88, %c0_89, %c0_90, %c0_91], %189 {strides = array<i32>} : memref<2x16x16x128xf32, #tpu.memory_space<vmem>>, vector<2x16x16x128xf32>,
    return
  }
  func.func @transform_0(%arg0: i32) -> (i32, i32, i32, i32) {
    %c0_i32 = arith.constant 0 : i32
    %c0_i32_0 = arith.constant 0 : i32
    %c0_i32_1 = arith.constant 0 : i32
    %c0_i32_2 = arith.constant 0 : i32
    %c0_i32_3 = arith.constant 0 : i32
    return %c0_i32, %c0_i32_0, %c0_i32_1, %c0_i32_2 : i32, i32, i32, i32
  }
  func.func @transform_1(%arg0: i32) -> (i32, i32) {
    %c0_i32 = arith.constant 0 : i32
    %c0_i32_0 = arith.constant 0 : i32
    %c0_i32_1 = arith.constant 0 : i32
    return %c0_i32, %c0_i32_0 : i32, i32
  }
  func.func @transform_2(%arg0: i32) -> (i32, i32) {
    %c0_i32 = arith.constant 0 : i32
    %c0_i32_0 = arith.constant 0 : i32
    %c0_i32_1 = arith.constant 0 : i32
    return %c0_i32, %c0_i32_0 : i32, i32
  }
  func.func @transform_3(%arg0: i32) -> (i32, i32) {
    %c0_i32 = arith.constant 0 : i32
    %c0_i32_0 = arith.constant 0 : i32
    %c0_i32_1 = arith.constant 0 : i32
    return %c0_i32, %c0_i32_0 : i32, i32
  }
  func.func @transform_4(%arg0: i32) -> (i32, i32) {
    %c0_i32 = arith.constant 0 : i32
    %c0_i32_0 = arith.constant 0 : i32
    %c0_i32_1 = arith.constant 0 : i32
    return %c0_i32, %c0_i32_0 : i32, i32
  }
  func.func @transform_5(%arg0: i32) -> (i32, i32) {
    %c0_i32 = arith.constant 0 : i32
    %c0_i32_0 = arith.constant 0 : i32
    %c0_i32_1 = arith.constant 0 : i32
    return %c0_i32, %c0_i32_0 : i32, i32
  }
  func.func @transform_6(%arg0: i32) -> (i32, i32) {
    %c0_i32 = arith.constant 0 : i32
    %c0_i32_0 = arith.constant 0 : i32
    %c0_i32_1 = arith.constant 0 : i32
    return %c0_i32, %c0_i32_0 : i32, i32
  }
  func.func @transform_7(%arg0: i32) -> (i32, i32, i32, i32) {
    %c0_i32 = arith.constant 0 : i32
    %c0_i32_0 = arith.constant 0 : i32
    %c0_i32_1 = arith.constant 0 : i32
    %c0_i32_2 = arith.constant 0 : i32
    %c0_i32_3 = arith.constant 0 : i32
    return %c0_i32, %c0_i32_0, %c0_i32_1, %c0_i32_2 : i32, i32, i32, i32
  }
}

</mosaic_0001>

<llo_original>
// kernel: tpu_custom_call.1
$region0: #{tpu_custom_call.1}
  #allocation0 [shape = 'u32[]', space=smem, size = 0x4, offset = 0x4, fixed_abs, tag = 'smem constant byte address 0x4 - core index']
  #allocation1 [shape = 'u32[144,128]{1,0:T(1,128)}', space=vmem, size = 0x12000, scoped, tag = 'internal scratch']
  %s0 = inlined_call_operand.hbm [shape: f32[2,16,16,128], index: 0, kind: input, shape index: {}]
  %s1 = inlined_call_operand.vmem [shape: f32[1,128], index: 1, kind: input, shape index: {}]
  %s2 = inlined_call_operand.vmem [shape: f32[1,128], index: 2, kind: input, shape index: {}]
  %s3 = inlined_call_operand.hbm [shape: f32[1152,128], index: 3, kind: input, shape index: {}]
  %s4 = inlined_call_operand.vmem [shape: f32[1,128], index: 4, kind: input, shape index: {}]
  %s5 = inlined_call_operand.vmem [shape: f32[1,128], index: 5, kind: input, shape index: {}]
  %s6 = inlined_call_operand.hbm [shape: f32[1152,128], index: 6, kind: input, shape index: {}]
  %s7 = inlined_call_operand.hbm [shape: f32[2,16,16,128], index: 7, kind: output, shape index: {}]
  %s8 = sld [smem:[#allocation0]]
  $region50: #{tpu_custom_call.1} parent=0
    _
  %s10 = ssub.s32 1, %s8
  %s11 = scalar_select 0, %s10, %s8
  $region1: #{tpu_custom_call.1} parent=0
    #allocation2 [shape = 'u8[262144]{0}', space=vmem, size = 0x40000, scoped, tag = 'input window, operand 0, single buffered']
    #allocation3 [shape = 's32[1]{0}', space=sflag, size = 0x4, scoped, tag = 'scoped memory for tpu_custom_call.1']
    #allocation4 [shape = 's32[1]{0}', space=sflag, size = 0x4, scoped, tag = 'scoped memory for tpu_custom_call.1']
    #allocation5 [shape = 'u8[589824]{0}', space=vmem, size = 0x90000, scoped, tag = 'input window, operand 3, single buffered']
    #allocation6 [shape = 's32[1]{0}', space=sflag, size = 0x4, scoped, tag = 'scoped memory for tpu_custom_call.1']
    #allocation7 [shape = 'u8[589824]{0}', space=vmem, size = 0x90000, scoped, tag = 'input window, operand 6, single buffered']
    #allocation8 [shape = 'u8[262144]{0}', space=vmem, size = 0x40000, scoped, tag = 'output window, operand 0, single buffered']
    %12 = vsyncpa [#allocation3], 0
    %13 = vsyncpa [#allocation6], 0
    %14 = vsyncpa [#allocation4], 0
    // Predicated region
    $region2: #{tpu_custom_call.1} parent=1 // pred_check
      _
    $region3: #{tpu_custom_call.1} parent=1 // pred_check_branch
      %16 = sbr.rel (0) target = $region5
    $region4: #{tpu_custom_call.1} parent=1 // pred_region
      %s18 = ssub.s32 8192, 8192
      %19 = vsyncadd [#allocation3], %s18
      %s20 = sshll.u32 [#allocation2], 4
      %s21 = int_to_ptr.vmem [resolvable:$true] %s20
      %26 = dma.hbm_to_vmem [thread:$0]  %s0, 8192, %s21, [#allocation3], 128, 128, 8
    $region5: #{tpu_custom_call.1} parent=1 // pred_fallthru
      _
    // Predicated region
    $region6: #{tpu_custom_call.1} parent=1 // pred_check
      _
    $region7: #{tpu_custom_call.1} parent=1 // pred_check_branch
      %28 = sbr.rel (0) target = $region9
    $region8: #{tpu_custom_call.1} parent=1 // pred_region
      _
    $region9: #{tpu_custom_call.1} parent=1 // pred_fallthru
      _
    // Predicated region
    $region10: #{tpu_custom_call.1} parent=1 // pred_check
      _
    $region11: #{tpu_custom_call.1} parent=1 // pred_check_branch
      %30 = sbr.rel (0) target = $region13
    $region12: #{tpu_custom_call.1} parent=1 // pred_region
      _
    $region13: #{tpu_custom_call.1} parent=1 // pred_fallthru
      _
    // Predicated region
    $region14: #{tpu_custom_call.1} parent=1 // pred_check
      _
    $region15: #{tpu_custom_call.1} parent=1 // pred_check_branch
      %32 = sbr.rel (0) target = $region17
    $region16: #{tpu_custom_call.1} parent=1 // pred_region
      %s34 = ssub.s32 18432, 18432
      %35 = vsyncadd [#allocation6], %s34
      %s36 = sshll.u32 [#allocation5], 4
      %s37 = int_to_ptr.vmem [resolvable:$true] %s36
      %42 = dma.hbm_to_vmem [thread:$0]  %s3, 18432, %s37, [#allocation6], 128, 128, 8
    $region17: #{tpu_custom_call.1} parent=1 // pred_fallthru
      _
    // Predicated region
    $region18: #{tpu_custom_call.1} parent=1 // pred_check
      _
    $region19: #{tpu_custom_call.1} parent=1 // pred_check_branch
      %44 = sbr.rel (0) target = $region21
    $region20: #{tpu_custom_call.1} parent=1 // pred_region
      _
    $region21: #{tpu_custom_call.1} parent=1 // pred_fallthru
      _
    // Predicated region
    $region22: #{tpu_custom_call.1} parent=1 // pred_check
      _
    $region23: #{tpu_custom_call.1} parent=1 // pred_check_branch
      %46 = sbr.rel (0) target = $region25
    $region24: #{tpu_custom_call.1} parent=1 // pred_region
      _
    $region25: #{tpu_custom_call.1} parent=1 // pred_fallthru
      _
    // Predicated region
    $region26: #{tpu_custom_call.1} parent=1 // pred_check
      _
    $region27: #{tpu_custom_call.1} parent=1 // pred_check_branch
      %48 = sbr.rel (0) target = $region29
    $region28: #{tpu_custom_call.1} parent=1 // pred_region
      %s50 = ssub.s32 18432, 18432
      %51 = vsyncadd [#allocation6], %s50
      %s52 = sshll.u32 [#allocation7], 4
      %s53 = int_to_ptr.vmem [resolvable:$true] %s52
      %58 = dma.hbm_to_vmem [thread:$0]  %s6, 18432, %s53, [#allocation6], 128, 128, 8
    $region29: #{tpu_custom_call.1} parent=1 // pred_fallthru
      _
    // Predicated region
    $region30: #{tpu_custom_call.1} parent=1 // pred_check
      _
    $region31: #{tpu_custom_call.1} parent=1 // pred_check_branch
      %60 = sbr.rel (0) target = $region33
    $region32: #{tpu_custom_call.1} parent=1 // pred_region
      %61 = dma.done [#allocation3], 8192
    $region33: #{tpu_custom_call.1} parent=1 // pred_fallthru
      _
    // Predicated region
    $region34: #{tpu_custom_call.1} parent=1 // pred_check
      _
    $region35: #{tpu_custom_call.1} parent=1 // pred_check_branch
      %63 = sbr.rel (0) target = $region37
    $region36: #{tpu_custom_call.1} parent=1 // pred_region
      %64 = dma.done [#allocation6], 18432
    $region37: #{tpu_custom_call.1} parent=1 // pred_fallthru
      _
    // Predicated region
    $region38: #{tpu_custom_call.1} parent=1 // pred_check
      _
    $region39: #{tpu_custom_call.1} parent=1 // pred_check_branch
      %66 = sbr.rel (0) target = $region41
    $region40: #{tpu_custom_call.1} parent=1 // pred_region
      %67 = dma.done [#allocation6], 18432
    $region41: #{tpu_custom_call.1} parent=1 // pred_fallthru
      _
    %v68 = vld [vmem:[#allocation2] sm:$0xff]
    %v69 = vld [vmem:[#allocation2 + $0x8] sm:$0xff]
    %v70 = vld [vmem:[#allocation2 + $0x10] sm:$0xff]
    %v71 = vld [vmem:[#allocation2 + $0x18] sm:$0xff]
    %v72 = vld [vmem:[#allocation2 + $0x20] sm:$0xff]
    %v73 = vld [vmem:[#allocation2 + $0x28] sm:$0xff]
    %v74 = vld [vmem:[#allocation2 + $0x30] sm:$0xff]
    %v75 = vld [vmem:[#allocation2 + $0x38] sm:$0xff]
    %v76 = vld [vmem:[#allocation2 + $0x40] sm:$0xff]
    %v77 = vld [vmem:[#allocation2 + $0x48] sm:$0xff]
    %v78 = vld [vmem:[#allocation2 + $0x50] sm:$0xff]
    %v79 = vld [vmem:[#allocation2 + $0x58] sm:$0xff]
    %v80 = vld [vmem:[#allocation2 + $0x60] sm:$0xff]
    %v81 = vld [vmem:[#allocation2 + $0x68] sm:$0xff]
    %v82 = vld [vmem:[#allocation2 + $0x70] sm:$0xff]
    %v83 = vld [vmem:[#allocation2 + $0x78] sm:$0xff]
    %v84 = vld [vmem:[#allocation2 + $0x80] sm:$0xff]
    %v85 = vld [vmem:[#allocation2 + $0x88] sm:$0xff]
    %v86 = vld [vmem:[#allocation2 + $0x90] sm:$0xff]
    %v87 = vld [vmem:[#allocation2 + $0x98] sm:$0xff]
    %v88 = vld [vmem:[#allocation2 + $0xa0] sm:$0xff]
    %v89 = vld [vmem:[#allocation2 + $0xa8] sm:$0xff]
    %v90 = vld [vmem:[#allocation2 + $0xb0] sm:$0xff]
    %v91 = vld [vmem:[#allocation2 + $0xb8] sm:$0xff]
    %v92 = vld [vmem:[#allocation2 + $0xc0] sm:$0xff]
    %v93 = vld [vmem:[#allocation2 + $0xc8] sm:$0xff]
    %v94 = vld [vmem:[#allocation2 + $0xd0] sm:$0xff]
    %v95 = vld [vmem:[#allocation2 + $0xd8] sm:$0xff]
    %v96 = vld [vmem:[#allocation2 + $0xe0] sm:$0xff]
    %v97 = vld [vmem:[#allocation2 + $0xe8] sm:$0xff]
    %v98 = vld [vmem:[#allocation2 + $0xf0] sm:$0xff]
    %v99 = vld [vmem:[#allocation2 + $0xf8] sm:$0xff]
    %v100 = vld [vmem:[#allocation2 + $0x100] sm:$0xff]
    %v101 = vld [vmem:[#allocation2 + $0x108] sm:$0xff]
    %v102 = vld [vmem:[#allocation2 + $0x110] sm:$0xff]
    %v103 = vld [vmem:[#allocation2 + $0x118] sm:$0xff]
    %v104 = vld [vmem:[#allocation2 + $0x120] sm:$0xff]
    %v105 = vld [vmem:[#allocation2 + $0x128] sm:$0xff]
    %v106 = vld [vmem:[#allocation2 + $0x130] sm:$0xff]
    %v107 = vld [vmem:[#allocation2 + $0x138] sm:$0xff]
    %v108 = vld [vmem:[#allocation2 + $0x140] sm:$0xff]
    %v109 = vld [vmem:[#allocation2 + $0x148] sm:$0xff]
    %v110 = vld [vmem:[#allocation2 + $0x150] sm:$0xff]
    %v111 = vld [vmem:[#allocation2 + $0x158] sm:$0xff]
    %v112 = vld [vmem:[#allocation2 + $0x160] sm:$0xff]
    %v113 = vld [vmem:[#allocation2 + $0x168] sm:$0xff]
    %v114 = vld [vmem:[#allocation2 + $0x170] sm:$0xff]
    %v115 = vld [vmem:[#allocation2 + $0x178] sm:$0xff]
    %v116 = vld [vmem:[#allocation2 + $0x180] sm:$0xff]
    %v117 = vld [vmem:[#allocation2 + $0x188] sm:$0xff]
    %v118 = vld [vmem:[#allocation2 + $0x190] sm:$0xff]
    %v119 = vld [vmem:[#allocation2 + $0x198] sm:$0xff]
    %v120 = vld [vmem:[#allocation2 + $0x1a0] sm:$0xff]
    %v121 = vld [vmem:[#allocation2 + $0x1a8] sm:$0xff]
    %v122 = vld [vmem:[#allocation2 + $0x1b0] sm:$0xff]
    %v123 = vld [vmem:[#allocation2 + $0x1b8] sm:$0xff]
    %v124 = vld [vmem:[#allocation2 + $0x1c0] sm:$0xff]
    %v125 = vld [vmem:[#allocation2 + $0x1c8] sm:$0xff]
    %v126 = vld [vmem:[#allocation2 + $0x1d0] sm:$0xff]
    %v127 = vld [vmem:[#allocation2 + $0x1d8] sm:$0xff]
    %v128 = vld [vmem:[#allocation2 + $0x1e0] sm:$0xff]
    %v129 = vld [vmem:[#allocation2 + $0x1e8] sm:$0xff]
    %v130 = vld [vmem:[#allocation2 + $0x1f0] sm:$0xff]
    %v131 = vld [vmem:[#allocation2 + $0x1f8] sm:$0xff]
    %v132 = vlaneseq
    %v133 = vshrl.u32 %v132, 7
    %v134 = vadd.s32 %v133, 8
    %v135 = vld [vmem:[%s1] sm:$0x1]
    %v136 = vld [vmem:[%s2] sm:$0x1]
    %v137 = vadd.f32 %v68, %v69
    %v138 = vadd.f32 %v137, %v70
    %v139 = vadd.f32 %v138, %v71
    %v140 = vadd.f32 %v139, %v72
    %v141 = vadd.f32 %v140, %v73
    %v142 = vadd.f32 %v141, %v74
    %v143 = vadd.f32 %v142, %v75
    %v144 = vadd.f32 %v143, %v76
    %v145 = vadd.f32 %v144, %v77
    %v146 = vadd.f32 %v145, %v78
    %v147 = vadd.f32 %v146, %v79
    %v148 = vadd.f32 %v147, %v80
    %v149 = vadd.f32 %v148, %v81
    %v150 = vadd.f32 %v149, %v82
    %v151 = vadd.f32 %v150, %v83
    %v152 = vadd.f32 %v151, %v84
    %v153 = vadd.f32 %v152, %v85
    %v154 = vadd.f32 %v153, %v86
    %v155 = vadd.f32 %v154, %v87
    %v156 = vadd.f32 %v155, %v88
    %v157 = vadd.f32 %v156, %v89
    %v158 = vadd.f32 %v157, %v90
    %v159 = vadd.f32 %v158, %v91
    %v160 = vadd.f32 %v159, %v92
    %v161 = vadd.f32 %v160, %v93
    %v162 = vadd.f32 %v161, %v94
    %v163 = vadd.f32 %v162, %v95
    %v164 = vadd.f32 %v163, %v96
    %v165 = vadd.f32 %v164, %v97
    %v166 = vadd.f32 %v165, %v98
    %v167 = vadd.f32 %v166, %v99
    %v168 = vadd.f32 %v167, %v100
    %v169 = vadd.f32 %v168, %v101
    %v170 = vadd.f32 %v169, %v102
    %v171 = vadd.f32 %v170, %v103
    %v172 = vadd.f32 %v171, %v104
    %v173 = vadd.f32 %v172, %v105
    %v174 = vadd.f32 %v173, %v106
    %v175 = vadd.f32 %v174, %v107
    %v176 = vadd.f32 %v175, %v108
    %v177 = vadd.f32 %v176, %v109
    %v178 = vadd.f32 %v177, %v110
    %v179 = vadd.f32 %v178, %v111
    %v180 = vadd.f32 %v179, %v112
    %v181 = vadd.f32 %v180, %v113
    %v182 = vadd.f32 %v181, %v114
    %v183 = vadd.f32 %v182, %v115
    %v184 = vadd.f32 %v183, %v116
    %v185 = vadd.f32 %v184, %v117
    %v186 = vadd.f32 %v185, %v118
    %v187 = vadd.f32 %v186, %v119
    %v188 = vadd.f32 %v187, %v120
    %v189 = vadd.f32 %v188, %v121
    %v190 = vadd.f32 %v189, %v122
    %v191 = vadd.f32 %v190, %v123
    %v192 = vadd.f32 %v191, %v124
    %v193 = vadd.f32 %v192, %v125
    %v194 = vadd.f32 %v193, %v126
    %v195 = vadd.f32 %v194, %v127
    %v196 = vadd.f32 %v195, %v128
    %v197 = vadd.f32 %v196, %v129
    %v198 = vadd.f32 %v197, %v130
    %v199 = vadd.f32 %v198, %v131
    %v200 = vrot.slane %v199, 4
    %v201 = vadd.f32 %v199, %v200
    %v202 = vrot.slane %v201, 2
    %v203 = vadd.f32 %v201, %v202
    %v204 = vrot.slane %v203, 1
    %v205 = vadd.f32 %v203, %v204
    %v206 = vmul.f32 %v68, %v68
    %v207 = vmul.f32 %v69, %v69
    %v208 = vmul.f32 %v70, %v70
    %v209 = vmul.f32 %v71, %v71
    %v210 = vmul.f32 %v72, %v72
    %v211 = vmul.f32 %v73, %v73
    %v212 = vmul.f32 %v74, %v74
    %v213 = vmul.f32 %v75, %v75
    %v214 = vmul.f32 %v76, %v76
    %v215 = vmul.f32 %v77, %v77
    %v216 = vmul.f32 %v78, %v78
    %v217 = vmul.f32 %v79, %v79
    %v218 = vmul.f32 %v80, %v80
    %v219 = vmul.f32 %v81, %v81
    %v220 = vmul.f32 %v82, %v82
    %v221 = vmul.f32 %v83, %v83
    %v222 = vmul.f32 %v84, %v84
    %v223 = vmul.f32 %v85, %v85
    %v224 = vmul.f32 %v86, %v86
    %v225 = vmul.f32 %v87, %v87
    %v226 = vmul.f32 %v88, %v88
    %v227 = vmul.f32 %v89, %v89
    %v228 = vmul.f32 %v90, %v90
    %v229 = vmul.f32 %v91, %v91
    %v230 = vmul.f32 %v92, %v92
    %v231 = vmul.f32 %v93, %v93
    %v232 = vmul.f32 %v94, %v94
    %v233 = vmul.f32 %v95, %v95
    %v234 = vmul.f32 %v96, %v96
    %v235 = vmul.f32 %v97, %v97
    %v236 = vmul.f32 %v98, %v98
    %v237 = vmul.f32 %v99, %v99
    %v238 = vmul.f32 %v100, %v100
    %v239 = vmul.f32 %v101, %v101
    %v240 = vmul.f32 %v102, %v102
    %v241 = vmul.f32 %v103, %v103
    %v242 = vmul.f32 %v104, %v104
    %v243 = vmul.f32 %v105, %v105
    %v244 = vmul.f32 %v106, %v106
    %v245 = vmul.f32 %v107, %v107
    %v246 = vmul.f32 %v108, %v108
    %v247 = vmul.f32 %v109, %v109
    %v248 = vmul.f32 %v110, %v110
    %v249 = vmul.f32 %v111, %v111
    %v250 = vmul.f32 %v112, %v112
    %v251 = vmul.f32 %v113, %v113
    %v252 = vmul.f32 %v114, %v114
    %v253 = vmul.f32 %v115, %v115
    %v254 = vmul.f32 %v116, %v116
    %v255 = vmul.f32 %v117, %v117
    %v256 = vmul.f32 %v118, %v118
    %v257 = vmul.f32 %v119, %v119
    %v258 = vmul.f32 %v120, %v120
    %v259 = vmul.f32 %v121, %v121
    %v260 = vmul.f32 %v122, %v122
    %v261 = vmul.f32 %v123, %v123
    %v262 = vmul.f32 %v124, %v124
    %v263 = vmul.f32 %v125, %v125
    %v264 = vmul.f32 %v126, %v126
    %v265 = vmul.f32 %v127, %v127
    %v266 = vmul.f32 %v128, %v128
    %v267 = vmul.f32 %v129, %v129
    %v268 = vmul.f32 %v130, %v130
    %v269 = vmul.f32 %v131, %v131
    %v270 = vadd.f32 %v206, %v207
    %v271 = vadd.f32 %v270, %v208
    %v272 = vadd.f32 %v271, %v209
    %v273 = vadd.f32 %v272, %v210
    %v274 = vadd.f32 %v273, %v211
    %v275 = vadd.f32 %v274, %v212
    %v276 = vadd.f32 %v275, %v213
    %v277 = vadd.f32 %v276, %v214
    %v278 = vadd.f32 %v277, %v215
    %v279 = vadd.f32 %v278, %v216
    %v280 = vadd.f32 %v279, %v217
    %v281 = vadd.f32 %v280, %v218
    %v282 = vadd.f32 %v281, %v219
    %v283 = vadd.f32 %v282, %v220
    %v284 = vadd.f32 %v283, %v221
    %v285 = vadd.f32 %v284, %v222
    %v286 = vadd.f32 %v285, %v223
    %v287 = vadd.f32 %v286, %v224
    %v288 = vadd.f32 %v287, %v225
    %v289 = vadd.f32 %v288, %v226
    %v290 = vadd.f32 %v289, %v227
    %v291 = vadd.f32 %v290, %v228
    %v292 = vadd.f32 %v291, %v229
    %v293 = vadd.f32 %v292, %v230
    %v294 = vadd.f32 %v293, %v231
    %v295 = vadd.f32 %v294, %v232
    %v296 = vadd.f32 %v295, %v233
    %v297 = vadd.f32 %v296, %v234
    %v298 = vadd.f32 %v297, %v235
    %v299 = vadd.f32 %v298, %v236
    %v300 = vadd.f32 %v299, %v237
    %v301 = vadd.f32 %v300, %v238
    %v302 = vadd.f32 %v301, %v239
    %v303 = vadd.f32 %v302, %v240
    %v304 = vadd.f32 %v303, %v241
    %v305 = vadd.f32 %v304, %v242
    %v306 = vadd.f32 %v305, %v243
    %v307 = vadd.f32 %v306, %v244
    %v308 = vadd.f32 %v307, %v245
    %v309 = vadd.f32 %v308, %v246
    %v310 = vadd.f32 %v309, %v247
    %v311 = vadd.f32 %v310, %v248
    %v312 = vadd.f32 %v311, %v249
    %v313 = vadd.f32 %v312, %v250
    %v314 = vadd.f32 %v313, %v251
    %v315 = vadd.f32 %v314, %v252
    %v316 = vadd.f32 %v315, %v253
    %v317 = vadd.f32 %v316, %v254
    %v318 = vadd.f32 %v317, %v255
    %v319 = vadd.f32 %v318, %v256
    %v320 = vadd.f32 %v319, %v257
    %v321 = vadd.f32 %v320, %v258
    %v322 = vadd.f32 %v321, %v259
    %v323 = vadd.f32 %v322, %v260
    %v324 = vadd.f32 %v323, %v261
    %v325 = vadd.f32 %v324, %v262
    %v326 = vadd.f32 %v325, %v263
    %v327 = vadd.f32 %v326, %v264
    %v328 = vadd.f32 %v327, %v265
    %v329 = vadd.f32 %v328, %v266
    %v330 = vadd.f32 %v329, %v267
    %v331 = vadd.f32 %v330, %v268
    %v332 = vadd.f32 %v331, %v269
    %v333 = vrot.slane %v332, 4
    %v334 = vadd.f32 %v332, %v333
    %v335 = vrot.slane %v334, 2
    %v336 = vadd.f32 %v334, %v335
    %v337 = vrot.slane %v336, 1
    %v338 = vadd.f32 %v336, %v337
    %v339 = vmul.f32 %v205, 0.001953125
    %v340 = vmul.f32 %v338, 0.001953125
    %v341 = vmul.f32 %v339, %v339
    %v342 = vsub.f32 %v340, %v341
    %v343 = vmax.f32 %v342, 0.0
    %v344 = vsub.f32 %v68, %v339
    %v345 = vsub.f32 %v69, %v339
    %v346 = vsub.f32 %v70, %v339
    %v347 = vsub.f32 %v71, %v339
    %v348 = vsub.f32 %v72, %v339
    %v349 = vsub.f32 %v73, %v339
    %v350 = vsub.f32 %v74, %v339
    %v351 = vsub.f32 %v75, %v339
    %v352 = vsub.f32 %v76, %v339
    %v353 = vsub.f32 %v77, %v339
    %v354 = vsub.f32 %v78, %v339
    %v355 = vsub.f32 %v79, %v339
    %v356 = vsub.f32 %v80, %v339
    %v357 = vsub.f32 %v81, %v339
    %v358 = vsub.f32 %v82, %v339
    %v359 = vsub.f32 %v83, %v339
    %v360 = vsub.f32 %v84, %v339
    %v361 = vsub.f32 %v85, %v339
    %v362 = vsub.f32 %v86, %v339
    %v363 = vsub.f32 %v87, %v339
    %v364 = vsub.f32 %v88, %v339
    %v365 = vsub.f32 %v89, %v339
    %v366 = vsub.f32 %v90, %v339
    %v367 = vsub.f32 %v91, %v339
    %v368 = vsub.f32 %v92, %v339
    %v369 = vsub.f32 %v93, %v339
    %v370 = vsub.f32 %v94, %v339
    %v371 = vsub.f32 %v95, %v339
    %v372 = vsub.f32 %v96, %v339
    %v373 = vsub.f32 %v97, %v339
    %v374 = vsub.f32 %v98, %v339
    %v375 = vsub.f32 %v99, %v339
    %v376 = vsub.f32 %v100, %v339
    %v377 = vsub.f32 %v101, %v339
    %v378 = vsub.f32 %v102, %v339
    %v379 = vsub.f32 %v103, %v339
    %v380 = vsub.f32 %v104, %v339
    %v381 = vsub.f32 %v105, %v339
    %v382 = vsub.f32 %v106, %v339
    %v383 = vsub.f32 %v107, %v339
    %v384 = vsub.f32 %v108, %v339
    %v385 = vsub.f32 %v109, %v339
    %v386 = vsub.f32 %v110, %v339
    %v387 = vsub.f32 %v111, %v339
    %v388 = vsub.f32 %v112, %v339
    %v389 = vsub.f32 %v113, %v339
    %v390 = vsub.f32 %v114, %v339
    %v391 = vsub.f32 %v115, %v339
    %v392 = vsub.f32 %v116, %v339
    %v393 = vsub.f32 %v117, %v339
    %v394 = vsub.f32 %v118, %v339
    %v395 = vsub.f32 %v119, %v339
    %v396 = vsub.f32 %v120, %v339
    %v397 = vsub.f32 %v121, %v339
    %v398 = vsub.f32 %v122, %v339
    %v399 = vsub.f32 %v123, %v339
    %v400 = vsub.f32 %v124, %v339
    %v401 = vsub.f32 %v125, %v339
    %v402 = vsub.f32 %v126, %v339
    %v403 = vsub.f32 %v127, %v339
    %v404 = vsub.f32 %v128, %v339
    %v405 = vsub.f32 %v129, %v339
    %v406 = vsub.f32 %v130, %v339
    %v407 = vsub.f32 %v131, %v339
    %v408 = vadd.f32 %v343, 1e-05
    %v409 = vrsqrt.pop %v408
    %v410 = vmul.f32 %v344, %v409
    %v411 = vmul.f32 %v345, %v409
    %v412 = vmul.f32 %v346, %v409
    %v413 = vmul.f32 %v347, %v409
    %v414 = vmul.f32 %v348, %v409
    %v415 = vmul.f32 %v349, %v409
    %v416 = vmul.f32 %v350, %v409
    %v417 = vmul.f32 %v351, %v409
    %v418 = vmul.f32 %v352, %v409
    %v419 = vmul.f32 %v353, %v409
    %v420 = vmul.f32 %v354, %v409
    %v421 = vmul.f32 %v355, %v409
    %v422 = vmul.f32 %v356, %v409
    %v423 = vmul.f32 %v357, %v409
    %v424 = vmul.f32 %v358, %v409
    %v425 = vmul.f32 %v359, %v409
    %v426 = vmul.f32 %v360, %v409
    %v427 = vmul.f32 %v361, %v409
    %v428 = vmul.f32 %v362, %v409
    %v429 = vmul.f32 %v363, %v409
    %v430 = vmul.f32 %v364, %v409
    %v431 = vmul.f32 %v365, %v409
    %v432 = vmul.f32 %v366, %v409
    %v433 = vmul.f32 %v367, %v409
    %v434 = vmul.f32 %v368, %v409
    %v435 = vmul.f32 %v369, %v409
    %v436 = vmul.f32 %v370, %v409
    %v437 = vmul.f32 %v371, %v409
    %v438 = vmul.f32 %v372, %v409
    %v439 = vmul.f32 %v373, %v409
    %v440 = vmul.f32 %v374, %v409
    %v441 = vmul.f32 %v375, %v409
    %v442 = vmul.f32 %v376, %v409
    %v443 = vmul.f32 %v377, %v409
    %v444 = vmul.f32 %v378, %v409
    %v445 = vmul.f32 %v379, %v409
    %v446 = vmul.f32 %v380, %v409
    %v447 = vmul.f32 %v381, %v409
    %v448 = vmul.f32 %v382, %v409
    %v449 = vmul.f32 %v383, %v409
    %v450 = vmul.f32 %v384, %v409
    %v451 = vmul.f32 %v385, %v409
    %v452 = vmul.f32 %v386, %v409
    %v453 = vmul.f32 %v387, %v409
    %v454 = vmul.f32 %v388, %v409
    %v455 = vmul.f32 %v389, %v409
    %v456 = vmul.f32 %v390, %v409
    %v457 = vmul.f32 %v391, %v409
    %v458 = vmul.f32 %v392, %v409
    %v459 = vmul.f32 %v393, %v409
    %v460 = vmul.f32 %v394, %v409
    %v461 = vmul.f32 %v395, %v409
    %v462 = vmul.f32 %v396, %v409
    %v463 = vmul.f32 %v397, %v409
    %v464 = vmul.f32 %v398, %v409
    %v465 = vmul.f32 %v399, %v409
    %v466 = vmul.f32 %v400, %v409
    %v467 = vmul.f32 %v401, %v409
    %v468 = vmul.f32 %v402, %v409
    %v469 = vmul.f32 %v403, %v409
    %v470 = vmul.f32 %v404, %v409
    %v471 = vmul.f32 %v405, %v409
    %v472 = vmul.f32 %v406, %v409
    %v473 = vmul.f32 %v407, %v409
    %v475 = vlaneseq
    %v476 = vshrl.u32 %v475, 7
    %v477 = vsub.s32 0, %v476
    %v478 = vrot.slane %v135, %v477
    %v480 = vmul.f32 %v410, %v478
    %v481 = vmul.f32 %v411, %v478
    %v482 = vmul.f32 %v412, %v478
    %v483 = vmul.f32 %v413, %v478
    %v484 = vmul.f32 %v414, %v478
    %v485 = vmul.f32 %v415, %v478
    %v486 = vmul.f32 %v416, %v478
    %v487 = vmul.f32 %v417, %v478
    %v488 = vmul.f32 %v418, %v478
    %v489 = vmul.f32 %v419, %v478
    %v490 = vmul.f32 %v420, %v478
    %v491 = vmul.f32 %v421, %v478
    %v492 = vmul.f32 %v422, %v478
    %v493 = vmul.f32 %v423, %v478
    %v494 = vmul.f32 %v424, %v478
    %v495 = vmul.f32 %v425, %v478
    %v496 = vmul.f32 %v426, %v478
    %v497 = vmul.f32 %v427, %v478
    %v498 = vmul.f32 %v428, %v478
    %v499 = vmul.f32 %v429, %v478
    %v500 = vmul.f32 %v430, %v478
    %v501 = vmul.f32 %v431, %v478
    %v502 = vmul.f32 %v432, %v478
    %v503 = vmul.f32 %v433, %v478
    %v504 = vmul.f32 %v434, %v478
    %v505 = vmul.f32 %v435, %v478
    %v506 = vmul.f32 %v436, %v478
    %v507 = vmul.f32 %v437, %v478
    %v508 = vmul.f32 %v438, %v478
    %v509 = vmul.f32 %v439, %v478
    %v510 = vmul.f32 %v440, %v478
    %v511 = vmul.f32 %v441, %v478
    %v512 = vmul.f32 %v442, %v478
    %v513 = vmul.f32 %v443, %v478
    %v514 = vmul.f32 %v444, %v478
    %v515 = vmul.f32 %v445, %v478
    %v516 = vmul.f32 %v446, %v478
    %v517 = vmul.f32 %v447, %v478
    %v518 = vmul.f32 %v448, %v478
    %v519 = vmul.f32 %v449, %v478
    %v520 = vmul.f32 %v450, %v478
    %v521 = vmul.f32 %v451, %v478
    %v522 = vmul.f32 %v452, %v478
    %v523 = vmul.f32 %v453, %v478
    %v524 = vmul.f32 %v454, %v478
    %v525 = vmul.f32 %v455, %v478
    %v526 = vmul.f32 %v456, %v478
    %v527 = vmul.f32 %v457, %v478
    %v528 = vmul.f32 %v458, %v478
    %v529 = vmul.f32 %v459, %v478
    %v530 = vmul.f32 %v460, %v478
    %v531 = vmul.f32 %v461, %v478
    %v532 = vmul.f32 %v462, %v478
    %v533 = vmul.f32 %v463, %v478
    %v534 = vmul.f32 %v464, %v478
    %v535 = vmul.f32 %v465, %v478
    %v536 = vmul.f32 %v466, %v478
    %v537 = vmul.f32 %v467, %v478
    %v538 = vmul.f32 %v468, %v478
    %v539 = vmul.f32 %v469, %v478
    %v540 = vmul.f32 %v470, %v478
    %v541 = vmul.f32 %v471, %v478
    %v542 = vmul.f32 %v472, %v478
    %v543 = vmul.f32 %v473, %v478
    %v545 = vlaneseq
    %v546 = vshrl.u32 %v545, 7
    %v547 = vsub.s32 0, %v546
    %v548 = vrot.slane %v136, %v547
    %v550 = vadd.f32 %v480, %v548
    %v551 = vadd.f32 %v481, %v548
    %v552 = vadd.f32 %v482, %v548
    %v553 = vadd.f32 %v483, %v548
    %v554 = vadd.f32 %v484, %v548
    %v555 = vadd.f32 %v485, %v548
    %v556 = vadd.f32 %v486, %v548
    %v557 = vadd.f32 %v487, %v548
    %v558 = vadd.f32 %v488, %v548
    %v559 = vadd.f32 %v489, %v548
    %v560 = vadd.f32 %v490, %v548
    %v561 = vadd.f32 %v491, %v548
    %v562 = vadd.f32 %v492, %v548
    %v563 = vadd.f32 %v493, %v548
    %v564 = vadd.f32 %v494, %v548
    %v565 = vadd.f32 %v495, %v548
    %v566 = vadd.f32 %v496, %v548
    %v567 = vadd.f32 %v497, %v548
    %v568 = vadd.f32 %v498, %v548
    %v569 = vadd.f32 %v499, %v548
    %v570 = vadd.f32 %v500, %v548
    %v571 = vadd.f32 %v501, %v548
    %v572 = vadd.f32 %v502, %v548
    %v573 = vadd.f32 %v503, %v548
    %v574 = vadd.f32 %v504, %v548
    %v575 = vadd.f32 %v505, %v548
    %v576 = vadd.f32 %v506, %v548
    %v577 = vadd.f32 %v507, %v548
    %v578 = vadd.f32 %v508, %v548
    %v579 = vadd.f32 %v509, %v548
    %v580 = vadd.f32 %v510, %v548
    %v581 = vadd.f32 %v511, %v548
    %v582 = vadd.f32 %v512, %v548
    %v583 = vadd.f32 %v513, %v548
    %v584 = vadd.f32 %v514, %v548
    %v585 = vadd.f32 %v515, %v548
    %v586 = vadd.f32 %v516, %v548
    %v587 = vadd.f32 %v517, %v548
    %v588 = vadd.f32 %v518, %v548
    %v589 = vadd.f32 %v519, %v548
    %v590 = vadd.f32 %v520, %v548
    %v591 = vadd.f32 %v521, %v548
    %v592 = vadd.f32 %v522, %v548
    %v593 = vadd.f32 %v523, %v548
    %v594 = vadd.f32 %v524, %v548
    %v595 = vadd.f32 %v525, %v548
    %v596 = vadd.f32 %v526, %v548
    %v597 = vadd.f32 %v527, %v548
    %v598 = vadd.f32 %v528, %v548
    %v599 = vadd.f32 %v529, %v548
    %v600 = vadd.f32 %v530, %v548
    %v601 = vadd.f32 %v531, %v548
    %v602 = vadd.f32 %v532, %v548
    %v603 = vadd.f32 %v533, %v548
    %v604 = vadd.f32 %v534, %v548
    %v605 = vadd.f32 %v535, %v548
    %v606 = vadd.f32 %v536, %v548
    %v607 = vadd.f32 %v537, %v548
    %v608 = vadd.f32 %v538, %v548
    %v609 = vadd.f32 %v539, %v548
    %v610 = vadd.f32 %v540, %v548
    %v611 = vadd.f32 %v541, %v548
    %v612 = vadd.f32 %v542, %v548
    %v613 = vadd.f32 %v543, %v548
    %v614 = vmax.f32 %v550, 0.0
    %v615 = vmax.f32 %v551, 0.0
    %v616 = vmax.f32 %v552, 0.0
    %v617 = vmax.f32 %v553, 0.0
    %v618 = vmax.f32 %v554, 0.0
    %v619 = vmax.f32 %v555, 0.0
    %v620 = vmax.f32 %v556, 0.0
    %v621 = vmax.f32 %v557, 0.0
    %v622 = vmax.f32 %v558, 0.0
    %v623 = vmax.f32 %v559, 0.0
    %v624 = vmax.f32 %v560, 0.0
    %v625 = vmax.f32 %v561, 0.0
    %v626 = vmax.f32 %v562, 0.0
    %v627 = vmax.f32 %v563, 0.0
    %v628 = vmax.f32 %v564, 0.0
    %v629 = vmax.f32 %v565, 0.0
    %v630 = vmax.f32 %v566, 0.0
    %v631 = vmax.f32 %v567, 0.0
    %v632 = vmax.f32 %v568, 0.0
    %v633 = vmax.f32 %v569, 0.0
    %v634 = vmax.f32 %v570, 0.0
    %v635 = vmax.f32 %v571, 0.0
    %v636 = vmax.f32 %v572, 0.0
    %v637 = vmax.f32 %v573, 0.0
    %v638 = vmax.f32 %v574, 0.0
    %v639 = vmax.f32 %v575, 0.0
    %v640 = vmax.f32 %v576, 0.0
    %v641 = vmax.f32 %v577, 0.0
    %v642 = vmax.f32 %v578, 0.0
    %v643 = vmax.f32 %v579, 0.0
    %v644 = vmax.f32 %v580, 0.0
    %v645 = vmax.f32 %v581, 0.0
    %v646 = vmax.f32 %v582, 0.0
    %v647 = vmax.f32 %v583, 0.0
    %v648 = vmax.f32 %v584, 0.0
    %v649 = vmax.f32 %v585, 0.0
    %v650 = vmax.f32 %v586, 0.0
    %v651 = vmax.f32 %v587, 0.0
    %v652 = vmax.f32 %v588, 0.0
    %v653 = vmax.f32 %v589, 0.0
    %v654 = vmax.f32 %v590, 0.0
    %v655 = vmax.f32 %v591, 0.0
    %v656 = vmax.f32 %v592, 0.0
    %v657 = vmax.f32 %v593, 0.0
    %v658 = vmax.f32 %v594, 0.0
    %v659 = vmax.f32 %v595, 0.0
    %v660 = vmax.f32 %v596, 0.0
    %v661 = vmax.f32 %v597, 0.0
    %v662 = vmax.f32 %v598, 0.0
    %v663 = vmax.f32 %v599, 0.0
    %v664 = vmax.f32 %v600, 0.0
    %v665 = vmax.f32 %v601, 0.0
    %v666 = vmax.f32 %v602, 0.0
    %v667 = vmax.f32 %v603, 0.0
    %v668 = vmax.f32 %v604, 0.0
    %v669 = vmax.f32 %v605, 0.0
    %v670 = vmax.f32 %v606, 0.0
    %v671 = vmax.f32 %v607, 0.0
    %v672 = vmax.f32 %v608, 0.0
    %v673 = vmax.f32 %v609, 0.0
    %v674 = vmax.f32 %v610, 0.0
    %v675 = vmax.f32 %v611, 0.0
    %v676 = vmax.f32 %v612, 0.0
    %v677 = vmax.f32 %v613, 0.0
    %v678 = vld [vmem:[#allocation5] sm:$0xff]
    %v679 = vld [vmem:[#allocation5 + $0x8] sm:$0xff]
    %v680 = vld [vmem:[#allocation5 + $0x10] sm:$0xff]
    %v681 = vld [vmem:[#allocation5 + $0x18] sm:$0xff]
    %v682 = vld [vmem:[#allocation5 + $0x20] sm:$0xff]
    %v683 = vld [vmem:[#allocation5 + $0x28] sm:$0xff]
    %v684 = vld [vmem:[#allocation5 + $0x30] sm:$0xff]
    %v685 = vld [vmem:[#allocation5 + $0x38] sm:$0xff]
    %v686 = vld [vmem:[#allocation5 + $0x40] sm:$0xff]
    %v687 = vld [vmem:[#allocation5 + $0x48] sm:$0xff]
    %v688 = vld [vmem:[#allocation5 + $0x50] sm:$0xff]
    %v689 = vld [vmem:[#allocation5 + $0x58] sm:$0xff]
    %v690 = vld [vmem:[#allocation5 + $0x60] sm:$0xff]
    %v691 = vld [vmem:[#allocation5 + $0x68] sm:$0xff]
    %v692 = vld [vmem:[#allocation5 + $0x70] sm:$0xff]
    %v693 = vld [vmem:[#allocation5 + $0x78] sm:$0xff]
    %v694 = vld [vmem:[#allocation5 + $0x80] sm:$0xff]
    %v695 = vld [vmem:[#allocation5 + $0x88] sm:$0xff]
    %v696 = vld [vmem:[#allocation5 + $0x90] sm:$0xff]
    %v697 = vld [vmem:[#allocation5 + $0x98] sm:$0xff]
    %v698 = vld [vmem:[#allocation5 + $0xa0] sm:$0xff]
    %v699 = vld [vmem:[#allocation5 + $0xa8] sm:$0xff]
    %v700 = vld [vmem:[#allocation5 + $0xb0] sm:$0xff]
    %v701 = vld [vmem:[#allocation5 + $0xb8] sm:$0xff]
    %v702 = vld [vmem:[#allocation5 + $0xc0] sm:$0xff]
    %v703 = vld [vmem:[#allocation5 + $0xc8] sm:$0xff]
    %v704 = vld [vmem:[#allocation5 + $0xd0] sm:$0xff]
    %v705 = vld [vmem:[#allocation5 + $0xd8] sm:$0xff]
    %v706 = vld [vmem:[#allocation5 + $0xe0] sm:$0xff]
    %v707 = vld [vmem:[#allocation5 + $0xe8] sm:$0xff]
    %v708 = vld [vmem:[#allocation5 + $0xf0] sm:$0xff]
    %v709 = vld [vmem:[#allocation5 + $0xf8] sm:$0xff]
    %v710 = vld [vmem:[#allocation5 + $0x100] sm:$0xff]
    %v711 = vld [vmem:[#allocation5 + $0x108] sm:$0xff]
    %v712 = vld [vmem:[#allocation5 + $0x110] sm:$0xff]
    %v713 = vld [vmem:[#allocation5 + $0x118] sm:$0xff]
    %v714 = vld [vmem:[#allocation5 + $0x120] sm:$0xff]
    %v715 = vld [vmem:[#allocation5 + $0x128] sm:$0xff]
    %v716 = vld [vmem:[#allocation5 + $0x130] sm:$0xff]
    %v717 = vld [vmem:[#allocation5 + $0x138] sm:$0xff]
    %v718 = vld [vmem:[#allocation5 + $0x140] sm:$0xff]
    %v719 = vld [vmem:[#allocation5 + $0x148] sm:$0xff]
    %v720 = vld [vmem:[#allocation5 + $0x150] sm:$0xff]
    %v721 = vld [vmem:[#allocation5 + $0x158] sm:$0xff]
    %v722 = vld [vmem:[#allocation5 + $0x160] sm:$0xff]
    %v723 = vld [vmem:[#allocation5 + $0x168] sm:$0xff]
    %v724 = vld [vmem:[#allocation5 + $0x170] sm:$0xff]
    %v725 = vld [vmem:[#allocation5 + $0x178] sm:$0xff]
    %v726 = vld [vmem:[#allocation5 + $0x180] sm:$0xff]
    %v727 = vld [vmem:[#allocation5 + $0x188] sm:$0xff]
    %v728 = vld [vmem:[#allocation5 + $0x190] sm:$0xff]
    %v729 = vld [vmem:[#allocation5 + $0x198] sm:$0xff]
    %v730 = vld [vmem:[#allocation5 + $0x1a0] sm:$0xff]
    %v731 = vld [vmem:[#allocation5 + $0x1a8] sm:$0xff]
    %v732 = vld [vmem:[#allocation5 + $0x1b0] sm:$0xff]
    %v733 = vld [vmem:[#allocation5 + $0x1b8] sm:$0xff]
    %v734 = vld [vmem:[#allocation5 + $0x1c0] sm:$0xff]
    %v735 = vld [vmem:[#allocation5 + $0x1c8] sm:$0xff]
    %v736 = vld [vmem:[#allocation5 + $0x1d0] sm:$0xff]
    %v737 = vld [vmem:[#allocation5 + $0x1d8] sm:$0xff]
    %v738 = vld [vmem:[#allocation5 + $0x1e0] sm:$0xff]
    %v739 = vld [vmem:[#allocation5 + $0x1e8] sm:$0xff]
    %v740 = vld [vmem:[#allocation5 + $0x1f0] sm:$0xff]
    %v741 = vld [vmem:[#allocation5 + $0x1f8] sm:$0xff]
    %v742 = vld [vmem:[#allocation5 + $0x200] sm:$0xff]
    %v743 = vld [vmem:[#allocation5 + $0x208] sm:$0xff]
    %v744 = vld [vmem:[#allocation5 + $0x210] sm:$0xff]
    %v745 = vld [vmem:[#allocation5 + $0x218] sm:$0xff]
    %v746 = vld [vmem:[#allocation5 + $0x220] sm:$0xff]
    %v747 = vld [vmem:[#allocation5 + $0x228] sm:$0xff]
    %v748 = vld [vmem:[#allocation5 + $0x230] sm:$0xff]
    %v749 = vld [vmem:[#allocation5 + $0x238] sm:$0xff]
    %v750 = vld [vmem:[#allocation5 + $0x240] sm:$0xff]
    %v751 = vld [vmem:[#allocation5 + $0x248] sm:$0xff]
    %v752 = vld [vmem:[#allocation5 + $0x250] sm:$0xff]
    %v753 = vld [vmem:[#allocation5 + $0x258] sm:$0xff]
    %v754 = vld [vmem:[#allocation5 + $0x260] sm:$0xff]
    %v755 = vld [vmem:[#allocation5 + $0x268] sm:$0xff]
    %v756 = vld [vmem:[#allocation5 + $0x270] sm:$0xff]
    %v757 = vld [vmem:[#allocation5 + $0x278] sm:$0xff]
    %v758 = vld [vmem:[#allocation5 + $0x280] sm:$0xff]
    %v759 = vld [vmem:[#allocation5 + $0x288] sm:$0xff]
    %v760 = vld [vmem:[#allocation5 + $0x290] sm:$0xff]
    %v761 = vld [vmem:[#allocation5 + $0x298] sm:$0xff]
    %v762 = vld [vmem:[#allocation5 + $0x2a0] sm:$0xff]
    %v763 = vld [vmem:[#allocation5 + $0x2a8] sm:$0xff]
    %v764 = vld [vmem:[#allocation5 + $0x2b0] sm:$0xff]
    %v765 = vld [vmem:[#allocation5 + $0x2b8] sm:$0xff]
    %v766 = vld [vmem:[#allocation5 + $0x2c0] sm:$0xff]
    %v767 = vld [vmem:[#allocation5 + $0x2c8] sm:$0xff]
    %v768 = vld [vmem:[#allocation5 + $0x2d0] sm:$0xff]
    %v769 = vld [vmem:[#allocation5 + $0x2d8] sm:$0xff]
    %v770 = vld [vmem:[#allocation5 + $0x2e0] sm:$0xff]
    %v771 = vld [vmem:[#allocation5 + $0x2e8] sm:$0xff]
    %v772 = vld [vmem:[#allocation5 + $0x2f0] sm:$0xff]
    %v773 = vld [vmem:[#allocation5 + $0x2f8] sm:$0xff]
    %v774 = vld [vmem:[#allocation5 + $0x300] sm:$0xff]
    %v775 = vld [vmem:[#allocation5 + $0x308] sm:$0xff]
    %v776 = vld [vmem:[#allocation5 + $0x310] sm:$0xff]
    %v777 = vld [vmem:[#allocation5 + $0x318] sm:$0xff]
    %v778 = vld [vmem:[#allocation5 + $0x320] sm:$0xff]
    %v779 = vld [vmem:[#allocation5 + $0x328] sm:$0xff]
    %v780 = vld [vmem:[#allocation5 + $0x330] sm:$0xff]
    %v781 = vld [vmem:[#allocation5 + $0x338] sm:$0xff]
    %v782 = vld [vmem:[#allocation5 + $0x340] sm:$0xff]
    %v783 = vld [vmem:[#allocation5 + $0x348] sm:$0xff]
    %v784 = vld [vmem:[#allocation5 + $0x350] sm:$0xff]
    %v785 = vld [vmem:[#allocation5 + $0x358] sm:$0xff]
    %v786 = vld [vmem:[#allocation5 + $0x360] sm:$0xff]
    %v787 = vld [vmem:[#allocation5 + $0x368] sm:$0xff]
    %v788 = vld [vmem:[#allocation5 + $0x370] sm:$0xff]
    %v789 = vld [vmem:[#allocation5 + $0x378] sm:$0xff]
    %v790 = vld [vmem:[#allocation5 + $0x380] sm:$0xff]
    %v791 = vld [vmem:[#allocation5 + $0x388] sm:$0xff]
    %v792 = vld [vmem:[#allocation5 + $0x390] sm:$0xff]
    %v793 = vld [vmem:[#allocation5 + $0x398] sm:$0xff]
    %v794 = vld [vmem:[#allocation5 + $0x3a0] sm:$0xff]
    %v795 = vld [vmem:[#allocation5 + $0x3a8] sm:$0xff]
    %v796 = vld [vmem:[#allocation5 + $0x3b0] sm:$0xff]
    %v797 = vld [vmem:[#allocation5 + $0x3b8] sm:$0xff]
    %v798 = vld [vmem:[#allocation5 + $0x3c0] sm:$0xff]
    %v799 = vld [vmem:[#allocation5 + $0x3c8] sm:$0xff]
    %v800 = vld [vmem:[#allocation5 + $0x3d0] sm:$0xff]
    %v801 = vld [vmem:[#allocation5 + $0x3d8] sm:$0xff]
    %v802 = vld [vmem:[#allocation5 + $0x3e0] sm:$0xff]
    %v803 = vld [vmem:[#allocation5 + $0x3e8] sm:$0xff]
    %v804 = vld [vmem:[#allocation5 + $0x3f0] sm:$0xff]
    %v805 = vld [vmem:[#allocation5 + $0x3f8] sm:$0xff]
    %v806 = vld [vmem:[#allocation5 + $0x400] sm:$0xff]
    %v807 = vld [vmem:[#allocation5 + $0x408] sm:$0xff]
    %v808 = vld [vmem:[#allocation5 + $0x410] sm:$0xff]
    %v809 = vld [vmem:[#allocation5 + $0x418] sm:$0xff]
    %v810 = vld [vmem:[#allocation5 + $0x420] sm:$0xff]
    %v811 = vld [vmem:[#allocation5 + $0x428] sm:$0xff]
    %v812 = vld [vmem:[#allocation5 + $0x430] sm:$0xff]
    %v813 = vld [vmem:[#allocation5 + $0x438] sm:$0xff]
    %v814 = vld [vmem:[#allocation5 + $0x440] sm:$0xff]
    %v815 = vld [vmem:[#allocation5 + $0x448] sm:$0xff]
    %v816 = vld [vmem:[#allocation5 + $0x450] sm:$0xff]
    %v817 = vld [vmem:[#allocation5 + $0x458] sm:$0xff]
    %v818 = vld [vmem:[#allocation5 + $0x460] sm:$0xff]
    %v819 = vld [vmem:[#allocation5 + $0x468] sm:$0xff]
    %v820 = vld [vmem:[#allocation5 + $0x470] sm:$0xff]
    %v821 = vld [vmem:[#allocation5 + $0x478] sm:$0xff]
    %v822 = vrot.slane %v614, 7
    %v823 = vrot.slane %v615, 7
    %v824 = vrot.slane %v616, 7
    %v825 = vrot.slane %v617, 7
    %v826 = vrot.slane %v618, 7
    %v827 = vrot.slane %v619, 7
    %v828 = vrot.slane %v620, 7
    %v829 = vrot.slane %v621, 7
    %v830 = vrot.slane %v622, 7
    %v831 = vrot.slane %v623, 7
    %v832 = vrot.slane %v624, 7
    %v833 = vrot.slane %v625, 7
    %v834 = vrot.slane %v626, 7
    %v835 = vrot.slane %v627, 7
    %v836 = vrot.slane %v628, 7
    %v837 = vrot.slane %v629, 7
    %v838 = vrot.slane %v630, 7
    %v839 = vrot.slane %v631, 7
    %v840 = vrot.slane %v632, 7
    %v841 = vrot.slane %v633, 7
    %v842 = vrot.slane %v634, 7
    %v843 = vrot.slane %v635, 7
    %v844 = vrot.slane %v636, 7
    %v845 = vrot.slane %v637, 7
    %v846 = vrot.slane %v638, 7
    %v847 = vrot.slane %v639, 7
    %v848 = vrot.slane %v640, 7
    %v849 = vrot.slane %v641, 7
    %v850 = vrot.slane %v642, 7
    %v851 = vrot.slane %v643, 7
    %v852 = vrot.slane %v644, 7
    %v853 = vrot.slane %v645, 7
    %v854 = vrot.slane %v646, 7
    %v855 = vrot.slane %v647, 7
    %v856 = vrot.slane %v648, 7
    %v857 = vrot.slane %v649, 7
    %v858 = vrot.slane %v650, 7
    %v859 = vrot.slane %v651, 7
    %v860 = vrot.slane %v652, 7
    %v861 = vrot.slane %v653, 7
    %v862 = vrot.slane %v654, 7
    %v863 = vrot.slane %v655, 7
    %v864 = vrot.slane %v656, 7
    %v865 = vrot.slane %v657, 7
    %v866 = vrot.slane %v658, 7
    %v867 = vrot.slane %v659, 7
    %v868 = vrot.slane %v660, 7
    %v869 = vrot.slane %v661, 7
    %v870 = vrot.slane %v662, 7
    %v871 = vrot.slane %v663, 7
    %v872 = vrot.slane %v664, 7
    %v873 = vrot.slane %v665, 7
    %v874 = vrot.slane %v666, 7
    %v875 = vrot.slane %v667, 7
    %v876 = vrot.slane %v668, 7
    %v877 = vrot.slane %v669, 7
    %v878 = vrot.slane %v670, 7
    %v879 = vrot.slane %v671, 7
    %v880 = vrot.slane %v672, 7
    %v881 = vrot.slane %v673, 7
    %v882 = vrot.slane %v674, 7
    %v883 = vrot.slane %v675, 7
    %v884 = vrot.slane %v676, 7
    %v885 = vrot.slane %v677, 7
    %vm886 = vcmp.lt.s32.totalorder %v133, 1
    %v887 = vsel %vm886, %v884, %v885
    %v888 = vsel %vm886, %v883, %v884
    %v889 = vsel %vm886, %v882, %v883
    %v890 = vsel %vm886, %v881, %v882
    %v891 = vsel %vm886, %v880, %v881
    %v892 = vsel %vm886, %v879, %v880
    %v893 = vsel %vm886, %v878, %v879
    %v894 = vsel %vm886, %v877, %v878
    %v895 = vsel %vm886, %v876, %v877
    %v896 = vsel %vm886, %v875, %v876
    %v897 = vsel %vm886, %v874, %v875
    %v898 = vsel %vm886, %v873, %v874
    %v899 = vsel %vm886, %v872, %v873
    %v900 = vsel %vm886, %v871, %v872
    %v901 = vsel %vm886, %v870, %v871
    %v902 = vsel %vm886, %v869, %v870
    %v903 = vsel %vm886, %v868, %v869
    %v904 = vsel %vm886, %v867, %v868
    %v905 = vsel %vm886, %v866, %v867
    %v906 = vsel %vm886, %v865, %v866
    %v907 = vsel %vm886, %v864, %v865
    %v908 = vsel %vm886, %v863, %v864
    %v909 = vsel %vm886, %v862, %v863
    %v910 = vsel %vm886, %v861, %v862
    %v911 = vsel %vm886, %v860, %v861
    %v912 = vsel %vm886, %v859, %v860
    %v913 = vsel %vm886, %v858, %v859
    %v914 = vsel %vm886, %v857, %v858
    %v915 = vsel %vm886, %v856, %v857
    %v916 = vsel %vm886, %v855, %v856
    %v917 = vsel %vm886, %v854, %v855
    %v918 = vsel %vm886, %v853, %v854
    %v919 = vsel %vm886, %v852, %v853
    %v920 = vsel %vm886, %v851, %v852
    %v921 = vsel %vm886, %v850, %v851
    %v922 = vsel %vm886, %v849, %v850
    %v923 = vsel %vm886, %v848, %v849
    %v924 = vsel %vm886, %v847, %v848
    %v925 = vsel %vm886, %v846, %v847
    %v926 = vsel %vm886, %v845, %v846
    %v927 = vsel %vm886, %v844, %v845
    %v928 = vsel %vm886, %v843, %v844
    %v929 = vsel %vm886, %v842, %v843
    %v930 = vsel %vm886, %v841, %v842
    %v931 = vsel %vm886, %v840, %v841
    %v932 = vsel %vm886, %v839, %v840
    %v933 = vsel %vm886, %v838, %v839
    %v934 = vsel %vm886, %v837, %v838
    %v935 = vsel %vm886, %v836, %v837
    %v936 = vsel %vm886, %v835, %v836
    %v937 = vsel %vm886, %v834, %v835
    %v938 = vsel %vm886, %v833, %v834
    %v939 = vsel %vm886, %v832, %v833
    %v940 = vsel %vm886, %v831, %v832
    %v941 = vsel %vm886, %v830, %v831
    %v942 = vsel %vm886, %v829, %v830
    %v943 = vsel %vm886, %v828, %v829
    %v944 = vsel %vm886, %v827, %v828
    %v945 = vsel %vm886, %v826, %v827
    %v946 = vsel %vm886, %v825, %v826
    %v947 = vsel %vm886, %v824, %v825
    %v948 = vsel %vm886, %v823, %v824
    %v949 = vsel %vm886, %v822, %v823
    %v950 = vsel %vm886, %v885, %v822
    %v951 = vadd.s32 %v133, 4294967295
    %v952 = vadd.s32 %v134, 4294967295
    %vm953 = vcmp.ge.s32.totalorder %v951, 0
    %vm954 = vcmp.ge.s32.totalorder %v952, 0
    %vm955 = vcmp.lt.s32.totalorder %v951, 16
    %vm956 = vcmp.lt.s32.totalorder %v952, 16
    %vm957 = vmand %vm953, %vm955
    %vm958 = vmand %vm954, %vm956
    %v959 = vsel %vm957, %v950, 0.0
    %v960 = vsel %vm958, %v949, 0.0
    %v961 = vsel %vm957, %v948, 0.0
    %v962 = vsel %vm958, %v947, 0.0
    %v963 = vsel %vm957, %v946, 0.0
    %v964 = vsel %vm958, %v945, 0.0
    %v965 = vsel %vm957, %v944, 0.0
    %v966 = vsel %vm958, %v943, 0.0
    %v967 = vsel %vm957, %v942, 0.0
    %v968 = vsel %vm958, %v941, 0.0
    %v969 = vsel %vm957, %v940, 0.0
    %v970 = vsel %vm958, %v939, 0.0
    %v971 = vsel %vm957, %v938, 0.0
    %v972 = vsel %vm958, %v937, 0.0
    %v973 = vsel %vm957, %v936, 0.0
    %v974 = vsel %vm958, %v935, 0.0
    %v975 = vsel %vm957, %v934, 0.0
    %v976 = vsel %vm958, %v933, 0.0
    %v977 = vsel %vm957, %v932, 0.0
    %v978 = vsel %vm958, %v931, 0.0
    %v979 = vsel %vm957, %v930, 0.0
    %v980 = vsel %vm958, %v929, 0.0
    %v981 = vsel %vm957, %v928, 0.0
    %v982 = vsel %vm958, %v927, 0.0
    %v983 = vsel %vm957, %v926, 0.0
    %v984 = vsel %vm958, %v925, 0.0
    %v985 = vsel %vm957, %v924, 0.0
    %v986 = vsel %vm958, %v923, 0.0
    %v987 = vsel %vm957, %v922, 0.0
    %v988 = vsel %vm958, %v921, 0.0
    %v989 = vsel %vm957, %v920, 0.0
    %v990 = vsel %vm958, %v919, 0.0
    %v991 = vsel %vm957, %v918, 0.0
    %v992 = vsel %vm958, %v917, 0.0
    %v993 = vsel %vm957, %v916, 0.0
    %v994 = vsel %vm958, %v915, 0.0
    %v995 = vsel %vm957, %v914, 0.0
    %v996 = vsel %vm958, %v913, 0.0
    %v997 = vsel %vm957, %v912, 0.0
    %v998 = vsel %vm958, %v911, 0.0
    %v999 = vsel %vm957, %v910, 0.0
    %v1000 = vsel %vm958, %v909, 0.0
    %v1001 = vsel %vm957, %v908, 0.0
    %v1002 = vsel %vm958, %v907, 0.0
    %v1003 = vsel %vm957, %v906, 0.0
    %v1004 = vsel %vm958, %v905, 0.0
    %v1005 = vsel %vm957, %v904, 0.0
    %v1006 = vsel %vm958, %v903, 0.0
    %v1007 = vsel %vm957, %v902, 0.0
    %v1008 = vsel %vm958, %v901, 0.0
    %v1009 = vsel %vm957, %v900, 0.0
    %v1010 = vsel %vm958, %v899, 0.0
    %v1011 = vsel %vm957, %v898, 0.0
    %v1012 = vsel %vm958, %v897, 0.0
    %v1013 = vsel %vm957, %v896, 0.0
    %v1014 = vsel %vm958, %v895, 0.0
    %v1015 = vsel %vm957, %v894, 0.0
    %v1016 = vsel %vm958, %v893, 0.0
    %v1017 = vsel %vm957, %v892, 0.0
    %v1018 = vsel %vm958, %v891, 0.0
    %v1019 = vsel %vm957, %v890, 0.0
    %v1020 = vsel %vm958, %v889, 0.0
    %v1021 = vsel %vm957, %v888, 0.0
    %v1022 = vsel %vm958, %v887, 0.0
    %v1023 = vrot.slane %v614, 1
    %v1024 = vrot.slane %v615, 1
    %v1025 = vrot.slane %v616, 1
    %v1026 = vrot.slane %v617, 1
    %v1027 = vrot.slane %v618, 1
    %v1028 = vrot.slane %v619, 1
    %v1029 = vrot.slane %v620, 1
    %v1030 = vrot.slane %v621, 1
    %v1031 = vrot.slane %v622, 1
    %v1032 = vrot.slane %v623, 1
    %v1033 = vrot.slane %v624, 1
    %v1034 = vrot.slane %v625, 1
    %v1035 = vrot.slane %v626, 1
    %v1036 = vrot.slane %v627, 1
    %v1037 = vrot.slane %v628, 1
    %v1038 = vrot.slane %v629, 1
    %v1039 = vrot.slane %v630, 1
    %v1040 = vrot.slane %v631, 1
    %v1041 = vrot.slane %v632, 1
    %v1042 = vrot.slane %v633, 1
    %v1043 = vrot.slane %v634, 1
    %v1044 = vrot.slane %v635, 1
    %v1045 = vrot.slane %v636, 1
    %v1046 = vrot.slane %v637, 1
    %v1047 = vrot.slane %v638, 1
    %v1048 = vrot.slane %v639, 1
    %v1049 = vrot.slane %v640, 1
    %v1050 = vrot.slane %v641, 1
    %v1051 = vrot.slane %v642, 1
    %v1052 = vrot.slane %v643, 1
    %v1053 = vrot.slane %v644, 1
    %v1054 = vrot.slane %v645, 1
    %v1055 = vrot.slane %v646, 1
    %v1056 = vrot.slane %v647, 1
    %v1057 = vrot.slane %v648, 1
    %v1058 = vrot.slane %v649, 1
    %v1059 = vrot.slane %v650, 1
    %v1060 = vrot.slane %v651, 1
    %v1061 = vrot.slane %v652, 1
    %v1062 = vrot.slane %v653, 1
    %v1063 = vrot.slane %v654, 1
    %v1064 = vrot.slane %v655, 1
    %v1065 = vrot.slane %v656, 1
    %v1066 = vrot.slane %v657, 1
    %v1067 = vrot.slane %v658, 1
    %v1068 = vrot.slane %v659, 1
    %v1069 = vrot.slane %v660, 1
    %v1070 = vrot.slane %v661, 1
    %v1071 = vrot.slane %v662, 1
    %v1072 = vrot.slane %v663, 1
    %v1073 = vrot.slane %v664, 1
    %v1074 = vrot.slane %v665, 1
    %v1075 = vrot.slane %v666, 1
    %v1076 = vrot.slane %v667, 1
    %v1077 = vrot.slane %v668, 1
    %v1078 = vrot.slane %v669, 1
    %v1079 = vrot.slane %v670, 1
    %v1080 = vrot.slane %v671, 1
    %v1081 = vrot.slane %v672, 1
    %v1082 = vrot.slane %v673, 1
    %v1083 = vrot.slane %v674, 1
    %v1084 = vrot.slane %v675, 1
    %v1085 = vrot.slane %v676, 1
    %v1086 = vrot.slane %v677, 1
    %vm1087 = vcmp.lt.s32.totalorder %v133, 7
    %v1088 = vsel %vm1087, %v1085, %v1086
    %v1089 = vsel %vm1087, %v1084, %v1085
    %v1090 = vsel %vm1087, %v1083, %v1084
    %v1091 = vsel %vm1087, %v1082, %v1083
    %v1092 = vsel %vm1087, %v1081, %v1082
    %v1093 = vsel %vm1087, %v1080, %v1081
    %v1094 = vsel %vm1087, %v1079, %v1080
    %v1095 = vsel %vm1087, %v1078, %v1079
    %v1096 = vsel %vm1087, %v1077, %v1078
    %v1097 = vsel %vm1087, %v1076, %v1077
    %v1098 = vsel %vm1087, %v1075, %v1076
    %v1099 = vsel %vm1087, %v1074, %v1075
    %v1100 = vsel %vm1087, %v1073, %v1074
    %v1101 = vsel %vm1087, %v1072, %v1073
    %v1102 = vsel %vm1087, %v1071, %v1072
    %v1103 = vsel %vm1087, %v1070, %v1071
    %v1104 = vsel %vm1087, %v1069, %v1070
    %v1105 = vsel %vm1087, %v1068, %v1069
    %v1106 = vsel %vm1087, %v1067, %v1068
    %v1107 = vsel %vm1087, %v1066, %v1067
    %v1108 = vsel %vm1087, %v1065, %v1066
    %v1109 = vsel %vm1087, %v1064, %v1065
    %v1110 = vsel %vm1087, %v1063, %v1064
    %v1111 = vsel %vm1087, %v1062, %v1063
    %v1112 = vsel %vm1087, %v1061, %v1062
    %v1113 = vsel %vm1087, %v1060, %v1061
    %v1114 = vsel %vm1087, %v1059, %v1060
    %v1115 = vsel %vm1087, %v1058, %v1059
    %v1116 = vsel %vm1087, %v1057, %v1058
    %v1117 = vsel %vm1087, %v1056, %v1057
    %v1118 = vsel %vm1087, %v1055, %v1056
    %v1119 = vsel %vm1087, %v1054, %v1055
    %v1120 = vsel %vm1087, %v1053, %v1054
    %v1121 = vsel %vm1087, %v1052, %v1053
    %v1122 = vsel %vm1087, %v1051, %v1052
    %v1123 = vsel %vm1087, %v1050, %v1051
    %v1124 = vsel %vm1087, %v1049, %v1050
    %v1125 = vsel %vm1087, %v1048, %v1049
    %v1126 = vsel %vm1087, %v1047, %v1048
    %v1127 = vsel %vm1087, %v1046, %v1047
    %v1128 = vsel %vm1087, %v1045, %v1046
    %v1129 = vsel %vm1087, %v1044, %v1045
    %v1130 = vsel %vm1087, %v1043, %v1044
    %v1131 = vsel %vm1087, %v1042, %v1043
    %v1132 = vsel %vm1087, %v1041, %v1042
    %v1133 = vsel %vm1087, %v1040, %v1041
    %v1134 = vsel %vm1087, %v1039, %v1040
    %v1135 = vsel %vm1087, %v1038, %v1039
    %v1136 = vsel %vm1087, %v1037, %v1038
    %v1137 = vsel %vm1087, %v1036, %v1037
    %v1138 = vsel %vm1087, %v1035, %v1036
    %v1139 = vsel %vm1087, %v1034, %v1035
    %v1140 = vsel %vm1087, %v1033, %v1034
    %v1141 = vsel %vm1087, %v1032, %v1033
    %v1142 = vsel %vm1087, %v1031, %v1032
    %v1143 = vsel %vm1087, %v1030, %v1031
    %v1144 = vsel %vm1087, %v1029, %v1030
    %v1145 = vsel %vm1087, %v1028, %v1029
    %v1146 = vsel %vm1087, %v1027, %v1028
    %v1147 = vsel %vm1087, %v1026, %v1027
    %v1148 = vsel %vm1087, %v1025, %v1026
    %v1149 = vsel %vm1087, %v1024, %v1025
    %v1150 = vsel %vm1087, %v1023, %v1024
    %v1151 = vsel %vm1087, %v1086, %v1023
    %v1152 = vadd.s32 %v133, 1
    %v1153 = vadd.s32 %v134, 1
    %vm1154 = vcmp.ge.s32.totalorder %v1152, 0
    %vm1155 = vcmp.ge.s32.totalorder %v1153, 0
    %vm1156 = vcmp.lt.s32.totalorder %v1152, 16
    %vm1157 = vcmp.lt.s32.totalorder %v1153, 16
    %vm1158 = vmand %vm1154, %vm1156
    %vm1159 = vmand %vm1155, %vm1157
    %v1160 = vsel %vm1158, %v1150, 0.0
    %v1161 = vsel %vm1159, %v1149, 0.0
    %v1162 = vsel %vm1158, %v1148, 0.0
    %v1163 = vsel %vm1159, %v1147, 0.0
    %v1164 = vsel %vm1158, %v1146, 0.0
    %v1165 = vsel %vm1159, %v1145, 0.0
    %v1166 = vsel %vm1158, %v1144, 0.0
    %v1167 = vsel %vm1159, %v1143, 0.0
    %v1168 = vsel %vm1158, %v1142, 0.0
    %v1169 = vsel %vm1159, %v1141, 0.0
    %v1170 = vsel %vm1158, %v1140, 0.0
    %v1171 = vsel %vm1159, %v1139, 0.0
    %v1172 = vsel %vm1158, %v1138, 0.0
    %v1173 = vsel %vm1159, %v1137, 0.0
    %v1174 = vsel %vm1158, %v1136, 0.0
    %v1175 = vsel %vm1159, %v1135, 0.0
    %v1176 = vsel %vm1158, %v1134, 0.0
    %v1177 = vsel %vm1159, %v1133, 0.0
    %v1178 = vsel %vm1158, %v1132, 0.0
    %v1179 = vsel %vm1159, %v1131, 0.0
    %v1180 = vsel %vm1158, %v1130, 0.0
    %v1181 = vsel %vm1159, %v1129, 0.0
    %v1182 = vsel %vm1158, %v1128, 0.0
    %v1183 = vsel %vm1159, %v1127, 0.0
    %v1184 = vsel %vm1158, %v1126, 0.0
    %v1185 = vsel %vm1159, %v1125, 0.0
    %v1186 = vsel %vm1158, %v1124, 0.0
    %v1187 = vsel %vm1159, %v1123, 0.0
    %v1188 = vsel %vm1158, %v1122, 0.0
    %v1189 = vsel %vm1159, %v1121, 0.0
    %v1190 = vsel %vm1158, %v1120, 0.0
    %v1191 = vsel %vm1159, %v1119, 0.0
    %v1192 = vsel %vm1158, %v1118, 0.0
    %v1193 = vsel %vm1159, %v1117, 0.0
    %v1194 = vsel %vm1158, %v1116, 0.0
    %v1195 = vsel %vm1159, %v1115, 0.0
    %v1196 = vsel %vm1158, %v1114, 0.0
    %v1197 = vsel %vm1159, %v1113, 0.0
    %v1198 = vsel %vm1158, %v1112, 0.0
    %v1199 = vsel %vm1159, %v1111, 0.0
    %v1200 = vsel %vm1158, %v1110, 0.0
    %v1201 = vsel %vm1159, %v1109, 0.0
    %v1202 = vsel %vm1158, %v1108, 0.0
    %v1203 = vsel %vm1159, %v1107, 0.0
    %v1204 = vsel %vm1158, %v1106, 0.0
    %v1205 = vsel %vm1159, %v1105, 0.0
    %v1206 = vsel %vm1158, %v1104, 0.0
    %v1207 = vsel %vm1159, %v1103, 0.0
    %v1208 = vsel %vm1158, %v1102, 0.0
    %v1209 = vsel %vm1159, %v1101, 0.0
    %v1210 = vsel %vm1158, %v1100, 0.0
    %v1211 = vsel %vm1159, %v1099, 0.0
    %v1212 = vsel %vm1158, %v1098, 0.0
    %v1213 = vsel %vm1159, %v1097, 0.0
    %v1214 = vsel %vm1158, %v1096, 0.0
    %v1215 = vsel %vm1159, %v1095, 0.0
    %v1216 = vsel %vm1158, %v1094, 0.0
    %v1217 = vsel %vm1159, %v1093, 0.0
    %v1218 = vsel %vm1158, %v1092, 0.0
    %v1219 = vsel %vm1159, %v1091, 0.0
    %v1220 = vsel %vm1158, %v1090, 0.0
    %v1221 = vsel %vm1159, %v1089, 0.0
    %v1222 = vsel %vm1158, %v1088, 0.0
    %v1223 = vsel %vm1159, %v1151, 0.0
    %1224 = vmatprep.subr.mxu0 0.0
    %1225 = vmatpush1.msra.mxu0 %v678
    %1226 = vmatprep.subr.mxu0 0.0
    %1227 = vmatpush1.msra.mxu0 %v679
    %1228 = vmatprep.subr.mxu0 0.0
    %1229 = vmatpush1.msra.mxu0 %v680
    %1230 = vmatprep.subr.mxu0 0.0
    %1231 = vmatpush1.msra.mxu0 %v681
    %1232 = vmatprep.subr.mxu0 0.0
    %1233 = vmatpush1.msra.mxu0 %v682
    %1234 = vmatprep.subr.mxu0 0.0
    %1235 = vmatpush1.msra.mxu0 %v683
    %1236 = vmatprep.subr.mxu0 0.0
    %1237 = vmatpush1.msra.mxu0 %v684
    %1238 = vmatprep.subr.mxu0 0.0
    %1239 = vmatpush1.msra.mxu0 %v685
    %1240 = vmatprep.subr.mxu0 0.0
    %1241 = vmatpush1.msra.mxu0 %v686
    %1242 = vmatprep.subr.mxu0 0.0
    %1243 = vmatpush1.msra.mxu0 %v687
    %1244 = vmatprep.subr.mxu0 0.0
    %1245 = vmatpush1.msra.mxu0 %v688
    %1246 = vmatprep.subr.mxu0 0.0
    %1247 = vmatpush1.msra.mxu0 %v689
    %1248 = vmatprep.subr.mxu0 0.0
    %1249 = vmatpush1.msra.mxu0 %v690
    %1250 = vmatprep.subr.mxu0 0.0
    %1251 = vmatpush1.msra.mxu0 %v691
    %1252 = vmatprep.subr.mxu0 0.0
    %1253 = vmatpush1.msra.mxu0 %v692
    %1254 = vmatprep.subr.mxu0 0.0
    %1255 = vmatpush1.msra.mxu0 %v693
    %1256 = vmatprep.subr.mxu0 0.0
    %1257 = vmatpush1.msra.mxu0 %v694
    %1258 = vmatprep.subr.mxu0 0.0
    %1259 = vmatpush1.msra.mxu0 %v695
    %1260 = vmatprep.subr.mxu0 0.0
    %1261 = vmatpush1.msra.mxu0 %v696
    %1262 = vmatprep.subr.mxu0 0.0
    %1263 = vmatpush1.msra.mxu0 %v697
    %1264 = vmatprep.subr.mxu0 0.0
    %1265 = vmatpush1.msra.mxu0 %v698
    %1266 = vmatprep.subr.mxu0 0.0
    %1267 = vmatpush1.msra.mxu0 %v699
    %1268 = vmatprep.subr.mxu0 0.0
    %1269 = vmatpush1.msra.mxu0 %v700
    %1270 = vmatprep.subr.mxu0 0.0
    %1271 = vmatpush1.msra.mxu0 %v701
    %1272 = vmatprep.subr.mxu0 0.0
    %1273 = vmatpush1.msra.mxu0 %v702
    %1274 = vmatprep.subr.mxu0 0.0
    %1275 = vmatpush1.msra.mxu0 %v703
    %1276 = vmatprep.subr.mxu0 0.0
    %1277 = vmatpush1.msra.mxu0 %v704
    %1278 = vmatprep.subr.mxu0 0.0
    %1279 = vmatpush1.msra.mxu0 %v705
    %1280 = vmatprep.subr.mxu0 0.0
    %1281 = vmatpush1.msra.mxu0 %v706
    %1282 = vmatprep.subr.mxu0 0.0
    %1283 = vmatpush1.msra.mxu0 %v707
    %1284 = vmatprep.subr.mxu0 0.0
    %1285 = vmatpush1.msra.mxu0 %v708
    %1286 = vmatprep.subr.mxu0 0.0
    %1287 = vmatpush1.msra.mxu0 %v709
    %1288 = vmatprep.mubr.f32.mxu0 0.0
    %1289 = vmatmul.mubr.f32.gmra.mrb[0].mxu0 0.0
    %v1290 = vpop.f32.mrb[0].mxu0
    %v1291 = vadd.f32 0.0, %v1290
    %v1292 = vpop.f32.mrb[0].mxu0
    %1293 = vmatprep.mubr.f32.mxu0 0.0
    %1294 = vmatmul.mubr.f32.gmra.mrb[0].mxu0 0.0
    %v1295 = vpop.f32.mrb[0].mxu0
    %v1296 = vadd.f32 0.0, %v1295
    %v1297 = vpop.f32.mrb[0].mxu0
    %1298 = vmatprep.mubr.f32.mxu0 %v614
    %1299 = vmatmul.mubr.f32.gmra.mrb[0].mxu0 %v959
    %v1300 = vpop.f32.mrb[0].mxu0
    %v1301 = vadd.f32 0.0, %v1300
    %v1302 = vpop.f32.mrb[0].mxu0
    %1303 = vmatprep.mubr.f32.mxu0 %v615
    %1304 = vmatmul.mubr.f32.gmra.mrb[0].mxu0 %v960
    %v1305 = vpop.f32.mrb[0].mxu0
    %v1306 = vadd.f32 0.0, %v1305
    %v1307 = vpop.f32.mrb[0].mxu0
    %1308 = vmatprep.mubr.f32.mxu0 %v616
    %1309 = vmatmul.mubr.f32.gmra.mrb[0].mxu0 %v961
    %v1310 = vpop.f32.mrb[0].mxu0
    %v1311 = vadd.f32 0.0, %v1310
    %v1312 = vpop.f32.mrb[0].mxu0
    %1313 = vmatprep.mubr.f32.mxu0 %v617
    %1314 = vmatmul.mubr.f32.gmra.mrb[0].mxu0 %v962
    %v1315 = vpop.f32.mrb[0].mxu0
    %v1316 = vadd.f32 0.0, %v1315
    %v1317 = vpop.f32.mrb[0].mxu0
    %1318 = vmatprep.mubr.f32.mxu0 %v618
    %1319 = vmatmul.mubr.f32.gmra.mrb[0].mxu0 %v963
    %v1320 = vpop.f32.mrb[0].mxu0
    %v1321 = vadd.f32 0.0, %v1320
    %v1322 = vpop.f32.mrb[0].mxu0
    %1323 = vmatprep.mubr.f32.mxu0 %v619
    %1324 = vmatmul.mubr.f32.gmra.mrb[0].mxu0 %v964
    %v1325 = vpop.f32.mrb[0].mxu0
    %v1326 = vadd.f32 0.0, %v1325
    %v1327 = vpop.f32.mrb[0].mxu0
    %1328 = vmatprep.mubr.f32.mxu0 %v620
    %1329 = vmatmul.mubr.f32.gmra.mrb[0].mxu0 %v965
    %v1330 = vpop.f32.mrb[0].mxu0
    %v1331 = vadd.f32 0.0, %v1330
    %v1332 = vpop.f32.mrb[0].mxu0
    %1333 = vmatprep.mubr.f32.mxu0 %v621
    %1334 = vmatmul.mubr.f32.gmra.mrb[0].mxu0 %v966
    %v1335 = vpop.f32.mrb[0].mxu0
    %v1336 = vadd.f32 0.0, %v1335
    %v1337 = vpop.f32.mrb[0].mxu0
    %1338 = vmatprep.mubr.f32.mxu0 %v622
    %1339 = vmatmul.mubr.f32.gmra.mrb[0].mxu0 %v967
    %v1340 = vpop.f32.mrb[0].mxu0
    %v1341 = vadd.f32 0.0, %v1340
    %v1342 = vpop.f32.mrb[0].mxu0
    %1343 = vmatprep.mubr.f32.mxu0 %v623
    %1344 = vmatmul.mubr.f32.gmra.mrb[0].mxu0 %v968
    %v1345 = vpop.f32.mrb[0].mxu0
    %v1346 = vadd.f32 0.0, %v1345
    %v1347 = vpop.f32.mrb[0].mxu0
    %1348 = vmatprep.mubr.f32.mxu0 %v624
    %1349 = vmatmul.mubr.f32.gmra.mrb[0].mxu0 %v969
    %v1350 = vpop.f32.mrb[0].mxu0
    %v1351 = vadd.f32 0.0, %v1350
    %v1352 = vpop.f32.mrb[0].mxu0
    %1353 = vmatprep.mubr.f32.mxu0 %v625
    %1354 = vmatmul.mubr.f32.gmra.mrb[0].mxu0 %v970
    %v1355 = vpop.f32.mrb[0].mxu0
    %v1356 = vadd.f32 0.0, %v1355
    %v1357 = vpop.f32.mrb[0].mxu0
    %1358 = vmatprep.mubr.f32.mxu0 %v626
    %1359 = vmatmul.mubr.f32.gmra.mrb[0].mxu0 %v971
    %v1360 = vpop.f32.mrb[0].mxu0
    %v1361 = vadd.f32 0.0, %v1360
    %v1362 = vpop.f32.mrb[0].mxu0
    %1363 = vmatprep.mubr.f32.mxu0 %v627
    %1364 = vmatmul.mubr.f32.gmra.mrb[0].mxu0 %v972
    %v1365 = vpop.f32.mrb[0].mxu0
    %v1366 = vadd.f32 0.0, %v1365
    %v1367 = vpop.f32.mrb[0].mxu0
    %1368 = vmatprep.mubr.f32.mxu0 %v628
    %1369 = vmatmul.mubr.f32.gmra.mrb[0].mxu0 %v973
    %v1370 = vpop.f32.mrb[0].mxu0
    %v1371 = vadd.f32 0.0, %v1370
    %v1372 = vpop.f32.mrb[0].mxu0
    %1373 = vmatprep.mubr.f32.mxu0 %v629
    %1374 = vmatmul.mubr.f32.gmra.mrb[0].mxu0 %v974
    %v1375 = vpop.f32.mrb[0].mxu0
    %v1376 = vadd.f32 0.0, %v1375
    %v1377 = vpop.f32.mrb[0].mxu0
    %1378 = vmatprep.mubr.f32.mxu0 %v630
    %1379 = vmatmul.mubr.f32.gmra.mrb[0].mxu0 %v975
    %v1380 = vpop.f32.mrb[0].mxu0
    %v1381 = vadd.f32 0.0, %v1380
    %v1382 = vpop.f32.mrb[0].mxu0
    %1383 = vmatprep.mubr.f32.mxu0 %v631
    %1384 = vmatmul.mubr.f32.gmra.mrb[0].mxu0 %v976
    %v1385 = vpop.f32.mrb[0].mxu0
    %v1386 = vadd.f32 0.0, %v1385
    %v1387 = vpop.f32.mrb[0].mxu0
    %1388 = vmatprep.mubr.f32.mxu0 %v632
    %1389 = vmatmul.mubr.f32.gmra.mrb[0].mxu0 %v977
    %v1390 = vpop.f32.mrb[0].mxu0
    %v1391 = vadd.f32 0.0, %v1390
    %v1392 = vpop.f32.mrb[0].mxu0
    %1393 = vmatprep.mubr.f32.mxu0 %v633
    %1394 = vmatmul.mubr.f32.gmra.mrb[0].mxu0 %v978
    %v1395 = vpop.f32.mrb[0].mxu0
    %v1396 = vadd.f32 0.0, %v1395
    %v1397 = vpop.f32.mrb[0].mxu0
    %1398 = vmatprep.mubr.f32.mxu0 %v634
    %1399 = vmatmul.mubr.f32.gmra.mrb[0].mxu0 %v979
    %v1400 = vpop.f32.mrb[0].mxu0
    %v1401 = vadd.f32 0.0, %v1400
    %v1402 = vpop.f32.mrb[0].mxu0
    %1403 = vmatprep.mubr.f32.mxu0 %v635
    %1404 = vmatmul.mubr.f32.gmra.mrb[0].mxu0 %v980
    %v1405 = vpop.f32.mrb[0].mxu0
    %v1406 = vadd.f32 0.0, %v1405
    %v1407 = vpop.f32.mrb[0].mxu0
    %1408 = vmatprep.mubr.f32.mxu0 %v636
    %1409 = vmatmul.mubr.f32.gmra.mrb[0].mxu0 %v981
    %v1410 = vpop.f32.mrb[0].mxu0
    %v1411 = vadd.f32 0.0, %v1410
    %v1412 = vpop.f32.mrb[0].mxu0
    %1413 = vmatprep.mubr.f32.mxu0 %v637
    %1414 = vmatmul.mubr.f32.gmra.mrb[0].mxu0 %v982
    %v1415 = vpop.f32.mrb[0].mxu0
    %v1416 = vadd.f32 0.0, %v1415
    %v1417 = vpop.f32.mrb[0].mxu0
    %1418 = vmatprep.mubr.f32.mxu0 %v638
    %1419 = vmatmul.mubr.f32.gmra.mrb[0].mxu0 %v983
    %v1420 = vpop.f32.mrb[0].mxu0
    %v1421 = vadd.f32 0.0, %v1420
    %v1422 = vpop.f32.mrb[0].mxu0
    %1423 = vmatprep.mubr.f32.mxu0 %v639
    %1424 = vmatmul.mubr.f32.gmra.mrb[0].mxu0 %v984
    %v1425 = vpop.f32.mrb[0].mxu0
    %v1426 = vadd.f32 0.0, %v1425
    %v1427 = vpop.f32.mrb[0].mxu0
    %1428 = vmatprep.mubr.f32.mxu0 %v640
    %1429 = vmatmul.mubr.f32.gmra.mrb[0].mxu0 %v985
    %v1430 = vpop.f32.mrb[0].mxu0
    %v1431 = vadd.f32 0.0, %v1430
    %v1432 = vpop.f32.mrb[0].mxu0
    %1433 = vmatprep.mubr.f32.mxu0 %v641
    %1434 = vmatmul.mubr.f32.gmra.mrb[0].mxu0 %v986
    %v1435 = vpop.f32.mrb[0].mxu0
    %v1436 = vadd.f32 0.0, %v1435
    %v1437 = vpop.f32.mrb[0].mxu0
    %1438 = vmatprep.mubr.f32.mxu0 %v642
    %1439 = vmatmul.mubr.f32.gmra.mrb[0].mxu0 %v987
    %v1440 = vpop.f32.mrb[0].mxu0
    %v1441 = vadd.f32 0.0, %v1440
    %v1442 = vpop.f32.mrb[0].mxu0
    %1443 = vmatprep.mubr.f32.mxu0 %v643
    %1444 = vmatmul.mubr.f32.gmra.mrb[0].mxu0 %v988
    %v1445 = vpop.f32.mrb[0].mxu0
    %v1446 = vadd.f32 0.0, %v1445
    %v1447 = vpop.f32.mrb[0].mxu0
    %1448 = vmatprep.mubr.f32.mxu0 0.0
    %1449 = vmatmul.mubr.f32.gmra.mrb[0].mxu0 0.0
    %v1450 = vpop.f32.mrb[0].mxu0
    %v1451 = vadd.f32 0.0, %v1450
    %v1452 = vpop.f32.mrb[0].mxu0
    %1453 = vmatprep.mubr.f32.mxu0 0.0
    %1454 = vmatmul.mubr.f32.gmra.mrb[0].mxu0 0.0
    %v1455 = vpop.f32.mrb[0].mxu0
    %v1456 = vadd.f32 0.0, %v1455
    %v1457 = vpop.f32.mrb[0].mxu0
    %1458 = vmatprep.mubr.f32.mxu0 %v646
    %1459 = vmatmul.mubr.f32.gmra.mrb[0].mxu0 %v991
    %v1460 = vpop.f32.mrb[0].mxu0
    %v1461 = vadd.f32 0.0, %v1460
    %v1462 = vpop.f32.mrb[0].mxu0
    %1463 = vmatprep.mubr.f32.mxu0 %v647
    %1464 = vmatmul.mubr.f32.gmra.mrb[0].mxu0 %v992
    %v1465 = vpop.f32.mrb[0].mxu0
    %v1466 = vadd.f32 0.0, %v1465
    %v1467 = vpop.f32.mrb[0].mxu0
    %1468 = vmatprep.mubr.f32.mxu0 %v648
    %1469 = vmatmul.mubr.f32.gmra.mrb[0].mxu0 %v993
    %v1470 = vpop.f32.mrb[0].mxu0
    %v1471 = vadd.f32 0.0, %v1470
    %v1472 = vpop.f32.mrb[0].mxu0
    %1473 = vmatprep.mubr.f32.mxu0 %v649
    %1474 = vmatmul.mubr.f32.gmra.mrb[0].mxu0 %v994
    %v1475 = vpop.f32.mrb[0].mxu0
    %v1476 = vadd.f32 0.0, %v1475
    %v1477 = vpop.f32.mrb[0].mxu0
    %1478 = vmatprep.mubr.f32.mxu0 %v650
    %1479 = vmatmul.mubr.f32.gmra.mrb[0].mxu0 %v995
    %v1480 = vpop.f32.mrb[0].mxu0
    %v1481 = vadd.f32 0.0, %v1480
    %v1482 = vpop.f32.mrb[0].mxu0
    %1483 = vmatprep.mubr.f32.mxu0 %v651
    %1484 = vmatmul.mubr.f32.gmra.mrb[0].mxu0 %v996
    %v1485 = vpop.f32.mrb[0].mxu0
    %v1486 = vadd.f32 0.0, %v1485
    %v1487 = vpop.f32.mrb[0].mxu0
    %1488 = vmatprep.mubr.f32.mxu0 %v652
    %1489 = vmatmul.mubr.f32.gmra.mrb[0].mxu0 %v997
    %v1490 = vpop.f32.mrb[0].mxu0
    %v1491 = vadd.f32 0.0, %v1490
    %v1492 = vpop.f32.mrb[0].mxu0
    %1493 = vmatprep.mubr.f32.mxu0 %v653
    %1494 = vmatmul.mubr.f32.gmra.mrb[0].mxu0 %v998
    %v1495 = vpop.f32.mrb[0].mxu0
    %v1496 = vadd.f32 0.0, %v1495
    %v1497 = vpop.f32.mrb[0].mxu0
    %1498 = vmatprep.mubr.f32.mxu0 %v654
    %1499 = vmatmul.mubr.f32.gmra.mrb[0].mxu0 %v999
    %v1500 = vpop.f32.mrb[0].mxu0
    %v1501 = vadd.f32 0.0, %v1500
    %v1502 = vpop.f32.mrb[0].mxu0
    %1503 = vmatprep.mubr.f32.mxu0 %v655
    %1504 = vmatmul.mubr.f32.gmra.mrb[0].mxu0 %v1000
    %v1505 = vpop.f32.mrb[0].mxu0
    %v1506 = vadd.f32 0.0, %v1505
    %v1507 = vpop.f32.mrb[0].mxu0
    %1508 = vmatprep.mubr.f32.mxu0 %v656
    %1509 = vmatmul.mubr.f32.gmra.mrb[0].mxu0 %v1001
    %v1510 = vpop.f32.mrb[0].mxu0
    %v1511 = vadd.f32 0.0, %v1510
    %v1512 = vpop.f32.mrb[0].mxu0
    %1513 = vmatprep.mubr.f32.mxu0 %v657
    %1514 = vmatmul.mubr.f32.gmra.mrb[0].mxu0 %v1002
    %v1515 = vpop.f32.mrb[0].mxu0
    %v1516 = vadd.f32 0.0, %v1515
    %v1517 = vpop.f32.mrb[0].mxu0
    %1518 = vmatprep.mubr.f32.mxu0 %v658
    %1519 = vmatmul.mubr.f32.gmra.mrb[0].mxu0 %v1003
    %v1520 = vpop.f32.mrb[0].mxu0
    %v1521 = vadd.f32 0.0, %v1520
    %v1522 = vpop.f32.mrb[0].mxu0
    %1523 = vmatprep.mubr.f32.mxu0 %v659
    %1524 = vmatmul.mubr.f32.gmra.mrb[0].mxu0 %v1004
    %v1525 = vpop.f32.mrb[0].mxu0
    %v1526 = vadd.f32 0.0, %v1525
    %v1527 = vpop.f32.mrb[0].mxu0
    %1528 = vmatprep.mubr.f32.mxu0 %v660
    %1529 = vmatmul.mubr.f32.gmra.mrb[0].mxu0 %v1005
    %v1530 = vpop.f32.mrb[0].mxu0
    %v1531 = vadd.f32 0.0, %v1530
    %v1532 = vpop.f32.mrb[0].mxu0
    %1533 = vmatprep.mubr.f32.mxu0 %v661
    %1534 = vmatmul.mubr.f32.gmra.mrb[0].mxu0 %v1006
    %v1535 = vpop.f32.mrb[0].mxu0
    %v1536 = vadd.f32 0.0, %v1535
    %v1537 = vpop.f32.mrb[0].mxu0
    %1538 = vmatprep.mubr.f32.mxu0 %v662
    %1539 = vmatmul.mubr.f32.gmra.mrb[0].mxu0 %v1007
    %v1540 = vpop.f32.mrb[0].mxu0
    %v1541 = vadd.f32 0.0, %v1540
    %v1542 = vpop.f32.mrb[0].mxu0
    %1543 = vmatprep.mubr.f32.mxu0 %v663
    %1544 = vmatmul.mubr.f32.gmra.mrb[0].mxu0 %v1008
    %v1545 = vpop.f32.mrb[0].mxu0
    %v1546 = vadd.f32 0.0, %v1545
    %v1547 = vpop.f32.mrb[0].mxu0
    %1548 = vmatprep.mubr.f32.mxu0 %v664
    %1549 = vmatmul.mubr.f32.gmra.mrb[0].mxu0 %v1009
    %v1550 = vpop.f32.mrb[0].mxu0
    %v1551 = vadd.f32 0.0, %v1550
    %v1552 = vpop.f32.mrb[0].mxu0
    %1553 = vmatprep.mubr.f32.mxu0 %v665
    %1554 = vmatmul.mubr.f32.gmra.mrb[0].mxu0 %v1010
    %v1555 = vpop.f32.mrb[0].mxu0
    %v1556 = vadd.f32 0.0, %v1555
    %v1557 = vpop.f32.mrb[0].mxu0
    %1558 = vmatprep.mubr.f32.mxu0 %v666
    %1559 = vmatmul.mubr.f32.gmra.mrb[0].mxu0 %v1011
    %v1560 = vpop.f32.mrb[0].mxu0
    %v1561 = vadd.f32 0.0, %v1560
    %v1562 = vpop.f32.mrb[0].mxu0
    %1563 = vmatprep.mubr.f32.mxu0 %v667
    %1564 = vmatmul.mubr.f32.gmra.mrb[0].mxu0 %v1012
    %v1565 = vpop.f32.mrb[0].mxu0
    %v1566 = vadd.f32 0.0, %v1565
    %v1567 = vpop.f32.mrb[0].mxu0
    %1568 = vmatprep.mubr.f32.mxu0 %v668
    %1569 = vmatmul.mubr.f32.gmra.mrb[0].mxu0 %v1013
    %v1570 = vpop.f32.mrb[0].mxu0
    %v1571 = vadd.f32 0.0, %v1570
    %v1572 = vpop.f32.mrb[0].mxu0
    %1573 = vmatprep.mubr.f32.mxu0 %v669
    %1574 = vmatmul.mubr.f32.gmra.mrb[0].mxu0 %v1014
    %v1575 = vpop.f32.mrb[0].mxu0
    %v1576 = vadd.f32 0.0, %v1575
    %v1577 = vpop.f32.mrb[0].mxu0
    %1578 = vmatprep.mubr.f32.mxu0 %v670
    %1579 = vmatmul.mubr.f32.gmra.mrb[0].mxu0 %v1015
    %v1580 = vpop.f32.mrb[0].mxu0
    %v1581 = vadd.f32 0.0, %v1580
    %v1582 = vpop.f32.mrb[0].mxu0
    %1583 = vmatprep.mubr.f32.mxu0 %v671
    %1584 = vmatmul.mubr.f32.gmra.mrb[0].mxu0 %v1016
    %v1585 = vpop.f32.mrb[0].mxu0
    %v1586 = vadd.f32 0.0, %v1585
    %v1587 = vpop.f32.mrb[0].mxu0
    %1588 = vmatprep.mubr.f32.mxu0 %v672
    %1589 = vmatmul.mubr.f32.gmra.mrb[0].mxu0 %v1017
    %v1590 = vpop.f32.mrb[0].mxu0
    %v1591 = vadd.f32 0.0, %v1590
    %v1592 = vpop.f32.mrb[0].mxu0
    %1593 = vmatprep.mubr.f32.mxu0 %v673
    %1594 = vmatmul.mubr.f32.gmra.mrb[0].mxu0 %v1018
    %v1595 = vpop.f32.mrb[0].mxu0
    %v1596 = vadd.f32 0.0, %v1595
    %v1597 = vpop.f32.mrb[0].mxu0
    %1598 = vmatprep.mubr.f32.mxu0 %v674
    %1599 = vmatmul.mubr.f32.gmra.mrb[0].mxu0 %v1019
    %v1600 = vpop.f32.mrb[0].mxu0
    %v1601 = vadd.f32 0.0, %v1600
    %v1602 = vpop.f32.mrb[0].mxu0
    %1603 = vmatprep.mubr.f32.mxu0 %v675
    %1604 = vmatmul.mubr.f32.gmra.mrb[0].mxu0 %v1020
    %v1605 = vpop.f32.mrb[0].mxu0
    %v1606 = vadd.f32 0.0, %v1605
    %v1607 = vpop.f32.mrb[0].mxu0
    %1608 = vdwg.mxu0
    %1609 = vmatprep.subr.mxu0 0.0
    %1610 = vmatpush1.msra.mxu0 %v710
    %1611 = vmatprep.subr.mxu0 0.0
    %1612 = vmatpush1.msra.mxu0 %v711
    %1613 = vmatprep.subr.mxu0 0.0
    %1614 = vmatpush1.msra.mxu0 %v712
    %1615 = vmatprep.subr.mxu0 0.0
    %1616 = vmatpush1.msra.mxu0 %v713
    %1617 = vmatprep.subr.mxu0 0.0
    %1618 = vmatpush1.msra.mxu0 %v714
    %1619 = vmatprep.subr.mxu0 0.0
    %1620 = vmatpush1.msra.mxu0 %v715
    %1621 = vmatprep.subr.mxu0 0.0
    %1622 = vmatpush1.msra.mxu0 %v716
    %1623 = vmatprep.subr.mxu0 0.0
    %1624 = vmatpush1.msra.mxu0 %v717
    %1625 = vmatprep.subr.mxu0 0.0
    %1626 = vmatpush1.msra.mxu0 %v718
    %1627 = vmatprep.subr.mxu0 0.0
    %1628 = vmatpush1.msra.mxu0 %v719
    %1629 = vmatprep.subr.mxu0 0.0
    %1630 = vmatpush1.msra.mxu0 %v720
    %1631 = vmatprep.subr.mxu0 0.0
    %1632 = vmatpush1.msra.mxu0 %v721
    %1633 = vmatprep.subr.mxu0 0.0
    %1634 = vmatpush1.msra.mxu0 %v722
    %1635 = vmatprep.subr.mxu0 0.0
    %1636 = vmatpush1.msra.mxu0 %v723
    %1637 = vmatprep.subr.mxu0 0.0
    %1638 = vmatpush1.msra.mxu0 %v724
    %1639 = vmatprep.subr.mxu0 0.0
    %1640 = vmatpush1.msra.mxu0 %v725
    %1641 = vmatprep.subr.mxu0 0.0
    %1642 = vmatpush1.msra.mxu0 %v726
    %1643 = vmatprep.subr.mxu0 0.0
    %1644 = vmatpush1.msra.mxu0 %v727
    %1645 = vmatprep.subr.mxu0 0.0
    %1646 = vmatpush1.msra.mxu0 %v728
    %1647 = vmatprep.subr.mxu0 0.0
    %1648 = vmatpush1.msra.mxu0 %v729
    %1649 = vmatprep.subr.mxu0 0.0
    %1650 = vmatpush1.msra.mxu0 %v730
    %1651 = vmatprep.subr.mxu0 0.0
    %1652 = vmatpush1.msra.mxu0 %v731
    %1653 = vmatprep.subr.mxu0 0.0
    %1654 = vmatpush1.msra.mxu0 %v732
    %1655 = vmatprep.subr.mxu0 0.0
    %1656 = vmatpush1.msra.mxu0 %v733
    %1657 = vmatprep.subr.mxu0 0.0
    %1658 = vmatpush1.msra.mxu0 %v734
    %1659 = vmatprep.subr.mxu0 0.0
    %1660 = vmatpush1.msra.mxu0 %v735
    %1661 = vmatprep.subr.mxu0 0.0
    %1662 = vmatpush1.msra.mxu0 %v736
    %1663 = vmatprep.subr.mxu0 0.0
    %1664 = vmatpush1.msra.mxu0 %v737
    %1665 = vmatprep.subr.mxu0 0.0
    %1666 = vmatpush1.msra.mxu0 %v738
    %1667 = vmatprep.subr.mxu0 0.0
    %1668 = vmatpush1.msra.mxu0 %v739
    %1669 = vmatprep.subr.mxu0 0.0
    %1670 = vmatpush1.msra.mxu0 %v740
    %1671 = vmatprep.subr.mxu0 0.0
    %1672 = vmatpush1.msra.mxu0 %v741
    %1673 = vmatprep.mubr.f32.mxu0 %v959
    %1674 = vmatmul.mubr.f32.gmra.mrb[0].mxu0 0.0
    %v1675 = vpop.f32.mrb[0].mxu0
    %v1676 = vadd.f32 %v1291, %v1675
    %v1677 = vpop.f32.mrb[0].mxu0
    %1678 = vmatprep.mubr.f32.mxu0 %v960
    %1679 = vmatmul.mubr.f32.gmra.mrb[0].mxu0 0.0
    %v1680 = vpop.f32.mrb[0].mxu0
    %v1681 = vadd.f32 %v1296, %v1680
    %v1682 = vpop.f32.mrb[0].mxu0
    %1683 = vmatprep.mubr.f32.mxu0 %v961
    %1684 = vmatmul.mubr.f32.gmra.mrb[0].mxu0 %v1160
    %v1685 = vpop.f32.mrb[0].mxu0
    %v1686 = vadd.f32 %v1301, %v1685
    %v1687 = vpop.f32.mrb[0].mxu0
    %1688 = vmatprep.mubr.f32.mxu0 %v962
    %1689 = vmatmul.mubr.f32.gmra.mrb[0].mxu0 %v1161
    %v1690 = vpop.f32.mrb[0].mxu0
    %v1691 = vadd.f32 %v1306, %v1690
    %v1692 = vpop.f32.mrb[0].mxu0
    %1693 = vmatprep.mubr.f32.mxu0 %v963
    %1694 = vmatmul.mubr.f32.gmra.mrb[0].mxu0 %v1162
    %v1695 = vpop.f32.mrb[0].mxu0
    %v1696 = vadd.f32 %v1311, %v1695
    %v1697 = vpop.f32.mrb[0].mxu0
    %1698 = vmatprep.mubr.f32.mxu0 %v964
    %1699 = vmatmul.mubr.f32.gmra.mrb[0].mxu0 %v1163
    %v1700 = vpop.f32.mrb[0].mxu0
    %v1701 = vadd.f32 %v1316, %v1700
    %v1702 = vpop.f32.mrb[0].mxu0
    %1703 = vmatprep.mubr.f32.mxu0 %v965
    %1704 = vmatmul.mubr.f32.gmra.mrb[0].mxu0 %v1164
    %v1705 = vpop.f32.mrb[0].mxu0
    %v1706 = vadd.f32 %v1321, %v1705
    %v1707 = vpop.f32.mrb[0].mxu0
    %1708 = vmatprep.mubr.f32.mxu0 %v966
    %1709 = vmatmul.mubr.f32.gmra.mrb[0].mxu0 %v1165
    %v1710 = vpop.f32.mrb[0].mxu0
    %v1711 = vadd.f32 %v1326, %v1710
    %v1712 = vpop.f32.mrb[0].mxu0
    %1713 = vmatprep.mubr.f32.mxu0 %v967
    %1714 = vmatmul.mubr.f32.gmra.mrb[0].mxu0 %v1166
    %v1715 = vpop.f32.mrb[0].mxu0
    %v1716 = vadd.f32 %v1331, %v1715
    %v1717 = vpop.f32.mrb[0].mxu0
    %1718 = vmatprep.mubr.f32.mxu0 %v968
    %1719 = vmatmul.mubr.f32.gmra.mrb[0].mxu0 %v1167
    %v1720 = vpop.f32.mrb[0].mxu0
    %v1721 = vadd.f32 %v1336, %v1720
    %v1722 = vpop.f32.mrb[0].mxu0
    %1723 = vmatprep.mubr.f32.mxu0 %v969
    %1724 = vmatmul.mubr.f32.gmra.mrb[0].mxu0 %v1168
    %v1725 = vpop.f32.mrb[0].mxu0
    %v1726 = vadd.f32 %v1341, %v1725
    %v1727 = vpop.f32.mrb[0].mxu0
    %1728 = vmatprep.mubr.f32.mxu0 %v970
    %1729 = vmatmul.mubr.f32.gmra.mrb[0].mxu0 %v1169
    %v1730 = vpop.f32.mrb[0].mxu0
    %v1731 = vadd.f32 %v1346, %v1730
    %v1732 = vpop.f32.mrb[0].mxu0
    %1733 = vmatprep.mubr.f32.mxu0 %v971
    %1734 = vmatmul.mubr.f32.gmra.mrb[0].mxu0 %v1170
    %v1735 = vpop.f32.mrb[0].mxu0
    %v1736 = vadd.f32 %v1351, %v1735
    %v1737 = vpop.f32.mrb[0].mxu0
    %1738 = vmatprep.mubr.f32.mxu0 %v972
    %1739 = vmatmul.mubr.f32.gmra.mrb[0].mxu0 %v1171
    %v1740 = vpop.f32.mrb[0].mxu0
    %v1741 = vadd.f32 %v1356, %v1740
    %v1742 = vpop.f32.mrb[0].mxu0
    %1743 = vmatprep.mubr.f32.mxu0 %v973
    %1744 = vmatmul.mubr.f32.gmra.mrb[0].mxu0 %v1172
    %v1745 = vpop.f32.mrb[0].mxu0
    %v1746 = vadd.f32 %v1361, %v1745
    %v1747 = vpop.f32.mrb[0].mxu0
    %1748 = vmatprep.mubr.f32.mxu0 %v974
    %1749 = vmatmul.mubr.f32.gmra.mrb[0].mxu0 %v1173
    %v1750 = vpop.f32.mrb[0].mxu0
    %v1751 = vadd.f32 %v1366, %v1750
    %v1752 = vpop.f32.mrb[0].mxu0
    %1753 = vmatprep.mubr.f32.mxu0 %v975
    %1754 = vmatmul.mubr.f32.gmra.mrb[0].mxu0 %v1174
    %v1755 = vpop.f32.mrb[0].mxu0
    %v1756 = vadd.f32 %v1371, %v1755
    %v1757 = vpop.f32.mrb[0].mxu0
    %1758 = vmatprep.mubr.f32.mxu0 %v976
    %1759 = vmatmul.mubr.f32.gmra.mrb[0].mxu0 %v1175
    %v1760 = vpop.f32.mrb[0].mxu0
    %v1761 = vadd.f32 %v1376, %v1760
    %v1762 = vpop.f32.mrb[0].mxu0
    %1763 = vmatprep.mubr.f32.mxu0 %v977
    %1764 = vmatmul.mubr.f32.gmra.mrb[0].mxu0 %v1176
    %v1765 = vpop.f32.mrb[0].mxu0
    %v1766 = vadd.f32 %v1381, %v1765
    %v1767 = vpop.f32.mrb[0].mxu0
    %1768 = vmatprep.mubr.f32.mxu0 %v978
    %1769 = vmatmul.mubr.f32.gmra.mrb[0].mxu0 %v1177
    %v1770 = vpop.f32.mrb[0].mxu0
    %v1771 = vadd.f32 %v1386, %v1770
    %v1772 = vpop.f32.mrb[0].mxu0
    %1773 = vmatprep.mubr.f32.mxu0 %v979
    %1774 = vmatmul.mubr.f32.gmra.mrb[0].mxu0 %v1178
    %v1775 = vpop.f32.mrb[0].mxu0
    %v1776 = vadd.f32 %v1391, %v1775
    %v1777 = vpop.f32.mrb[0].mxu0
    %1778 = vmatprep.mubr.f32.mxu0 %v980
    %1779 = vmatmul.mubr.f32.gmra.mrb[0].mxu0 %v1179
    %v1780 = vpop.f32.mrb[0].mxu0
    %v1781 = vadd.f32 %v1396, %v1780
    %v1782 = vpop.f32.mrb[0].mxu0
    %1783 = vmatprep.mubr.f32.mxu0 %v981
    %1784 = vmatmul.mubr.f32.gmra.mrb[0].mxu0 %v1180
    %v1785 = vpop.f32.mrb[0].mxu0
    %v1786 = vadd.f32 %v1401, %v1785
    %v1787 = vpop.f32.mrb[0].mxu0
    %1788 = vmatprep.mubr.f32.mxu0 %v982
    %1789 = vmatmul.mubr.f32.gmra.mrb[0].mxu0 %v1181
    %v1790 = vpop.f32.mrb[0].mxu0
    %v1791 = vadd.f32 %v1406, %v1790
    %v1792 = vpop.f32.mrb[0].mxu0
    %1793 = vmatprep.mubr.f32.mxu0 %v983
    %1794 = vmatmul.mubr.f32.gmra.mrb[0].mxu0 %v1182
    %v1795 = vpop.f32.mrb[0].mxu0
    %v1796 = vadd.f32 %v1411, %v1795
    %v1797 = vpop.f32.mrb[0].mxu0
    %1798 = vmatprep.mubr.f32.mxu0 %v984
    %1799 = vmatmul.mubr.f32.gmra.mrb[0].mxu0 %v1183
    %v1800 = vpop.f32.mrb[0].mxu0
    %v1801 = vadd.f32 %v1416, %v1800
    %v1802 = vpop.f32.mrb[0].mxu0
    %1803 = vmatprep.mubr.f32.mxu0 %v985
    %1804 = vmatmul.mubr.f32.gmra.mrb[0].mxu0 %v1184
    %v1805 = vpop.f32.mrb[0].mxu0
    %v1806 = vadd.f32 %v1421, %v1805
    %v1807 = vpop.f32.mrb[0].mxu0
    %1808 = vmatprep.mubr.f32.mxu0 %v986
    %1809 = vmatmul.mubr.f32.gmra.mrb[0].mxu0 %v1185
    %v1810 = vpop.f32.mrb[0].mxu0
    %v1811 = vadd.f32 %v1426, %v1810
    %v1812 = vpop.f32.mrb[0].mxu0
    %1813 = vmatprep.mubr.f32.mxu0 %v987
    %1814 = vmatmul.mubr.f32.gmra.mrb[0].mxu0 %v1186
    %v1815 = vpop.f32.mrb[0].mxu0
    %v1816 = vadd.f32 %v1431, %v1815
    %v1817 = vpop.f32.mrb[0].mxu0
    %1818 = vmatprep.mubr.f32.mxu0 %v988
    %1819 = vmatmul.mubr.f32.gmra.mrb[0].mxu0 %v1187
    %v1820 = vpop.f32.mrb[0].mxu0
    %v1821 = vadd.f32 %v1436, %v1820
    %v1822 = vpop.f32.mrb[0].mxu0
    %1823 = vmatprep.mubr.f32.mxu0 %v989
    %1824 = vmatmul.mubr.f32.gmra.mrb[0].mxu0 %v1188
    %v1825 = vpop.f32.mrb[0].mxu0
    %v1826 = vadd.f32 %v1441, %v1825
    %v1827 = vpop.f32.mrb[0].mxu0
    %1828 = vmatprep.mubr.f32.mxu0 %v990
    %1829 = vmatmul.mubr.f32.gmra.mrb[0].mxu0 %v1189
    %v1830 = vpop.f32.mrb[0].mxu0
    %v1831 = vadd.f32 %v1446, %v1830
    %v1832 = vpop.f32.mrb[0].mxu0
    %1833 = vmatprep.mubr.f32.mxu0 %v991
    %1834 = vmatmul.mubr.f32.gmra.mrb[0].mxu0 0.0
    %v1835 = vpop.f32.mrb[0].mxu0
    %v1836 = vadd.f32 %v1451, %v1835
    %v1837 = vpop.f32.mrb[0].mxu0
    %1838 = vmatprep.mubr.f32.mxu0 %v992
    %1839 = vmatmul.mubr.f32.gmra.mrb[0].mxu0 0.0
    %v1840 = vpop.f32.mrb[0].mxu0
    %v1841 = vadd.f32 %v1456, %v1840
    %v1842 = vpop.f32.mrb[0].mxu0
    %1843 = vmatprep.mubr.f32.mxu0 %v993
    %1844 = vmatmul.mubr.f32.gmra.mrb[0].mxu0 %v1192
    %v1845 = vpop.f32.mrb[0].mxu0
    %v1846 = vadd.f32 %v1461, %v1845
    %v1847 = vpop.f32.mrb[0].mxu0
    %1848 = vmatprep.mubr.f32.mxu0 %v994
    %1849 = vmatmul.mubr.f32.gmra.mrb[0].mxu0 %v1193
    %v1850 = vpop.f32.mrb[0].mxu0
    %v1851 = vadd.f32 %v1466, %v1850
    %v1852 = vpop.f32.mrb[0].mxu0
    %1853 = vmatprep.mubr.f32.mxu0 %v995
    %1854 = vmatmul.mubr.f32.gmra.mrb[0].mxu0 %v1194
    %v1855 = vpop.f32.mrb[0].mxu0
    %v1856 = vadd.f32 %v1471, %v1855
    %v1857 = vpop.f32.mrb[0].mxu0
    %1858 = vmatprep.mubr.f32.mxu0 %v996
    %1859 = vmatmul.mubr.f32.gmra.mrb[0].mxu0 %v1195
    %v1860 = vpop.f32.mrb[0].mxu0
    %v1861 = vadd.f32 %v1476, %v1860
    %v1862 = vpop.f32.mrb[0].mxu0
    %1863 = vmatprep.mubr.f32.mxu0 %v997
    %1864 = vmatmul.mubr.f32.gmra.mrb[0].mxu0 %v1196
    %v1865 = vpop.f32.mrb[0].mxu0
    %v1866 = vadd.f32 %v1481, %v1865
    %v1867 = vpop.f32.mrb[0].mxu0
    %1868 = vmatprep.mubr.f32.mxu0 %v998
    %1869 = vmatmul.mubr.f32.gmra.mrb[0].mxu0 %v1197
    %v1870 = vpop.f32.mrb[0].mxu0
    %v1871 = vadd.f32 %v1486, %v1870
    %v1872 = vpop.f32.mrb[0].mxu0
    %1873 = vmatprep.mubr.f32.mxu0 %v999
    %1874 = vmatmul.mubr.f32.gmra.mrb[0].mxu0 %v1198
    %v1875 = vpop.f32.mrb[0].mxu0
    %v1876 = vadd.f32 %v1491, %v1875
    %v1877 = vpop.f32.mrb[0].mxu0
    %1878 = vmatprep.mubr.f32.mxu0 %v1000
    %1879 = vmatmul.mubr.f32.gmra.mrb[0].mxu0 %v1199
    %v1880 = vpop.f32.mrb[0].mxu0
    %v1881 = vadd.f32 %v1496, %v1880
    %v1882 = vpop.f32.mrb[0].mxu0
    %1883 = vmatprep.mubr.f32.mxu0 %v1001
    %1884 = vmatmul.mubr.f32.gmra.mrb[0].mxu0 %v1200
    %v1885 = vpop.f32.mrb[0].mxu0
    %v1886 = vadd.f32 %v1501, %v1885
    %v1887 = vpop.f32.mrb[0].mxu0
    %1888 = vmatprep.mubr.f32.mxu0 %v1002
    %1889 = vmatmul.mubr.f32.gmra.mrb[0].mxu0 %v1201
    %v1890 = vpop.f32.mrb[0].mxu0
    %v1891 = vadd.f32 %v1506, %v1890
    %v1892 = vpop.f32.mrb[0].mxu0
    %1893 = vmatprep.mubr.f32.mxu0 %v1003
    %1894 = vmatmul.mubr.f32.gmra.mrb[0].mxu0 %v1202
    %v1895 = vpop.f32.mrb[0].mxu0
    %v1896 = vadd.f32 %v1511, %v1895
    %v1897 = vpop.f32.mrb[0].mxu0
    %1898 = vmatprep.mubr.f32.mxu0 %v1004
    %1899 = vmatmul.mubr.f32.gmra.mrb[0].mxu0 %v1203
    %v1900 = vpop.f32.mrb[0].mxu0
    %v1901 = vadd.f32 %v1516, %v1900
    %v1902 = vpop.f32.mrb[0].mxu0
    %1903 = vmatprep.mubr.f32.mxu0 %v1005
    %1904 = vmatmul.mubr.f32.gmra.mrb[0].mxu0 %v1204
    %v1905 = vpop.f32.mrb[0].mxu0
    %v1906 = vadd.f32 %v1521, %v1905
    %v1907 = vpop.f32.mrb[0].mxu0
    %1908 = vmatprep.mubr.f32.mxu0 %v1006
    %1909 = vmatmul.mubr.f32.gmra.mrb[0].mxu0 %v1205
    %v1910 = vpop.f32.mrb[0].mxu0
    %v1911 = vadd.f32 %v1526, %v1910
    %v1912 = vpop.f32.mrb[0].mxu0
    %1913 = vmatprep.mubr.f32.mxu0 %v1007
    %1914 = vmatmul.mubr.f32.gmra.mrb[0].mxu0 %v1206
    %v1915 = vpop.f32.mrb[0].mxu0
    %v1916 = vadd.f32 %v1531, %v1915
    %v1917 = vpop.f32.mrb[0].mxu0
    %1918 = vmatprep.mubr.f32.mxu0 %v1008
    %1919 = vmatmul.mubr.f32.gmra.mrb[0].mxu0 %v1207
    %v1920 = vpop.f32.mrb[0].mxu0
    %v1921 = vadd.f32 %v1536, %v1920
    %v1922 = vpop.f32.mrb[0].mxu0
    %1923 = vmatprep.mubr.f32.mxu0 %v1009
    %1924 = vmatmul.mubr.f32.gmra.mrb[0].mxu0 %v1208
    %v1925 = vpop.f32.mrb[0].mxu0
    %v1926 = vadd.f32 %v1541, %v1925
    %v1927 = vpop.f32.mrb[0].mxu0
    %1928 = vmatprep.mubr.f32.mxu0 %v1010
    %1929 = vmatmul.mubr.f32.gmra.mrb[0].mxu0 %v1209
    %v1930 = vpop.f32.mrb[0].mxu0
    %v1931 = vadd.f32 %v1546, %v1930
    %v1932 = vpop.f32.mrb[0].mxu0
    %1933 = vmatprep.mubr.f32.mxu0 %v1011
    %1934 = vmatmul.mubr.f32.gmra.mrb[0].mxu0 %v1210
    %v1935 = vpop.f32.mrb[0].mxu0
    %v1936 = vadd.f32 %v1551, %v1935
    %v1937 = vpop.f32.mrb[0].mxu0
    %1938 = vmatprep.mubr.f32.mxu0 %v1012
    %1939 = vmatmul.mubr.f32.gmra.mrb[0].mxu0 %v1211
    %v1940 = vpop.f32.mrb[0].mxu0
    %v1941 = vadd.f32 %v1556, %v1940
    %v1942 = vpop.f32.mrb[0].mxu0
    %1943 = vmatprep.mubr.f32.mxu0 %v1013
    %1944 = vmatmul.mubr.f32.gmra.mrb[0].mxu0 %v1212
    %v1945 = vpop.f32.mrb[0].mxu0
    %v1946 = vadd.f32 %v1561, %v1945
    %v1947 = vpop.f32.mrb[0].mxu0
    %1948 = vmatprep.mubr.f32.mxu0 %v1014
    %1949 = vmatmul.mubr.f32.gmra.mrb[0].mxu0 %v1213
    %v1950 = vpop.f32.mrb[0].mxu0
    %v1951 = vadd.f32 %v1566, %v1950
    %v1952 = vpop.f32.mrb[0].mxu0
    %1953 = vmatprep.mubr.f32.mxu0 %v1015
    %1954 = vmatmul.mubr.f32.gmra.mrb[0].mxu0 %v1214
    %v1955 = vpop.f32.mrb[0].mxu0
    %v1956 = vadd.f32 %v1571, %v1955
    %v1957 = vpop.f32.mrb[0].mxu0
    %1958 = vmatprep.mubr.f32.mxu0 %v1016
    %1959 = vmatmul.mubr.f32.gmra.mrb[0].mxu0 %v1215
    %v1960 = vpop.f32.mrb[0].mxu0
    %v1961 = vadd.f32 %v1576, %v1960
    %v1962 = vpop.f32.mrb[0].mxu0
    %1963 = vmatprep.mubr.f32.mxu0 %v1017
    %1964 = vmatmul.mubr.f32.gmra.mrb[0].mxu0 %v1216
    %v1965 = vpop.f32.mrb[0].mxu0
    %v1966 = vadd.f32 %v1581, %v1965
    %v1967 = vpop.f32.mrb[0].mxu0
    %1968 = vmatprep.mubr.f32.mxu0 %v1018
    %1969 = vmatmul.mubr.f32.gmra.mrb[0].mxu0 %v1217
    %v1970 = vpop.f32.mrb[0].mxu0
    %v1971 = vadd.f32 %v1586, %v1970
    %v1972 = vpop.f32.mrb[0].mxu0
    %1973 = vmatprep.mubr.f32.mxu0 %v1019
    %1974 = vmatmul.mubr.f32.gmra.mrb[0].mxu0 %v1218
    %v1975 = vpop.f32.mrb[0].mxu0
    %v1976 = vadd.f32 %v1591, %v1975
    %v1977 = vpop.f32.mrb[0].mxu0
    %1978 = vmatprep.mubr.f32.mxu0 %v1020
    %1979 = vmatmul.mubr.f32.gmra.mrb[0].mxu0 %v1219
    %v1980 = vpop.f32.mrb[0].mxu0
    %v1981 = vadd.f32 %v1596, %v1980
    %v1982 = vpop.f32.mrb[0].mxu0
    %1983 = vmatprep.mubr.f32.mxu0 %v1021
    %1984 = vmatmul.mubr.f32.gmra.mrb[0].mxu0 %v1220
    %v1985 = vpop.f32.mrb[0].mxu0
    %v1986 = vadd.f32 %v1601, %v1985
    %v1987 = vpop.f32.mrb[0].mxu0
    %1988 = vmatprep.mubr.f32.mxu0 %v1022
    %1989 = vmatmul.mubr.f32.gmra.mrb[0].mxu0 %v1221
    %v1990 = vpop.f32.mrb[0].mxu0
    %v1991 = vadd.f32 %v1606, %v1990
    %v1992 = vpop.f32.mrb[0].mxu0
    %1993 = vdwg.mxu0
    %1994 = vmatprep.subr.mxu0 0.0
    %1995 = vmatpush1.msra.mxu0 %v742
    %1996 = vmatprep.subr.mxu0 0.0
    %1997 = vmatpush1.msra.mxu0 %v743
    %1998 = vmatprep.subr.mxu0 0.0
    %1999 = vmatpush1.msra.mxu0 %v744
    %2000 = vmatprep.subr.mxu0 0.0
    %2001 = vmatpush1.msra.mxu0 %v745
    %2002 = vmatprep.subr.mxu0 0.0
    %2003 = vmatpush1.msra.mxu0 %v746
    %2004 = vmatprep.subr.mxu0 0.0
    %2005 = vmatpush1.msra.mxu0 %v747
    %2006 = vmatprep.subr.mxu0 0.0
    %2007 = vmatpush1.msra.mxu0 %v748
    %2008 = vmatprep.subr.mxu0 0.0
    %2009 = vmatpush1.msra.mxu0 %v749
    %2010 = vmatprep.subr.mxu0 0.0
    %2011 = vmatpush1.msra.mxu0 %v750
    %2012 = vmatprep.subr.mxu0 0.0
    %2013 = vmatpush1.msra.mxu0 %v751
    %2014 = vmatprep.subr.mxu0 0.0
    %2015 = vmatpush1.msra.mxu0 %v752
    %2016 = vmatprep.subr.mxu0 0.0
    %2017 = vmatpush1.msra.mxu0 %v753
    %2018 = vmatprep.subr.mxu0 0.0
    %2019 = vmatpush1.msra.mxu0 %v754
    %2020 = vmatprep.subr.mxu0 0.0
    %2021 = vmatpush1.msra.mxu0 %v755
    %2022 = vmatprep.subr.mxu0 0.0
    %2023 = vmatpush1.msra.mxu0 %v756
    %2024 = vmatprep.subr.mxu0 0.0
    %2025 = vmatpush1.msra.mxu0 %v757
    %2026 = vmatprep.subr.mxu0 0.0
    %2027 = vmatpush1.msra.mxu0 %v758
    %2028 = vmatprep.subr.mxu0 0.0
    %2029 = vmatpush1.msra.mxu0 %v759
    %2030 = vmatprep.subr.mxu0 0.0
    %2031 = vmatpush1.msra.mxu0 %v760
    %2032 = vmatprep.subr.mxu0 0.0
    %2033 = vmatpush1.msra.mxu0 %v761
    %2034 = vmatprep.subr.mxu0 0.0
    %2035 = vmatpush1.msra.mxu0 %v762
    %2036 = vmatprep.subr.mxu0 0.0
    %2037 = vmatpush1.msra.mxu0 %v763
    %2038 = vmatprep.subr.mxu0 0.0
    %2039 = vmatpush1.msra.mxu0 %v764
    %2040 = vmatprep.subr.mxu0 0.0
    %2041 = vmatpush1.msra.mxu0 %v765
    %2042 = vmatprep.subr.mxu0 0.0
    %2043 = vmatpush1.msra.mxu0 %v766
    %2044 = vmatprep.subr.mxu0 0.0
    %2045 = vmatpush1.msra.mxu0 %v767
    %2046 = vmatprep.subr.mxu0 0.0
    %2047 = vmatpush1.msra.mxu0 %v768
    %2048 = vmatprep.subr.mxu0 0.0
    %2049 = vmatpush1.msra.mxu0 %v769
    %2050 = vmatprep.subr.mxu0 0.0
    %2051 = vmatpush1.msra.mxu0 %v770
    %2052 = vmatprep.subr.mxu0 0.0
    %2053 = vmatpush1.msra.mxu0 %v771
    %2054 = vmatprep.subr.mxu0 0.0
    %2055 = vmatpush1.msra.mxu0 %v772
    %2056 = vmatprep.subr.mxu0 0.0
    %2057 = vmatpush1.msra.mxu0 %v773
    %2058 = vmatprep.mubr.f32.mxu0 %v1160
    %2059 = vmatmul.mubr.f32.gmra.mrb[0].mxu0 %v614
    %v2060 = vpop.f32.mrb[0].mxu0
    %v2061 = vadd.f32 %v1676, %v2060
    %v2062 = vpop.f32.mrb[0].mxu0
    %2063 = vmatprep.mubr.f32.mxu0 %v1161
    %2064 = vmatmul.mubr.f32.gmra.mrb[0].mxu0 %v615
    %v2065 = vpop.f32.mrb[0].mxu0
    %v2066 = vadd.f32 %v1681, %v2065
    %v2067 = vpop.f32.mrb[0].mxu0
    %2068 = vmatprep.mubr.f32.mxu0 %v1162
    %2069 = vmatmul.mubr.f32.gmra.mrb[0].mxu0 %v616
    %v2070 = vpop.f32.mrb[0].mxu0
    %v2071 = vadd.f32 %v1686, %v2070
    %v2072 = vpop.f32.mrb[0].mxu0
    %2073 = vmatprep.mubr.f32.mxu0 %v1163
    %2074 = vmatmul.mubr.f32.gmra.mrb[0].mxu0 %v617
    %v2075 = vpop.f32.mrb[0].mxu0
    %v2076 = vadd.f32 %v1691, %v2075
    %v2077 = vpop.f32.mrb[0].mxu0
    %2078 = vmatprep.mubr.f32.mxu0 %v1164
    %2079 = vmatmul.mubr.f32.gmra.mrb[0].mxu0 %v618
    %v2080 = vpop.f32.mrb[0].mxu0
    %v2081 = vadd.f32 %v1696, %v2080
    %v2082 = vpop.f32.mrb[0].mxu0
    %2083 = vmatprep.mubr.f32.mxu0 %v1165
    %2084 = vmatmul.mubr.f32.gmra.mrb[0].mxu0 %v619
    %v2085 = vpop.f32.mrb[0].mxu0
    %v2086 = vadd.f32 %v1701, %v2085
    %v2087 = vpop.f32.mrb[0].mxu0
    %2088 = vmatprep.mubr.f32.mxu0 %v1166
    %2089 = vmatmul.mubr.f32.gmra.mrb[0].mxu0 %v620
    %v2090 = vpop.f32.mrb[0].mxu0
    %v2091 = vadd.f32 %v1706, %v2090
    %v2092 = vpop.f32.mrb[0].mxu0
    %2093 = vmatprep.mubr.f32.mxu0 %v1167
    %2094 = vmatmul.mubr.f32.gmra.mrb[0].mxu0 %v621
    %v2095 = vpop.f32.mrb[0].mxu0
    %v2096 = vadd.f32 %v1711, %v2095
    %v2097 = vpop.f32.mrb[0].mxu0
    %2098 = vmatprep.mubr.f32.mxu0 %v1168
    %2099 = vmatmul.mubr.f32.gmra.mrb[0].mxu0 %v622
    %v2100 = vpop.f32.mrb[0].mxu0
    %v2101 = vadd.f32 %v1716, %v2100
    %v2102 = vpop.f32.mrb[0].mxu0
    %2103 = vmatprep.mubr.f32.mxu0 %v1169
    %2104 = vmatmul.mubr.f32.gmra.mrb[0].mxu0 %v623
    %v2105 = vpop.f32.mrb[0].mxu0
    %v2106 = vadd.f32 %v1721, %v2105
    %v2107 = vpop.f32.mrb[0].mxu0
    %2108 = vmatprep.mubr.f32.mxu0 %v1170
    %2109 = vmatmul.mubr.f32.gmra.mrb[0].mxu0 %v624
    %v2110 = vpop.f32.mrb[0].mxu0
    %v2111 = vadd.f32 %v1726, %v2110
    %v2112 = vpop.f32.mrb[0].mxu0
    %2113 = vmatprep.mubr.f32.mxu0 %v1171
    %2114 = vmatmul.mubr.f32.gmra.mrb[0].mxu0 %v625
    %v2115 = vpop.f32.mrb[0].mxu0
    %v2116 = vadd.f32 %v1731, %v2115
    %v2117 = vpop.f32.mrb[0].mxu0
    %2118 = vmatprep.mubr.f32.mxu0 %v1172
    %2119 = vmatmul.mubr.f32.gmra.mrb[0].mxu0 %v626
    %v2120 = vpop.f32.mrb[0].mxu0
    %v2121 = vadd.f32 %v1736, %v2120
    %v2122 = vpop.f32.mrb[0].mxu0
    %2123 = vmatprep.mubr.f32.mxu0 %v1173
    %2124 = vmatmul.mubr.f32.gmra.mrb[0].mxu0 %v627
    %v2125 = vpop.f32.mrb[0].mxu0
    %v2126 = vadd.f32 %v1741, %v2125
    %v2127 = vpop.f32.mrb[0].mxu0
    %2128 = vmatprep.mubr.f32.mxu0 %v1174
    %2129 = vmatmul.mubr.f32.gmra.mrb[0].mxu0 %v628
    %v2130 = vpop.f32.mrb[0].mxu0
    %v2131 = vadd.f32 %v1746, %v2130
    %v2132 = vpop.f32.mrb[0].mxu0
    %2133 = vmatprep.mubr.f32.mxu0 %v1175
    %2134 = vmatmul.mubr.f32.gmra.mrb[0].mxu0 %v629
    %v2135 = vpop.f32.mrb[0].mxu0
    %v2136 = vadd.f32 %v1751, %v2135
    %v2137 = vpop.f32.mrb[0].mxu0
    %2138 = vmatprep.mubr.f32.mxu0 %v1176
    %2139 = vmatmul.mubr.f32.gmra.mrb[0].mxu0 %v630
    %v2140 = vpop.f32.mrb[0].mxu0
    %v2141 = vadd.f32 %v1756, %v2140
    %v2142 = vpop.f32.mrb[0].mxu0
    %2143 = vmatprep.mubr.f32.mxu0 %v1177
    %2144 = vmatmul.mubr.f32.gmra.mrb[0].mxu0 %v631
    %v2145 = vpop.f32.mrb[0].mxu0
    %v2146 = vadd.f32 %v1761, %v2145
    %v2147 = vpop.f32.mrb[0].mxu0
    %2148 = vmatprep.mubr.f32.mxu0 %v1178
    %2149 = vmatmul.mubr.f32.gmra.mrb[0].mxu0 %v632
    %v2150 = vpop.f32.mrb[0].mxu0
    %v2151 = vadd.f32 %v1766, %v2150
    %v2152 = vpop.f32.mrb[0].mxu0
    %2153 = vmatprep.mubr.f32.mxu0 %v1179
    %2154 = vmatmul.mubr.f32.gmra.mrb[0].mxu0 %v633
    %v2155 = vpop.f32.mrb[0].mxu0
    %v2156 = vadd.f32 %v1771, %v2155
    %v2157 = vpop.f32.mrb[0].mxu0
    %2158 = vmatprep.mubr.f32.mxu0 %v1180
    %2159 = vmatmul.mubr.f32.gmra.mrb[0].mxu0 %v634
    %v2160 = vpop.f32.mrb[0].mxu0
    %v2161 = vadd.f32 %v1776, %v2160
    %v2162 = vpop.f32.mrb[0].mxu0
    %2163 = vmatprep.mubr.f32.mxu0 %v1181
    %2164 = vmatmul.mubr.f32.gmra.mrb[0].mxu0 %v635
    %v2165 = vpop.f32.mrb[0].mxu0
    %v2166 = vadd.f32 %v1781, %v2165
    %v2167 = vpop.f32.mrb[0].mxu0
    %2168 = vmatprep.mubr.f32.mxu0 %v1182
    %2169 = vmatmul.mubr.f32.gmra.mrb[0].mxu0 %v636
    %v2170 = vpop.f32.mrb[0].mxu0
    %v2171 = vadd.f32 %v1786, %v2170
    %v2172 = vpop.f32.mrb[0].mxu0
    %2173 = vmatprep.mubr.f32.mxu0 %v1183
    %2174 = vmatmul.mubr.f32.gmra.mrb[0].mxu0 %v637
    %v2175 = vpop.f32.mrb[0].mxu0
    %v2176 = vadd.f32 %v1791, %v2175
    %v2177 = vpop.f32.mrb[0].mxu0
    %2178 = vmatprep.mubr.f32.mxu0 %v1184
    %2179 = vmatmul.mubr.f32.gmra.mrb[0].mxu0 %v638
    %v2180 = vpop.f32.mrb[0].mxu0
    %v2181 = vadd.f32 %v1796, %v2180
    %v2182 = vpop.f32.mrb[0].mxu0
    %2183 = vmatprep.mubr.f32.mxu0 %v1185
    %2184 = vmatmul.mubr.f32.gmra.mrb[0].mxu0 %v639
    %v2185 = vpop.f32.mrb[0].mxu0
    %v2186 = vadd.f32 %v1801, %v2185
    %v2187 = vpop.f32.mrb[0].mxu0
    %2188 = vmatprep.mubr.f32.mxu0 %v1186
    %2189 = vmatmul.mubr.f32.gmra.mrb[0].mxu0 %v640
    %v2190 = vpop.f32.mrb[0].mxu0
    %v2191 = vadd.f32 %v1806, %v2190
    %v2192 = vpop.f32.mrb[0].mxu0
    %2193 = vmatprep.mubr.f32.mxu0 %v1187
    %2194 = vmatmul.mubr.f32.gmra.mrb[0].mxu0 %v641
    %v2195 = vpop.f32.mrb[0].mxu0
    %v2196 = vadd.f32 %v1811, %v2195
    %v2197 = vpop.f32.mrb[0].mxu0
    %2198 = vmatprep.mubr.f32.mxu0 %v1188
    %2199 = vmatmul.mubr.f32.gmra.mrb[0].mxu0 %v642
    %v2200 = vpop.f32.mrb[0].mxu0
    %v2201 = vadd.f32 %v1816, %v2200
    %v2202 = vpop.f32.mrb[0].mxu0
    %2203 = vmatprep.mubr.f32.mxu0 %v1189
    %2204 = vmatmul.mubr.f32.gmra.mrb[0].mxu0 %v643
    %v2205 = vpop.f32.mrb[0].mxu0
    %v2206 = vadd.f32 %v1821, %v2205
    %v2207 = vpop.f32.mrb[0].mxu0
    %2208 = vmatprep.mubr.f32.mxu0 %v1190
    %2209 = vmatmul.mubr.f32.gmra.mrb[0].mxu0 %v644
    %v2210 = vpop.f32.mrb[0].mxu0
    %v2211 = vadd.f32 %v1826, %v2210
    %v2212 = vpop.f32.mrb[0].mxu0
    %2213 = vmatprep.mubr.f32.mxu0 %v1191
    %2214 = vmatmul.mubr.f32.gmra.mrb[0].mxu0 %v645
    %v2215 = vpop.f32.mrb[0].mxu0
    %v2216 = vadd.f32 %v1831, %v2215
    %v2217 = vpop.f32.mrb[0].mxu0
    %2218 = vmatprep.mubr.f32.mxu0 %v1192
    %2219 = vmatmul.mubr.f32.gmra.mrb[0].mxu0 %v646
    %v2220 = vpop.f32.mrb[0].mxu0
    %v2221 = vadd.f32 %v1836, %v2220
    %v2222 = vpop.f32.mrb[0].mxu0
    %2223 = vmatprep.mubr.f32.mxu0 %v1193
    %2224 = vmatmul.mubr.f32.gmra.mrb[0].mxu0 %v647
    %v2225 = vpop.f32.mrb[0].mxu0
    %v2226 = vadd.f32 %v1841, %v2225
    %v2227 = vpop.f32.mrb[0].mxu0
    %2228 = vmatprep.mubr.f32.mxu0 %v1194
    %2229 = vmatmul.mubr.f32.gmra.mrb[0].mxu0 %v648
    %v2230 = vpop.f32.mrb[0].mxu0
    %v2231 = vadd.f32 %v1846, %v2230
    %v2232 = vpop.f32.mrb[0].mxu0
    %2233 = vmatprep.mubr.f32.mxu0 %v1195
    %2234 = vmatmul.mubr.f32.gmra.mrb[0].mxu0 %v649
    %v2235 = vpop.f32.mrb[0].mxu0
    %v2236 = vadd.f32 %v1851, %v2235
    %v2237 = vpop.f32.mrb[0].mxu0
    %2238 = vmatprep.mubr.f32.mxu0 %v1196
    %2239 = vmatmul.mubr.f32.gmra.mrb[0].mxu0 %v650
    %v2240 = vpop.f32.mrb[0].mxu0
    %v2241 = vadd.f32 %v1856, %v2240
    %v2242 = vpop.f32.mrb[0].mxu0
    %2243 = vmatprep.mubr.f32.mxu0 %v1197
    %2244 = vmatmul.mubr.f32.gmra.mrb[0].mxu0 %v651
    %v2245 = vpop.f32.mrb[0].mxu0
    %v2246 = vadd.f32 %v1861, %v2245
    %v2247 = vpop.f32.mrb[0].mxu0
    %2248 = vmatprep.mubr.f32.mxu0 %v1198
    %2249 = vmatmul.mubr.f32.gmra.mrb[0].mxu0 %v652
    %v2250 = vpop.f32.mrb[0].mxu0
    %v2251 = vadd.f32 %v1866, %v2250
    %v2252 = vpop.f32.mrb[0].mxu0
    %2253 = vmatprep.mubr.f32.mxu0 %v1199
    %2254 = vmatmul.mubr.f32.gmra.mrb[0].mxu0 %v653
    %v2255 = vpop.f32.mrb[0].mxu0
    %v2256 = vadd.f32 %v1871, %v2255
    %v2257 = vpop.f32.mrb[0].mxu0
    %2258 = vmatprep.mubr.f32.mxu0 %v1200
    %2259 = vmatmul.mubr.f32.gmra.mrb[0].mxu0 %v654
    %v2260 = vpop.f32.mrb[0].mxu0
    %v2261 = vadd.f32 %v1876, %v2260
    %v2262 = vpop.f32.mrb[0].mxu0
    %2263 = vmatprep.mubr.f32.mxu0 %v1201
    %2264 = vmatmul.mubr.f32.gmra.mrb[0].mxu0 %v655
    %v2265 = vpop.f32.mrb[0].mxu0
    %v2266 = vadd.f32 %v1881, %v2265
    %v2267 = vpop.f32.mrb[0].mxu0
    %2268 = vmatprep.mubr.f32.mxu0 %v1202
    %2269 = vmatmul.mubr.f32.gmra.mrb[0].mxu0 %v656
    %v2270 = vpop.f32.mrb[0].mxu0
    %v2271 = vadd.f32 %v1886, %v2270
    %v2272 = vpop.f32.mrb[0].mxu0
    %2273 = vmatprep.mubr.f32.mxu0 %v1203
    %2274 = vmatmul.mubr.f32.gmra.mrb[0].mxu0 %v657
    %v2275 = vpop.f32.mrb[0].mxu0
    %v2276 = vadd.f32 %v1891, %v2275
    %v2277 = vpop.f32.mrb[0].mxu0
    %2278 = vmatprep.mubr.f32.mxu0 %v1204
    %2279 = vmatmul.mubr.f32.gmra.mrb[0].mxu0 %v658
    %v2280 = vpop.f32.mrb[0].mxu0
    %v2281 = vadd.f32 %v1896, %v2280
    %v2282 = vpop.f32.mrb[0].mxu0
    %2283 = vmatprep.mubr.f32.mxu0 %v1205
    %2284 = vmatmul.mubr.f32.gmra.mrb[0].mxu0 %v659
    %v2285 = vpop.f32.mrb[0].mxu0
    %v2286 = vadd.f32 %v1901, %v2285
    %v2287 = vpop.f32.mrb[0].mxu0
    %2288 = vmatprep.mubr.f32.mxu0 %v1206
    %2289 = vmatmul.mubr.f32.gmra.mrb[0].mxu0 %v660
    %v2290 = vpop.f32.mrb[0].mxu0
    %v2291 = vadd.f32 %v1906, %v2290
    %v2292 = vpop.f32.mrb[0].mxu0
    %2293 = vmatprep.mubr.f32.mxu0 %v1207
    %2294 = vmatmul.mubr.f32.gmra.mrb[0].mxu0 %v661
    %v2295 = vpop.f32.mrb[0].mxu0
    %v2296 = vadd.f32 %v1911, %v2295
    %v2297 = vpop.f32.mrb[0].mxu0
    %2298 = vmatprep.mubr.f32.mxu0 %v1208
    %2299 = vmatmul.mubr.f32.gmra.mrb[0].mxu0 %v662
    %v2300 = vpop.f32.mrb[0].mxu0
    %v2301 = vadd.f32 %v1916, %v2300
    %v2302 = vpop.f32.mrb[0].mxu0
    %2303 = vmatprep.mubr.f32.mxu0 %v1209
    %2304 = vmatmul.mubr.f32.gmra.mrb[0].mxu0 %v663
    %v2305 = vpop.f32.mrb[0].mxu0
    %v2306 = vadd.f32 %v1921, %v2305
    %v2307 = vpop.f32.mrb[0].mxu0
    %2308 = vmatprep.mubr.f32.mxu0 %v1210
    %2309 = vmatmul.mubr.f32.gmra.mrb[0].mxu0 %v664
    %v2310 = vpop.f32.mrb[0].mxu0
    %v2311 = vadd.f32 %v1926, %v2310
    %v2312 = vpop.f32.mrb[0].mxu0
    %2313 = vmatprep.mubr.f32.mxu0 %v1211
    %2314 = vmatmul.mubr.f32.gmra.mrb[0].mxu0 %v665
    %v2315 = vpop.f32.mrb[0].mxu0
    %v2316 = vadd.f32 %v1931, %v2315
    %v2317 = vpop.f32.mrb[0].mxu0
    %2318 = vmatprep.mubr.f32.mxu0 %v1212
    %2319 = vmatmul.mubr.f32.gmra.mrb[0].mxu0 %v666
    %v2320 = vpop.f32.mrb[0].mxu0
    %v2321 = vadd.f32 %v1936, %v2320
    %v2322 = vpop.f32.mrb[0].mxu0
    %2323 = vmatprep.mubr.f32.mxu0 %v1213
    %2324 = vmatmul.mubr.f32.gmra.mrb[0].mxu0 %v667
    %v2325 = vpop.f32.mrb[0].mxu0
    %v2326 = vadd.f32 %v1941, %v2325
    %v2327 = vpop.f32.mrb[0].mxu0
    %2328 = vmatprep.mubr.f32.mxu0 %v1214
    %2329 = vmatmul.mubr.f32.gmra.mrb[0].mxu0 %v668
    %v2330 = vpop.f32.mrb[0].mxu0
    %v2331 = vadd.f32 %v1946, %v2330
    %v2332 = vpop.f32.mrb[0].mxu0
    %2333 = vmatprep.mubr.f32.mxu0 %v1215
    %2334 = vmatmul.mubr.f32.gmra.mrb[0].mxu0 %v669
    %v2335 = vpop.f32.mrb[0].mxu0
    %v2336 = vadd.f32 %v1951, %v2335
    %v2337 = vpop.f32.mrb[0].mxu0
    %2338 = vmatprep.mubr.f32.mxu0 %v1216
    %2339 = vmatmul.mubr.f32.gmra.mrb[0].mxu0 %v670
    %v2340 = vpop.f32.mrb[0].mxu0
    %v2341 = vadd.f32 %v1956, %v2340
    %v2342 = vpop.f32.mrb[0].mxu0
    %2343 = vmatprep.mubr.f32.mxu0 %v1217
    %2344 = vmatmul.mubr.f32.gmra.mrb[0].mxu0 %v671
    %v2345 = vpop.f32.mrb[0].mxu0
    %v2346 = vadd.f32 %v1961, %v2345
    %v2347 = vpop.f32.mrb[0].mxu0
    %2348 = vmatprep.mubr.f32.mxu0 %v1218
    %2349 = vmatmul.mubr.f32.gmra.mrb[0].mxu0 %v672
    %v2350 = vpop.f32.mrb[0].mxu0
    %v2351 = vadd.f32 %v1966, %v2350
    %v2352 = vpop.f32.mrb[0].mxu0
    %2353 = vmatprep.mubr.f32.mxu0 %v1219
    %2354 = vmatmul.mubr.f32.gmra.mrb[0].mxu0 %v673
    %v2355 = vpop.f32.mrb[0].mxu0
    %v2356 = vadd.f32 %v1971, %v2355
    %v2357 = vpop.f32.mrb[0].mxu0
    %2358 = vmatprep.mubr.f32.mxu0 %v1220
    %2359 = vmatmul.mubr.f32.gmra.mrb[0].mxu0 %v674
    %v2360 = vpop.f32.mrb[0].mxu0
    %v2361 = vadd.f32 %v1976, %v2360
    %v2362 = vpop.f32.mrb[0].mxu0
    %2363 = vmatprep.mubr.f32.mxu0 %v1221
    %2364 = vmatmul.mubr.f32.gmra.mrb[0].mxu0 %v675
    %v2365 = vpop.f32.mrb[0].mxu0
    %v2366 = vadd.f32 %v1981, %v2365
    %v2367 = vpop.f32.mrb[0].mxu0
    %2368 = vmatprep.mubr.f32.mxu0 %v1222
    %2369 = vmatmul.mubr.f32.gmra.mrb[0].mxu0 %v676
    %v2370 = vpop.f32.mrb[0].mxu0
    %v2371 = vadd.f32 %v1986, %v2370
    %v2372 = vpop.f32.mrb[0].mxu0
    %2373 = vmatprep.mubr.f32.mxu0 %v1223
    %2374 = vmatmul.mubr.f32.gmra.mrb[0].mxu0 %v677
    %v2375 = vpop.f32.mrb[0].mxu0
    %v2376 = vadd.f32 %v1991, %v2375
    %v2377 = vpop.f32.mrb[0].mxu0
    %2378 = vdwg.mxu0
    %2379 = vmatprep.subr.mxu0 0.0
    %2380 = vmatpush1.msra.mxu0 %v774
    %2381 = vmatprep.subr.mxu0 0.0
    %2382 = vmatpush1.msra.mxu0 %v775
    %2383 = vmatprep.subr.mxu0 0.0
    %2384 = vmatpush1.msra.mxu0 %v776
    %2385 = vmatprep.subr.mxu0 0.0
    %2386 = vmatpush1.msra.mxu0 %v777
    %2387 = vmatprep.subr.mxu0 0.0
    %2388 = vmatpush1.msra.mxu0 %v778
    %2389 = vmatprep.subr.mxu0 0.0
    %2390 = vmatpush1.msra.mxu0 %v779
    %2391 = vmatprep.subr.mxu0 0.0
    %2392 = vmatpush1.msra.mxu0 %v780
    %2393 = vmatprep.subr.mxu0 0.0
    %2394 = vmatpush1.msra.mxu0 %v781
    %2395 = vmatprep.subr.mxu0 0.0
    %2396 = vmatpush1.msra.mxu0 %v782
    %2397 = vmatprep.subr.mxu0 0.0
    %2398 = vmatpush1.msra.mxu0 %v783
    %2399 = vmatprep.subr.mxu0 0.0
    %2400 = vmatpush1.msra.mxu0 %v784
    %2401 = vmatprep.subr.mxu0 0.0
    %2402 = vmatpush1.msra.mxu0 %v785
    %2403 = vmatprep.subr.mxu0 0.0
    %2404 = vmatpush1.msra.mxu0 %v786
    %2405 = vmatprep.subr.mxu0 0.0
    %2406 = vmatpush1.msra.mxu0 %v787
    %2407 = vmatprep.subr.mxu0 0.0
    %2408 = vmatpush1.msra.mxu0 %v788
    %2409 = vmatprep.subr.mxu0 0.0
    %2410 = vmatpush1.msra.mxu0 %v789
    %2411 = vmatprep.subr.mxu0 0.0
    %2412 = vmatpush1.msra.mxu0 %v790
    %2413 = vmatprep.subr.mxu0 0.0
    %2414 = vmatpush1.msra.mxu0 %v791
    %2415 = vmatprep.subr.mxu0 0.0
    %2416 = vmatpush1.msra.mxu0 %v792
    %2417 = vmatprep.subr.mxu0 0.0
    %2418 = vmatpush1.msra.mxu0 %v793
    %2419 = vmatprep.subr.mxu0 0.0
    %2420 = vmatpush1.msra.mxu0 %v794
    %2421 = vmatprep.subr.mxu0 0.0
    %2422 = vmatpush1.msra.mxu0 %v795
    %2423 = vmatprep.subr.mxu0 0.0
    %2424 = vmatpush1.msra.mxu0 %v796
    %2425 = vmatprep.subr.mxu0 0.0
    %2426 = vmatpush1.msra.mxu0 %v797
    %2427 = vmatprep.subr.mxu0 0.0
    %2428 = vmatpush1.msra.mxu0 %v798
    %2429 = vmatprep.subr.mxu0 0.0
    %2430 = vmatpush1.msra.mxu0 %v799
    %2431 = vmatprep.subr.mxu0 0.0
    %2432 = vmatpush1.msra.mxu0 %v800
    %2433 = vmatprep.subr.mxu0 0.0
    %2434 = vmatpush1.msra.mxu0 %v801
    %2435 = vmatprep.subr.mxu0 0.0
    %2436 = vmatpush1.msra.mxu0 %v802
    %2437 = vmatprep.subr.mxu0 0.0
    %2438 = vmatpush1.msra.mxu0 %v803
    %2439 = vmatprep.subr.mxu0 0.0
    %2440 = vmatpush1.msra.mxu0 %v804
    %2441 = vmatprep.subr.mxu0 0.0
    %2442 = vmatpush1.msra.mxu0 %v805
    %2443 = vmatprep.mubr.f32.mxu0 %v616
    %2444 = vmatmul.mubr.f32.gmra.mrb[0].mxu0 %v961
    %v2445 = vpop.f32.mrb[0].mxu0
    %v2446 = vadd.f32 %v2061, %v2445
    %v2447 = vpop.f32.mrb[0].mxu0
    %2448 = vmatprep.mubr.f32.mxu0 %v617
    %2449 = vmatmul.mubr.f32.gmra.mrb[0].mxu0 %v962
    %v2450 = vpop.f32.mrb[0].mxu0
    %v2451 = vadd.f32 %v2066, %v2450
    %v2452 = vpop.f32.mrb[0].mxu0
    %2453 = vmatprep.mubr.f32.mxu0 %v618
    %2454 = vmatmul.mubr.f32.gmra.mrb[0].mxu0 %v963
    %v2455 = vpop.f32.mrb[0].mxu0
    %v2456 = vadd.f32 %v2071, %v2455
    %v2457 = vpop.f32.mrb[0].mxu0
    %2458 = vmatprep.mubr.f32.mxu0 %v619
    %2459 = vmatmul.mubr.f32.gmra.mrb[0].mxu0 %v964
    %v2460 = vpop.f32.mrb[0].mxu0
    %v2461 = vadd.f32 %v2076, %v2460
    %v2462 = vpop.f32.mrb[0].mxu0
    %2463 = vmatprep.mubr.f32.mxu0 %v620
    %2464 = vmatmul.mubr.f32.gmra.mrb[0].mxu0 %v965
    %v2465 = vpop.f32.mrb[0].mxu0
    %v2466 = vadd.f32 %v2081, %v2465
    %v2467 = vpop.f32.mrb[0].mxu0
    %2468 = vmatprep.mubr.f32.mxu0 %v621
    %2469 = vmatmul.mubr.f32.gmra.mrb[0].mxu0 %v966
    %v2470 = vpop.f32.mrb[0].mxu0
    %v2471 = vadd.f32 %v2086, %v2470
    %v2472 = vpop.f32.mrb[0].mxu0
    %2473 = vmatprep.mubr.f32.mxu0 %v622
    %2474 = vmatmul.mubr.f32.gmra.mrb[0].mxu0 %v967
    %v2475 = vpop.f32.mrb[0].mxu0
    %v2476 = vadd.f32 %v2091, %v2475
    %v2477 = vpop.f32.mrb[0].mxu0
    %2478 = vmatprep.mubr.f32.mxu0 %v623
    %2479 = vmatmul.mubr.f32.gmra.mrb[0].mxu0 %v968
    %v2480 = vpop.f32.mrb[0].mxu0
    %v2481 = vadd.f32 %v2096, %v2480
    %v2482 = vpop.f32.mrb[0].mxu0
    %2483 = vmatprep.mubr.f32.mxu0 %v624
    %2484 = vmatmul.mubr.f32.gmra.mrb[0].mxu0 %v969
    %v2485 = vpop.f32.mrb[0].mxu0
    %v2486 = vadd.f32 %v2101, %v2485
    %v2487 = vpop.f32.mrb[0].mxu0
    %2488 = vmatprep.mubr.f32.mxu0 %v625
    %2489 = vmatmul.mubr.f32.gmra.mrb[0].mxu0 %v970
    %v2490 = vpop.f32.mrb[0].mxu0
    %v2491 = vadd.f32 %v2106, %v2490
    %v2492 = vpop.f32.mrb[0].mxu0
    %2493 = vmatprep.mubr.f32.mxu0 %v626
    %2494 = vmatmul.mubr.f32.gmra.mrb[0].mxu0 %v971
    %v2495 = vpop.f32.mrb[0].mxu0
    %v2496 = vadd.f32 %v2111, %v2495
    %v2497 = vpop.f32.mrb[0].mxu0
    %2498 = vmatprep.mubr.f32.mxu0 %v627
    %2499 = vmatmul.mubr.f32.gmra.mrb[0].mxu0 %v972
    %v2500 = vpop.f32.mrb[0].mxu0
    %v2501 = vadd.f32 %v2116, %v2500
    %v2502 = vpop.f32.mrb[0].mxu0
    %2503 = vmatprep.mubr.f32.mxu0 %v628
    %2504 = vmatmul.mubr.f32.gmra.mrb[0].mxu0 %v973
    %v2505 = vpop.f32.mrb[0].mxu0
    %v2506 = vadd.f32 %v2121, %v2505
    %v2507 = vpop.f32.mrb[0].mxu0
    %2508 = vmatprep.mubr.f32.mxu0 %v629
    %2509 = vmatmul.mubr.f32.gmra.mrb[0].mxu0 %v974
    %v2510 = vpop.f32.mrb[0].mxu0
    %v2511 = vadd.f32 %v2126, %v2510
    %v2512 = vpop.f32.mrb[0].mxu0
    %2513 = vmatprep.mubr.f32.mxu0 %v630
    %2514 = vmatmul.mubr.f32.gmra.mrb[0].mxu0 %v975
    %v2515 = vpop.f32.mrb[0].mxu0
    %v2516 = vadd.f32 %v2131, %v2515
    %v2517 = vpop.f32.mrb[0].mxu0
    %2518 = vmatprep.mubr.f32.mxu0 %v631
    %2519 = vmatmul.mubr.f32.gmra.mrb[0].mxu0 %v976
    %v2520 = vpop.f32.mrb[0].mxu0
    %v2521 = vadd.f32 %v2136, %v2520
    %v2522 = vpop.f32.mrb[0].mxu0
    %2523 = vmatprep.mubr.f32.mxu0 %v632
    %2524 = vmatmul.mubr.f32.gmra.mrb[0].mxu0 %v977
    %v2525 = vpop.f32.mrb[0].mxu0
    %v2526 = vadd.f32 %v2141, %v2525
    %v2527 = vpop.f32.mrb[0].mxu0
    %2528 = vmatprep.mubr.f32.mxu0 %v633
    %2529 = vmatmul.mubr.f32.gmra.mrb[0].mxu0 %v978
    %v2530 = vpop.f32.mrb[0].mxu0
    %v2531 = vadd.f32 %v2146, %v2530
    %v2532 = vpop.f32.mrb[0].mxu0
    %2533 = vmatprep.mubr.f32.mxu0 %v634
    %2534 = vmatmul.mubr.f32.gmra.mrb[0].mxu0 %v979
    %v2535 = vpop.f32.mrb[0].mxu0
    %v2536 = vadd.f32 %v2151, %v2535
    %v2537 = vpop.f32.mrb[0].mxu0
    %2538 = vmatprep.mubr.f32.mxu0 %v635
    %2539 = vmatmul.mubr.f32.gmra.mrb[0].mxu0 %v980
    %v2540 = vpop.f32.mrb[0].mxu0
    %v2541 = vadd.f32 %v2156, %v2540
    %v2542 = vpop.f32.mrb[0].mxu0
    %2543 = vmatprep.mubr.f32.mxu0 %v636
    %2544 = vmatmul.mubr.f32.gmra.mrb[0].mxu0 %v981
    %v2545 = vpop.f32.mrb[0].mxu0
    %v2546 = vadd.f32 %v2161, %v2545
    %v2547 = vpop.f32.mrb[0].mxu0
    %2548 = vmatprep.mubr.f32.mxu0 %v637
    %2549 = vmatmul.mubr.f32.gmra.mrb[0].mxu0 %v982
    %v2550 = vpop.f32.mrb[0].mxu0
    %v2551 = vadd.f32 %v2166, %v2550
    %v2552 = vpop.f32.mrb[0].mxu0
    %2553 = vmatprep.mubr.f32.mxu0 %v638
    %2554 = vmatmul.mubr.f32.gmra.mrb[0].mxu0 %v983
    %v2555 = vpop.f32.mrb[0].mxu0
    %v2556 = vadd.f32 %v2171, %v2555
    %v2557 = vpop.f32.mrb[0].mxu0
    %2558 = vmatprep.mubr.f32.mxu0 %v639
    %2559 = vmatmul.mubr.f32.gmra.mrb[0].mxu0 %v984
    %v2560 = vpop.f32.mrb[0].mxu0
    %v2561 = vadd.f32 %v2176, %v2560
    %v2562 = vpop.f32.mrb[0].mxu0
    %2563 = vmatprep.mubr.f32.mxu0 %v640
    %2564 = vmatmul.mubr.f32.gmra.mrb[0].mxu0 %v985
    %v2565 = vpop.f32.mrb[0].mxu0
    %v2566 = vadd.f32 %v2181, %v2565
    %v2567 = vpop.f32.mrb[0].mxu0
    %2568 = vmatprep.mubr.f32.mxu0 %v641
    %2569 = vmatmul.mubr.f32.gmra.mrb[0].mxu0 %v986
    %v2570 = vpop.f32.mrb[0].mxu0
    %v2571 = vadd.f32 %v2186, %v2570
    %v2572 = vpop.f32.mrb[0].mxu0
    %2573 = vmatprep.mubr.f32.mxu0 %v642
    %2574 = vmatmul.mubr.f32.gmra.mrb[0].mxu0 %v987
    %v2575 = vpop.f32.mrb[0].mxu0
    %v2576 = vadd.f32 %v2191, %v2575
    %v2577 = vpop.f32.mrb[0].mxu0
    %2578 = vmatprep.mubr.f32.mxu0 %v643
    %2579 = vmatmul.mubr.f32.gmra.mrb[0].mxu0 %v988
    %v2580 = vpop.f32.mrb[0].mxu0
    %v2581 = vadd.f32 %v2196, %v2580
    %v2582 = vpop.f32.mrb[0].mxu0
    %2583 = vmatprep.mubr.f32.mxu0 %v644
    %2584 = vmatmul.mubr.f32.gmra.mrb[0].mxu0 %v989
    %v2585 = vpop.f32.mrb[0].mxu0
    %v2586 = vadd.f32 %v2201, %v2585
    %v2587 = vpop.f32.mrb[0].mxu0
    %2588 = vmatprep.mubr.f32.mxu0 %v645
    %2589 = vmatmul.mubr.f32.gmra.mrb[0].mxu0 %v990
    %v2590 = vpop.f32.mrb[0].mxu0
    %v2591 = vadd.f32 %v2206, %v2590
    %v2592 = vpop.f32.mrb[0].mxu0
    %2593 = vmatprep.mubr.f32.mxu0 0.0
    %2594 = vmatmul.mubr.f32.gmra.mrb[0].mxu0 0.0
    %v2595 = vpop.f32.mrb[0].mxu0
    %v2596 = vadd.f32 %v2211, %v2595
    %v2597 = vpop.f32.mrb[0].mxu0
    %2598 = vmatprep.mubr.f32.mxu0 0.0
    %2599 = vmatmul.mubr.f32.gmra.mrb[0].mxu0 0.0
    %v2600 = vpop.f32.mrb[0].mxu0
    %v2601 = vadd.f32 %v2216, %v2600
    %v2602 = vpop.f32.mrb[0].mxu0
    %2603 = vmatprep.mubr.f32.mxu0 %v648
    %2604 = vmatmul.mubr.f32.gmra.mrb[0].mxu0 %v993
    %v2605 = vpop.f32.mrb[0].mxu0
    %v2606 = vadd.f32 %v2221, %v2605
    %v2607 = vpop.f32.mrb[0].mxu0
    %2608 = vmatprep.mubr.f32.mxu0 %v649
    %2609 = vmatmul.mubr.f32.gmra.mrb[0].mxu0 %v994
    %v2610 = vpop.f32.mrb[0].mxu0
    %v2611 = vadd.f32 %v2226, %v2610
    %v2612 = vpop.f32.mrb[0].mxu0
    %2613 = vmatprep.mubr.f32.mxu0 %v650
    %2614 = vmatmul.mubr.f32.gmra.mrb[0].mxu0 %v995
    %v2615 = vpop.f32.mrb[0].mxu0
    %v2616 = vadd.f32 %v2231, %v2615
    %v2617 = vpop.f32.mrb[0].mxu0
    %2618 = vmatprep.mubr.f32.mxu0 %v651
    %2619 = vmatmul.mubr.f32.gmra.mrb[0].mxu0 %v996
    %v2620 = vpop.f32.mrb[0].mxu0
    %v2621 = vadd.f32 %v2236, %v2620
    %v2622 = vpop.f32.mrb[0].mxu0
    %2623 = vmatprep.mubr.f32.mxu0 %v652
    %2624 = vmatmul.mubr.f32.gmra.mrb[0].mxu0 %v997
    %v2625 = vpop.f32.mrb[0].mxu0
    %v2626 = vadd.f32 %v2241, %v2625
    %v2627 = vpop.f32.mrb[0].mxu0
    %2628 = vmatprep.mubr.f32.mxu0 %v653
    %2629 = vmatmul.mubr.f32.gmra.mrb[0].mxu0 %v998
    %v2630 = vpop.f32.mrb[0].mxu0
    %v2631 = vadd.f32 %v2246, %v2630
    %v2632 = vpop.f32.mrb[0].mxu0
    %2633 = vmatprep.mubr.f32.mxu0 %v654
    %2634 = vmatmul.mubr.f32.gmra.mrb[0].mxu0 %v999
    %v2635 = vpop.f32.mrb[0].mxu0
    %v2636 = vadd.f32 %v2251, %v2635
    %v2637 = vpop.f32.mrb[0].mxu0
    %2638 = vmatprep.mubr.f32.mxu0 %v655
    %2639 = vmatmul.mubr.f32.gmra.mrb[0].mxu0 %v1000
    %v2640 = vpop.f32.mrb[0].mxu0
    %v2641 = vadd.f32 %v2256, %v2640
    %v2642 = vpop.f32.mrb[0].mxu0
    %2643 = vmatprep.mubr.f32.mxu0 %v656
    %2644 = vmatmul.mubr.f32.gmra.mrb[0].mxu0 %v1001
    %v2645 = vpop.f32.mrb[0].mxu0
    %v2646 = vadd.f32 %v2261, %v2645
    %v2647 = vpop.f32.mrb[0].mxu0
    %2648 = vmatprep.mubr.f32.mxu0 %v657
    %2649 = vmatmul.mubr.f32.gmra.mrb[0].mxu0 %v1002
    %v2650 = vpop.f32.mrb[0].mxu0
    %v2651 = vadd.f32 %v2266, %v2650
    %v2652 = vpop.f32.mrb[0].mxu0
    %2653 = vmatprep.mubr.f32.mxu0 %v658
    %2654 = vmatmul.mubr.f32.gmra.mrb[0].mxu0 %v1003
    %v2655 = vpop.f32.mrb[0].mxu0
    %v2656 = vadd.f32 %v2271, %v2655
    %v2657 = vpop.f32.mrb[0].mxu0
    %2658 = vmatprep.mubr.f32.mxu0 %v659
    %2659 = vmatmul.mubr.f32.gmra.mrb[0].mxu0 %v1004
    %v2660 = vpop.f32.mrb[0].mxu0
    %v2661 = vadd.f32 %v2276, %v2660
    %v2662 = vpop.f32.mrb[0].mxu0
    %2663 = vmatprep.mubr.f32.mxu0 %v660
    %2664 = vmatmul.mubr.f32.gmra.mrb[0].mxu0 %v1005
    %v2665 = vpop.f32.mrb[0].mxu0
    %v2666 = vadd.f32 %v2281, %v2665
    %v2667 = vpop.f32.mrb[0].mxu0
    %2668 = vmatprep.mubr.f32.mxu0 %v661
    %2669 = vmatmul.mubr.f32.gmra.mrb[0].mxu0 %v1006
    %v2670 = vpop.f32.mrb[0].mxu0
    %v2671 = vadd.f32 %v2286, %v2670
    %v2672 = vpop.f32.mrb[0].mxu0
    %2673 = vmatprep.mubr.f32.mxu0 %v662
    %2674 = vmatmul.mubr.f32.gmra.mrb[0].mxu0 %v1007
    %v2675 = vpop.f32.mrb[0].mxu0
    %v2676 = vadd.f32 %v2291, %v2675
    %v2677 = vpop.f32.mrb[0].mxu0
    %2678 = vmatprep.mubr.f32.mxu0 %v663
    %2679 = vmatmul.mubr.f32.gmra.mrb[0].mxu0 %v1008
    %v2680 = vpop.f32.mrb[0].mxu0
    %v2681 = vadd.f32 %v2296, %v2680
    %v2682 = vpop.f32.mrb[0].mxu0
    %2683 = vmatprep.mubr.f32.mxu0 %v664
    %2684 = vmatmul.mubr.f32.gmra.mrb[0].mxu0 %v1009
    %v2685 = vpop.f32.mrb[0].mxu0
    %v2686 = vadd.f32 %v2301, %v2685
    %v2687 = vpop.f32.mrb[0].mxu0
    %2688 = vmatprep.mubr.f32.mxu0 %v665
    %2689 = vmatmul.mubr.f32.gmra.mrb[0].mxu0 %v1010
    %v2690 = vpop.f32.mrb[0].mxu0
    %v2691 = vadd.f32 %v2306, %v2690
    %v2692 = vpop.f32.mrb[0].mxu0
    %2693 = vmatprep.mubr.f32.mxu0 %v666
    %2694 = vmatmul.mubr.f32.gmra.mrb[0].mxu0 %v1011
    %v2695 = vpop.f32.mrb[0].mxu0
    %v2696 = vadd.f32 %v2311, %v2695
    %v2697 = vpop.f32.mrb[0].mxu0
    %2698 = vmatprep.mubr.f32.mxu0 %v667
    %2699 = vmatmul.mubr.f32.gmra.mrb[0].mxu0 %v1012
    %v2700 = vpop.f32.mrb[0].mxu0
    %v2701 = vadd.f32 %v2316, %v2700
    %v2702 = vpop.f32.mrb[0].mxu0
    %2703 = vmatprep.mubr.f32.mxu0 %v668
    %2704 = vmatmul.mubr.f32.gmra.mrb[0].mxu0 %v1013
    %v2705 = vpop.f32.mrb[0].mxu0
    %v2706 = vadd.f32 %v2321, %v2705
    %v2707 = vpop.f32.mrb[0].mxu0
    %2708 = vmatprep.mubr.f32.mxu0 %v669
    %2709 = vmatmul.mubr.f32.gmra.mrb[0].mxu0 %v1014
    %v2710 = vpop.f32.mrb[0].mxu0
    %v2711 = vadd.f32 %v2326, %v2710
    %v2712 = vpop.f32.mrb[0].mxu0
    %2713 = vmatprep.mubr.f32.mxu0 %v670
    %2714 = vmatmul.mubr.f32.gmra.mrb[0].mxu0 %v1015
    %v2715 = vpop.f32.mrb[0].mxu0
    %v2716 = vadd.f32 %v2331, %v2715
    %v2717 = vpop.f32.mrb[0].mxu0
    %2718 = vmatprep.mubr.f32.mxu0 %v671
    %2719 = vmatmul.mubr.f32.gmra.mrb[0].mxu0 %v1016
    %v2720 = vpop.f32.mrb[0].mxu0
    %v2721 = vadd.f32 %v2336, %v2720
    %v2722 = vpop.f32.mrb[0].mxu0
    %2723 = vmatprep.mubr.f32.mxu0 %v672
    %2724 = vmatmul.mubr.f32.gmra.mrb[0].mxu0 %v1017
    %v2725 = vpop.f32.mrb[0].mxu0
    %v2726 = vadd.f32 %v2341, %v2725
    %v2727 = vpop.f32.mrb[0].mxu0
    %2728 = vmatprep.mubr.f32.mxu0 %v673
    %2729 = vmatmul.mubr.f32.gmra.mrb[0].mxu0 %v1018
    %v2730 = vpop.f32.mrb[0].mxu0
    %v2731 = vadd.f32 %v2346, %v2730
    %v2732 = vpop.f32.mrb[0].mxu0
    %2733 = vmatprep.mubr.f32.mxu0 %v674
    %2734 = vmatmul.mubr.f32.gmra.mrb[0].mxu0 %v1019
    %v2735 = vpop.f32.mrb[0].mxu0
    %v2736 = vadd.f32 %v2351, %v2735
    %v2737 = vpop.f32.mrb[0].mxu0
    %2738 = vmatprep.mubr.f32.mxu0 %v675
    %2739 = vmatmul.mubr.f32.gmra.mrb[0].mxu0 %v1020
    %v2740 = vpop.f32.mrb[0].mxu0
    %v2741 = vadd.f32 %v2356, %v2740
    %v2742 = vpop.f32.mrb[0].mxu0
    %2743 = vmatprep.mubr.f32.mxu0 %v676
    %2744 = vmatmul.mubr.f32.gmra.mrb[0].mxu0 %v1021
    %v2745 = vpop.f32.mrb[0].mxu0
    %v2746 = vadd.f32 %v2361, %v2745
    %v2747 = vpop.f32.mrb[0].mxu0
    %2748 = vmatprep.mubr.f32.mxu0 %v677
    %2749 = vmatmul.mubr.f32.gmra.mrb[0].mxu0 %v1022
    %v2750 = vpop.f32.mrb[0].mxu0
    %v2751 = vadd.f32 %v2366, %v2750
    %v2752 = vpop.f32.mrb[0].mxu0
    %2753 = vmatprep.mubr.f32.mxu0 0.0
    %2754 = vmatmul.mubr.f32.gmra.mrb[0].mxu0 0.0
    %v2755 = vpop.f32.mrb[0].mxu0
    %v2756 = vadd.f32 %v2371, %v2755
    %v2757 = vpop.f32.mrb[0].mxu0
    %2758 = vmatprep.mubr.f32.mxu0 0.0
    %2759 = vmatmul.mubr.f32.gmra.mrb[0].mxu0 0.0
    %v2760 = vpop.f32.mrb[0].mxu0
    %v2761 = vadd.f32 %v2376, %v2760
    %v2762 = vpop.f32.mrb[0].mxu0
    %2763 = vdwg.mxu0
    %2764 = vmatprep.subr.mxu0 0.0
    %2765 = vmatpush1.msra.mxu0 %v806
    %2766 = vmatprep.subr.mxu0 0.0
    %2767 = vmatpush1.msra.mxu0 %v807
    %2768 = vmatprep.subr.mxu0 0.0
    %2769 = vmatpush1.msra.mxu0 %v808
    %2770 = vmatprep.subr.mxu0 0.0
    %2771 = vmatpush1.msra.mxu0 %v809
    %2772 = vmatprep.subr.mxu0 0.0
    %2773 = vmatpush1.msra.mxu0 %v810
    %2774 = vmatprep.subr.mxu0 0.0
    %2775 = vmatpush1.msra.mxu0 %v811
    %2776 = vmatprep.subr.mxu0 0.0
    %2777 = vmatpush1.msra.mxu0 %v812
    %2778 = vmatprep.subr.mxu0 0.0
    %2779 = vmatpush1.msra.mxu0 %v813
    %2780 = vmatprep.subr.mxu0 0.0
    %2781 = vmatpush1.msra.mxu0 %v814
    %2782 = vmatprep.subr.mxu0 0.0
    %2783 = vmatpush1.msra.mxu0 %v815
    %2784 = vmatprep.subr.mxu0 0.0
    %2785 = vmatpush1.msra.mxu0 %v816
    %2786 = vmatprep.subr.mxu0 0.0
    %2787 = vmatpush1.msra.mxu0 %v817
    %2788 = vmatprep.subr.mxu0 0.0
    %2789 = vmatpush1.msra.mxu0 %v818
    %2790 = vmatprep.subr.mxu0 0.0
    %2791 = vmatpush1.msra.mxu0 %v819
    %2792 = vmatprep.subr.mxu0 0.0
    %2793 = vmatpush1.msra.mxu0 %v820
    %2794 = vmatprep.subr.mxu0 0.0
    %2795 = vmatpush1.msra.mxu0 %v821
    %2796 = vmatprep.subr.mxu0 0.0
    %2797 = vmatpush1.msra.mxu0 0.0
    %2798 = vmatprep.subr.mxu0 0.0
    %2799 = vmatpush1.msra.mxu0 0.0
    %2800 = vmatprep.subr.mxu0 0.0
    %2801 = vmatpush1.msra.mxu0 0.0
    %2802 = vmatprep.subr.mxu0 0.0
    %2803 = vmatpush1.msra.mxu0 0.0
    %2804 = vmatprep.subr.mxu0 0.0
    %2805 = vmatpush1.msra.mxu0 0.0
    %2806 = vmatprep.subr.mxu0 0.0
    %2807 = vmatpush1.msra.mxu0 0.0
    %2808 = vmatprep.subr.mxu0 0.0
    %2809 = vmatpush1.msra.mxu0 0.0
    %2810 = vmatprep.subr.mxu0 0.0
    %2811 = vmatpush1.msra.mxu0 0.0
    %2812 = vmatprep.subr.mxu0 0.0
    %2813 = vmatpush1.msra.mxu0 0.0
    %2814 = vmatprep.subr.mxu0 0.0
    %2815 = vmatpush1.msra.mxu0 0.0
    %2816 = vmatprep.subr.mxu0 0.0
    %2817 = vmatpush1.msra.mxu0 0.0
    %2818 = vmatprep.subr.mxu0 0.0
    %2819 = vmatpush1.msra.mxu0 0.0
    %2820 = vmatprep.subr.mxu0 0.0
    %2821 = vmatpush1.msra.mxu0 0.0
    %2822 = vmatprep.subr.mxu0 0.0
    %2823 = vmatpush1.msra.mxu0 0.0
    %2824 = vmatprep.subr.mxu0 0.0
    %2825 = vmatpush1.msra.mxu0 0.0
    %2826 = vmatprep.subr.mxu0 0.0
    %2827 = vmatpush1.msra.mxu0 0.0
    %2828 = vmatprep.mubr.f32.mxu0 0.0
    %2829 = vmatmul.mubr.f32.gmra.mrb[0].mxu0 %v1162
    %v2830 = vpop.f32.mrb[0].mxu0
    %v2831 = vadd.f32 %v2446, %v2830
    %v2832 = vpop.f32.mrb[0].mxu0
    %2833 = vmatprep.mubr.f32.mxu0 0.0
    %2834 = vmatmul.mubr.f32.gmra.mrb[0].mxu0 %v1163
    %v2835 = vpop.f32.mrb[0].mxu0
    %v2836 = vadd.f32 %v2451, %v2835
    %v2837 = vpop.f32.mrb[0].mxu0
    %2838 = vmatprep.mubr.f32.mxu0 0.0
    %2839 = vmatmul.mubr.f32.gmra.mrb[0].mxu0 %v1164
    %v2840 = vpop.f32.mrb[0].mxu0
    %v2841 = vadd.f32 %v2456, %v2840
    %v2842 = vpop.f32.mrb[0].mxu0
    %2843 = vmatprep.mubr.f32.mxu0 0.0
    %2844 = vmatmul.mubr.f32.gmra.mrb[0].mxu0 %v1165
    %v2845 = vpop.f32.mrb[0].mxu0
    %v2846 = vadd.f32 %v2461, %v2845
    %v2847 = vpop.f32.mrb[0].mxu0
    %2848 = vmatprep.mubr.f32.mxu0 0.0
    %2849 = vmatmul.mubr.f32.gmra.mrb[0].mxu0 %v1166
    %v2850 = vpop.f32.mrb[0].mxu0
    %v2851 = vadd.f32 %v2466, %v2850
    %v2852 = vpop.f32.mrb[0].mxu0
    %2853 = vmatprep.mubr.f32.mxu0 0.0
    %2854 = vmatmul.mubr.f32.gmra.mrb[0].mxu0 %v1167
    %v2855 = vpop.f32.mrb[0].mxu0
    %v2856 = vadd.f32 %v2471, %v2855
    %v2857 = vpop.f32.mrb[0].mxu0
    %2858 = vmatprep.mubr.f32.mxu0 0.0
    %2859 = vmatmul.mubr.f32.gmra.mrb[0].mxu0 %v1168
    %v2860 = vpop.f32.mrb[0].mxu0
    %v2861 = vadd.f32 %v2476, %v2860
    %v2862 = vpop.f32.mrb[0].mxu0
    %2863 = vmatprep.mubr.f32.mxu0 0.0
    %2864 = vmatmul.mubr.f32.gmra.mrb[0].mxu0 %v1169
    %v2865 = vpop.f32.mrb[0].mxu0
    %v2866 = vadd.f32 %v2481, %v2865
    %v2867 = vpop.f32.mrb[0].mxu0
    %2868 = vmatprep.mubr.f32.mxu0 0.0
    %2869 = vmatmul.mubr.f32.gmra.mrb[0].mxu0 %v1170
    %v2870 = vpop.f32.mrb[0].mxu0
    %v2871 = vadd.f32 %v2486, %v2870
    %v2872 = vpop.f32.mrb[0].mxu0
    %2873 = vmatprep.mubr.f32.mxu0 0.0
    %2874 = vmatmul.mubr.f32.gmra.mrb[0].mxu0 %v1171
    %v2875 = vpop.f32.mrb[0].mxu0
    %v2876 = vadd.f32 %v2491, %v2875
    %v2877 = vpop.f32.mrb[0].mxu0
    %2878 = vmatprep.mubr.f32.mxu0 0.0
    %2879 = vmatmul.mubr.f32.gmra.mrb[0].mxu0 %v1172
    %v2880 = vpop.f32.mrb[0].mxu0
    %v2881 = vadd.f32 %v2496, %v2880
    %v2882 = vpop.f32.mrb[0].mxu0
    %2883 = vmatprep.mubr.f32.mxu0 0.0
    %2884 = vmatmul.mubr.f32.gmra.mrb[0].mxu0 %v1173
    %v2885 = vpop.f32.mrb[0].mxu0
    %v2886 = vadd.f32 %v2501, %v2885
    %v2887 = vpop.f32.mrb[0].mxu0
    %2888 = vmatprep.mubr.f32.mxu0 0.0
    %2889 = vmatmul.mubr.f32.gmra.mrb[0].mxu0 %v1174
    %v2890 = vpop.f32.mrb[0].mxu0
    %v2891 = vadd.f32 %v2506, %v2890
    %v2892 = vpop.f32.mrb[0].mxu0
    %2893 = vmatprep.mubr.f32.mxu0 0.0
    %2894 = vmatmul.mubr.f32.gmra.mrb[0].mxu0 %v1175
    %v2895 = vpop.f32.mrb[0].mxu0
    %v2896 = vadd.f32 %v2511, %v2895
    %v2897 = vpop.f32.mrb[0].mxu0
    %2898 = vmatprep.mubr.f32.mxu0 0.0
    %2899 = vmatmul.mubr.f32.gmra.mrb[0].mxu0 %v1176
    %v2900 = vpop.f32.mrb[0].mxu0
    %v2901 = vadd.f32 %v2516, %v2900
    %v2902 = vpop.f32.mrb[0].mxu0
    %2903 = vmatprep.mubr.f32.mxu0 0.0
    %2904 = vmatmul.mubr.f32.gmra.mrb[0].mxu0 %v1177
    %v2905 = vpop.f32.mrb[0].mxu0
    %v2906 = vadd.f32 %v2521, %v2905
    %v2907 = vpop.f32.mrb[0].mxu0
    %2908 = vmatprep.mubr.f32.mxu0 0.0
    %2909 = vmatmul.mubr.f32.gmra.mrb[0].mxu0 %v1178
    %v2910 = vpop.f32.mrb[0].mxu0
    %v2911 = vadd.f32 %v2526, %v2910
    %v2912 = vpop.f32.mrb[0].mxu0
    %2913 = vmatprep.mubr.f32.mxu0 0.0
    %2914 = vmatmul.mubr.f32.gmra.mrb[0].mxu0 %v1179
    %v2915 = vpop.f32.mrb[0].mxu0
    %v2916 = vadd.f32 %v2531, %v2915
    %v2917 = vpop.f32.mrb[0].mxu0
    %2918 = vmatprep.mubr.f32.mxu0 0.0
    %2919 = vmatmul.mubr.f32.gmra.mrb[0].mxu0 %v1180
    %v2920 = vpop.f32.mrb[0].mxu0
    %v2921 = vadd.f32 %v2536, %v2920
    %v2922 = vpop.f32.mrb[0].mxu0
    %2923 = vmatprep.mubr.f32.mxu0 0.0
    %2924 = vmatmul.mubr.f32.gmra.mrb[0].mxu0 %v1181
    %v2925 = vpop.f32.mrb[0].mxu0
    %v2926 = vadd.f32 %v2541, %v2925
    %v2927 = vpop.f32.mrb[0].mxu0
    %2928 = vmatprep.mubr.f32.mxu0 0.0
    %2929 = vmatmul.mubr.f32.gmra.mrb[0].mxu0 %v1182
    %v2930 = vpop.f32.mrb[0].mxu0
    %v2931 = vadd.f32 %v2546, %v2930
    %v2932 = vpop.f32.mrb[0].mxu0
    %2933 = vmatprep.mubr.f32.mxu0 0.0
    %2934 = vmatmul.mubr.f32.gmra.mrb[0].mxu0 %v1183
    %v2935 = vpop.f32.mrb[0].mxu0
    %v2936 = vadd.f32 %v2551, %v2935
    %v2937 = vpop.f32.mrb[0].mxu0
    %2938 = vmatprep.mubr.f32.mxu0 0.0
    %2939 = vmatmul.mubr.f32.gmra.mrb[0].mxu0 %v1184
    %v2940 = vpop.f32.mrb[0].mxu0
    %v2941 = vadd.f32 %v2556, %v2940
    %v2942 = vpop.f32.mrb[0].mxu0
    %2943 = vmatprep.mubr.f32.mxu0 0.0
    %2944 = vmatmul.mubr.f32.gmra.mrb[0].mxu0 %v1185
    %v2945 = vpop.f32.mrb[0].mxu0
    %v2946 = vadd.f32 %v2561, %v2945
    %v2947 = vpop.f32.mrb[0].mxu0
    %2948 = vmatprep.mubr.f32.mxu0 0.0
    %2949 = vmatmul.mubr.f32.gmra.mrb[0].mxu0 %v1186
    %v2950 = vpop.f32.mrb[0].mxu0
    %v2951 = vadd.f32 %v2566, %v2950
    %v2952 = vpop.f32.mrb[0].mxu0
    %2953 = vmatprep.mubr.f32.mxu0 0.0
    %2954 = vmatmul.mubr.f32.gmra.mrb[0].mxu0 %v1187
    %v2955 = vpop.f32.mrb[0].mxu0
    %v2956 = vadd.f32 %v2571, %v2955
    %v2957 = vpop.f32.mrb[0].mxu0
    %2958 = vmatprep.mubr.f32.mxu0 0.0
    %2959 = vmatmul.mubr.f32.gmra.mrb[0].mxu0 %v1188
    %v2960 = vpop.f32.mrb[0].mxu0
    %v2961 = vadd.f32 %v2576, %v2960
    %v2962 = vpop.f32.mrb[0].mxu0
    %2963 = vmatprep.mubr.f32.mxu0 0.0
    %2964 = vmatmul.mubr.f32.gmra.mrb[0].mxu0 %v1189
    %v2965 = vpop.f32.mrb[0].mxu0
    %v2966 = vadd.f32 %v2581, %v2965
    %v2967 = vpop.f32.mrb[0].mxu0
    %2968 = vmatprep.mubr.f32.mxu0 0.0
    %2969 = vmatmul.mubr.f32.gmra.mrb[0].mxu0 %v1190
    %v2970 = vpop.f32.mrb[0].mxu0
    %v2971 = vadd.f32 %v2586, %v2970
    %v2972 = vpop.f32.mrb[0].mxu0
    %2973 = vmatprep.mubr.f32.mxu0 0.0
    %2974 = vmatmul.mubr.f32.gmra.mrb[0].mxu0 %v1191
    %v2975 = vpop.f32.mrb[0].mxu0
    %v2976 = vadd.f32 %v2591, %v2975
    %v2977 = vpop.f32.mrb[0].mxu0
    %2978 = vmatprep.mubr.f32.mxu0 0.0
    %2979 = vmatmul.mubr.f32.gmra.mrb[0].mxu0 0.0
    %v2980 = vpop.f32.mrb[0].mxu0
    %v2981 = vadd.f32 %v2596, %v2980
    %v2982 = vpop.f32.mrb[0].mxu0
    %2983 = vmatprep.mubr.f32.mxu0 0.0
    %2984 = vmatmul.mubr.f32.gmra.mrb[0].mxu0 0.0
    %v2985 = vpop.f32.mrb[0].mxu0
    %v2986 = vadd.f32 %v2601, %v2985
    %v2987 = vpop.f32.mrb[0].mxu0
    %2988 = vmatprep.mubr.f32.mxu0 0.0
    %2989 = vmatmul.mubr.f32.gmra.mrb[0].mxu0 %v1194
    %v2990 = vpop.f32.mrb[0].mxu0
    %v2991 = vadd.f32 %v2606, %v2990
    %v2992 = vpop.f32.mrb[0].mxu0
    %2993 = vmatprep.mubr.f32.mxu0 0.0
    %2994 = vmatmul.mubr.f32.gmra.mrb[0].mxu0 %v1195
    %v2995 = vpop.f32.mrb[0].mxu0
    %v2996 = vadd.f32 %v2611, %v2995
    %v2997 = vpop.f32.mrb[0].mxu0
    %2998 = vmatprep.mubr.f32.mxu0 0.0
    %2999 = vmatmul.mubr.f32.gmra.mrb[0].mxu0 %v1196
    %v3000 = vpop.f32.mrb[0].mxu0
    %v3001 = vadd.f32 %v2616, %v3000
    %v3002 = vpop.f32.mrb[0].mxu0
    %3003 = vmatprep.mubr.f32.mxu0 0.0
    %3004 = vmatmul.mubr.f32.gmra.mrb[0].mxu0 %v1197
    %v3005 = vpop.f32.mrb[0].mxu0
    %v3006 = vadd.f32 %v2621, %v3005
    %v3007 = vpop.f32.mrb[0].mxu0
    %3008 = vmatprep.mubr.f32.mxu0 0.0
    %3009 = vmatmul.mubr.f32.gmra.mrb[0].mxu0 %v1198
    %v3010 = vpop.f32.mrb[0].mxu0
    %v3011 = vadd.f32 %v2626, %v3010
    %v3012 = vpop.f32.mrb[0].mxu0
    %3013 = vmatprep.mubr.f32.mxu0 0.0
    %3014 = vmatmul.mubr.f32.gmra.mrb[0].mxu0 %v1199
    %v3015 = vpop.f32.mrb[0].mxu0
    %v3016 = vadd.f32 %v2631, %v3015
    %v3017 = vpop.f32.mrb[0].mxu0
    %3018 = vmatprep.mubr.f32.mxu0 0.0
    %3019 = vmatmul.mubr.f32.gmra.mrb[0].mxu0 %v1200
    %v3020 = vpop.f32.mrb[0].mxu0
    %v3021 = vadd.f32 %v2636, %v3020
    %v3022 = vpop.f32.mrb[0].mxu0
    %3023 = vmatprep.mubr.f32.mxu0 0.0
    %3024 = vmatmul.mubr.f32.gmra.mrb[0].mxu0 %v1201
    %v3025 = vpop.f32.mrb[0].mxu0
    %v3026 = vadd.f32 %v2641, %v3025
    %v3027 = vpop.f32.mrb[0].mxu0
    %3028 = vmatprep.mubr.f32.mxu0 0.0
    %3029 = vmatmul.mubr.f32.gmra.mrb[0].mxu0 %v1202
    %v3030 = vpop.f32.mrb[0].mxu0
    %v3031 = vadd.f32 %v2646, %v3030
    %v3032 = vpop.f32.mrb[0].mxu0
    %3033 = vmatprep.mubr.f32.mxu0 0.0
    %3034 = vmatmul.mubr.f32.gmra.mrb[0].mxu0 %v1203
    %v3035 = vpop.f32.mrb[0].mxu0
    %v3036 = vadd.f32 %v2651, %v3035
    %v3037 = vpop.f32.mrb[0].mxu0
    %3038 = vmatprep.mubr.f32.mxu0 0.0
    %3039 = vmatmul.mubr.f32.gmra.mrb[0].mxu0 %v1204
    %v3040 = vpop.f32.mrb[0].mxu0
    %v3041 = vadd.f32 %v2656, %v3040
    %v3042 = vpop.f32.mrb[0].mxu0
    %3043 = vmatprep.mubr.f32.mxu0 0.0
    %3044 = vmatmul.mubr.f32.gmra.mrb[0].mxu0 %v1205
    %v3045 = vpop.f32.mrb[0].mxu0
    %v3046 = vadd.f32 %v2661, %v3045
    %v3047 = vpop.f32.mrb[0].mxu0
    %3048 = vmatprep.mubr.f32.mxu0 0.0
    %3049 = vmatmul.mubr.f32.gmra.mrb[0].mxu0 %v1206
    %v3050 = vpop.f32.mrb[0].mxu0
    %v3051 = vadd.f32 %v2666, %v3050
    %v3052 = vpop.f32.mrb[0].mxu0
    %3053 = vmatprep.mubr.f32.mxu0 0.0
    %3054 = vmatmul.mubr.f32.gmra.mrb[0].mxu0 %v1207
    %v3055 = vpop.f32.mrb[0].mxu0
    %v3056 = vadd.f32 %v2671, %v3055
    %v3057 = vpop.f32.mrb[0].mxu0
    %3058 = vmatprep.mubr.f32.mxu0 0.0
    %3059 = vmatmul.mubr.f32.gmra.mrb[0].mxu0 %v1208
    %v3060 = vpop.f32.mrb[0].mxu0
    %v3061 = vadd.f32 %v2676, %v3060
    %v3062 = vpop.f32.mrb[0].mxu0
    %3063 = vmatprep.mubr.f32.mxu0 0.0
    %3064 = vmatmul.mubr.f32.gmra.mrb[0].mxu0 %v1209
    %v3065 = vpop.f32.mrb[0].mxu0
    %v3066 = vadd.f32 %v2681, %v3065
    %v3067 = vpop.f32.mrb[0].mxu0
    %3068 = vmatprep.mubr.f32.mxu0 0.0
    %3069 = vmatmul.mubr.f32.gmra.mrb[0].mxu0 %v1210
    %v3070 = vpop.f32.mrb[0].mxu0
    %v3071 = vadd.f32 %v2686, %v3070
    %v3072 = vpop.f32.mrb[0].mxu0
    %3073 = vmatprep.mubr.f32.mxu0 0.0
    %3074 = vmatmul.mubr.f32.gmra.mrb[0].mxu0 %v1211
    %v3075 = vpop.f32.mrb[0].mxu0
    %v3076 = vadd.f32 %v2691, %v3075
    %v3077 = vpop.f32.mrb[0].mxu0
    %3078 = vmatprep.mubr.f32.mxu0 0.0
    %3079 = vmatmul.mubr.f32.gmra.mrb[0].mxu0 %v1212
    %v3080 = vpop.f32.mrb[0].mxu0
    %v3081 = vadd.f32 %v2696, %v3080
    %v3082 = vpop.f32.mrb[0].mxu0
    %3083 = vmatprep.mubr.f32.mxu0 0.0
    %3084 = vmatmul.mubr.f32.gmra.mrb[0].mxu0 %v1213
    %v3085 = vpop.f32.mrb[0].mxu0
    %v3086 = vadd.f32 %v2701, %v3085
    %v3087 = vpop.f32.mrb[0].mxu0
    %3088 = vmatprep.mubr.f32.mxu0 0.0
    %3089 = vmatmul.mubr.f32.gmra.mrb[0].mxu0 %v1214
    %v3090 = vpop.f32.mrb[0].mxu0
    %v3091 = vadd.f32 %v2706, %v3090
    %v3092 = vpop.f32.mrb[0].mxu0
    %3093 = vmatprep.mubr.f32.mxu0 0.0
    %3094 = vmatmul.mubr.f32.gmra.mrb[0].mxu0 %v1215
    %v3095 = vpop.f32.mrb[0].mxu0
    %v3096 = vadd.f32 %v2711, %v3095
    %v3097 = vpop.f32.mrb[0].mxu0
    %3098 = vmatprep.mubr.f32.mxu0 0.0
    %3099 = vmatmul.mubr.f32.gmra.mrb[0].mxu0 %v1216
    %v3100 = vpop.f32.mrb[0].mxu0
    %v3101 = vadd.f32 %v2716, %v3100
    %v3102 = vpop.f32.mrb[0].mxu0
    %3103 = vmatprep.mubr.f32.mxu0 0.0
    %3104 = vmatmul.mubr.f32.gmra.mrb[0].mxu0 %v1217
    %v3105 = vpop.f32.mrb[0].mxu0
    %v3106 = vadd.f32 %v2721, %v3105
    %v3107 = vpop.f32.mrb[0].mxu0
    %3108 = vmatprep.mubr.f32.mxu0 0.0
    %3109 = vmatmul.mubr.f32.gmra.mrb[0].mxu0 %v1218
    %v3110 = vpop.f32.mrb[0].mxu0
    %v3111 = vadd.f32 %v2726, %v3110
    %v3112 = vpop.f32.mrb[0].mxu0
    %3113 = vmatprep.mubr.f32.mxu0 0.0
    %3114 = vmatmul.mubr.f32.gmra.mrb[0].mxu0 %v1219
    %v3115 = vpop.f32.mrb[0].mxu0
    %v3116 = vadd.f32 %v2731, %v3115
    %v3117 = vpop.f32.mrb[0].mxu0
    %3118 = vmatprep.mubr.f32.mxu0 0.0
    %3119 = vmatmul.mubr.f32.gmra.mrb[0].mxu0 %v1220
    %v3120 = vpop.f32.mrb[0].mxu0
    %v3121 = vadd.f32 %v2736, %v3120
    %v3122 = vpop.f32.mrb[0].mxu0
    %3123 = vmatprep.mubr.f32.mxu0 0.0
    %3124 = vmatmul.mubr.f32.gmra.mrb[0].mxu0 %v1221
    %v3125 = vpop.f32.mrb[0].mxu0
    %v3126 = vadd.f32 %v2741, %v3125
    %v3127 = vpop.f32.mrb[0].mxu0
    %3128 = vmatprep.mubr.f32.mxu0 0.0
    %3129 = vmatmul.mubr.f32.gmra.mrb[0].mxu0 %v1222
    %v3130 = vpop.f32.mrb[0].mxu0
    %v3131 = vadd.f32 %v2746, %v3130
    %v3132 = vpop.f32.mrb[0].mxu0
    %3133 = vmatprep.mubr.f32.mxu0 0.0
    %3134 = vmatmul.mubr.f32.gmra.mrb[0].mxu0 %v1223
    %v3135 = vpop.f32.mrb[0].mxu0
    %v3136 = vadd.f32 %v2751, %v3135
    %v3137 = vpop.f32.mrb[0].mxu0
    %3138 = vmatprep.mubr.f32.mxu0 0.0
    %3139 = vmatmul.mubr.f32.gmra.mrb[0].mxu0 0.0
    %v3140 = vpop.f32.mrb[0].mxu0
    %v3141 = vadd.f32 %v2756, %v3140
    %v3142 = vpop.f32.mrb[0].mxu0
    %3143 = vmatprep.mubr.f32.mxu0 0.0
    %3144 = vmatmul.mubr.f32.gmra.mrb[0].mxu0 0.0
    %v3145 = vpop.f32.mrb[0].mxu0
    %v3146 = vadd.f32 %v2761, %v3145
    %v3147 = vpop.f32.mrb[0].mxu0
    %3148 = vdwg.mxu0
    %v3149 = vld [vmem:[%s4] sm:$0x1]
    %v3150 = vld [vmem:[%s5] sm:$0x1]
    %v3151 = vadd.f32 %v2831, %v2836
    %v3152 = vadd.f32 %v3151, %v2841
    %v3153 = vadd.f32 %v3152, %v2846
    %v3154 = vadd.f32 %v3153, %v2851
    %v3155 = vadd.f32 %v3154, %v2856
    %v3156 = vadd.f32 %v3155, %v2861
    %v3157 = vadd.f32 %v3156, %v2866
    %v3158 = vadd.f32 %v3157, %v2871
    %v3159 = vadd.f32 %v3158, %v2876
    %v3160 = vadd.f32 %v3159, %v2881
    %v3161 = vadd.f32 %v3160, %v2886
    %v3162 = vadd.f32 %v3161, %v2891
    %v3163 = vadd.f32 %v3162, %v2896
    %v3164 = vadd.f32 %v3163, %v2901
    %v3165 = vadd.f32 %v3164, %v2906
    %v3166 = vadd.f32 %v3165, %v2911
    %v3167 = vadd.f32 %v3166, %v2916
    %v3168 = vadd.f32 %v3167, %v2921
    %v3169 = vadd.f32 %v3168, %v2926
    %v3170 = vadd.f32 %v3169, %v2931
    %v3171 = vadd.f32 %v3170, %v2936
    %v3172 = vadd.f32 %v3171, %v2941
    %v3173 = vadd.f32 %v3172, %v2946
    %v3174 = vadd.f32 %v3173, %v2951
    %v3175 = vadd.f32 %v3174, %v2956
    %v3176 = vadd.f32 %v3175, %v2961
    %v3177 = vadd.f32 %v3176, %v2966
    %v3178 = vadd.f32 %v3177, %v2971
    %v3179 = vadd.f32 %v3178, %v2976
    %v3180 = vadd.f32 %v3179, %v2981
    %v3181 = vadd.f32 %v3180, %v2986
    %v3182 = vadd.f32 %v3181, %v2991
    %v3183 = vadd.f32 %v3182, %v2996
    %v3184 = vadd.f32 %v3183, %v3001
    %v3185 = vadd.f32 %v3184, %v3006
    %v3186 = vadd.f32 %v3185, %v3011
    %v3187 = vadd.f32 %v3186, %v3016
    %v3188 = vadd.f32 %v3187, %v3021
    %v3189 = vadd.f32 %v3188, %v3026
    %v3190 = vadd.f32 %v3189, %v3031
    %v3191 = vadd.f32 %v3190, %v3036
    %v3192 = vadd.f32 %v3191, %v3041
    %v3193 = vadd.f32 %v3192, %v3046
    %v3194 = vadd.f32 %v3193, %v3051
    %v3195 = vadd.f32 %v3194, %v3056
    %v3196 = vadd.f32 %v3195, %v3061
    %v3197 = vadd.f32 %v3196, %v3066
    %v3198 = vadd.f32 %v3197, %v3071
    %v3199 = vadd.f32 %v3198, %v3076
    %v3200 = vadd.f32 %v3199, %v3081
    %v3201 = vadd.f32 %v3200, %v3086
    %v3202 = vadd.f32 %v3201, %v3091
    %v3203 = vadd.f32 %v3202, %v3096
    %v3204 = vadd.f32 %v3203, %v3101
    %v3205 = vadd.f32 %v3204, %v3106
    %v3206 = vadd.f32 %v3205, %v3111
    %v3207 = vadd.f32 %v3206, %v3116
    %v3208 = vadd.f32 %v3207, %v3121
    %v3209 = vadd.f32 %v3208, %v3126
    %v3210 = vadd.f32 %v3209, %v3131
    %v3211 = vadd.f32 %v3210, %v3136
    %v3212 = vadd.f32 %v3211, %v3141
    %v3213 = vadd.f32 %v3212, %v3146
    %v3214 = vrot.slane %v3213, 4
    %v3215 = vadd.f32 %v3213, %v3214
    %v3216 = vrot.slane %v3215, 2
    %v3217 = vadd.f32 %v3215, %v3216
    %v3218 = vrot.slane %v3217, 1
    %v3219 = vadd.f32 %v3217, %v3218
    %v3220 = vmul.f32 %v2831, %v2831
    %v3221 = vmul.f32 %v2836, %v2836
    %v3222 = vmul.f32 %v2841, %v2841
    %v3223 = vmul.f32 %v2846, %v2846
    %v3224 = vmul.f32 %v2851, %v2851
    %v3225 = vmul.f32 %v2856, %v2856
    %v3226 = vmul.f32 %v2861, %v2861
    %v3227 = vmul.f32 %v2866, %v2866
    %v3228 = vmul.f32 %v2871, %v2871
    %v3229 = vmul.f32 %v2876, %v2876
    %v3230 = vmul.f32 %v2881, %v2881
    %v3231 = vmul.f32 %v2886, %v2886
    %v3232 = vmul.f32 %v2891, %v2891
    %v3233 = vmul.f32 %v2896, %v2896
    %v3234 = vmul.f32 %v2901, %v2901
    %v3235 = vmul.f32 %v2906, %v2906
    %v3236 = vmul.f32 %v2911, %v2911
    %v3237 = vmul.f32 %v2916, %v2916
    %v3238 = vmul.f32 %v2921, %v2921
    %v3239 = vmul.f32 %v2926, %v2926
    %v3240 = vmul.f32 %v2931, %v2931
    %v3241 = vmul.f32 %v2936, %v2936
    %v3242 = vmul.f32 %v2941, %v2941
    %v3243 = vmul.f32 %v2946, %v2946
    %v3244 = vmul.f32 %v2951, %v2951
    %v3245 = vmul.f32 %v2956, %v2956
    %v3246 = vmul.f32 %v2961, %v2961
    %v3247 = vmul.f32 %v2966, %v2966
    %v3248 = vmul.f32 %v2971, %v2971
    %v3249 = vmul.f32 %v2976, %v2976
    %v3250 = vmul.f32 %v2981, %v2981
    %v3251 = vmul.f32 %v2986, %v2986
    %v3252 = vmul.f32 %v2991, %v2991
    %v3253 = vmul.f32 %v2996, %v2996
    %v3254 = vmul.f32 %v3001, %v3001
    %v3255 = vmul.f32 %v3006, %v3006
    %v3256 = vmul.f32 %v3011, %v3011
    %v3257 = vmul.f32 %v3016, %v3016
    %v3258 = vmul.f32 %v3021, %v3021
    %v3259 = vmul.f32 %v3026, %v3026
    %v3260 = vmul.f32 %v3031, %v3031
    %v3261 = vmul.f32 %v3036, %v3036
    %v3262 = vmul.f32 %v3041, %v3041
    %v3263 = vmul.f32 %v3046, %v3046
    %v3264 = vmul.f32 %v3051, %v3051
    %v3265 = vmul.f32 %v3056, %v3056
    %v3266 = vmul.f32 %v3061, %v3061
    %v3267 = vmul.f32 %v3066, %v3066
    %v3268 = vmul.f32 %v3071, %v3071
    %v3269 = vmul.f32 %v3076, %v3076
    %v3270 = vmul.f32 %v3081, %v3081
    %v3271 = vmul.f32 %v3086, %v3086
    %v3272 = vmul.f32 %v3091, %v3091
    %v3273 = vmul.f32 %v3096, %v3096
    %v3274 = vmul.f32 %v3101, %v3101
    %v3275 = vmul.f32 %v3106, %v3106
    %v3276 = vmul.f32 %v3111, %v3111
    %v3277 = vmul.f32 %v3116, %v3116
    %v3278 = vmul.f32 %v3121, %v3121
    %v3279 = vmul.f32 %v3126, %v3126
    %v3280 = vmul.f32 %v3131, %v3131
    %v3281 = vmul.f32 %v3136, %v3136
    %v3282 = vmul.f32 %v3141, %v3141
    %v3283 = vmul.f32 %v3146, %v3146
    %v3284 = vadd.f32 %v3220, %v3221
    %v3285 = vadd.f32 %v3284, %v3222
    %v3286 = vadd.f32 %v3285, %v3223
    %v3287 = vadd.f32 %v3286, %v3224
    %v3288 = vadd.f32 %v3287, %v3225
    %v3289 = vadd.f32 %v3288, %v3226
    %v3290 = vadd.f32 %v3289, %v3227
    %v3291 = vadd.f32 %v3290, %v3228
    %v3292 = vadd.f32 %v3291, %v3229
    %v3293 = vadd.f32 %v3292, %v3230
    %v3294 = vadd.f32 %v3293, %v3231
    %v3295 = vadd.f32 %v3294, %v3232
    %v3296 = vadd.f32 %v3295, %v3233
    %v3297 = vadd.f32 %v3296, %v3234
    %v3298 = vadd.f32 %v3297, %v3235
    %v3299 = vadd.f32 %v3298, %v3236
    %v3300 = vadd.f32 %v3299, %v3237
    %v3301 = vadd.f32 %v3300, %v3238
    %v3302 = vadd.f32 %v3301, %v3239
    %v3303 = vadd.f32 %v3302, %v3240
    %v3304 = vadd.f32 %v3303, %v3241
    %v3305 = vadd.f32 %v3304, %v3242
    %v3306 = vadd.f32 %v3305, %v3243
    %v3307 = vadd.f32 %v3306, %v3244
    %v3308 = vadd.f32 %v3307, %v3245
    %v3309 = vadd.f32 %v3308, %v3246
    %v3310 = vadd.f32 %v3309, %v3247
    %v3311 = vadd.f32 %v3310, %v3248
    %v3312 = vadd.f32 %v3311, %v3249
    %v3313 = vadd.f32 %v3312, %v3250
    %v3314 = vadd.f32 %v3313, %v3251
    %v3315 = vadd.f32 %v3314, %v3252
    %v3316 = vadd.f32 %v3315, %v3253
    %v3317 = vadd.f32 %v3316, %v3254
    %v3318 = vadd.f32 %v3317, %v3255
    %v3319 = vadd.f32 %v3318, %v3256
    %v3320 = vadd.f32 %v3319, %v3257
    %v3321 = vadd.f32 %v3320, %v3258
    %v3322 = vadd.f32 %v3321, %v3259
    %v3323 = vadd.f32 %v3322, %v3260
    %v3324 = vadd.f32 %v3323, %v3261
    %v3325 = vadd.f32 %v3324, %v3262
    %v3326 = vadd.f32 %v3325, %v3263
    %v3327 = vadd.f32 %v3326, %v3264
    %v3328 = vadd.f32 %v3327, %v3265
    %v3329 = vadd.f32 %v3328, %v3266
    %v3330 = vadd.f32 %v3329, %v3267
    %v3331 = vadd.f32 %v3330, %v3268
    %v3332 = vadd.f32 %v3331, %v3269
    %v3333 = vadd.f32 %v3332, %v3270
    %v3334 = vadd.f32 %v3333, %v3271
    %v3335 = vadd.f32 %v3334, %v3272
    %v3336 = vadd.f32 %v3335, %v3273
    %v3337 = vadd.f32 %v3336, %v3274
    %v3338 = vadd.f32 %v3337, %v3275
    %v3339 = vadd.f32 %v3338, %v3276
    %v3340 = vadd.f32 %v3339, %v3277
    %v3341 = vadd.f32 %v3340, %v3278
    %v3342 = vadd.f32 %v3341, %v3279
    %v3343 = vadd.f32 %v3342, %v3280
    %v3344 = vadd.f32 %v3343, %v3281
    %v3345 = vadd.f32 %v3344, %v3282
    %v3346 = vadd.f32 %v3345, %v3283
    %v3347 = vrot.slane %v3346, 4
    %v3348 = vadd.f32 %v3346, %v3347
    %v3349 = vrot.slane %v3348, 2
    %v3350 = vadd.f32 %v3348, %v3349
    %v3351 = vrot.slane %v3350, 1
    %v3352 = vadd.f32 %v3350, %v3351
    %v3353 = vmul.f32 %v3219, 0.001953125
    %v3354 = vmul.f32 %v3352, 0.001953125
    %v3355 = vmul.f32 %v3353, %v3353
    %v3356 = vsub.f32 %v3354, %v3355
    %v3357 = vmax.f32 %v3356, 0.0
    %v3358 = vsub.f32 %v2831, %v3353
    %v3359 = vsub.f32 %v2836, %v3353
    %v3360 = vsub.f32 %v2841, %v3353
    %v3361 = vsub.f32 %v2846, %v3353
    %v3362 = vsub.f32 %v2851, %v3353
    %v3363 = vsub.f32 %v2856, %v3353
    %v3364 = vsub.f32 %v2861, %v3353
    %v3365 = vsub.f32 %v2866, %v3353
    %v3366 = vsub.f32 %v2871, %v3353
    %v3367 = vsub.f32 %v2876, %v3353
    %v3368 = vsub.f32 %v2881, %v3353
    %v3369 = vsub.f32 %v2886, %v3353
    %v3370 = vsub.f32 %v2891, %v3353
    %v3371 = vsub.f32 %v2896, %v3353
    %v3372 = vsub.f32 %v2901, %v3353
    %v3373 = vsub.f32 %v2906, %v3353
    %v3374 = vsub.f32 %v2911, %v3353
    %v3375 = vsub.f32 %v2916, %v3353
    %v3376 = vsub.f32 %v2921, %v3353
    %v3377 = vsub.f32 %v2926, %v3353
    %v3378 = vsub.f32 %v2931, %v3353
    %v3379 = vsub.f32 %v2936, %v3353
    %v3380 = vsub.f32 %v2941, %v3353
    %v3381 = vsub.f32 %v2946, %v3353
    %v3382 = vsub.f32 %v2951, %v3353
    %v3383 = vsub.f32 %v2956, %v3353
    %v3384 = vsub.f32 %v2961, %v3353
    %v3385 = vsub.f32 %v2966, %v3353
    %v3386 = vsub.f32 %v2971, %v3353
    %v3387 = vsub.f32 %v2976, %v3353
    %v3388 = vsub.f32 %v2981, %v3353
    %v3389 = vsub.f32 %v2986, %v3353
    %v3390 = vsub.f32 %v2991, %v3353
    %v3391 = vsub.f32 %v2996, %v3353
    %v3392 = vsub.f32 %v3001, %v3353
    %v3393 = vsub.f32 %v3006, %v3353
    %v3394 = vsub.f32 %v3011, %v3353
    %v3395 = vsub.f32 %v3016, %v3353
    %v3396 = vsub.f32 %v3021, %v3353
    %v3397 = vsub.f32 %v3026, %v3353
    %v3398 = vsub.f32 %v3031, %v3353
    %v3399 = vsub.f32 %v3036, %v3353
    %v3400 = vsub.f32 %v3041, %v3353
    %v3401 = vsub.f32 %v3046, %v3353
    %v3402 = vsub.f32 %v3051, %v3353
    %v3403 = vsub.f32 %v3056, %v3353
    %v3404 = vsub.f32 %v3061, %v3353
    %v3405 = vsub.f32 %v3066, %v3353
    %v3406 = vsub.f32 %v3071, %v3353
    %v3407 = vsub.f32 %v3076, %v3353
    %v3408 = vsub.f32 %v3081, %v3353
    %v3409 = vsub.f32 %v3086, %v3353
    %v3410 = vsub.f32 %v3091, %v3353
    %v3411 = vsub.f32 %v3096, %v3353
    %v3412 = vsub.f32 %v3101, %v3353
    %v3413 = vsub.f32 %v3106, %v3353
    %v3414 = vsub.f32 %v3111, %v3353
    %v3415 = vsub.f32 %v3116, %v3353
    %v3416 = vsub.f32 %v3121, %v3353
    %v3417 = vsub.f32 %v3126, %v3353
    %v3418 = vsub.f32 %v3131, %v3353
    %v3419 = vsub.f32 %v3136, %v3353
    %v3420 = vsub.f32 %v3141, %v3353
    %v3421 = vsub.f32 %v3146, %v3353
    %v3422 = vadd.f32 %v3357, 1e-05
    %v3423 = vrsqrt.pop %v3422
    %v3424 = vmul.f32 %v3358, %v3423
    %v3425 = vmul.f32 %v3359, %v3423
    %v3426 = vmul.f32 %v3360, %v3423
    %v3427 = vmul.f32 %v3361, %v3423
    %v3428 = vmul.f32 %v3362, %v3423
    %v3429 = vmul.f32 %v3363, %v3423
    %v3430 = vmul.f32 %v3364, %v3423
    %v3431 = vmul.f32 %v3365, %v3423
    %v3432 = vmul.f32 %v3366, %v3423
    %v3433 = vmul.f32 %v3367, %v3423
    %v3434 = vmul.f32 %v3368, %v3423
    %v3435 = vmul.f32 %v3369, %v3423
    %v3436 = vmul.f32 %v3370, %v3423
    %v3437 = vmul.f32 %v3371, %v3423
    %v3438 = vmul.f32 %v3372, %v3423
    %v3439 = vmul.f32 %v3373, %v3423
    %v3440 = vmul.f32 %v3374, %v3423
    %v3441 = vmul.f32 %v3375, %v3423
    %v3442 = vmul.f32 %v3376, %v3423
    %v3443 = vmul.f32 %v3377, %v3423
    %v3444 = vmul.f32 %v3378, %v3423
    %v3445 = vmul.f32 %v3379, %v3423
    %v3446 = vmul.f32 %v3380, %v3423
    %v3447 = vmul.f32 %v3381, %v3423
    %v3448 = vmul.f32 %v3382, %v3423
    %v3449 = vmul.f32 %v3383, %v3423
    %v3450 = vmul.f32 %v3384, %v3423
    %v3451 = vmul.f32 %v3385, %v3423
    %v3452 = vmul.f32 %v3386, %v3423
    %v3453 = vmul.f32 %v3387, %v3423
    %v3454 = vmul.f32 %v3388, %v3423
    %v3455 = vmul.f32 %v3389, %v3423
    %v3456 = vmul.f32 %v3390, %v3423
    %v3457 = vmul.f32 %v3391, %v3423
    %v3458 = vmul.f32 %v3392, %v3423
    %v3459 = vmul.f32 %v3393, %v3423
    %v3460 = vmul.f32 %v3394, %v3423
    %v3461 = vmul.f32 %v3395, %v3423
    %v3462 = vmul.f32 %v3396, %v3423
    %v3463 = vmul.f32 %v3397, %v3423
    %v3464 = vmul.f32 %v3398, %v3423
    %v3465 = vmul.f32 %v3399, %v3423
    %v3466 = vmul.f32 %v3400, %v3423
    %v3467 = vmul.f32 %v3401, %v3423
    %v3468 = vmul.f32 %v3402, %v3423
    %v3469 = vmul.f32 %v3403, %v3423
    %v3470 = vmul.f32 %v3404, %v3423
    %v3471 = vmul.f32 %v3405, %v3423
    %v3472 = vmul.f32 %v3406, %v3423
    %v3473 = vmul.f32 %v3407, %v3423
    %v3474 = vmul.f32 %v3408, %v3423
    %v3475 = vmul.f32 %v3409, %v3423
    %v3476 = vmul.f32 %v3410, %v3423
    %v3477 = vmul.f32 %v3411, %v3423
    %v3478 = vmul.f32 %v3412, %v3423
    %v3479 = vmul.f32 %v3413, %v3423
    %v3480 = vmul.f32 %v3414, %v3423
    %v3481 = vmul.f32 %v3415, %v3423
    %v3482 = vmul.f32 %v3416, %v3423
    %v3483 = vmul.f32 %v3417, %v3423
    %v3484 = vmul.f32 %v3418, %v3423
    %v3485 = vmul.f32 %v3419, %v3423
    %v3486 = vmul.f32 %v3420, %v3423
    %v3487 = vmul.f32 %v3421, %v3423
    %v3489 = vlaneseq
    %v3490 = vshrl.u32 %v3489, 7
    %v3491 = vsub.s32 0, %v3490
    %v3492 = vrot.slane %v3149, %v3491
    %v3494 = vmul.f32 %v3424, %v3492
    %v3495 = vmul.f32 %v3425, %v3492
    %v3496 = vmul.f32 %v3426, %v3492
    %v3497 = vmul.f32 %v3427, %v3492
    %v3498 = vmul.f32 %v3428, %v3492
    %v3499 = vmul.f32 %v3429, %v3492
    %v3500 = vmul.f32 %v3430, %v3492
    %v3501 = vmul.f32 %v3431, %v3492
    %v3502 = vmul.f32 %v3432, %v3492
    %v3503 = vmul.f32 %v3433, %v3492
    %v3504 = vmul.f32 %v3434, %v3492
    %v3505 = vmul.f32 %v3435, %v3492
    %v3506 = vmul.f32 %v3436, %v3492
    %v3507 = vmul.f32 %v3437, %v3492
    %v3508 = vmul.f32 %v3438, %v3492
    %v3509 = vmul.f32 %v3439, %v3492
    %v3510 = vmul.f32 %v3440, %v3492
    %v3511 = vmul.f32 %v3441, %v3492
    %v3512 = vmul.f32 %v3442, %v3492
    %v3513 = vmul.f32 %v3443, %v3492
    %v3514 = vmul.f32 %v3444, %v3492
    %v3515 = vmul.f32 %v3445, %v3492
    %v3516 = vmul.f32 %v3446, %v3492
    %v3517 = vmul.f32 %v3447, %v3492
    %v3518 = vmul.f32 %v3448, %v3492
    %v3519 = vmul.f32 %v3449, %v3492
    %v3520 = vmul.f32 %v3450, %v3492
    %v3521 = vmul.f32 %v3451, %v3492
    %v3522 = vmul.f32 %v3452, %v3492
    %v3523 = vmul.f32 %v3453, %v3492
    %v3524 = vmul.f32 %v3454, %v3492
    %v3525 = vmul.f32 %v3455, %v3492
    %v3526 = vmul.f32 %v3456, %v3492
    %v3527 = vmul.f32 %v3457, %v3492
    %v3528 = vmul.f32 %v3458, %v3492
    %v3529 = vmul.f32 %v3459, %v3492
    %v3530 = vmul.f32 %v3460, %v3492
    %v3531 = vmul.f32 %v3461, %v3492
    %v3532 = vmul.f32 %v3462, %v3492
    %v3533 = vmul.f32 %v3463, %v3492
    %v3534 = vmul.f32 %v3464, %v3492
    %v3535 = vmul.f32 %v3465, %v3492
    %v3536 = vmul.f32 %v3466, %v3492
    %v3537 = vmul.f32 %v3467, %v3492
    %v3538 = vmul.f32 %v3468, %v3492
    %v3539 = vmul.f32 %v3469, %v3492
    %v3540 = vmul.f32 %v3470, %v3492
    %v3541 = vmul.f32 %v3471, %v3492
    %v3542 = vmul.f32 %v3472, %v3492
    %v3543 = vmul.f32 %v3473, %v3492
    %v3544 = vmul.f32 %v3474, %v3492
    %v3545 = vmul.f32 %v3475, %v3492
    %v3546 = vmul.f32 %v3476, %v3492
    %v3547 = vmul.f32 %v3477, %v3492
    %v3548 = vmul.f32 %v3478, %v3492
    %v3549 = vmul.f32 %v3479, %v3492
    %v3550 = vmul.f32 %v3480, %v3492
    %v3551 = vmul.f32 %v3481, %v3492
    %v3552 = vmul.f32 %v3482, %v3492
    %v3553 = vmul.f32 %v3483, %v3492
    %v3554 = vmul.f32 %v3484, %v3492
    %v3555 = vmul.f32 %v3485, %v3492
    %v3556 = vmul.f32 %v3486, %v3492
    %v3557 = vmul.f32 %v3487, %v3492
    %v3559 = vlaneseq
    %v3560 = vshrl.u32 %v3559, 7
    %v3561 = vsub.s32 0, %v3560
    %v3562 = vrot.slane %v3150, %v3561
    %v3564 = vadd.f32 %v3494, %v3562
    %v3565 = vadd.f32 %v3495, %v3562
    %v3566 = vadd.f32 %v3496, %v3562
    %v3567 = vadd.f32 %v3497, %v3562
    %v3568 = vadd.f32 %v3498, %v3562
    %v3569 = vadd.f32 %v3499, %v3562
    %v3570 = vadd.f32 %v3500, %v3562
    %v3571 = vadd.f32 %v3501, %v3562
    %v3572 = vadd.f32 %v3502, %v3562
    %v3573 = vadd.f32 %v3503, %v3562
    %v3574 = vadd.f32 %v3504, %v3562
    %v3575 = vadd.f32 %v3505, %v3562
    %v3576 = vadd.f32 %v3506, %v3562
    %v3577 = vadd.f32 %v3507, %v3562
    %v3578 = vadd.f32 %v3508, %v3562
    %v3579 = vadd.f32 %v3509, %v3562
    %v3580 = vadd.f32 %v3510, %v3562
    %v3581 = vadd.f32 %v3511, %v3562
    %v3582 = vadd.f32 %v3512, %v3562
    %v3583 = vadd.f32 %v3513, %v3562
    %v3584 = vadd.f32 %v3514, %v3562
    %v3585 = vadd.f32 %v3515, %v3562
    %v3586 = vadd.f32 %v3516, %v3562
    %v3587 = vadd.f32 %v3517, %v3562
    %v3588 = vadd.f32 %v3518, %v3562
    %v3589 = vadd.f32 %v3519, %v3562
    %v3590 = vadd.f32 %v3520, %v3562
    %v3591 = vadd.f32 %v3521, %v3562
    %v3592 = vadd.f32 %v3522, %v3562
    %v3593 = vadd.f32 %v3523, %v3562
    %v3594 = vadd.f32 %v3524, %v3562
    %v3595 = vadd.f32 %v3525, %v3562
    %v3596 = vadd.f32 %v3526, %v3562
    %v3597 = vadd.f32 %v3527, %v3562
    %v3598 = vadd.f32 %v3528, %v3562
    %v3599 = vadd.f32 %v3529, %v3562
    %v3600 = vadd.f32 %v3530, %v3562
    %v3601 = vadd.f32 %v3531, %v3562
    %v3602 = vadd.f32 %v3532, %v3562
    %v3603 = vadd.f32 %v3533, %v3562
    %v3604 = vadd.f32 %v3534, %v3562
    %v3605 = vadd.f32 %v3535, %v3562
    %v3606 = vadd.f32 %v3536, %v3562
    %v3607 = vadd.f32 %v3537, %v3562
    %v3608 = vadd.f32 %v3538, %v3562
    %v3609 = vadd.f32 %v3539, %v3562
    %v3610 = vadd.f32 %v3540, %v3562
    %v3611 = vadd.f32 %v3541, %v3562
    %v3612 = vadd.f32 %v3542, %v3562
    %v3613 = vadd.f32 %v3543, %v3562
    %v3614 = vadd.f32 %v3544, %v3562
    %v3615 = vadd.f32 %v3545, %v3562
    %v3616 = vadd.f32 %v3546, %v3562
    %v3617 = vadd.f32 %v3547, %v3562
    %v3618 = vadd.f32 %v3548, %v3562
    %v3619 = vadd.f32 %v3549, %v3562
    %v3620 = vadd.f32 %v3550, %v3562
    %v3621 = vadd.f32 %v3551, %v3562
    %v3622 = vadd.f32 %v3552, %v3562
    %v3623 = vadd.f32 %v3553, %v3562
    %v3624 = vadd.f32 %v3554, %v3562
    %v3625 = vadd.f32 %v3555, %v3562
    %v3626 = vadd.f32 %v3556, %v3562
    %v3627 = vadd.f32 %v3557, %v3562
    %v3628 = vmax.f32 %v3564, 0.0
    %v3629 = vmax.f32 %v3565, 0.0
    %v3630 = vmax.f32 %v3566, 0.0
    %v3631 = vmax.f32 %v3567, 0.0
    %v3632 = vmax.f32 %v3568, 0.0
    %v3633 = vmax.f32 %v3569, 0.0
    %v3634 = vmax.f32 %v3570, 0.0
    %v3635 = vmax.f32 %v3571, 0.0
    %v3636 = vmax.f32 %v3572, 0.0
    %v3637 = vmax.f32 %v3573, 0.0
    %v3638 = vmax.f32 %v3574, 0.0
    %v3639 = vmax.f32 %v3575, 0.0
    %v3640 = vmax.f32 %v3576, 0.0
    %v3641 = vmax.f32 %v3577, 0.0
    %v3642 = vmax.f32 %v3578, 0.0
    %v3643 = vmax.f32 %v3579, 0.0
    %v3644 = vmax.f32 %v3580, 0.0
    %v3645 = vmax.f32 %v3581, 0.0
    %v3646 = vmax.f32 %v3582, 0.0
    %v3647 = vmax.f32 %v3583, 0.0
    %v3648 = vmax.f32 %v3584, 0.0
    %v3649 = vmax.f32 %v3585, 0.0
    %v3650 = vmax.f32 %v3586, 0.0
    %v3651 = vmax.f32 %v3587, 0.0
    %v3652 = vmax.f32 %v3588, 0.0
    %v3653 = vmax.f32 %v3589, 0.0
    %v3654 = vmax.f32 %v3590, 0.0
    %v3655 = vmax.f32 %v3591, 0.0
    %v3656 = vmax.f32 %v3592, 0.0
    %v3657 = vmax.f32 %v3593, 0.0
    %v3658 = vmax.f32 %v3594, 0.0
    %v3659 = vmax.f32 %v3595, 0.0
    %v3660 = vmax.f32 %v3596, 0.0
    %v3661 = vmax.f32 %v3597, 0.0
    %v3662 = vmax.f32 %v3598, 0.0
    %v3663 = vmax.f32 %v3599, 0.0
    %v3664 = vmax.f32 %v3600, 0.0
    %v3665 = vmax.f32 %v3601, 0.0
    %v3666 = vmax.f32 %v3602, 0.0
    %v3667 = vmax.f32 %v3603, 0.0
    %v3668 = vmax.f32 %v3604, 0.0
    %v3669 = vmax.f32 %v3605, 0.0
    %v3670 = vmax.f32 %v3606, 0.0
    %v3671 = vmax.f32 %v3607, 0.0
    %v3672 = vmax.f32 %v3608, 0.0
    %v3673 = vmax.f32 %v3609, 0.0
    %v3674 = vmax.f32 %v3610, 0.0
    %v3675 = vmax.f32 %v3611, 0.0
    %v3676 = vmax.f32 %v3612, 0.0
    %v3677 = vmax.f32 %v3613, 0.0
    %v3678 = vmax.f32 %v3614, 0.0
    %v3679 = vmax.f32 %v3615, 0.0
    %v3680 = vmax.f32 %v3616, 0.0
    %v3681 = vmax.f32 %v3617, 0.0
    %v3682 = vmax.f32 %v3618, 0.0
    %v3683 = vmax.f32 %v3619, 0.0
    %v3684 = vmax.f32 %v3620, 0.0
    %v3685 = vmax.f32 %v3621, 0.0
    %v3686 = vmax.f32 %v3622, 0.0
    %v3687 = vmax.f32 %v3623, 0.0
    %v3688 = vmax.f32 %v3624, 0.0
    %v3689 = vmax.f32 %v3625, 0.0
    %v3690 = vmax.f32 %v3626, 0.0
    %v3691 = vmax.f32 %v3627, 0.0
    %v3692 = vld [vmem:[#allocation7] sm:$0xff]
    %v3693 = vld [vmem:[#allocation7 + $0x8] sm:$0xff]
    %v3694 = vld [vmem:[#allocation7 + $0x10] sm:$0xff]
    %v3695 = vld [vmem:[#allocation7 + $0x18] sm:$0xff]
    %v3696 = vld [vmem:[#allocation7 + $0x20] sm:$0xff]
    %v3697 = vld [vmem:[#allocation7 + $0x28] sm:$0xff]
    %v3698 = vld [vmem:[#allocation7 + $0x30] sm:$0xff]
    %v3699 = vld [vmem:[#allocation7 + $0x38] sm:$0xff]
    %v3700 = vld [vmem:[#allocation7 + $0x40] sm:$0xff]
    %v3701 = vld [vmem:[#allocation7 + $0x48] sm:$0xff]
    %v3702 = vld [vmem:[#allocation7 + $0x50] sm:$0xff]
    %v3703 = vld [vmem:[#allocation7 + $0x58] sm:$0xff]
    %v3704 = vld [vmem:[#allocation7 + $0x60] sm:$0xff]
    %v3705 = vld [vmem:[#allocation7 + $0x68] sm:$0xff]
    %v3706 = vld [vmem:[#allocation7 + $0x70] sm:$0xff]
    %v3707 = vld [vmem:[#allocation7 + $0x78] sm:$0xff]
    %v3708 = vld [vmem:[#allocation7 + $0x80] sm:$0xff]
    %v3709 = vld [vmem:[#allocation7 + $0x88] sm:$0xff]
    %v3710 = vld [vmem:[#allocation7 + $0x90] sm:$0xff]
    %v3711 = vld [vmem:[#allocation7 + $0x98] sm:$0xff]
    %v3712 = vld [vmem:[#allocation7 + $0xa0] sm:$0xff]
    %v3713 = vld [vmem:[#allocation7 + $0xa8] sm:$0xff]
    %v3714 = vld [vmem:[#allocation7 + $0xb0] sm:$0xff]
    %v3715 = vld [vmem:[#allocation7 + $0xb8] sm:$0xff]
    %v3716 = vld [vmem:[#allocation7 + $0xc0] sm:$0xff]
    %v3717 = vld [vmem:[#allocation7 + $0xc8] sm:$0xff]
    %v3718 = vld [vmem:[#allocation7 + $0xd0] sm:$0xff]
    %v3719 = vld [vmem:[#allocation7 + $0xd8] sm:$0xff]
    %v3720 = vld [vmem:[#allocation7 + $0xe0] sm:$0xff]
    %v3721 = vld [vmem:[#allocation7 + $0xe8] sm:$0xff]
    %v3722 = vld [vmem:[#allocation7 + $0xf0] sm:$0xff]
    %v3723 = vld [vmem:[#allocation7 + $0xf8] sm:$0xff]
    %v3724 = vld [vmem:[#allocation7 + $0x100] sm:$0xff]
    %v3725 = vld [vmem:[#allocation7 + $0x108] sm:$0xff]
    %v3726 = vld [vmem:[#allocation7 + $0x110] sm:$0xff]
    %v3727 = vld [vmem:[#allocation7 + $0x118] sm:$0xff]
    %v3728 = vld [vmem:[#allocation7 + $0x120] sm:$0xff]
    %v3729 = vld [vmem:[#allocation7 + $0x128] sm:$0xff]
    %v3730 = vld [vmem:[#allocation7 + $0x130] sm:$0xff]
    %v3731 = vld [vmem:[#allocation7 + $0x138] sm:$0xff]
    %v3732 = vld [vmem:[#allocation7 + $0x140] sm:$0xff]
    %v3733 = vld [vmem:[#allocation7 + $0x148] sm:$0xff]
    %v3734 = vld [vmem:[#allocation7 + $0x150] sm:$0xff]
    %v3735 = vld [vmem:[#allocation7 + $0x158] sm:$0xff]
    %v3736 = vld [vmem:[#allocation7 + $0x160] sm:$0xff]
    %v3737 = vld [vmem:[#allocation7 + $0x168] sm:$0xff]
    %v3738 = vld [vmem:[#allocation7 + $0x170] sm:$0xff]
    %v3739 = vld [vmem:[#allocation7 + $0x178] sm:$0xff]
    %v3740 = vld [vmem:[#allocation7 + $0x180] sm:$0xff]
    %v3741 = vld [vmem:[#allocation7 + $0x188] sm:$0xff]
    %v3742 = vld [vmem:[#allocation7 + $0x190] sm:$0xff]
    %v3743 = vld [vmem:[#allocation7 + $0x198] sm:$0xff]
    %v3744 = vld [vmem:[#allocation7 + $0x1a0] sm:$0xff]
    %v3745 = vld [vmem:[#allocation7 + $0x1a8] sm:$0xff]
    %v3746 = vld [vmem:[#allocation7 + $0x1b0] sm:$0xff]
    %v3747 = vld [vmem:[#allocation7 + $0x1b8] sm:$0xff]
    %v3748 = vld [vmem:[#allocation7 + $0x1c0] sm:$0xff]
    %v3749 = vld [vmem:[#allocation7 + $0x1c8] sm:$0xff]
    %v3750 = vld [vmem:[#allocation7 + $0x1d0] sm:$0xff]
    %v3751 = vld [vmem:[#allocation7 + $0x1d8] sm:$0xff]
    %v3752 = vld [vmem:[#allocation7 + $0x1e0] sm:$0xff]
    %v3753 = vld [vmem:[#allocation7 + $0x1e8] sm:$0xff]
    %v3754 = vld [vmem:[#allocation7 + $0x1f0] sm:$0xff]
    %v3755 = vld [vmem:[#allocation7 + $0x1f8] sm:$0xff]
    %v3756 = vld [vmem:[#allocation7 + $0x200] sm:$0xff]
    %v3757 = vld [vmem:[#allocation7 + $0x208] sm:$0xff]
    %v3758 = vld [vmem:[#allocation7 + $0x210] sm:$0xff]
    %v3759 = vld [vmem:[#allocation7 + $0x218] sm:$0xff]
    %v3760 = vld [vmem:[#allocation7 + $0x220] sm:$0xff]
    %v3761 = vld [vmem:[#allocation7 + $0x228] sm:$0xff]
    %v3762 = vld [vmem:[#allocation7 + $0x230] sm:$0xff]
    %v3763 = vld [vmem:[#allocation7 + $0x238] sm:$0xff]
    %v3764 = vld [vmem:[#allocation7 + $0x240] sm:$0xff]
    %v3765 = vld [vmem:[#allocation7 + $0x248] sm:$0xff]
    %v3766 = vld [vmem:[#allocation7 + $0x250] sm:$0xff]
    %v3767 = vld [vmem:[#allocation7 + $0x258] sm:$0xff]
    %v3768 = vld [vmem:[#allocation7 + $0x260] sm:$0xff]
    %v3769 = vld [vmem:[#allocation7 + $0x268] sm:$0xff]
    %v3770 = vld [vmem:[#allocation7 + $0x270] sm:$0xff]
    %v3771 = vld [vmem:[#allocation7 + $0x278] sm:$0xff]
    %v3772 = vld [vmem:[#allocation7 + $0x280] sm:$0xff]
    %v3773 = vld [vmem:[#allocation7 + $0x288] sm:$0xff]
    %v3774 = vld [vmem:[#allocation7 + $0x290] sm:$0xff]
    %v3775 = vld [vmem:[#allocation7 + $0x298] sm:$0xff]
    %v3776 = vld [vmem:[#allocation7 + $0x2a0] sm:$0xff]
    %v3777 = vld [vmem:[#allocation7 + $0x2a8] sm:$0xff]
    %v3778 = vld [vmem:[#allocation7 + $0x2b0] sm:$0xff]
    %v3779 = vld [vmem:[#allocation7 + $0x2b8] sm:$0xff]
    %v3780 = vld [vmem:[#allocation7 + $0x2c0] sm:$0xff]
    %v3781 = vld [vmem:[#allocation7 + $0x2c8] sm:$0xff]
    %v3782 = vld [vmem:[#allocation7 + $0x2d0] sm:$0xff]
    %v3783 = vld [vmem:[#allocation7 + $0x2d8] sm:$0xff]
    %v3784 = vld [vmem:[#allocation7 + $0x2e0] sm:$0xff]
    %v3785 = vld [vmem:[#allocation7 + $0x2e8] sm:$0xff]
    %v3786 = vld [vmem:[#allocation7 + $0x2f0] sm:$0xff]
    %v3787 = vld [vmem:[#allocation7 + $0x2f8] sm:$0xff]
    %v3788 = vld [vmem:[#allocation7 + $0x300] sm:$0xff]
    %v3789 = vld [vmem:[#allocation7 + $0x308] sm:$0xff]
    %v3790 = vld [vmem:[#allocation7 + $0x310] sm:$0xff]
    %v3791 = vld [vmem:[#allocation7 + $0x318] sm:$0xff]
    %v3792 = vld [vmem:[#allocation7 + $0x320] sm:$0xff]
    %v3793 = vld [vmem:[#allocation7 + $0x328] sm:$0xff]
    %v3794 = vld [vmem:[#allocation7 + $0x330] sm:$0xff]
    %v3795 = vld [vmem:[#allocation7 + $0x338] sm:$0xff]
    %v3796 = vld [vmem:[#allocation7 + $0x340] sm:$0xff]
    %v3797 = vld [vmem:[#allocation7 + $0x348] sm:$0xff]
    %v3798 = vld [vmem:[#allocation7 + $0x350] sm:$0xff]
    %v3799 = vld [vmem:[#allocation7 + $0x358] sm:$0xff]
    %v3800 = vld [vmem:[#allocation7 + $0x360] sm:$0xff]
    %v3801 = vld [vmem:[#allocation7 + $0x368] sm:$0xff]
    %v3802 = vld [vmem:[#allocation7 + $0x370] sm:$0xff]
    %v3803 = vld [vmem:[#allocation7 + $0x378] sm:$0xff]
    %v3804 = vld [vmem:[#allocation7 + $0x380] sm:$0xff]
    %v3805 = vld [vmem:[#allocation7 + $0x388] sm:$0xff]
    %v3806 = vld [vmem:[#allocation7 + $0x390] sm:$0xff]
    %v3807 = vld [vmem:[#allocation7 + $0x398] sm:$0xff]
    %v3808 = vld [vmem:[#allocation7 + $0x3a0] sm:$0xff]
    %v3809 = vld [vmem:[#allocation7 + $0x3a8] sm:$0xff]
    %v3810 = vld [vmem:[#allocation7 + $0x3b0] sm:$0xff]
    %v3811 = vld [vmem:[#allocation7 + $0x3b8] sm:$0xff]
    %v3812 = vld [vmem:[#allocation7 + $0x3c0] sm:$0xff]
    %v3813 = vld [vmem:[#allocation7 + $0x3c8] sm:$0xff]
    %v3814 = vld [vmem:[#allocation7 + $0x3d0] sm:$0xff]
    %v3815 = vld [vmem:[#allocation7 + $0x3d8] sm:$0xff]
    %v3816 = vld [vmem:[#allocation7 + $0x3e0] sm:$0xff]
    %v3817 = vld [vmem:[#allocation7 + $0x3e8] sm:$0xff]
    %v3818 = vld [vmem:[#allocation7 + $0x3f0] sm:$0xff]
    %v3819 = vld [vmem:[#allocation7 + $0x3f8] sm:$0xff]
    %v3820 = vld [vmem:[#allocation7 + $0x400] sm:$0xff]
    %v3821 = vld [vmem:[#allocation7 + $0x408] sm:$0xff]
    %v3822 = vld [vmem:[#allocation7 + $0x410] sm:$0xff]
    %v3823 = vld [vmem:[#allocation7 + $0x418] sm:$0xff]
    %v3824 = vld [vmem:[#allocation7 + $0x420] sm:$0xff]
    %v3825 = vld [vmem:[#allocation7 + $0x428] sm:$0xff]
    %v3826 = vld [vmem:[#allocation7 + $0x430] sm:$0xff]
    %v3827 = vld [vmem:[#allocation7 + $0x438] sm:$0xff]
    %v3828 = vld [vmem:[#allocation7 + $0x440] sm:$0xff]
    %v3829 = vld [vmem:[#allocation7 + $0x448] sm:$0xff]
    %v3830 = vld [vmem:[#allocation7 + $0x450] sm:$0xff]
    %v3831 = vld [vmem:[#allocation7 + $0x458] sm:$0xff]
    %v3832 = vld [vmem:[#allocation7 + $0x460] sm:$0xff]
    %v3833 = vld [vmem:[#allocation7 + $0x468] sm:$0xff]
    %v3834 = vld [vmem:[#allocation7 + $0x470] sm:$0xff]
    %v3835 = vld [vmem:[#allocation7 + $0x478] sm:$0xff]
    %v3836 = vrot.slane %v3628, 7
    %v3837 = vrot.slane %v3629, 7
    %v3838 = vrot.slane %v3630, 7
    %v3839 = vrot.slane %v3631, 7
    %v3840 = vrot.slane %v3632, 7
    %v3841 = vrot.slane %v3633, 7
    %v3842 = vrot.slane %v3634, 7
    %v3843 = vrot.slane %v3635, 7
    %v3844 = vrot.slane %v3636, 7
    %v3845 = vrot.slane %v3637, 7
    %v3846 = vrot.slane %v3638, 7
    %v3847 = vrot.slane %v3639, 7
    %v3848 = vrot.slane %v3640, 7
    %v3849 = vrot.slane %v3641, 7
    %v3850 = vrot.slane %v3642, 7
    %v3851 = vrot.slane %v3643, 7
    %v3852 = vrot.slane %v3644, 7
    %v3853 = vrot.slane %v3645, 7
    %v3854 = vrot.slane %v3646, 7
    %v3855 = vrot.slane %v3647, 7
    %v3856 = vrot.slane %v3648, 7
    %v3857 = vrot.slane %v3649, 7
    %v3858 = vrot.slane %v3650, 7
    %v3859 = vrot.slane %v3651, 7
    %v3860 = vrot.slane %v3652, 7
    %v3861 = vrot.slane %v3653, 7
    %v3862 = vrot.slane %v3654, 7
    %v3863 = vrot.slane %v3655, 7
    %v3864 = vrot.slane %v3656, 7
    %v3865 = vrot.slane %v3657, 7
    %v3866 = vrot.slane %v3658, 7
    %v3867 = vrot.slane %v3659, 7
    %v3868 = vrot.slane %v3660, 7
    %v3869 = vrot.slane %v3661, 7
    %v3870 = vrot.slane %v3662, 7
    %v3871 = vrot.slane %v3663, 7
    %v3872 = vrot.slane %v3664, 7
    %v3873 = vrot.slane %v3665, 7
    %v3874 = vrot.slane %v3666, 7
    %v3875 = vrot.slane %v3667, 7
    %v3876 = vrot.slane %v3668, 7
    %v3877 = vrot.slane %v3669, 7
    %v3878 = vrot.slane %v3670, 7
    %v3879 = vrot.slane %v3671, 7
    %v3880 = vrot.slane %v3672, 7
    %v3881 = vrot.slane %v3673, 7
    %v3882 = vrot.slane %v3674, 7
    %v3883 = vrot.slane %v3675, 7
    %v3884 = vrot.slane %v3676, 7
    %v3885 = vrot.slane %v3677, 7
    %v3886 = vrot.slane %v3678, 7
    %v3887 = vrot.slane %v3679, 7
    %v3888 = vrot.slane %v3680, 7
    %v3889 = vrot.slane %v3681, 7
    %v3890 = vrot.slane %v3682, 7
    %v3891 = vrot.slane %v3683, 7
    %v3892 = vrot.slane %v3684, 7
    %v3893 = vrot.slane %v3685, 7
    %v3894 = vrot.slane %v3686, 7
    %v3895 = vrot.slane %v3687, 7
    %v3896 = vrot.slane %v3688, 7
    %v3897 = vrot.slane %v3689, 7
    %v3898 = vrot.slane %v3690, 7
    %v3899 = vrot.slane %v3691, 7
    %v3900 = vsel %vm886, %v3898, %v3899
    %v3901 = vsel %vm886, %v3897, %v3898
    %v3902 = vsel %vm886, %v3896, %v3897
    %v3903 = vsel %vm886, %v3895, %v3896
    %v3904 = vsel %vm886, %v3894, %v3895
    %v3905 = vsel %vm886, %v3893, %v3894
    %v3906 = vsel %vm886, %v3892, %v3893
    %v3907 = vsel %vm886, %v3891, %v3892
    %v3908 = vsel %vm886, %v3890, %v3891
    %v3909 = vsel %vm886, %v3889, %v3890
    %v3910 = vsel %vm886, %v3888, %v3889
    %v3911 = vsel %vm886, %v3887, %v3888
    %v3912 = vsel %vm886, %v3886, %v3887
    %v3913 = vsel %vm886, %v3885, %v3886
    %v3914 = vsel %vm886, %v3884, %v3885
    %v3915 = vsel %vm886, %v3883, %v3884
    %v3916 = vsel %vm886, %v3882, %v3883
    %v3917 = vsel %vm886, %v3881, %v3882
    %v3918 = vsel %vm886, %v3880, %v3881
    %v3919 = vsel %vm886, %v3879, %v3880
    %v3920 = vsel %vm886, %v3878, %v3879
    %v3921 = vsel %vm886, %v3877, %v3878
    %v3922 = vsel %vm886, %v3876, %v3877
    %v3923 = vsel %vm886, %v3875, %v3876
    %v3924 = vsel %vm886, %v3874, %v3875
    %v3925 = vsel %vm886, %v3873, %v3874
    %v3926 = vsel %vm886, %v3872, %v3873
    %v3927 = vsel %vm886, %v3871, %v3872
    %v3928 = vsel %vm886, %v3870, %v3871
    %v3929 = vsel %vm886, %v3869, %v3870
    %v3930 = vsel %vm886, %v3868, %v3869
    %v3931 = vsel %vm886, %v3867, %v3868
    %v3932 = vsel %vm886, %v3866, %v3867
    %v3933 = vsel %vm886, %v3865, %v3866
    %v3934 = vsel %vm886, %v3864, %v3865
    %v3935 = vsel %vm886, %v3863, %v3864
    %v3936 = vsel %vm886, %v3862, %v3863
    %v3937 = vsel %vm886, %v3861, %v3862
    %v3938 = vsel %vm886, %v3860, %v3861
    %v3939 = vsel %vm886, %v3859, %v3860
    %v3940 = vsel %vm886, %v3858, %v3859
    %v3941 = vsel %vm886, %v3857, %v3858
    %v3942 = vsel %vm886, %v3856, %v3857
    %v3943 = vsel %vm886, %v3855, %v3856
    %v3944 = vsel %vm886, %v3854, %v3855
    %v3945 = vsel %vm886, %v3853, %v3854
    %v3946 = vsel %vm886, %v3852, %v3853
    %v3947 = vsel %vm886, %v3851, %v3852
    %v3948 = vsel %vm886, %v3850, %v3851
    %v3949 = vsel %vm886, %v3849, %v3850
    %v3950 = vsel %vm886, %v3848, %v3849
    %v3951 = vsel %vm886, %v3847, %v3848
    %v3952 = vsel %vm886, %v3846, %v3847
    %v3953 = vsel %vm886, %v3845, %v3846
    %v3954 = vsel %vm886, %v3844, %v3845
    %v3955 = vsel %vm886, %v3843, %v3844
    %v3956 = vsel %vm886, %v3842, %v3843
    %v3957 = vsel %vm886, %v3841, %v3842
    %v3958 = vsel %vm886, %v3840, %v3841
    %v3959 = vsel %vm886, %v3839, %v3840
    %v3960 = vsel %vm886, %v3838, %v3839
    %v3961 = vsel %vm886, %v3837, %v3838
    %v3962 = vsel %vm886, %v3836, %v3837
    %v3963 = vsel %vm886, %v3899, %v3836
    %v3964 = vsel %vm957, %v3963, 0.0
    %v3965 = vsel %vm958, %v3962, 0.0
    %v3966 = vsel %vm957, %v3961, 0.0
    %v3967 = vsel %vm958, %v3960, 0.0
    %v3968 = vsel %vm957, %v3959, 0.0
    %v3969 = vsel %vm958, %v3958, 0.0
    %v3970 = vsel %vm957, %v3957, 0.0
    %v3971 = vsel %vm958, %v3956, 0.0
    %v3972 = vsel %vm957, %v3955, 0.0
    %v3973 = vsel %vm958, %v3954, 0.0
    %v3974 = vsel %vm957, %v3953, 0.0
    %v3975 = vsel %vm958, %v3952, 0.0
    %v3976 = vsel %vm957, %v3951, 0.0
    %v3977 = vsel %vm958, %v3950, 0.0
    %v3978 = vsel %vm957, %v3949, 0.0
    %v3979 = vsel %vm958, %v3948, 0.0
    %v3980 = vsel %vm957, %v3947, 0.0
    %v3981 = vsel %vm958, %v3946, 0.0
    %v3982 = vsel %vm957, %v3945, 0.0
    %v3983 = vsel %vm958, %v3944, 0.0
    %v3984 = vsel %vm957, %v3943, 0.0
    %v3985 = vsel %vm958, %v3942, 0.0
    %v3986 = vsel %vm957, %v3941, 0.0
    %v3987 = vsel %vm958, %v3940, 0.0
    %v3988 = vsel %vm957, %v3939, 0.0
    %v3989 = vsel %vm958, %v3938, 0.0
    %v3990 = vsel %vm957, %v3937, 0.0
    %v3991 = vsel %vm958, %v3936, 0.0
    %v3992 = vsel %vm957, %v3935, 0.0
    %v3993 = vsel %vm958, %v3934, 0.0
    %v3994 = vsel %vm957, %v3933, 0.0
    %v3995 = vsel %vm958, %v3932, 0.0
    %v3996 = vsel %vm957, %v3931, 0.0
    %v3997 = vsel %vm958, %v3930, 0.0
    %v3998 = vsel %vm957, %v3929, 0.0
    %v3999 = vsel %vm958, %v3928, 0.0
    %v4000 = vsel %vm957, %v3927, 0.0
    %v4001 = vsel %vm958, %v3926, 0.0
    %v4002 = vsel %vm957, %v3925, 0.0
    %v4003 = vsel %vm958, %v3924, 0.0
    %v4004 = vsel %vm957, %v3923, 0.0
    %v4005 = vsel %vm958, %v3922, 0.0
    %v4006 = vsel %vm957, %v3921, 0.0
    %v4007 = vsel %vm958, %v3920, 0.0
    %v4008 = vsel %vm957, %v3919, 0.0
    %v4009 = vsel %vm958, %v3918, 0.0
    %v4010 = vsel %vm957, %v3917, 0.0
    %v4011 = vsel %vm958, %v3916, 0.0
    %v4012 = vsel %vm957, %v3915, 0.0
    %v4013 = vsel %vm958, %v3914, 0.0
    %v4014 = vsel %vm957, %v3913, 0.0
    %v4015 = vsel %vm958, %v3912, 0.0
    %v4016 = vsel %vm957, %v3911, 0.0
    %v4017 = vsel %vm958, %v3910, 0.0
    %v4018 = vsel %vm957, %v3909, 0.0
    %v4019 = vsel %vm958, %v3908, 0.0
    %v4020 = vsel %vm957, %v3907, 0.0
    %v4021 = vsel %vm958, %v3906, 0.0
    %v4022 = vsel %vm957, %v3905, 0.0
    %v4023 = vsel %vm958, %v3904, 0.0
    %v4024 = vsel %vm957, %v3903, 0.0
    %v4025 = vsel %vm958, %v3902, 0.0
    %v4026 = vsel %vm957, %v3901, 0.0
    %v4027 = vsel %vm958, %v3900, 0.0
    %v4028 = vrot.slane %v3628, 1
    %v4029 = vrot.slane %v3629, 1
    %v4030 = vrot.slane %v3630, 1
    %v4031 = vrot.slane %v3631, 1
    %v4032 = vrot.slane %v3632, 1
    %v4033 = vrot.slane %v3633, 1
    %v4034 = vrot.slane %v3634, 1
    %v4035 = vrot.slane %v3635, 1
    %v4036 = vrot.slane %v3636, 1
    %v4037 = vrot.slane %v3637, 1
    %v4038 = vrot.slane %v3638, 1
    %v4039 = vrot.slane %v3639, 1
    %v4040 = vrot.slane %v3640, 1
    %v4041 = vrot.slane %v3641, 1
    %v4042 = vrot.slane %v3642, 1
    %v4043 = vrot.slane %v3643, 1
    %v4044 = vrot.slane %v3644, 1
    %v4045 = vrot.slane %v3645, 1
    %v4046 = vrot.slane %v3646, 1
    %v4047 = vrot.slane %v3647, 1
    %v4048 = vrot.slane %v3648, 1
    %v4049 = vrot.slane %v3649, 1
    %v4050 = vrot.slane %v3650, 1
    %v4051 = vrot.slane %v3651, 1
    %v4052 = vrot.slane %v3652, 1
    %v4053 = vrot.slane %v3653, 1
    %v4054 = vrot.slane %v3654, 1
    %v4055 = vrot.slane %v3655, 1
    %v4056 = vrot.slane %v3656, 1
    %v4057 = vrot.slane %v3657, 1
    %v4058 = vrot.slane %v3658, 1
    %v4059 = vrot.slane %v3659, 1
    %v4060 = vrot.slane %v3660, 1
    %v4061 = vrot.slane %v3661, 1
    %v4062 = vrot.slane %v3662, 1
    %v4063 = vrot.slane %v3663, 1
    %v4064 = vrot.slane %v3664, 1
    %v4065 = vrot.slane %v3665, 1
    %v4066 = vrot.slane %v3666, 1
    %v4067 = vrot.slane %v3667, 1
    %v4068 = vrot.slane %v3668, 1
    %v4069 = vrot.slane %v3669, 1
    %v4070 = vrot.slane %v3670, 1
    %v4071 = vrot.slane %v3671, 1
    %v4072 = vrot.slane %v3672, 1
    %v4073 = vrot.slane %v3673, 1
    %v4074 = vrot.slane %v3674, 1
    %v4075 = vrot.slane %v3675, 1
    %v4076 = vrot.slane %v3676, 1
    %v4077 = vrot.slane %v3677, 1
    %v4078 = vrot.slane %v3678, 1
    %v4079 = vrot.slane %v3679, 1
    %v4080 = vrot.slane %v3680, 1
    %v4081 = vrot.slane %v3681, 1
    %v4082 = vrot.slane %v3682, 1
    %v4083 = vrot.slane %v3683, 1
    %v4084 = vrot.slane %v3684, 1
    %v4085 = vrot.slane %v3685, 1
    %v4086 = vrot.slane %v3686, 1
    %v4087 = vrot.slane %v3687, 1
    %v4088 = vrot.slane %v3688, 1
    %v4089 = vrot.slane %v3689, 1
    %v4090 = vrot.slane %v3690, 1
    %v4091 = vrot.slane %v3691, 1
    %v4092 = vsel %vm1087, %v4090, %v4091
    %v4093 = vsel %vm1087, %v4089, %v4090
    %v4094 = vsel %vm1087, %v4088, %v4089
    %v4095 = vsel %vm1087, %v4087, %v4088
    %v4096 = vsel %vm1087, %v4086, %v4087
    %v4097 = vsel %vm1087, %v4085, %v4086
    %v4098 = vsel %vm1087, %v4084, %v4085
    %v4099 = vsel %vm1087, %v4083, %v4084
    %v4100 = vsel %vm1087, %v4082, %v4083
    %v4101 = vsel %vm1087, %v4081, %v4082
    %v4102 = vsel %vm1087, %v4080, %v4081
    %v4103 = vsel %vm1087, %v4079, %v4080
    %v4104 = vsel %vm1087, %v4078, %v4079
    %v4105 = vsel %vm1087, %v4077, %v4078
    %v4106 = vsel %vm1087, %v4076, %v4077
    %v4107 = vsel %vm1087, %v4075, %v4076
    %v4108 = vsel %vm1087, %v4074, %v4075
    %v4109 = vsel %vm1087, %v4073, %v4074
    %v4110 = vsel %vm1087, %v4072, %v4073
    %v4111 = vsel %vm1087, %v4071, %v4072
    %v4112 = vsel %vm1087, %v4070, %v4071
    %v4113 = vsel %vm1087, %v4069, %v4070
    %v4114 = vsel %vm1087, %v4068, %v4069
    %v4115 = vsel %vm1087, %v4067, %v4068
    %v4116 = vsel %vm1087, %v4066, %v4067
    %v4117 = vsel %vm1087, %v4065, %v4066
    %v4118 = vsel %vm1087, %v4064, %v4065
    %v4119 = vsel %vm1087, %v4063, %v4064
    %v4120 = vsel %vm1087, %v4062, %v4063
    %v4121 = vsel %vm1087, %v4061, %v4062
    %v4122 = vsel %vm1087, %v4060, %v4061
    %v4123 = vsel %vm1087, %v4059, %v4060
    %v4124 = vsel %vm1087, %v4058, %v4059
    %v4125 = vsel %vm1087, %v4057, %v4058
    %v4126 = vsel %vm1087, %v4056, %v4057
    %v4127 = vsel %vm1087, %v4055, %v4056
    %v4128 = vsel %vm1087, %v4054, %v4055
    %v4129 = vsel %vm1087, %v4053, %v4054
    %v4130 = vsel %vm1087, %v4052, %v4053
    %v4131 = vsel %vm1087, %v4051, %v4052
    %v4132 = vsel %vm1087, %v4050, %v4051
    %v4133 = vsel %vm1087, %v4049, %v4050
    %v4134 = vsel %vm1087, %v4048, %v4049
    %v4135 = vsel %vm1087, %v4047, %v4048
    %v4136 = vsel %vm1087, %v4046, %v4047
    %v4137 = vsel %vm1087, %v4045, %v4046
    %v4138 = vsel %vm1087, %v4044, %v4045
    %v4139 = vsel %vm1087, %v4043, %v4044
    %v4140 = vsel %vm1087, %v4042, %v4043
    %v4141 = vsel %vm1087, %v4041, %v4042
    %v4142 = vsel %vm1087, %v4040, %v4041
    %v4143 = vsel %vm1087, %v4039, %v4040
    %v4144 = vsel %vm1087, %v4038, %v4039
    %v4145 = vsel %vm1087, %v4037, %v4038
    %v4146 = vsel %vm1087, %v4036, %v4037
    %v4147 = vsel %vm1087, %v4035, %v4036
    %v4148 = vsel %vm1087, %v4034, %v4035
    %v4149 = vsel %vm1087, %v4033, %v4034
    %v4150 = vsel %vm1087, %v4032, %v4033
    %v4151 = vsel %vm1087, %v4031, %v4032
    %v4152 = vsel %vm1087, %v4030, %v4031
    %v4153 = vsel %vm1087, %v4029, %v4030
    %v4154 = vsel %vm1087, %v4028, %v4029
    %v4155 = vsel %vm1087, %v4091, %v4028
    %v4156 = vsel %vm1158, %v4154, 0.0
    %v4157 = vsel %vm1159, %v4153, 0.0
    %v4158 = vsel %vm1158, %v4152, 0.0
    %v4159 = vsel %vm1159, %v4151, 0.0
    %v4160 = vsel %vm1158, %v4150, 0.0
    %v4161 = vsel %vm1159, %v4149, 0.0
    %v4162 = vsel %vm1158, %v4148, 0.0
    %v4163 = vsel %vm1159, %v4147, 0.0
    %v4164 = vsel %vm1158, %v4146, 0.0
    %v4165 = vsel %vm1159, %v4145, 0.0
    %v4166 = vsel %vm1158, %v4144, 0.0
    %v4167 = vsel %vm1159, %v4143, 0.0
    %v4168 = vsel %vm1158, %v4142, 0.0
    %v4169 = vsel %vm1159, %v4141, 0.0
    %v4170 = vsel %vm1158, %v4140, 0.0
    %v4171 = vsel %vm1159, %v4139, 0.0
    %v4172 = vsel %vm1158, %v4138, 0.0
    %v4173 = vsel %vm1159, %v4137, 0.0
    %v4174 = vsel %vm1158, %v4136, 0.0
    %v4175 = vsel %vm1159, %v4135, 0.0
    %v4176 = vsel %vm1158, %v4134, 0.0
    %v4177 = vsel %vm1159, %v4133, 0.0
    %v4178 = vsel %vm1158, %v4132, 0.0
    %v4179 = vsel %vm1159, %v4131, 0.0
    %v4180 = vsel %vm1158, %v4130, 0.0
    %v4181 = vsel %vm1159, %v4129, 0.0
    %v4182 = vsel %vm1158, %v4128, 0.0
    %v4183 = vsel %vm1159, %v4127, 0.0
    %v4184 = vsel %vm1158, %v4126, 0.0
    %v4185 = vsel %vm1159, %v4125, 0.0
    %v4186 = vsel %vm1158, %v4124, 0.0
    %v4187 = vsel %vm1159, %v4123, 0.0
    %v4188 = vsel %vm1158, %v4122, 0.0
    %v4189 = vsel %vm1159, %v4121, 0.0
    %v4190 = vsel %vm1158, %v4120, 0.0
    %v4191 = vsel %vm1159, %v4119, 0.0
    %v4192 = vsel %vm1158, %v4118, 0.0
    %v4193 = vsel %vm1159, %v4117, 0.0
    %v4194 = vsel %vm1158, %v4116, 0.0
    %v4195 = vsel %vm1159, %v4115, 0.0
    %v4196 = vsel %vm1158, %v4114, 0.0
    %v4197 = vsel %vm1159, %v4113, 0.0
    %v4198 = vsel %vm1158, %v4112, 0.0
    %v4199 = vsel %vm1159, %v4111, 0.0
    %v4200 = vsel %vm1158, %v4110, 0.0
    %v4201 = vsel %vm1159, %v4109, 0.0
    %v4202 = vsel %vm1158, %v4108, 0.0
    %v4203 = vsel %vm1159, %v4107, 0.0
    %v4204 = vsel %vm1158, %v4106, 0.0
    %v4205 = vsel %vm1159, %v4105, 0.0
    %v4206 = vsel %vm1158, %v4104, 0.0
    %v4207 = vsel %vm1159, %v4103, 0.0
    %v4208 = vsel %vm1158, %v4102, 0.0
    %v4209 = vsel %vm1159, %v4101, 0.0
    %v4210 = vsel %vm1158, %v4100, 0.0
    %v4211 = vsel %vm1159, %v4099, 0.0
    %v4212 = vsel %vm1158, %v4098, 0.0
    %v4213 = vsel %vm1159, %v4097, 0.0
    %v4214 = vsel %vm1158, %v4096, 0.0
    %v4215 = vsel %vm1159, %v4095, 0.0
    %v4216 = vsel %vm1158, %v4094, 0.0
    %v4217 = vsel %vm1159, %v4093, 0.0
    %v4218 = vsel %vm1158, %v4092, 0.0
    %v4219 = vsel %vm1159, %v4155, 0.0
    %4220 = vmatprep.subr.mxu0 0.0
    %4221 = vmatpush1.msra.mxu0 %v3692
    %4222 = vmatprep.subr.mxu0 0.0
    %4223 = vmatpush1.msra.mxu0 %v3693
    %4224 = vmatprep.subr.mxu0 0.0
    %4225 = vmatpush1.msra.mxu0 %v3694
    %4226 = vmatprep.subr.mxu0 0.0
    %4227 = vmatpush1.msra.mxu0 %v3695
    %4228 = vmatprep.subr.mxu0 0.0
    %4229 = vmatpush1.msra.mxu0 %v3696
    %4230 = vmatprep.subr.mxu0 0.0
    %4231 = vmatpush1.msra.mxu0 %v3697
    %4232 = vmatprep.subr.mxu0 0.0
    %4233 = vmatpush1.msra.mxu0 %v3698
    %4234 = vmatprep.subr.mxu0 0.0
    %4235 = vmatpush1.msra.mxu0 %v3699
    %4236 = vmatprep.subr.mxu0 0.0
    %4237 = vmatpush1.msra.mxu0 %v3700
    %4238 = vmatprep.subr.mxu0 0.0
    %4239 = vmatpush1.msra.mxu0 %v3701
    %4240 = vmatprep.subr.mxu0 0.0
    %4241 = vmatpush1.msra.mxu0 %v3702
    %4242 = vmatprep.subr.mxu0 0.0
    %4243 = vmatpush1.msra.mxu0 %v3703
    %4244 = vmatprep.subr.mxu0 0.0
    %4245 = vmatpush1.msra.mxu0 %v3704
    %4246 = vmatprep.subr.mxu0 0.0
    %4247 = vmatpush1.msra.mxu0 %v3705
    %4248 = vmatprep.subr.mxu0 0.0
    %4249 = vmatpush1.msra.mxu0 %v3706
    %4250 = vmatprep.subr.mxu0 0.0
    %4251 = vmatpush1.msra.mxu0 %v3707
    %4252 = vmatprep.subr.mxu0 0.0
    %4253 = vmatpush1.msra.mxu0 %v3708
    %4254 = vmatprep.subr.mxu0 0.0
    %4255 = vmatpush1.msra.mxu0 %v3709
    %4256 = vmatprep.subr.mxu0 0.0
    %4257 = vmatpush1.msra.mxu0 %v3710
    %4258 = vmatprep.subr.mxu0 0.0
    %4259 = vmatpush1.msra.mxu0 %v3711
    %4260 = vmatprep.subr.mxu0 0.0
    %4261 = vmatpush1.msra.mxu0 %v3712
    %4262 = vmatprep.subr.mxu0 0.0
    %4263 = vmatpush1.msra.mxu0 %v3713
    %4264 = vmatprep.subr.mxu0 0.0
    %4265 = vmatpush1.msra.mxu0 %v3714
    %4266 = vmatprep.subr.mxu0 0.0
    %4267 = vmatpush1.msra.mxu0 %v3715
    %4268 = vmatprep.subr.mxu0 0.0
    %4269 = vmatpush1.msra.mxu0 %v3716
    %4270 = vmatprep.subr.mxu0 0.0
    %4271 = vmatpush1.msra.mxu0 %v3717
    %4272 = vmatprep.subr.mxu0 0.0
    %4273 = vmatpush1.msra.mxu0 %v3718
    %4274 = vmatprep.subr.mxu0 0.0
    %4275 = vmatpush1.msra.mxu0 %v3719
    %4276 = vmatprep.subr.mxu0 0.0
    %4277 = vmatpush1.msra.mxu0 %v3720
    %4278 = vmatprep.subr.mxu0 0.0
    %4279 = vmatpush1.msra.mxu0 %v3721
    %4280 = vmatprep.subr.mxu0 0.0
    %4281 = vmatpush1.msra.mxu0 %v3722
    %4282 = vmatprep.subr.mxu0 0.0
    %4283 = vmatpush1.msra.mxu0 %v3723
    %4284 = vmatprep.mubr.f32.mxu0 0.0
    %4285 = vmatmul.mubr.f32.gmra.mrb[0].mxu0 0.0
    %v4286 = vpop.f32.mrb[0].mxu0
    %v4287 = vadd.f32 %v68, %v4286
    %v4288 = vpop.f32.mrb[0].mxu0
    %4289 = vmatprep.mubr.f32.mxu0 0.0
    %4290 = vmatmul.mubr.f32.gmra.mrb[0].mxu0 0.0
    %v4291 = vpop.f32.mrb[0].mxu0
    %v4292 = vadd.f32 %v69, %v4291
    %v4293 = vpop.f32.mrb[0].mxu0
    %4294 = vmatprep.mubr.f32.mxu0 %v3628
    %4295 = vmatmul.mubr.f32.gmra.mrb[0].mxu0 %v3964
    %v4296 = vpop.f32.mrb[0].mxu0
    %v4297 = vadd.f32 %v70, %v4296
    %v4298 = vpop.f32.mrb[0].mxu0
    %4299 = vmatprep.mubr.f32.mxu0 %v3629
    %4300 = vmatmul.mubr.f32.gmra.mrb[0].mxu0 %v3965
    %v4301 = vpop.f32.mrb[0].mxu0
    %v4302 = vadd.f32 %v71, %v4301
    %v4303 = vpop.f32.mrb[0].mxu0
    %4304 = vmatprep.mubr.f32.mxu0 %v3630
    %4305 = vmatmul.mubr.f32.gmra.mrb[0].mxu0 %v3966
    %v4306 = vpop.f32.mrb[0].mxu0
    %v4307 = vadd.f32 %v72, %v4306
    %v4308 = vpop.f32.mrb[0].mxu0
    %4309 = vmatprep.mubr.f32.mxu0 %v3631
    %4310 = vmatmul.mubr.f32.gmra.mrb[0].mxu0 %v3967
    %v4311 = vpop.f32.mrb[0].mxu0
    %v4312 = vadd.f32 %v73, %v4311
    %v4313 = vpop.f32.mrb[0].mxu0
    %4314 = vmatprep.mubr.f32.mxu0 %v3632
    %4315 = vmatmul.mubr.f32.gmra.mrb[0].mxu0 %v3968
    %v4316 = vpop.f32.mrb[0].mxu0
    %v4317 = vadd.f32 %v74, %v4316
    %v4318 = vpop.f32.mrb[0].mxu0
    %4319 = vmatprep.mubr.f32.mxu0 %v3633
    %4320 = vmatmul.mubr.f32.gmra.mrb[0].mxu0 %v3969
    %v4321 = vpop.f32.mrb[0].mxu0
    %v4322 = vadd.f32 %v75, %v4321
    %v4323 = vpop.f32.mrb[0].mxu0
    %4324 = vmatprep.mubr.f32.mxu0 %v3634
    %4325 = vmatmul.mubr.f32.gmra.mrb[0].mxu0 %v3970
    %v4326 = vpop.f32.mrb[0].mxu0
    %v4327 = vadd.f32 %v76, %v4326
    %v4328 = vpop.f32.mrb[0].mxu0
    %4329 = vmatprep.mubr.f32.mxu0 %v3635
    %4330 = vmatmul.mubr.f32.gmra.mrb[0].mxu0 %v3971
    %v4331 = vpop.f32.mrb[0].mxu0
    %v4332 = vadd.f32 %v77, %v4331
    %v4333 = vpop.f32.mrb[0].mxu0
    %4334 = vmatprep.mubr.f32.mxu0 %v3636
    %4335 = vmatmul.mubr.f32.gmra.mrb[0].mxu0 %v3972
    %v4336 = vpop.f32.mrb[0].mxu0
    %v4337 = vadd.f32 %v78, %v4336
    %v4338 = vpop.f32.mrb[0].mxu0
    %4339 = vmatprep.mubr.f32.mxu0 %v3637
    %4340 = vmatmul.mubr.f32.gmra.mrb[0].mxu0 %v3973
    %v4341 = vpop.f32.mrb[0].mxu0
    %v4342 = vadd.f32 %v79, %v4341
    %v4343 = vpop.f32.mrb[0].mxu0
    %4344 = vmatprep.mubr.f32.mxu0 %v3638
    %4345 = vmatmul.mubr.f32.gmra.mrb[0].mxu0 %v3974
    %v4346 = vpop.f32.mrb[0].mxu0
    %v4347 = vadd.f32 %v80, %v4346
    %v4348 = vpop.f32.mrb[0].mxu0
    %4349 = vmatprep.mubr.f32.mxu0 %v3639
    %4350 = vmatmul.mubr.f32.gmra.mrb[0].mxu0 %v3975
    %v4351 = vpop.f32.mrb[0].mxu0
    %v4352 = vadd.f32 %v81, %v4351
    %v4353 = vpop.f32.mrb[0].mxu0
    %4354 = vmatprep.mubr.f32.mxu0 %v3640
    %4355 = vmatmul.mubr.f32.gmra.mrb[0].mxu0 %v3976
    %v4356 = vpop.f32.mrb[0].mxu0
    %v4357 = vadd.f32 %v82, %v4356
    %v4358 = vpop.f32.mrb[0].mxu0
    %4359 = vmatprep.mubr.f32.mxu0 %v3641
    %4360 = vmatmul.mubr.f32.gmra.mrb[0].mxu0 %v3977
    %v4361 = vpop.f32.mrb[0].mxu0
    %v4362 = vadd.f32 %v83, %v4361
    %v4363 = vpop.f32.mrb[0].mxu0
    %4364 = vmatprep.mubr.f32.mxu0 %v3642
    %4365 = vmatmul.mubr.f32.gmra.mrb[0].mxu0 %v3978
    %v4366 = vpop.f32.mrb[0].mxu0
    %v4367 = vadd.f32 %v84, %v4366
    %v4368 = vpop.f32.mrb[0].mxu0
    %4369 = vmatprep.mubr.f32.mxu0 %v3643
    %4370 = vmatmul.mubr.f32.gmra.mrb[0].mxu0 %v3979
    %v4371 = vpop.f32.mrb[0].mxu0
    %v4372 = vadd.f32 %v85, %v4371
    %v4373 = vpop.f32.mrb[0].mxu0
    %4374 = vmatprep.mubr.f32.mxu0 %v3644
    %4375 = vmatmul.mubr.f32.gmra.mrb[0].mxu0 %v3980
    %v4376 = vpop.f32.mrb[0].mxu0
    %v4377 = vadd.f32 %v86, %v4376
    %v4378 = vpop.f32.mrb[0].mxu0
    %4379 = vmatprep.mubr.f32.mxu0 %v3645
    %4380 = vmatmul.mubr.f32.gmra.mrb[0].mxu0 %v3981
    %v4381 = vpop.f32.mrb[0].mxu0
    %v4382 = vadd.f32 %v87, %v4381
    %v4383 = vpop.f32.mrb[0].mxu0
    %4384 = vmatprep.mubr.f32.mxu0 %v3646
    %4385 = vmatmul.mubr.f32.gmra.mrb[0].mxu0 %v3982
    %v4386 = vpop.f32.mrb[0].mxu0
    %v4387 = vadd.f32 %v88, %v4386
    %v4388 = vpop.f32.mrb[0].mxu0
    %4389 = vmatprep.mubr.f32.mxu0 %v3647
    %4390 = vmatmul.mubr.f32.gmra.mrb[0].mxu0 %v3983
    %v4391 = vpop.f32.mrb[0].mxu0
    %v4392 = vadd.f32 %v89, %v4391
    %v4393 = vpop.f32.mrb[0].mxu0
    %4394 = vmatprep.mubr.f32.mxu0 %v3648
    %4395 = vmatmul.mubr.f32.gmra.mrb[0].mxu0 %v3984
    %v4396 = vpop.f32.mrb[0].mxu0
    %v4397 = vadd.f32 %v90, %v4396
    %v4398 = vpop.f32.mrb[0].mxu0
    %4399 = vmatprep.mubr.f32.mxu0 %v3649
    %4400 = vmatmul.mubr.f32.gmra.mrb[0].mxu0 %v3985
    %v4401 = vpop.f32.mrb[0].mxu0
    %v4402 = vadd.f32 %v91, %v4401
    %v4403 = vpop.f32.mrb[0].mxu0
    %4404 = vmatprep.mubr.f32.mxu0 %v3650
    %4405 = vmatmul.mubr.f32.gmra.mrb[0].mxu0 %v3986
    %v4406 = vpop.f32.mrb[0].mxu0
    %v4407 = vadd.f32 %v92, %v4406
    %v4408 = vpop.f32.mrb[0].mxu0
    %4409 = vmatprep.mubr.f32.mxu0 %v3651
    %4410 = vmatmul.mubr.f32.gmra.mrb[0].mxu0 %v3987
    %v4411 = vpop.f32.mrb[0].mxu0
    %v4412 = vadd.f32 %v93, %v4411
    %v4413 = vpop.f32.mrb[0].mxu0
    %4414 = vmatprep.mubr.f32.mxu0 %v3652
    %4415 = vmatmul.mubr.f32.gmra.mrb[0].mxu0 %v3988
    %v4416 = vpop.f32.mrb[0].mxu0
    %v4417 = vadd.f32 %v94, %v4416
    %v4418 = vpop.f32.mrb[0].mxu0
    %4419 = vmatprep.mubr.f32.mxu0 %v3653
    %4420 = vmatmul.mubr.f32.gmra.mrb[0].mxu0 %v3989
    %v4421 = vpop.f32.mrb[0].mxu0
    %v4422 = vadd.f32 %v95, %v4421
    %v4423 = vpop.f32.mrb[0].mxu0
    %4424 = vmatprep.mubr.f32.mxu0 %v3654
    %4425 = vmatmul.mubr.f32.gmra.mrb[0].mxu0 %v3990
    %v4426 = vpop.f32.mrb[0].mxu0
    %v4427 = vadd.f32 %v96, %v4426
    %v4428 = vpop.f32.mrb[0].mxu0
    %4429 = vmatprep.mubr.f32.mxu0 %v3655
    %4430 = vmatmul.mubr.f32.gmra.mrb[0].mxu0 %v3991
    %v4431 = vpop.f32.mrb[0].mxu0
    %v4432 = vadd.f32 %v97, %v4431
    %v4433 = vpop.f32.mrb[0].mxu0
    %4434 = vmatprep.mubr.f32.mxu0 %v3656
    %4435 = vmatmul.mubr.f32.gmra.mrb[0].mxu0 %v3992
    %v4436 = vpop.f32.mrb[0].mxu0
    %v4437 = vadd.f32 %v98, %v4436
    %v4438 = vpop.f32.mrb[0].mxu0
    %4439 = vmatprep.mubr.f32.mxu0 %v3657
    %4440 = vmatmul.mubr.f32.gmra.mrb[0].mxu0 %v3993
    %v4441 = vpop.f32.mrb[0].mxu0
    %v4442 = vadd.f32 %v99, %v4441
    %v4443 = vpop.f32.mrb[0].mxu0
    %4444 = vmatprep.mubr.f32.mxu0 0.0
    %4445 = vmatmul.mubr.f32.gmra.mrb[0].mxu0 0.0
    %v4446 = vpop.f32.mrb[0].mxu0
    %v4447 = vadd.f32 %v100, %v4446
    %v4448 = vpop.f32.mrb[0].mxu0
    %4449 = vmatprep.mubr.f32.mxu0 0.0
    %4450 = vmatmul.mubr.f32.gmra.mrb[0].mxu0 0.0
    %v4451 = vpop.f32.mrb[0].mxu0
    %v4452 = vadd.f32 %v101, %v4451
    %v4453 = vpop.f32.mrb[0].mxu0
    %4454 = vmatprep.mubr.f32.mxu0 %v3660
    %4455 = vmatmul.mubr.f32.gmra.mrb[0].mxu0 %v3996
    %v4456 = vpop.f32.mrb[0].mxu0
    %v4457 = vadd.f32 %v102, %v4456
    %v4458 = vpop.f32.mrb[0].mxu0
    %4459 = vmatprep.mubr.f32.mxu0 %v3661
    %4460 = vmatmul.mubr.f32.gmra.mrb[0].mxu0 %v3997
    %v4461 = vpop.f32.mrb[0].mxu0
    %v4462 = vadd.f32 %v103, %v4461
    %v4463 = vpop.f32.mrb[0].mxu0
    %4464 = vmatprep.mubr.f32.mxu0 %v3662
    %4465 = vmatmul.mubr.f32.gmra.mrb[0].mxu0 %v3998
    %v4466 = vpop.f32.mrb[0].mxu0
    %v4467 = vadd.f32 %v104, %v4466
    %v4468 = vpop.f32.mrb[0].mxu0
    %4469 = vmatprep.mubr.f32.mxu0 %v3663
    %4470 = vmatmul.mubr.f32.gmra.mrb[0].mxu0 %v3999
    %v4471 = vpop.f32.mrb[0].mxu0
    %v4472 = vadd.f32 %v105, %v4471
    %v4473 = vpop.f32.mrb[0].mxu0
    %4474 = vmatprep.mubr.f32.mxu0 %v3664
    %4475 = vmatmul.mubr.f32.gmra.mrb[0].mxu0 %v4000
    %v4476 = vpop.f32.mrb[0].mxu0
    %v4477 = vadd.f32 %v106, %v4476
    %v4478 = vpop.f32.mrb[0].mxu0
    %4479 = vmatprep.mubr.f32.mxu0 %v3665
    %4480 = vmatmul.mubr.f32.gmra.mrb[0].mxu0 %v4001
    %v4481 = vpop.f32.mrb[0].mxu0
    %v4482 = vadd.f32 %v107, %v4481
    %v4483 = vpop.f32.mrb[0].mxu0
    %4484 = vmatprep.mubr.f32.mxu0 %v3666
    %4485 = vmatmul.mubr.f32.gmra.mrb[0].mxu0 %v4002
    %v4486 = vpop.f32.mrb[0].mxu0
    %v4487 = vadd.f32 %v108, %v4486
    %v4488 = vpop.f32.mrb[0].mxu0
    %4489 = vmatprep.mubr.f32.mxu0 %v3667
    %4490 = vmatmul.mubr.f32.gmra.mrb[0].mxu0 %v4003
    %v4491 = vpop.f32.mrb[0].mxu0
    %v4492 = vadd.f32 %v109, %v4491
    %v4493 = vpop.f32.mrb[0].mxu0
    %4494 = vmatprep.mubr.f32.mxu0 %v3668
    %4495 = vmatmul.mubr.f32.gmra.mrb[0].mxu0 %v4004
    %v4496 = vpop.f32.mrb[0].mxu0
    %v4497 = vadd.f32 %v110, %v4496
    %v4498 = vpop.f32.mrb[0].mxu0
    %4499 = vmatprep.mubr.f32.mxu0 %v3669
    %4500 = vmatmul.mubr.f32.gmra.mrb[0].mxu0 %v4005
    %v4501 = vpop.f32.mrb[0].mxu0
    %v4502 = vadd.f32 %v111, %v4501
    %v4503 = vpop.f32.mrb[0].mxu0
    %4504 = vmatprep.mubr.f32.mxu0 %v3670
    %4505 = vmatmul.mubr.f32.gmra.mrb[0].mxu0 %v4006
    %v4506 = vpop.f32.mrb[0].mxu0
    %v4507 = vadd.f32 %v112, %v4506
    %v4508 = vpop.f32.mrb[0].mxu0
    %4509 = vmatprep.mubr.f32.mxu0 %v3671
    %4510 = vmatmul.mubr.f32.gmra.mrb[0].mxu0 %v4007
    %v4511 = vpop.f32.mrb[0].mxu0
    %v4512 = vadd.f32 %v113, %v4511
    %v4513 = vpop.f32.mrb[0].mxu0
    %4514 = vmatprep.mubr.f32.mxu0 %v3672
    %4515 = vmatmul.mubr.f32.gmra.mrb[0].mxu0 %v4008
    %v4516 = vpop.f32.mrb[0].mxu0
    %v4517 = vadd.f32 %v114, %v4516
    %v4518 = vpop.f32.mrb[0].mxu0
    %4519 = vmatprep.mubr.f32.mxu0 %v3673
    %4520 = vmatmul.mubr.f32.gmra.mrb[0].mxu0 %v4009
    %v4521 = vpop.f32.mrb[0].mxu0
    %v4522 = vadd.f32 %v115, %v4521
    %v4523 = vpop.f32.mrb[0].mxu0
    %4524 = vmatprep.mubr.f32.mxu0 %v3674
    %4525 = vmatmul.mubr.f32.gmra.mrb[0].mxu0 %v4010
    %v4526 = vpop.f32.mrb[0].mxu0
    %v4527 = vadd.f32 %v116, %v4526
    %v4528 = vpop.f32.mrb[0].mxu0
    %4529 = vmatprep.mubr.f32.mxu0 %v3675
    %4530 = vmatmul.mubr.f32.gmra.mrb[0].mxu0 %v4011
    %v4531 = vpop.f32.mrb[0].mxu0
    %v4532 = vadd.f32 %v117, %v4531
    %v4533 = vpop.f32.mrb[0].mxu0
    %4534 = vmatprep.mubr.f32.mxu0 %v3676
    %4535 = vmatmul.mubr.f32.gmra.mrb[0].mxu0 %v4012
    %v4536 = vpop.f32.mrb[0].mxu0
    %v4537 = vadd.f32 %v118, %v4536
    %v4538 = vpop.f32.mrb[0].mxu0
    %4539 = vmatprep.mubr.f32.mxu0 %v3677
    %4540 = vmatmul.mubr.f32.gmra.mrb[0].mxu0 %v4013
    %v4541 = vpop.f32.mrb[0].mxu0
    %v4542 = vadd.f32 %v119, %v4541
    %v4543 = vpop.f32.mrb[0].mxu0
    %4544 = vmatprep.mubr.f32.mxu0 %v3678
    %4545 = vmatmul.mubr.f32.gmra.mrb[0].mxu0 %v4014
    %v4546 = vpop.f32.mrb[0].mxu0
    %v4547 = vadd.f32 %v120, %v4546
    %v4548 = vpop.f32.mrb[0].mxu0
    %4549 = vmatprep.mubr.f32.mxu0 %v3679
    %4550 = vmatmul.mubr.f32.gmra.mrb[0].mxu0 %v4015
    %v4551 = vpop.f32.mrb[0].mxu0
    %v4552 = vadd.f32 %v121, %v4551
    %v4553 = vpop.f32.mrb[0].mxu0
    %4554 = vmatprep.mubr.f32.mxu0 %v3680
    %4555 = vmatmul.mubr.f32.gmra.mrb[0].mxu0 %v4016
    %v4556 = vpop.f32.mrb[0].mxu0
    %v4557 = vadd.f32 %v122, %v4556
    %v4558 = vpop.f32.mrb[0].mxu0
    %4559 = vmatprep.mubr.f32.mxu0 %v3681
    %4560 = vmatmul.mubr.f32.gmra.mrb[0].mxu0 %v4017
    %v4561 = vpop.f32.mrb[0].mxu0
    %v4562 = vadd.f32 %v123, %v4561
    %v4563 = vpop.f32.mrb[0].mxu0
    %4564 = vmatprep.mubr.f32.mxu0 %v3682
    %4565 = vmatmul.mubr.f32.gmra.mrb[0].mxu0 %v4018
    %v4566 = vpop.f32.mrb[0].mxu0
    %v4567 = vadd.f32 %v124, %v4566
    %v4568 = vpop.f32.mrb[0].mxu0
    %4569 = vmatprep.mubr.f32.mxu0 %v3683
    %4570 = vmatmul.mubr.f32.gmra.mrb[0].mxu0 %v4019
    %v4571 = vpop.f32.mrb[0].mxu0
    %v4572 = vadd.f32 %v125, %v4571
    %v4573 = vpop.f32.mrb[0].mxu0
    %4574 = vmatprep.mubr.f32.mxu0 %v3684
    %4575 = vmatmul.mubr.f32.gmra.mrb[0].mxu0 %v4020
    %v4576 = vpop.f32.mrb[0].mxu0
    %v4577 = vadd.f32 %v126, %v4576
    %v4578 = vpop.f32.mrb[0].mxu0
    %4579 = vmatprep.mubr.f32.mxu0 %v3685
    %4580 = vmatmul.mubr.f32.gmra.mrb[0].mxu0 %v4021
    %v4581 = vpop.f32.mrb[0].mxu0
    %v4582 = vadd.f32 %v127, %v4581
    %v4583 = vpop.f32.mrb[0].mxu0
    %4584 = vmatprep.mubr.f32.mxu0 %v3686
    %4585 = vmatmul.mubr.f32.gmra.mrb[0].mxu0 %v4022
    %v4586 = vpop.f32.mrb[0].mxu0
    %v4587 = vadd.f32 %v128, %v4586
    %v4588 = vpop.f32.mrb[0].mxu0
    %4589 = vmatprep.mubr.f32.mxu0 %v3687
    %4590 = vmatmul.mubr.f32.gmra.mrb[0].mxu0 %v4023
    %v4591 = vpop.f32.mrb[0].mxu0
    %v4592 = vadd.f32 %v129, %v4591
    %v4593 = vpop.f32.mrb[0].mxu0
    %4594 = vmatprep.mubr.f32.mxu0 %v3688
    %4595 = vmatmul.mubr.f32.gmra.mrb[0].mxu0 %v4024
    %v4596 = vpop.f32.mrb[0].mxu0
    %v4597 = vadd.f32 %v130, %v4596
    %v4598 = vpop.f32.mrb[0].mxu0
    %4599 = vmatprep.mubr.f32.mxu0 %v3689
    %4600 = vmatmul.mubr.f32.gmra.mrb[0].mxu0 %v4025
    %v4601 = vpop.f32.mrb[0].mxu0
    %v4602 = vadd.f32 %v131, %v4601
    %v4603 = vpop.f32.mrb[0].mxu0
    %4604 = vdwg.mxu0
    %4605 = vmatprep.subr.mxu0 0.0
    %4606 = vmatpush1.msra.mxu0 %v3724
    %4607 = vmatprep.subr.mxu0 0.0
    %4608 = vmatpush1.msra.mxu0 %v3725
    %4609 = vmatprep.subr.mxu0 0.0
    %4610 = vmatpush1.msra.mxu0 %v3726
    %4611 = vmatprep.subr.mxu0 0.0
    %4612 = vmatpush1.msra.mxu0 %v3727
    %4613 = vmatprep.subr.mxu0 0.0
    %4614 = vmatpush1.msra.mxu0 %v3728
    %4615 = vmatprep.subr.mxu0 0.0
    %4616 = vmatpush1.msra.mxu0 %v3729
    %4617 = vmatprep.subr.mxu0 0.0
    %4618 = vmatpush1.msra.mxu0 %v3730
    %4619 = vmatprep.subr.mxu0 0.0
    %4620 = vmatpush1.msra.mxu0 %v3731
    %4621 = vmatprep.subr.mxu0 0.0
    %4622 = vmatpush1.msra.mxu0 %v3732
    %4623 = vmatprep.subr.mxu0 0.0
    %4624 = vmatpush1.msra.mxu0 %v3733
    %4625 = vmatprep.subr.mxu0 0.0
    %4626 = vmatpush1.msra.mxu0 %v3734
    %4627 = vmatprep.subr.mxu0 0.0
    %4628 = vmatpush1.msra.mxu0 %v3735
    %4629 = vmatprep.subr.mxu0 0.0
    %4630 = vmatpush1.msra.mxu0 %v3736
    %4631 = vmatprep.subr.mxu0 0.0
    %4632 = vmatpush1.msra.mxu0 %v3737
    %4633 = vmatprep.subr.mxu0 0.0
    %4634 = vmatpush1.msra.mxu0 %v3738
    %4635 = vmatprep.subr.mxu0 0.0
    %4636 = vmatpush1.msra.mxu0 %v3739
    %4637 = vmatprep.subr.mxu0 0.0
    %4638 = vmatpush1.msra.mxu0 %v3740
    %4639 = vmatprep.subr.mxu0 0.0
    %4640 = vmatpush1.msra.mxu0 %v3741
    %4641 = vmatprep.subr.mxu0 0.0
    %4642 = vmatpush1.msra.mxu0 %v3742
    %4643 = vmatprep.subr.mxu0 0.0
    %4644 = vmatpush1.msra.mxu0 %v3743
    %4645 = vmatprep.subr.mxu0 0.0
    %4646 = vmatpush1.msra.mxu0 %v3744
    %4647 = vmatprep.subr.mxu0 0.0
    %4648 = vmatpush1.msra.mxu0 %v3745
    %4649 = vmatprep.subr.mxu0 0.0
    %4650 = vmatpush1.msra.mxu0 %v3746
    %4651 = vmatprep.subr.mxu0 0.0
    %4652 = vmatpush1.msra.mxu0 %v3747
    %4653 = vmatprep.subr.mxu0 0.0
    %4654 = vmatpush1.msra.mxu0 %v3748
    %4655 = vmatprep.subr.mxu0 0.0
    %4656 = vmatpush1.msra.mxu0 %v3749
    %4657 = vmatprep.subr.mxu0 0.0
    %4658 = vmatpush1.msra.mxu0 %v3750
    %4659 = vmatprep.subr.mxu0 0.0
    %4660 = vmatpush1.msra.mxu0 %v3751
    %4661 = vmatprep.subr.mxu0 0.0
    %4662 = vmatpush1.msra.mxu0 %v3752
    %4663 = vmatprep.subr.mxu0 0.0
    %4664 = vmatpush1.msra.mxu0 %v3753
    %4665 = vmatprep.subr.mxu0 0.0
    %4666 = vmatpush1.msra.mxu0 %v3754
    %4667 = vmatprep.subr.mxu0 0.0
    %4668 = vmatpush1.msra.mxu0 %v3755
    %4669 = vmatprep.mubr.f32.mxu0 %v3964
    %4670 = vmatmul.mubr.f32.gmra.mrb[0].mxu0 0.0
    %v4671 = vpop.f32.mrb[0].mxu0
    %v4672 = vadd.f32 %v4287, %v4671
    %v4673 = vpop.f32.mrb[0].mxu0
    %4674 = vmatprep.mubr.f32.mxu0 %v3965
    %4675 = vmatmul.mubr.f32.gmra.mrb[0].mxu0 0.0
    %v4676 = vpop.f32.mrb[0].mxu0
    %v4677 = vadd.f32 %v4292, %v4676
    %v4678 = vpop.f32.mrb[0].mxu0
    %4679 = vmatprep.mubr.f32.mxu0 %v3966
    %4680 = vmatmul.mubr.f32.gmra.mrb[0].mxu0 %v4156
    %v4681 = vpop.f32.mrb[0].mxu0
    %v4682 = vadd.f32 %v4297, %v4681
    %v4683 = vpop.f32.mrb[0].mxu0
    %4684 = vmatprep.mubr.f32.mxu0 %v3967
    %4685 = vmatmul.mubr.f32.gmra.mrb[0].mxu0 %v4157
    %v4686 = vpop.f32.mrb[0].mxu0
    %v4687 = vadd.f32 %v4302, %v4686
    %v4688 = vpop.f32.mrb[0].mxu0
    %4689 = vmatprep.mubr.f32.mxu0 %v3968
    %4690 = vmatmul.mubr.f32.gmra.mrb[0].mxu0 %v4158
    %v4691 = vpop.f32.mrb[0].mxu0
    %v4692 = vadd.f32 %v4307, %v4691
    %v4693 = vpop.f32.mrb[0].mxu0
    %4694 = vmatprep.mubr.f32.mxu0 %v3969
    %4695 = vmatmul.mubr.f32.gmra.mrb[0].mxu0 %v4159
    %v4696 = vpop.f32.mrb[0].mxu0
    %v4697 = vadd.f32 %v4312, %v4696
    %v4698 = vpop.f32.mrb[0].mxu0
    %4699 = vmatprep.mubr.f32.mxu0 %v3970
    %4700 = vmatmul.mubr.f32.gmra.mrb[0].mxu0 %v4160
    %v4701 = vpop.f32.mrb[0].mxu0
    %v4702 = vadd.f32 %v4317, %v4701
    %v4703 = vpop.f32.mrb[0].mxu0
    %4704 = vmatprep.mubr.f32.mxu0 %v3971
    %4705 = vmatmul.mubr.f32.gmra.mrb[0].mxu0 %v4161
    %v4706 = vpop.f32.mrb[0].mxu0
    %v4707 = vadd.f32 %v4322, %v4706
    %v4708 = vpop.f32.mrb[0].mxu0
    %4709 = vmatprep.mubr.f32.mxu0 %v3972
    %4710 = vmatmul.mubr.f32.gmra.mrb[0].mxu0 %v4162
    %v4711 = vpop.f32.mrb[0].mxu0
    %v4712 = vadd.f32 %v4327, %v4711
    %v4713 = vpop.f32.mrb[0].mxu0
    %4714 = vmatprep.mubr.f32.mxu0 %v3973
    %4715 = vmatmul.mubr.f32.gmra.mrb[0].mxu0 %v4163
    %v4716 = vpop.f32.mrb[0].mxu0
    %v4717 = vadd.f32 %v4332, %v4716
    %v4718 = vpop.f32.mrb[0].mxu0
    %4719 = vmatprep.mubr.f32.mxu0 %v3974
    %4720 = vmatmul.mubr.f32.gmra.mrb[0].mxu0 %v4164
    %v4721 = vpop.f32.mrb[0].mxu0
    %v4722 = vadd.f32 %v4337, %v4721
    %v4723 = vpop.f32.mrb[0].mxu0
    %4724 = vmatprep.mubr.f32.mxu0 %v3975
    %4725 = vmatmul.mubr.f32.gmra.mrb[0].mxu0 %v4165
    %v4726 = vpop.f32.mrb[0].mxu0
    %v4727 = vadd.f32 %v4342, %v4726
    %v4728 = vpop.f32.mrb[0].mxu0
    %4729 = vmatprep.mubr.f32.mxu0 %v3976
    %4730 = vmatmul.mubr.f32.gmra.mrb[0].mxu0 %v4166
    %v4731 = vpop.f32.mrb[0].mxu0
    %v4732 = vadd.f32 %v4347, %v4731
    %v4733 = vpop.f32.mrb[0].mxu0
    %4734 = vmatprep.mubr.f32.mxu0 %v3977
    %4735 = vmatmul.mubr.f32.gmra.mrb[0].mxu0 %v4167
    %v4736 = vpop.f32.mrb[0].mxu0
    %v4737 = vadd.f32 %v4352, %v4736
    %v4738 = vpop.f32.mrb[0].mxu0
    %4739 = vmatprep.mubr.f32.mxu0 %v3978
    %4740 = vmatmul.mubr.f32.gmra.mrb[0].mxu0 %v4168
    %v4741 = vpop.f32.mrb[0].mxu0
    %v4742 = vadd.f32 %v4357, %v4741
    %v4743 = vpop.f32.mrb[0].mxu0
    %4744 = vmatprep.mubr.f32.mxu0 %v3979
    %4745 = vmatmul.mubr.f32.gmra.mrb[0].mxu0 %v4169
    %v4746 = vpop.f32.mrb[0].mxu0
    %v4747 = vadd.f32 %v4362, %v4746
    %v4748 = vpop.f32.mrb[0].mxu0
    %4749 = vmatprep.mubr.f32.mxu0 %v3980
    %4750 = vmatmul.mubr.f32.gmra.mrb[0].mxu0 %v4170
    %v4751 = vpop.f32.mrb[0].mxu0
    %v4752 = vadd.f32 %v4367, %v4751
    %v4753 = vpop.f32.mrb[0].mxu0
    %4754 = vmatprep.mubr.f32.mxu0 %v3981
    %4755 = vmatmul.mubr.f32.gmra.mrb[0].mxu0 %v4171
    %v4756 = vpop.f32.mrb[0].mxu0
    %v4757 = vadd.f32 %v4372, %v4756
    %v4758 = vpop.f32.mrb[0].mxu0
    %4759 = vmatprep.mubr.f32.mxu0 %v3982
    %4760 = vmatmul.mubr.f32.gmra.mrb[0].mxu0 %v4172
    %v4761 = vpop.f32.mrb[0].mxu0
    %v4762 = vadd.f32 %v4377, %v4761
    %v4763 = vpop.f32.mrb[0].mxu0
    %4764 = vmatprep.mubr.f32.mxu0 %v3983
    %4765 = vmatmul.mubr.f32.gmra.mrb[0].mxu0 %v4173
    %v4766 = vpop.f32.mrb[0].mxu0
    %v4767 = vadd.f32 %v4382, %v4766
    %v4768 = vpop.f32.mrb[0].mxu0
    %4769 = vmatprep.mubr.f32.mxu0 %v3984
    %4770 = vmatmul.mubr.f32.gmra.mrb[0].mxu0 %v4174
    %v4771 = vpop.f32.mrb[0].mxu0
    %v4772 = vadd.f32 %v4387, %v4771
    %v4773 = vpop.f32.mrb[0].mxu0
    %4774 = vmatprep.mubr.f32.mxu0 %v3985
    %4775 = vmatmul.mubr.f32.gmra.mrb[0].mxu0 %v4175
    %v4776 = vpop.f32.mrb[0].mxu0
    %v4777 = vadd.f32 %v4392, %v4776
    %v4778 = vpop.f32.mrb[0].mxu0
    %4779 = vmatprep.mubr.f32.mxu0 %v3986
    %4780 = vmatmul.mubr.f32.gmra.mrb[0].mxu0 %v4176
    %v4781 = vpop.f32.mrb[0].mxu0
    %v4782 = vadd.f32 %v4397, %v4781
    %v4783 = vpop.f32.mrb[0].mxu0
    %4784 = vmatprep.mubr.f32.mxu0 %v3987
    %4785 = vmatmul.mubr.f32.gmra.mrb[0].mxu0 %v4177
    %v4786 = vpop.f32.mrb[0].mxu0
    %v4787 = vadd.f32 %v4402, %v4786
    %v4788 = vpop.f32.mrb[0].mxu0
    %4789 = vmatprep.mubr.f32.mxu0 %v3988
    %4790 = vmatmul.mubr.f32.gmra.mrb[0].mxu0 %v4178
    %v4791 = vpop.f32.mrb[0].mxu0
    %v4792 = vadd.f32 %v4407, %v4791
    %v4793 = vpop.f32.mrb[0].mxu0
    %4794 = vmatprep.mubr.f32.mxu0 %v3989
    %4795 = vmatmul.mubr.f32.gmra.mrb[0].mxu0 %v4179
    %v4796 = vpop.f32.mrb[0].mxu0
    %v4797 = vadd.f32 %v4412, %v4796
    %v4798 = vpop.f32.mrb[0].mxu0
    %4799 = vmatprep.mubr.f32.mxu0 %v3990
    %4800 = vmatmul.mubr.f32.gmra.mrb[0].mxu0 %v4180
    %v4801 = vpop.f32.mrb[0].mxu0
    %v4802 = vadd.f32 %v4417, %v4801
    %v4803 = vpop.f32.mrb[0].mxu0
    %4804 = vmatprep.mubr.f32.mxu0 %v3991
    %4805 = vmatmul.mubr.f32.gmra.mrb[0].mxu0 %v4181
    %v4806 = vpop.f32.mrb[0].mxu0
    %v4807 = vadd.f32 %v4422, %v4806
    %v4808 = vpop.f32.mrb[0].mxu0
    %4809 = vmatprep.mubr.f32.mxu0 %v3992
    %4810 = vmatmul.mubr.f32.gmra.mrb[0].mxu0 %v4182
    %v4811 = vpop.f32.mrb[0].mxu0
    %v4812 = vadd.f32 %v4427, %v4811
    %v4813 = vpop.f32.mrb[0].mxu0
    %4814 = vmatprep.mubr.f32.mxu0 %v3993
    %4815 = vmatmul.mubr.f32.gmra.mrb[0].mxu0 %v4183
    %v4816 = vpop.f32.mrb[0].mxu0
    %v4817 = vadd.f32 %v4432, %v4816
    %v4818 = vpop.f32.mrb[0].mxu0
    %4819 = vmatprep.mubr.f32.mxu0 %v3994
    %4820 = vmatmul.mubr.f32.gmra.mrb[0].mxu0 %v4184
    %v4821 = vpop.f32.mrb[0].mxu0
    %v4822 = vadd.f32 %v4437, %v4821
    %v4823 = vpop.f32.mrb[0].mxu0
    %4824 = vmatprep.mubr.f32.mxu0 %v3995
    %4825 = vmatmul.mubr.f32.gmra.mrb[0].mxu0 %v4185
    %v4826 = vpop.f32.mrb[0].mxu0
    %v4827 = vadd.f32 %v4442, %v4826
    %v4828 = vpop.f32.mrb[0].mxu0
    %4829 = vmatprep.mubr.f32.mxu0 %v3996
    %4830 = vmatmul.mubr.f32.gmra.mrb[0].mxu0 0.0
    %v4831 = vpop.f32.mrb[0].mxu0
    %v4832 = vadd.f32 %v4447, %v4831
    %v4833 = vpop.f32.mrb[0].mxu0
    %4834 = vmatprep.mubr.f32.mxu0 %v3997
    %4835 = vmatmul.mubr.f32.gmra.mrb[0].mxu0 0.0
    %v4836 = vpop.f32.mrb[0].mxu0
    %v4837 = vadd.f32 %v4452, %v4836
    %v4838 = vpop.f32.mrb[0].mxu0
    %4839 = vmatprep.mubr.f32.mxu0 %v3998
    %4840 = vmatmul.mubr.f32.gmra.mrb[0].mxu0 %v4188
    %v4841 = vpop.f32.mrb[0].mxu0
    %v4842 = vadd.f32 %v4457, %v4841
    %v4843 = vpop.f32.mrb[0].mxu0
    %4844 = vmatprep.mubr.f32.mxu0 %v3999
    %4845 = vmatmul.mubr.f32.gmra.mrb[0].mxu0 %v4189
    %v4846 = vpop.f32.mrb[0].mxu0
    %v4847 = vadd.f32 %v4462, %v4846
    %v4848 = vpop.f32.mrb[0].mxu0
    %4849 = vmatprep.mubr.f32.mxu0 %v4000
    %4850 = vmatmul.mubr.f32.gmra.mrb[0].mxu0 %v4190
    %v4851 = vpop.f32.mrb[0].mxu0
    %v4852 = vadd.f32 %v4467, %v4851
    %v4853 = vpop.f32.mrb[0].mxu0
    %4854 = vmatprep.mubr.f32.mxu0 %v4001
    %4855 = vmatmul.mubr.f32.gmra.mrb[0].mxu0 %v4191
    %v4856 = vpop.f32.mrb[0].mxu0
    %v4857 = vadd.f32 %v4472, %v4856
    %v4858 = vpop.f32.mrb[0].mxu0
    %4859 = vmatprep.mubr.f32.mxu0 %v4002
    %4860 = vmatmul.mubr.f32.gmra.mrb[0].mxu0 %v4192
    %v4861 = vpop.f32.mrb[0].mxu0
    %v4862 = vadd.f32 %v4477, %v4861
    %v4863 = vpop.f32.mrb[0].mxu0
    %4864 = vmatprep.mubr.f32.mxu0 %v4003
    %4865 = vmatmul.mubr.f32.gmra.mrb[0].mxu0 %v4193
    %v4866 = vpop.f32.mrb[0].mxu0
    %v4867 = vadd.f32 %v4482, %v4866
    %v4868 = vpop.f32.mrb[0].mxu0
    %4869 = vmatprep.mubr.f32.mxu0 %v4004
    %4870 = vmatmul.mubr.f32.gmra.mrb[0].mxu0 %v4194
    %v4871 = vpop.f32.mrb[0].mxu0
    %v4872 = vadd.f32 %v4487, %v4871
    %v4873 = vpop.f32.mrb[0].mxu0
    %4874 = vmatprep.mubr.f32.mxu0 %v4005
    %4875 = vmatmul.mubr.f32.gmra.mrb[0].mxu0 %v4195
    %v4876 = vpop.f32.mrb[0].mxu0
    %v4877 = vadd.f32 %v4492, %v4876
    %v4878 = vpop.f32.mrb[0].mxu0
    %4879 = vmatprep.mubr.f32.mxu0 %v4006
    %4880 = vmatmul.mubr.f32.gmra.mrb[0].mxu0 %v4196
    %v4881 = vpop.f32.mrb[0].mxu0
    %v4882 = vadd.f32 %v4497, %v4881
    %v4883 = vpop.f32.mrb[0].mxu0
    %4884 = vmatprep.mubr.f32.mxu0 %v4007
    %4885 = vmatmul.mubr.f32.gmra.mrb[0].mxu0 %v4197
    %v4886 = vpop.f32.mrb[0].mxu0
    %v4887 = vadd.f32 %v4502, %v4886
    %v4888 = vpop.f32.mrb[0].mxu0
    %4889 = vmatprep.mubr.f32.mxu0 %v4008
    %4890 = vmatmul.mubr.f32.gmra.mrb[0].mxu0 %v4198
    %v4891 = vpop.f32.mrb[0].mxu0
    %v4892 = vadd.f32 %v4507, %v4891
    %v4893 = vpop.f32.mrb[0].mxu0
    %4894 = vmatprep.mubr.f32.mxu0 %v4009
    %4895 = vmatmul.mubr.f32.gmra.mrb[0].mxu0 %v4199
    %v4896 = vpop.f32.mrb[0].mxu0
    %v4897 = vadd.f32 %v4512, %v4896
    %v4898 = vpop.f32.mrb[0].mxu0
    %4899 = vmatprep.mubr.f32.mxu0 %v4010
    %4900 = vmatmul.mubr.f32.gmra.mrb[0].mxu0 %v4200
    %v4901 = vpop.f32.mrb[0].mxu0
    %v4902 = vadd.f32 %v4517, %v4901
    %v4903 = vpop.f32.mrb[0].mxu0
    %4904 = vmatprep.mubr.f32.mxu0 %v4011
    %4905 = vmatmul.mubr.f32.gmra.mrb[0].mxu0 %v4201
    %v4906 = vpop.f32.mrb[0].mxu0
    %v4907 = vadd.f32 %v4522, %v4906
    %v4908 = vpop.f32.mrb[0].mxu0
    %4909 = vmatprep.mubr.f32.mxu0 %v4012
    %4910 = vmatmul.mubr.f32.gmra.mrb[0].mxu0 %v4202
    %v4911 = vpop.f32.mrb[0].mxu0
    %v4912 = vadd.f32 %v4527, %v4911
    %v4913 = vpop.f32.mrb[0].mxu0
    %4914 = vmatprep.mubr.f32.mxu0 %v4013
    %4915 = vmatmul.mubr.f32.gmra.mrb[0].mxu0 %v4203
    %v4916 = vpop.f32.mrb[0].mxu0
    %v4917 = vadd.f32 %v4532, %v4916
    %v4918 = vpop.f32.mrb[0].mxu0
    %4919 = vmatprep.mubr.f32.mxu0 %v4014
    %4920 = vmatmul.mubr.f32.gmra.mrb[0].mxu0 %v4204
    %v4921 = vpop.f32.mrb[0].mxu0
    %v4922 = vadd.f32 %v4537, %v4921
    %v4923 = vpop.f32.mrb[0].mxu0
    %4924 = vmatprep.mubr.f32.mxu0 %v4015
    %4925 = vmatmul.mubr.f32.gmra.mrb[0].mxu0 %v4205
    %v4926 = vpop.f32.mrb[0].mxu0
    %v4927 = vadd.f32 %v4542, %v4926
    %v4928 = vpop.f32.mrb[0].mxu0
    %4929 = vmatprep.mubr.f32.mxu0 %v4016
    %4930 = vmatmul.mubr.f32.gmra.mrb[0].mxu0 %v4206
    %v4931 = vpop.f32.mrb[0].mxu0
    %v4932 = vadd.f32 %v4547, %v4931
    %v4933 = vpop.f32.mrb[0].mxu0
    %4934 = vmatprep.mubr.f32.mxu0 %v4017
    %4935 = vmatmul.mubr.f32.gmra.mrb[0].mxu0 %v4207
    %v4936 = vpop.f32.mrb[0].mxu0
    %v4937 = vadd.f32 %v4552, %v4936
    %v4938 = vpop.f32.mrb[0].mxu0
    %4939 = vmatprep.mubr.f32.mxu0 %v4018
    %4940 = vmatmul.mubr.f32.gmra.mrb[0].mxu0 %v4208
    %v4941 = vpop.f32.mrb[0].mxu0
    %v4942 = vadd.f32 %v4557, %v4941
    %v4943 = vpop.f32.mrb[0].mxu0
    %4944 = vmatprep.mubr.f32.mxu0 %v4019
    %4945 = vmatmul.mubr.f32.gmra.mrb[0].mxu0 %v4209
    %v4946 = vpop.f32.mrb[0].mxu0
    %v4947 = vadd.f32 %v4562, %v4946
    %v4948 = vpop.f32.mrb[0].mxu0
    %4949 = vmatprep.mubr.f32.mxu0 %v4020
    %4950 = vmatmul.mubr.f32.gmra.mrb[0].mxu0 %v4210
    %v4951 = vpop.f32.mrb[0].mxu0
    %v4952 = vadd.f32 %v4567, %v4951
    %v4953 = vpop.f32.mrb[0].mxu0
    %4954 = vmatprep.mubr.f32.mxu0 %v4021
    %4955 = vmatmul.mubr.f32.gmra.mrb[0].mxu0 %v4211
    %v4956 = vpop.f32.mrb[0].mxu0
    %v4957 = vadd.f32 %v4572, %v4956
    %v4958 = vpop.f32.mrb[0].mxu0
    %4959 = vmatprep.mubr.f32.mxu0 %v4022
    %4960 = vmatmul.mubr.f32.gmra.mrb[0].mxu0 %v4212
    %v4961 = vpop.f32.mrb[0].mxu0
    %v4962 = vadd.f32 %v4577, %v4961
    %v4963 = vpop.f32.mrb[0].mxu0
    %4964 = vmatprep.mubr.f32.mxu0 %v4023
    %4965 = vmatmul.mubr.f32.gmra.mrb[0].mxu0 %v4213
    %v4966 = vpop.f32.mrb[0].mxu0
    %v4967 = vadd.f32 %v4582, %v4966
    %v4968 = vpop.f32.mrb[0].mxu0
    %4969 = vmatprep.mubr.f32.mxu0 %v4024
    %4970 = vmatmul.mubr.f32.gmra.mrb[0].mxu0 %v4214
    %v4971 = vpop.f32.mrb[0].mxu0
    %v4972 = vadd.f32 %v4587, %v4971
    %v4973 = vpop.f32.mrb[0].mxu0
    %4974 = vmatprep.mubr.f32.mxu0 %v4025
    %4975 = vmatmul.mubr.f32.gmra.mrb[0].mxu0 %v4215
    %v4976 = vpop.f32.mrb[0].mxu0
    %v4977 = vadd.f32 %v4592, %v4976
    %v4978 = vpop.f32.mrb[0].mxu0
    %4979 = vmatprep.mubr.f32.mxu0 %v4026
    %4980 = vmatmul.mubr.f32.gmra.mrb[0].mxu0 %v4216
    %v4981 = vpop.f32.mrb[0].mxu0
    %v4982 = vadd.f32 %v4597, %v4981
    %v4983 = vpop.f32.mrb[0].mxu0
    %4984 = vmatprep.mubr.f32.mxu0 %v4027
    %4985 = vmatmul.mubr.f32.gmra.mrb[0].mxu0 %v4217
    %v4986 = vpop.f32.mrb[0].mxu0
    %v4987 = vadd.f32 %v4602, %v4986
    %v4988 = vpop.f32.mrb[0].mxu0
    %4989 = vdwg.mxu0
    %4990 = vmatprep.subr.mxu0 0.0
    %4991 = vmatpush1.msra.mxu0 %v3756
    %4992 = vmatprep.subr.mxu0 0.0
    %4993 = vmatpush1.msra.mxu0 %v3757
    %4994 = vmatprep.subr.mxu0 0.0
    %4995 = vmatpush1.msra.mxu0 %v3758
    %4996 = vmatprep.subr.mxu0 0.0
    %4997 = vmatpush1.msra.mxu0 %v3759
    %4998 = vmatprep.subr.mxu0 0.0
    %4999 = vmatpush1.msra.mxu0 %v3760
    %5000 = vmatprep.subr.mxu0 0.0
    %5001 = vmatpush1.msra.mxu0 %v3761
    %5002 = vmatprep.subr.mxu0 0.0
    %5003 = vmatpush1.msra.mxu0 %v3762
    %5004 = vmatprep.subr.mxu0 0.0
    %5005 = vmatpush1.msra.mxu0 %v3763
    %5006 = vmatprep.subr.mxu0 0.0
    %5007 = vmatpush1.msra.mxu0 %v3764
    %5008 = vmatprep.subr.mxu0 0.0
    %5009 = vmatpush1.msra.mxu0 %v3765
    %5010 = vmatprep.subr.mxu0 0.0
    %5011 = vmatpush1.msra.mxu0 %v3766
    %5012 = vmatprep.subr.mxu0 0.0
    %5013 = vmatpush1.msra.mxu0 %v3767
    %5014 = vmatprep.subr.mxu0 0.0
    %5015 = vmatpush1.msra.mxu0 %v3768
    %5016 = vmatprep.subr.mxu0 0.0
    %5017 = vmatpush1.msra.mxu0 %v3769
    %5018 = vmatprep.subr.mxu0 0.0
    %5019 = vmatpush1.msra.mxu0 %v3770
    %5020 = vmatprep.subr.mxu0 0.0
    %5021 = vmatpush1.msra.mxu0 %v3771
    %5022 = vmatprep.subr.mxu0 0.0
    %5023 = vmatpush1.msra.mxu0 %v3772
    %5024 = vmatprep.subr.mxu0 0.0
    %5025 = vmatpush1.msra.mxu0 %v3773
    %5026 = vmatprep.subr.mxu0 0.0
    %5027 = vmatpush1.msra.mxu0 %v3774
    %5028 = vmatprep.subr.mxu0 0.0
    %5029 = vmatpush1.msra.mxu0 %v3775
    %5030 = vmatprep.subr.mxu0 0.0
    %5031 = vmatpush1.msra.mxu0 %v3776
    %5032 = vmatprep.subr.mxu0 0.0
    %5033 = vmatpush1.msra.mxu0 %v3777
    %5034 = vmatprep.subr.mxu0 0.0
    %5035 = vmatpush1.msra.mxu0 %v3778
    %5036 = vmatprep.subr.mxu0 0.0
    %5037 = vmatpush1.msra.mxu0 %v3779
    %5038 = vmatprep.subr.mxu0 0.0
    %5039 = vmatpush1.msra.mxu0 %v3780
    %5040 = vmatprep.subr.mxu0 0.0
    %5041 = vmatpush1.msra.mxu0 %v3781
    %5042 = vmatprep.subr.mxu0 0.0
    %5043 = vmatpush1.msra.mxu0 %v3782
    %5044 = vmatprep.subr.mxu0 0.0
    %5045 = vmatpush1.msra.mxu0 %v3783
    %5046 = vmatprep.subr.mxu0 0.0
    %5047 = vmatpush1.msra.mxu0 %v3784
    %5048 = vmatprep.subr.mxu0 0.0
    %5049 = vmatpush1.msra.mxu0 %v3785
    %5050 = vmatprep.subr.mxu0 0.0
    %5051 = vmatpush1.msra.mxu0 %v3786
    %5052 = vmatprep.subr.mxu0 0.0
    %5053 = vmatpush1.msra.mxu0 %v3787
    %5054 = vmatprep.mubr.f32.mxu0 %v4156
    %5055 = vmatmul.mubr.f32.gmra.mrb[0].mxu0 %v3628
    %v5056 = vpop.f32.mrb[0].mxu0
    %v5057 = vadd.f32 %v4672, %v5056
    %v5058 = vpop.f32.mrb[0].mxu0
    %5059 = vmatprep.mubr.f32.mxu0 %v4157
    %5060 = vmatmul.mubr.f32.gmra.mrb[0].mxu0 %v3629
    %v5061 = vpop.f32.mrb[0].mxu0
    %v5062 = vadd.f32 %v4677, %v5061
    %v5063 = vpop.f32.mrb[0].mxu0
    %5064 = vmatprep.mubr.f32.mxu0 %v4158
    %5065 = vmatmul.mubr.f32.gmra.mrb[0].mxu0 %v3630
    %v5066 = vpop.f32.mrb[0].mxu0
    %v5067 = vadd.f32 %v4682, %v5066
    %v5068 = vpop.f32.mrb[0].mxu0
    %5069 = vmatprep.mubr.f32.mxu0 %v4159
    %5070 = vmatmul.mubr.f32.gmra.mrb[0].mxu0 %v3631
    %v5071 = vpop.f32.mrb[0].mxu0
    %v5072 = vadd.f32 %v4687, %v5071
    %v5073 = vpop.f32.mrb[0].mxu0
    %5074 = vmatprep.mubr.f32.mxu0 %v4160
    %5075 = vmatmul.mubr.f32.gmra.mrb[0].mxu0 %v3632
    %v5076 = vpop.f32.mrb[0].mxu0
    %v5077 = vadd.f32 %v4692, %v5076
    %v5078 = vpop.f32.mrb[0].mxu0
    %5079 = vmatprep.mubr.f32.mxu0 %v4161
    %5080 = vmatmul.mubr.f32.gmra.mrb[0].mxu0 %v3633
    %v5081 = vpop.f32.mrb[0].mxu0
    %v5082 = vadd.f32 %v4697, %v5081
    %v5083 = vpop.f32.mrb[0].mxu0
    %5084 = vmatprep.mubr.f32.mxu0 %v4162
    %5085 = vmatmul.mubr.f32.gmra.mrb[0].mxu0 %v3634
    %v5086 = vpop.f32.mrb[0].mxu0
    %v5087 = vadd.f32 %v4702, %v5086
    %v5088 = vpop.f32.mrb[0].mxu0
    %5089 = vmatprep.mubr.f32.mxu0 %v4163
    %5090 = vmatmul.mubr.f32.gmra.mrb[0].mxu0 %v3635
    %v5091 = vpop.f32.mrb[0].mxu0
    %v5092 = vadd.f32 %v4707, %v5091
    %v5093 = vpop.f32.mrb[0].mxu0
    %5094 = vmatprep.mubr.f32.mxu0 %v4164
    %5095 = vmatmul.mubr.f32.gmra.mrb[0].mxu0 %v3636
    %v5096 = vpop.f32.mrb[0].mxu0
    %v5097 = vadd.f32 %v4712, %v5096
    %v5098 = vpop.f32.mrb[0].mxu0
    %5099 = vmatprep.mubr.f32.mxu0 %v4165
    %5100 = vmatmul.mubr.f32.gmra.mrb[0].mxu0 %v3637
    %v5101 = vpop.f32.mrb[0].mxu0
    %v5102 = vadd.f32 %v4717, %v5101
    %v5103 = vpop.f32.mrb[0].mxu0
    %5104 = vmatprep.mubr.f32.mxu0 %v4166
    %5105 = vmatmul.mubr.f32.gmra.mrb[0].mxu0 %v3638
    %v5106 = vpop.f32.mrb[0].mxu0
    %v5107 = vadd.f32 %v4722, %v5106
    %v5108 = vpop.f32.mrb[0].mxu0
    %5109 = vmatprep.mubr.f32.mxu0 %v4167
    %5110 = vmatmul.mubr.f32.gmra.mrb[0].mxu0 %v3639
    %v5111 = vpop.f32.mrb[0].mxu0
    %v5112 = vadd.f32 %v4727, %v5111
    %v5113 = vpop.f32.mrb[0].mxu0
    %5114 = vmatprep.mubr.f32.mxu0 %v4168
    %5115 = vmatmul.mubr.f32.gmra.mrb[0].mxu0 %v3640
    %v5116 = vpop.f32.mrb[0].mxu0
    %v5117 = vadd.f32 %v4732, %v5116
    %v5118 = vpop.f32.mrb[0].mxu0
    %5119 = vmatprep.mubr.f32.mxu0 %v4169
    %5120 = vmatmul.mubr.f32.gmra.mrb[0].mxu0 %v3641
    %v5121 = vpop.f32.mrb[0].mxu0
    %v5122 = vadd.f32 %v4737, %v5121
    %v5123 = vpop.f32.mrb[0].mxu0
    %5124 = vmatprep.mubr.f32.mxu0 %v4170
    %5125 = vmatmul.mubr.f32.gmra.mrb[0].mxu0 %v3642
    %v5126 = vpop.f32.mrb[0].mxu0
    %v5127 = vadd.f32 %v4742, %v5126
    %v5128 = vpop.f32.mrb[0].mxu0
    %5129 = vmatprep.mubr.f32.mxu0 %v4171
    %5130 = vmatmul.mubr.f32.gmra.mrb[0].mxu0 %v3643
    %v5131 = vpop.f32.mrb[0].mxu0
    %v5132 = vadd.f32 %v4747, %v5131
    %v5133 = vpop.f32.mrb[0].mxu0
    %5134 = vmatprep.mubr.f32.mxu0 %v4172
    %5135 = vmatmul.mubr.f32.gmra.mrb[0].mxu0 %v3644
    %v5136 = vpop.f32.mrb[0].mxu0
    %v5137 = vadd.f32 %v4752, %v5136
    %v5138 = vpop.f32.mrb[0].mxu0
    %5139 = vmatprep.mubr.f32.mxu0 %v4173
    %5140 = vmatmul.mubr.f32.gmra.mrb[0].mxu0 %v3645
    %v5141 = vpop.f32.mrb[0].mxu0
    %v5142 = vadd.f32 %v4757, %v5141
    %v5143 = vpop.f32.mrb[0].mxu0
    %5144 = vmatprep.mubr.f32.mxu0 %v4174
    %5145 = vmatmul.mubr.f32.gmra.mrb[0].mxu0 %v3646
    %v5146 = vpop.f32.mrb[0].mxu0
    %v5147 = vadd.f32 %v4762, %v5146
    %v5148 = vpop.f32.mrb[0].mxu0
    %5149 = vmatprep.mubr.f32.mxu0 %v4175
    %5150 = vmatmul.mubr.f32.gmra.mrb[0].mxu0 %v3647
    %v5151 = vpop.f32.mrb[0].mxu0
    %v5152 = vadd.f32 %v4767, %v5151
    %v5153 = vpop.f32.mrb[0].mxu0
    %5154 = vmatprep.mubr.f32.mxu0 %v4176
    %5155 = vmatmul.mubr.f32.gmra.mrb[0].mxu0 %v3648
    %v5156 = vpop.f32.mrb[0].mxu0
    %v5157 = vadd.f32 %v4772, %v5156
    %v5158 = vpop.f32.mrb[0].mxu0
    %5159 = vmatprep.mubr.f32.mxu0 %v4177
    %5160 = vmatmul.mubr.f32.gmra.mrb[0].mxu0 %v3649
    %v5161 = vpop.f32.mrb[0].mxu0
    %v5162 = vadd.f32 %v4777, %v5161
    %v5163 = vpop.f32.mrb[0].mxu0
    %5164 = vmatprep.mubr.f32.mxu0 %v4178
    %5165 = vmatmul.mubr.f32.gmra.mrb[0].mxu0 %v3650
    %v5166 = vpop.f32.mrb[0].mxu0
    %v5167 = vadd.f32 %v4782, %v5166
    %v5168 = vpop.f32.mrb[0].mxu0
    %5169 = vmatprep.mubr.f32.mxu0 %v4179
    %5170 = vmatmul.mubr.f32.gmra.mrb[0].mxu0 %v3651
    %v5171 = vpop.f32.mrb[0].mxu0
    %v5172 = vadd.f32 %v4787, %v5171
    %v5173 = vpop.f32.mrb[0].mxu0
    %5174 = vmatprep.mubr.f32.mxu0 %v4180
    %5175 = vmatmul.mubr.f32.gmra.mrb[0].mxu0 %v3652
    %v5176 = vpop.f32.mrb[0].mxu0
    %v5177 = vadd.f32 %v4792, %v5176
    %v5178 = vpop.f32.mrb[0].mxu0
    %5179 = vmatprep.mubr.f32.mxu0 %v4181
    %5180 = vmatmul.mubr.f32.gmra.mrb[0].mxu0 %v3653
    %v5181 = vpop.f32.mrb[0].mxu0
    %v5182 = vadd.f32 %v4797, %v5181
    %v5183 = vpop.f32.mrb[0].mxu0
    %5184 = vmatprep.mubr.f32.mxu0 %v4182
    %5185 = vmatmul.mubr.f32.gmra.mrb[0].mxu0 %v3654
    %v5186 = vpop.f32.mrb[0].mxu0
    %v5187 = vadd.f32 %v4802, %v5186
    %v5188 = vpop.f32.mrb[0].mxu0
    %5189 = vmatprep.mubr.f32.mxu0 %v4183
    %5190 = vmatmul.mubr.f32.gmra.mrb[0].mxu0 %v3655
    %v5191 = vpop.f32.mrb[0].mxu0
    %v5192 = vadd.f32 %v4807, %v5191
    %v5193 = vpop.f32.mrb[0].mxu0
    %5194 = vmatprep.mubr.f32.mxu0 %v4184
    %5195 = vmatmul.mubr.f32.gmra.mrb[0].mxu0 %v3656
    %v5196 = vpop.f32.mrb[0].mxu0
    %v5197 = vadd.f32 %v4812, %v5196
    %v5198 = vpop.f32.mrb[0].mxu0
    %5199 = vmatprep.mubr.f32.mxu0 %v4185
    %5200 = vmatmul.mubr.f32.gmra.mrb[0].mxu0 %v3657
    %v5201 = vpop.f32.mrb[0].mxu0
    %v5202 = vadd.f32 %v4817, %v5201
    %v5203 = vpop.f32.mrb[0].mxu0
    %5204 = vmatprep.mubr.f32.mxu0 %v4186
    %5205 = vmatmul.mubr.f32.gmra.mrb[0].mxu0 %v3658
    %v5206 = vpop.f32.mrb[0].mxu0
    %v5207 = vadd.f32 %v4822, %v5206
    %v5208 = vpop.f32.mrb[0].mxu0
    %5209 = vmatprep.mubr.f32.mxu0 %v4187
    %5210 = vmatmul.mubr.f32.gmra.mrb[0].mxu0 %v3659
    %v5211 = vpop.f32.mrb[0].mxu0
    %v5212 = vadd.f32 %v4827, %v5211
    %v5213 = vpop.f32.mrb[0].mxu0
    %5214 = vmatprep.mubr.f32.mxu0 %v4188
    %5215 = vmatmul.mubr.f32.gmra.mrb[0].mxu0 %v3660
    %v5216 = vpop.f32.mrb[0].mxu0
    %v5217 = vadd.f32 %v4832, %v5216
    %v5218 = vpop.f32.mrb[0].mxu0
    %5219 = vmatprep.mubr.f32.mxu0 %v4189
    %5220 = vmatmul.mubr.f32.gmra.mrb[0].mxu0 %v3661
    %v5221 = vpop.f32.mrb[0].mxu0
    %v5222 = vadd.f32 %v4837, %v5221
    %v5223 = vpop.f32.mrb[0].mxu0
    %5224 = vmatprep.mubr.f32.mxu0 %v4190
    %5225 = vmatmul.mubr.f32.gmra.mrb[0].mxu0 %v3662
    %v5226 = vpop.f32.mrb[0].mxu0
    %v5227 = vadd.f32 %v4842, %v5226
    %v5228 = vpop.f32.mrb[0].mxu0
    %5229 = vmatprep.mubr.f32.mxu0 %v4191
    %5230 = vmatmul.mubr.f32.gmra.mrb[0].mxu0 %v3663
    %v5231 = vpop.f32.mrb[0].mxu0
    %v5232 = vadd.f32 %v4847, %v5231
    %v5233 = vpop.f32.mrb[0].mxu0
    %5234 = vmatprep.mubr.f32.mxu0 %v4192
    %5235 = vmatmul.mubr.f32.gmra.mrb[0].mxu0 %v3664
    %v5236 = vpop.f32.mrb[0].mxu0
    %v5237 = vadd.f32 %v4852, %v5236
    %v5238 = vpop.f32.mrb[0].mxu0
    %5239 = vmatprep.mubr.f32.mxu0 %v4193
    %5240 = vmatmul.mubr.f32.gmra.mrb[0].mxu0 %v3665
    %v5241 = vpop.f32.mrb[0].mxu0
    %v5242 = vadd.f32 %v4857, %v5241
    %v5243 = vpop.f32.mrb[0].mxu0
    %5244 = vmatprep.mubr.f32.mxu0 %v4194
    %5245 = vmatmul.mubr.f32.gmra.mrb[0].mxu0 %v3666
    %v5246 = vpop.f32.mrb[0].mxu0
    %v5247 = vadd.f32 %v4862, %v5246
    %v5248 = vpop.f32.mrb[0].mxu0
    %5249 = vmatprep.mubr.f32.mxu0 %v4195
    %5250 = vmatmul.mubr.f32.gmra.mrb[0].mxu0 %v3667
    %v5251 = vpop.f32.mrb[0].mxu0
    %v5252 = vadd.f32 %v4867, %v5251
    %v5253 = vpop.f32.mrb[0].mxu0
    %5254 = vmatprep.mubr.f32.mxu0 %v4196
    %5255 = vmatmul.mubr.f32.gmra.mrb[0].mxu0 %v3668
    %v5256 = vpop.f32.mrb[0].mxu0
    %v5257 = vadd.f32 %v4872, %v5256
    %v5258 = vpop.f32.mrb[0].mxu0
    %5259 = vmatprep.mubr.f32.mxu0 %v4197
    %5260 = vmatmul.mubr.f32.gmra.mrb[0].mxu0 %v3669
    %v5261 = vpop.f32.mrb[0].mxu0
    %v5262 = vadd.f32 %v4877, %v5261
    %v5263 = vpop.f32.mrb[0].mxu0
    %5264 = vmatprep.mubr.f32.mxu0 %v4198
    %5265 = vmatmul.mubr.f32.gmra.mrb[0].mxu0 %v3670
    %v5266 = vpop.f32.mrb[0].mxu0
    %v5267 = vadd.f32 %v4882, %v5266
    %v5268 = vpop.f32.mrb[0].mxu0
    %5269 = vmatprep.mubr.f32.mxu0 %v4199
    %5270 = vmatmul.mubr.f32.gmra.mrb[0].mxu0 %v3671
    %v5271 = vpop.f32.mrb[0].mxu0
    %v5272 = vadd.f32 %v4887, %v5271
    %v5273 = vpop.f32.mrb[0].mxu0
    %5274 = vmatprep.mubr.f32.mxu0 %v4200
    %5275 = vmatmul.mubr.f32.gmra.mrb[0].mxu0 %v3672
    %v5276 = vpop.f32.mrb[0].mxu0
    %v5277 = vadd.f32 %v4892, %v5276
    %v5278 = vpop.f32.mrb[0].mxu0
    %5279 = vmatprep.mubr.f32.mxu0 %v4201
    %5280 = vmatmul.mubr.f32.gmra.mrb[0].mxu0 %v3673
    %v5281 = vpop.f32.mrb[0].mxu0
    %v5282 = vadd.f32 %v4897, %v5281
    %v5283 = vpop.f32.mrb[0].mxu0
    %5284 = vmatprep.mubr.f32.mxu0 %v4202
    %5285 = vmatmul.mubr.f32.gmra.mrb[0].mxu0 %v3674
    %v5286 = vpop.f32.mrb[0].mxu0
    %v5287 = vadd.f32 %v4902, %v5286
    %v5288 = vpop.f32.mrb[0].mxu0
    %5289 = vmatprep.mubr.f32.mxu0 %v4203
    %5290 = vmatmul.mubr.f32.gmra.mrb[0].mxu0 %v3675
    %v5291 = vpop.f32.mrb[0].mxu0
    %v5292 = vadd.f32 %v4907, %v5291
    %v5293 = vpop.f32.mrb[0].mxu0
    %5294 = vmatprep.mubr.f32.mxu0 %v4204
    %5295 = vmatmul.mubr.f32.gmra.mrb[0].mxu0 %v3676
    %v5296 = vpop.f32.mrb[0].mxu0
    %v5297 = vadd.f32 %v4912, %v5296
    %v5298 = vpop.f32.mrb[0].mxu0
    %5299 = vmatprep.mubr.f32.mxu0 %v4205
    %5300 = vmatmul.mubr.f32.gmra.mrb[0].mxu0 %v3677
    %v5301 = vpop.f32.mrb[0].mxu0
    %v5302 = vadd.f32 %v4917, %v5301
    %v5303 = vpop.f32.mrb[0].mxu0
    %5304 = vmatprep.mubr.f32.mxu0 %v4206
    %5305 = vmatmul.mubr.f32.gmra.mrb[0].mxu0 %v3678
    %v5306 = vpop.f32.mrb[0].mxu0
    %v5307 = vadd.f32 %v4922, %v5306
    %v5308 = vpop.f32.mrb[0].mxu0
    %5309 = vmatprep.mubr.f32.mxu0 %v4207
    %5310 = vmatmul.mubr.f32.gmra.mrb[0].mxu0 %v3679
    %v5311 = vpop.f32.mrb[0].mxu0
    %v5312 = vadd.f32 %v4927, %v5311
    %v5313 = vpop.f32.mrb[0].mxu0
    %5314 = vmatprep.mubr.f32.mxu0 %v4208
    %5315 = vmatmul.mubr.f32.gmra.mrb[0].mxu0 %v3680
    %v5316 = vpop.f32.mrb[0].mxu0
    %v5317 = vadd.f32 %v4932, %v5316
    %v5318 = vpop.f32.mrb[0].mxu0
    %5319 = vmatprep.mubr.f32.mxu0 %v4209
    %5320 = vmatmul.mubr.f32.gmra.mrb[0].mxu0 %v3681
    %v5321 = vpop.f32.mrb[0].mxu0
    %v5322 = vadd.f32 %v4937, %v5321
    %v5323 = vpop.f32.mrb[0].mxu0
    %5324 = vmatprep.mubr.f32.mxu0 %v4210
    %5325 = vmatmul.mubr.f32.gmra.mrb[0].mxu0 %v3682
    %v5326 = vpop.f32.mrb[0].mxu0
    %v5327 = vadd.f32 %v4942, %v5326
    %v5328 = vpop.f32.mrb[0].mxu0
    %5329 = vmatprep.mubr.f32.mxu0 %v4211
    %5330 = vmatmul.mubr.f32.gmra.mrb[0].mxu0 %v3683
    %v5331 = vpop.f32.mrb[0].mxu0
    %v5332 = vadd.f32 %v4947, %v5331
    %v5333 = vpop.f32.mrb[0].mxu0
    %5334 = vmatprep.mubr.f32.mxu0 %v4212
    %5335 = vmatmul.mubr.f32.gmra.mrb[0].mxu0 %v3684
    %v5336 = vpop.f32.mrb[0].mxu0
    %v5337 = vadd.f32 %v4952, %v5336
    %v5338 = vpop.f32.mrb[0].mxu0
    %5339 = vmatprep.mubr.f32.mxu0 %v4213
    %5340 = vmatmul.mubr.f32.gmra.mrb[0].mxu0 %v3685
    %v5341 = vpop.f32.mrb[0].mxu0
    %v5342 = vadd.f32 %v4957, %v5341
    %v5343 = vpop.f32.mrb[0].mxu0
    %5344 = vmatprep.mubr.f32.mxu0 %v4214
    %5345 = vmatmul.mubr.f32.gmra.mrb[0].mxu0 %v3686
    %v5346 = vpop.f32.mrb[0].mxu0
    %v5347 = vadd.f32 %v4962, %v5346
    %v5348 = vpop.f32.mrb[0].mxu0
    %5349 = vmatprep.mubr.f32.mxu0 %v4215
    %5350 = vmatmul.mubr.f32.gmra.mrb[0].mxu0 %v3687
    %v5351 = vpop.f32.mrb[0].mxu0
    %v5352 = vadd.f32 %v4967, %v5351
    %v5353 = vpop.f32.mrb[0].mxu0
    %5354 = vmatprep.mubr.f32.mxu0 %v4216
    %5355 = vmatmul.mubr.f32.gmra.mrb[0].mxu0 %v3688
    %v5356 = vpop.f32.mrb[0].mxu0
    %v5357 = vadd.f32 %v4972, %v5356
    %v5358 = vpop.f32.mrb[0].mxu0
    %5359 = vmatprep.mubr.f32.mxu0 %v4217
    %5360 = vmatmul.mubr.f32.gmra.mrb[0].mxu0 %v3689
    %v5361 = vpop.f32.mrb[0].mxu0
    %v5362 = vadd.f32 %v4977, %v5361
    %v5363 = vpop.f32.mrb[0].mxu0
    %5364 = vmatprep.mubr.f32.mxu0 %v4218
    %5365 = vmatmul.mubr.f32.gmra.mrb[0].mxu0 %v3690
    %v5366 = vpop.f32.mrb[0].mxu0
    %v5367 = vadd.f32 %v4982, %v5366
    %v5368 = vpop.f32.mrb[0].mxu0
    %5369 = vmatprep.mubr.f32.mxu0 %v4219
    %5370 = vmatmul.mubr.f32.gmra.mrb[0].mxu0 %v3691
    %v5371 = vpop.f32.mrb[0].mxu0
    %v5372 = vadd.f32 %v4987, %v5371
    %v5373 = vpop.f32.mrb[0].mxu0
    %5374 = vdwg.mxu0
    %5375 = vmatprep.subr.mxu0 0.0
    %5376 = vmatpush1.msra.mxu0 %v3788
    %5377 = vmatprep.subr.mxu0 0.0
    %5378 = vmatpush1.msra.mxu0 %v3789
    %5379 = vmatprep.subr.mxu0 0.0
    %5380 = vmatpush1.msra.mxu0 %v3790
    %5381 = vmatprep.subr.mxu0 0.0
    %5382 = vmatpush1.msra.mxu0 %v3791
    %5383 = vmatprep.subr.mxu0 0.0
    %5384 = vmatpush1.msra.mxu0 %v3792
    %5385 = vmatprep.subr.mxu0 0.0
    %5386 = vmatpush1.msra.mxu0 %v3793
    %5387 = vmatprep.subr.mxu0 0.0
    %5388 = vmatpush1.msra.mxu0 %v3794
    %5389 = vmatprep.subr.mxu0 0.0
    %5390 = vmatpush1.msra.mxu0 %v3795
    %5391 = vmatprep.subr.mxu0 0.0
    %5392 = vmatpush1.msra.mxu0 %v3796
    %5393 = vmatprep.subr.mxu0 0.0
    %5394 = vmatpush1.msra.mxu0 %v3797
    %5395 = vmatprep.subr.mxu0 0.0
    %5396 = vmatpush1.msra.mxu0 %v3798
    %5397 = vmatprep.subr.mxu0 0.0
    %5398 = vmatpush1.msra.mxu0 %v3799
    %5399 = vmatprep.subr.mxu0 0.0
    %5400 = vmatpush1.msra.mxu0 %v3800
    %5401 = vmatprep.subr.mxu0 0.0
    %5402 = vmatpush1.msra.mxu0 %v3801
    %5403 = vmatprep.subr.mxu0 0.0
    %5404 = vmatpush1.msra.mxu0 %v3802
    %5405 = vmatprep.subr.mxu0 0.0
    %5406 = vmatpush1.msra.mxu0 %v3803
    %5407 = vmatprep.subr.mxu0 0.0
    %5408 = vmatpush1.msra.mxu0 %v3804
    %5409 = vmatprep.subr.mxu0 0.0
    %5410 = vmatpush1.msra.mxu0 %v3805
    %5411 = vmatprep.subr.mxu0 0.0
    %5412 = vmatpush1.msra.mxu0 %v3806
    %5413 = vmatprep.subr.mxu0 0.0
    %5414 = vmatpush1.msra.mxu0 %v3807
    %5415 = vmatprep.subr.mxu0 0.0
    %5416 = vmatpush1.msra.mxu0 %v3808
    %5417 = vmatprep.subr.mxu0 0.0
    %5418 = vmatpush1.msra.mxu0 %v3809
    %5419 = vmatprep.subr.mxu0 0.0
    %5420 = vmatpush1.msra.mxu0 %v3810
    %5421 = vmatprep.subr.mxu0 0.0
    %5422 = vmatpush1.msra.mxu0 %v3811
    %5423 = vmatprep.subr.mxu0 0.0
    %5424 = vmatpush1.msra.mxu0 %v3812
    %5425 = vmatprep.subr.mxu0 0.0
    %5426 = vmatpush1.msra.mxu0 %v3813
    %5427 = vmatprep.subr.mxu0 0.0
    %5428 = vmatpush1.msra.mxu0 %v3814
    %5429 = vmatprep.subr.mxu0 0.0
    %5430 = vmatpush1.msra.mxu0 %v3815
    %5431 = vmatprep.subr.mxu0 0.0
    %5432 = vmatpush1.msra.mxu0 %v3816
    %5433 = vmatprep.subr.mxu0 0.0
    %5434 = vmatpush1.msra.mxu0 %v3817
    %5435 = vmatprep.subr.mxu0 0.0
    %5436 = vmatpush1.msra.mxu0 %v3818
    %5437 = vmatprep.subr.mxu0 0.0
    %5438 = vmatpush1.msra.mxu0 %v3819
    %5439 = vmatprep.mubr.f32.mxu0 %v3630
    %5440 = vmatmul.mubr.f32.gmra.mrb[0].mxu0 %v3966
    %v5441 = vpop.f32.mrb[0].mxu0
    %v5442 = vadd.f32 %v5057, %v5441
    %v5443 = vpop.f32.mrb[0].mxu0
    %5444 = vmatprep.mubr.f32.mxu0 %v3631
    %5445 = vmatmul.mubr.f32.gmra.mrb[0].mxu0 %v3967
    %v5446 = vpop.f32.mrb[0].mxu0
    %v5447 = vadd.f32 %v5062, %v5446
    %v5448 = vpop.f32.mrb[0].mxu0
    %5449 = vmatprep.mubr.f32.mxu0 %v3632
    %5450 = vmatmul.mubr.f32.gmra.mrb[0].mxu0 %v3968
    %v5451 = vpop.f32.mrb[0].mxu0
    %v5452 = vadd.f32 %v5067, %v5451
    %v5453 = vpop.f32.mrb[0].mxu0
    %5454 = vmatprep.mubr.f32.mxu0 %v3633
    %5455 = vmatmul.mubr.f32.gmra.mrb[0].mxu0 %v3969
    %v5456 = vpop.f32.mrb[0].mxu0
    %v5457 = vadd.f32 %v5072, %v5456
    %v5458 = vpop.f32.mrb[0].mxu0
    %5459 = vmatprep.mubr.f32.mxu0 %v3634
    %5460 = vmatmul.mubr.f32.gmra.mrb[0].mxu0 %v3970
    %v5461 = vpop.f32.mrb[0].mxu0
    %v5462 = vadd.f32 %v5077, %v5461
    %v5463 = vpop.f32.mrb[0].mxu0
    %5464 = vmatprep.mubr.f32.mxu0 %v3635
    %5465 = vmatmul.mubr.f32.gmra.mrb[0].mxu0 %v3971
    %v5466 = vpop.f32.mrb[0].mxu0
    %v5467 = vadd.f32 %v5082, %v5466
    %v5468 = vpop.f32.mrb[0].mxu0
    %5469 = vmatprep.mubr.f32.mxu0 %v3636
    %5470 = vmatmul.mubr.f32.gmra.mrb[0].mxu0 %v3972
    %v5471 = vpop.f32.mrb[0].mxu0
    %v5472 = vadd.f32 %v5087, %v5471
    %v5473 = vpop.f32.mrb[0].mxu0
    %5474 = vmatprep.mubr.f32.mxu0 %v3637
    %5475 = vmatmul.mubr.f32.gmra.mrb[0].mxu0 %v3973
    %v5476 = vpop.f32.mrb[0].mxu0
    %v5477 = vadd.f32 %v5092, %v5476
    %v5478 = vpop.f32.mrb[0].mxu0
    %5479 = vmatprep.mubr.f32.mxu0 %v3638
    %5480 = vmatmul.mubr.f32.gmra.mrb[0].mxu0 %v3974
    %v5481 = vpop.f32.mrb[0].mxu0
    %v5482 = vadd.f32 %v5097, %v5481
    %v5483 = vpop.f32.mrb[0].mxu0
    %5484 = vmatprep.mubr.f32.mxu0 %v3639
    %5485 = vmatmul.mubr.f32.gmra.mrb[0].mxu0 %v3975
    %v5486 = vpop.f32.mrb[0].mxu0
    %v5487 = vadd.f32 %v5102, %v5486
    %v5488 = vpop.f32.mrb[0].mxu0
    %5489 = vmatprep.mubr.f32.mxu0 %v3640
    %5490 = vmatmul.mubr.f32.gmra.mrb[0].mxu0 %v3976
    %v5491 = vpop.f32.mrb[0].mxu0
    %v5492 = vadd.f32 %v5107, %v5491
    %v5493 = vpop.f32.mrb[0].mxu0
    %5494 = vmatprep.mubr.f32.mxu0 %v3641
    %5495 = vmatmul.mubr.f32.gmra.mrb[0].mxu0 %v3977
    %v5496 = vpop.f32.mrb[0].mxu0
    %v5497 = vadd.f32 %v5112, %v5496
    %v5498 = vpop.f32.mrb[0].mxu0
    %5499 = vmatprep.mubr.f32.mxu0 %v3642
    %5500 = vmatmul.mubr.f32.gmra.mrb[0].mxu0 %v3978
    %v5501 = vpop.f32.mrb[0].mxu0
    %v5502 = vadd.f32 %v5117, %v5501
    %v5503 = vpop.f32.mrb[0].mxu0
    %5504 = vmatprep.mubr.f32.mxu0 %v3643
    %5505 = vmatmul.mubr.f32.gmra.mrb[0].mxu0 %v3979
    %v5506 = vpop.f32.mrb[0].mxu0
    %v5507 = vadd.f32 %v5122, %v5506
    %v5508 = vpop.f32.mrb[0].mxu0
    %5509 = vmatprep.mubr.f32.mxu0 %v3644
    %5510 = vmatmul.mubr.f32.gmra.mrb[0].mxu0 %v3980
    %v5511 = vpop.f32.mrb[0].mxu0
    %v5512 = vadd.f32 %v5127, %v5511
    %v5513 = vpop.f32.mrb[0].mxu0
    %5514 = vmatprep.mubr.f32.mxu0 %v3645
    %5515 = vmatmul.mubr.f32.gmra.mrb[0].mxu0 %v3981
    %v5516 = vpop.f32.mrb[0].mxu0
    %v5517 = vadd.f32 %v5132, %v5516
    %v5518 = vpop.f32.mrb[0].mxu0
    %5519 = vmatprep.mubr.f32.mxu0 %v3646
    %5520 = vmatmul.mubr.f32.gmra.mrb[0].mxu0 %v3982
    %v5521 = vpop.f32.mrb[0].mxu0
    %v5522 = vadd.f32 %v5137, %v5521
    %v5523 = vpop.f32.mrb[0].mxu0
    %5524 = vmatprep.mubr.f32.mxu0 %v3647
    %5525 = vmatmul.mubr.f32.gmra.mrb[0].mxu0 %v3983
    %v5526 = vpop.f32.mrb[0].mxu0
    %v5527 = vadd.f32 %v5142, %v5526
    %v5528 = vpop.f32.mrb[0].mxu0
    %5529 = vmatprep.mubr.f32.mxu0 %v3648
    %5530 = vmatmul.mubr.f32.gmra.mrb[0].mxu0 %v3984
    %v5531 = vpop.f32.mrb[0].mxu0
    %v5532 = vadd.f32 %v5147, %v5531
    %v5533 = vpop.f32.mrb[0].mxu0
    %5534 = vmatprep.mubr.f32.mxu0 %v3649
    %5535 = vmatmul.mubr.f32.gmra.mrb[0].mxu0 %v3985
    %v5536 = vpop.f32.mrb[0].mxu0
    %v5537 = vadd.f32 %v5152, %v5536
    %v5538 = vpop.f32.mrb[0].mxu0
    %5539 = vmatprep.mubr.f32.mxu0 %v3650
    %5540 = vmatmul.mubr.f32.gmra.mrb[0].mxu0 %v3986
    %v5541 = vpop.f32.mrb[0].mxu0
    %v5542 = vadd.f32 %v5157, %v5541
    %v5543 = vpop.f32.mrb[0].mxu0
    %5544 = vmatprep.mubr.f32.mxu0 %v3651
    %5545 = vmatmul.mubr.f32.gmra.mrb[0].mxu0 %v3987
    %v5546 = vpop.f32.mrb[0].mxu0
    %v5547 = vadd.f32 %v5162, %v5546
    %v5548 = vpop.f32.mrb[0].mxu0
    %5549 = vmatprep.mubr.f32.mxu0 %v3652
    %5550 = vmatmul.mubr.f32.gmra.mrb[0].mxu0 %v3988
    %v5551 = vpop.f32.mrb[0].mxu0
    %v5552 = vadd.f32 %v5167, %v5551
    %v5553 = vpop.f32.mrb[0].mxu0
    %5554 = vmatprep.mubr.f32.mxu0 %v3653
    %5555 = vmatmul.mubr.f32.gmra.mrb[0].mxu0 %v3989
    %v5556 = vpop.f32.mrb[0].mxu0
    %v5557 = vadd.f32 %v5172, %v5556
    %v5558 = vpop.f32.mrb[0].mxu0
    %5559 = vmatprep.mubr.f32.mxu0 %v3654
    %5560 = vmatmul.mubr.f32.gmra.mrb[0].mxu0 %v3990
    %v5561 = vpop.f32.mrb[0].mxu0
    %v5562 = vadd.f32 %v5177, %v5561
    %v5563 = vpop.f32.mrb[0].mxu0
    %5564 = vmatprep.mubr.f32.mxu0 %v3655
    %5565 = vmatmul.mubr.f32.gmra.mrb[0].mxu0 %v3991
    %v5566 = vpop.f32.mrb[0].mxu0
    %v5567 = vadd.f32 %v5182, %v5566
    %v5568 = vpop.f32.mrb[0].mxu0
    %5569 = vmatprep.mubr.f32.mxu0 %v3656
    %5570 = vmatmul.mubr.f32.gmra.mrb[0].mxu0 %v3992
    %v5571 = vpop.f32.mrb[0].mxu0
    %v5572 = vadd.f32 %v5187, %v5571
    %v5573 = vpop.f32.mrb[0].mxu0
    %5574 = vmatprep.mubr.f32.mxu0 %v3657
    %5575 = vmatmul.mubr.f32.gmra.mrb[0].mxu0 %v3993
    %v5576 = vpop.f32.mrb[0].mxu0
    %v5577 = vadd.f32 %v5192, %v5576
    %v5578 = vpop.f32.mrb[0].mxu0
    %5579 = vmatprep.mubr.f32.mxu0 %v3658
    %5580 = vmatmul.mubr.f32.gmra.mrb[0].mxu0 %v3994
    %v5581 = vpop.f32.mrb[0].mxu0
    %v5582 = vadd.f32 %v5197, %v5581
    %v5583 = vpop.f32.mrb[0].mxu0
    %5584 = vmatprep.mubr.f32.mxu0 %v3659
    %5585 = vmatmul.mubr.f32.gmra.mrb[0].mxu0 %v3995
    %v5586 = vpop.f32.mrb[0].mxu0
    %v5587 = vadd.f32 %v5202, %v5586
    %v5588 = vpop.f32.mrb[0].mxu0
    %5589 = vmatprep.mubr.f32.mxu0 0.0
    %5590 = vmatmul.mubr.f32.gmra.mrb[0].mxu0 0.0
    %v5591 = vpop.f32.mrb[0].mxu0
    %v5592 = vadd.f32 %v5207, %v5591
    %v5593 = vpop.f32.mrb[0].mxu0
    %5594 = vmatprep.mubr.f32.mxu0 0.0
    %5595 = vmatmul.mubr.f32.gmra.mrb[0].mxu0 0.0
    %v5596 = vpop.f32.mrb[0].mxu0
    %v5597 = vadd.f32 %v5212, %v5596
    %v5598 = vpop.f32.mrb[0].mxu0
    %5599 = vmatprep.mubr.f32.mxu0 %v3662
    %5600 = vmatmul.mubr.f32.gmra.mrb[0].mxu0 %v3998
    %v5601 = vpop.f32.mrb[0].mxu0
    %v5602 = vadd.f32 %v5217, %v5601
    %v5603 = vpop.f32.mrb[0].mxu0
    %5604 = vmatprep.mubr.f32.mxu0 %v3663
    %5605 = vmatmul.mubr.f32.gmra.mrb[0].mxu0 %v3999
    %v5606 = vpop.f32.mrb[0].mxu0
    %v5607 = vadd.f32 %v5222, %v5606
    %v5608 = vpop.f32.mrb[0].mxu0
    %5609 = vmatprep.mubr.f32.mxu0 %v3664
    %5610 = vmatmul.mubr.f32.gmra.mrb[0].mxu0 %v4000
    %v5611 = vpop.f32.mrb[0].mxu0
    %v5612 = vadd.f32 %v5227, %v5611
    %v5613 = vpop.f32.mrb[0].mxu0
    %5614 = vmatprep.mubr.f32.mxu0 %v3665
    %5615 = vmatmul.mubr.f32.gmra.mrb[0].mxu0 %v4001
    %v5616 = vpop.f32.mrb[0].mxu0
    %v5617 = vadd.f32 %v5232, %v5616
    %v5618 = vpop.f32.mrb[0].mxu0
    %5619 = vmatprep.mubr.f32.mxu0 %v3666
    %5620 = vmatmul.mubr.f32.gmra.mrb[0].mxu0 %v4002
    %v5621 = vpop.f32.mrb[0].mxu0
    %v5622 = vadd.f32 %v5237, %v5621
    %v5623 = vpop.f32.mrb[0].mxu0
    %5624 = vmatprep.mubr.f32.mxu0 %v3667
    %5625 = vmatmul.mubr.f32.gmra.mrb[0].mxu0 %v4003
    %v5626 = vpop.f32.mrb[0].mxu0
    %v5627 = vadd.f32 %v5242, %v5626
    %v5628 = vpop.f32.mrb[0].mxu0
    %5629 = vmatprep.mubr.f32.mxu0 %v3668
    %5630 = vmatmul.mubr.f32.gmra.mrb[0].mxu0 %v4004
    %v5631 = vpop.f32.mrb[0].mxu0
    %v5632 = vadd.f32 %v5247, %v5631
    %v5633 = vpop.f32.mrb[0].mxu0
    %5634 = vmatprep.mubr.f32.mxu0 %v3669
    %5635 = vmatmul.mubr.f32.gmra.mrb[0].mxu0 %v4005
    %v5636 = vpop.f32.mrb[0].mxu0
    %v5637 = vadd.f32 %v5252, %v5636
    %v5638 = vpop.f32.mrb[0].mxu0
    %5639 = vmatprep.mubr.f32.mxu0 %v3670
    %5640 = vmatmul.mubr.f32.gmra.mrb[0].mxu0 %v4006
    %v5641 = vpop.f32.mrb[0].mxu0
    %v5642 = vadd.f32 %v5257, %v5641
    %v5643 = vpop.f32.mrb[0].mxu0
    %5644 = vmatprep.mubr.f32.mxu0 %v3671
    %5645 = vmatmul.mubr.f32.gmra.mrb[0].mxu0 %v4007
    %v5646 = vpop.f32.mrb[0].mxu0
    %v5647 = vadd.f32 %v5262, %v5646
    %v5648 = vpop.f32.mrb[0].mxu0
    %5649 = vmatprep.mubr.f32.mxu0 %v3672
    %5650 = vmatmul.mubr.f32.gmra.mrb[0].mxu0 %v4008
    %v5651 = vpop.f32.mrb[0].mxu0
    %v5652 = vadd.f32 %v5267, %v5651
    %v5653 = vpop.f32.mrb[0].mxu0
    %5654 = vmatprep.mubr.f32.mxu0 %v3673
    %5655 = vmatmul.mubr.f32.gmra.mrb[0].mxu0 %v4009
    %v5656 = vpop.f32.mrb[0].mxu0
    %v5657 = vadd.f32 %v5272, %v5656
    %v5658 = vpop.f32.mrb[0].mxu0
    %5659 = vmatprep.mubr.f32.mxu0 %v3674
    %5660 = vmatmul.mubr.f32.gmra.mrb[0].mxu0 %v4010
    %v5661 = vpop.f32.mrb[0].mxu0
    %v5662 = vadd.f32 %v5277, %v5661
    %v5663 = vpop.f32.mrb[0].mxu0
    %5664 = vmatprep.mubr.f32.mxu0 %v3675
    %5665 = vmatmul.mubr.f32.gmra.mrb[0].mxu0 %v4011
    %v5666 = vpop.f32.mrb[0].mxu0
    %v5667 = vadd.f32 %v5282, %v5666
    %v5668 = vpop.f32.mrb[0].mxu0
    %5669 = vmatprep.mubr.f32.mxu0 %v3676
    %5670 = vmatmul.mubr.f32.gmra.mrb[0].mxu0 %v4012
    %v5671 = vpop.f32.mrb[0].mxu0
    %v5672 = vadd.f32 %v5287, %v5671
    %v5673 = vpop.f32.mrb[0].mxu0
    %5674 = vmatprep.mubr.f32.mxu0 %v3677
    %5675 = vmatmul.mubr.f32.gmra.mrb[0].mxu0 %v4013
    %v5676 = vpop.f32.mrb[0].mxu0
    %v5677 = vadd.f32 %v5292, %v5676
    %v5678 = vpop.f32.mrb[0].mxu0
    %5679 = vmatprep.mubr.f32.mxu0 %v3678
    %5680 = vmatmul.mubr.f32.gmra.mrb[0].mxu0 %v4014
    %v5681 = vpop.f32.mrb[0].mxu0
    %v5682 = vadd.f32 %v5297, %v5681
    %v5683 = vpop.f32.mrb[0].mxu0
    %5684 = vmatprep.mubr.f32.mxu0 %v3679
    %5685 = vmatmul.mubr.f32.gmra.mrb[0].mxu0 %v4015
    %v5686 = vpop.f32.mrb[0].mxu0
    %v5687 = vadd.f32 %v5302, %v5686
    %v5688 = vpop.f32.mrb[0].mxu0
    %5689 = vmatprep.mubr.f32.mxu0 %v3680
    %5690 = vmatmul.mubr.f32.gmra.mrb[0].mxu0 %v4016
    %v5691 = vpop.f32.mrb[0].mxu0
    %v5692 = vadd.f32 %v5307, %v5691
    %v5693 = vpop.f32.mrb[0].mxu0
    %5694 = vmatprep.mubr.f32.mxu0 %v3681
    %5695 = vmatmul.mubr.f32.gmra.mrb[0].mxu0 %v4017
    %v5696 = vpop.f32.mrb[0].mxu0
    %v5697 = vadd.f32 %v5312, %v5696
    %v5698 = vpop.f32.mrb[0].mxu0
    %5699 = vmatprep.mubr.f32.mxu0 %v3682
    %5700 = vmatmul.mubr.f32.gmra.mrb[0].mxu0 %v4018
    %v5701 = vpop.f32.mrb[0].mxu0
    %v5702 = vadd.f32 %v5317, %v5701
    %v5703 = vpop.f32.mrb[0].mxu0
    %5704 = vmatprep.mubr.f32.mxu0 %v3683
    %5705 = vmatmul.mubr.f32.gmra.mrb[0].mxu0 %v4019
    %v5706 = vpop.f32.mrb[0].mxu0
    %v5707 = vadd.f32 %v5322, %v5706
    %v5708 = vpop.f32.mrb[0].mxu0
    %5709 = vmatprep.mubr.f32.mxu0 %v3684
    %5710 = vmatmul.mubr.f32.gmra.mrb[0].mxu0 %v4020
    %v5711 = vpop.f32.mrb[0].mxu0
    %v5712 = vadd.f32 %v5327, %v5711
    %v5713 = vpop.f32.mrb[0].mxu0
    %5714 = vmatprep.mubr.f32.mxu0 %v3685
    %5715 = vmatmul.mubr.f32.gmra.mrb[0].mxu0 %v4021
    %v5716 = vpop.f32.mrb[0].mxu0
    %v5717 = vadd.f32 %v5332, %v5716
    %v5718 = vpop.f32.mrb[0].mxu0
    %5719 = vmatprep.mubr.f32.mxu0 %v3686
    %5720 = vmatmul.mubr.f32.gmra.mrb[0].mxu0 %v4022
    %v5721 = vpop.f32.mrb[0].mxu0
    %v5722 = vadd.f32 %v5337, %v5721
    %v5723 = vpop.f32.mrb[0].mxu0
    %5724 = vmatprep.mubr.f32.mxu0 %v3687
    %5725 = vmatmul.mubr.f32.gmra.mrb[0].mxu0 %v4023
    %v5726 = vpop.f32.mrb[0].mxu0
    %v5727 = vadd.f32 %v5342, %v5726
    %v5728 = vpop.f32.mrb[0].mxu0
    %5729 = vmatprep.mubr.f32.mxu0 %v3688
    %5730 = vmatmul.mubr.f32.gmra.mrb[0].mxu0 %v4024
    %v5731 = vpop.f32.mrb[0].mxu0
    %v5732 = vadd.f32 %v5347, %v5731
    %v5733 = vpop.f32.mrb[0].mxu0
    %5734 = vmatprep.mubr.f32.mxu0 %v3689
    %5735 = vmatmul.mubr.f32.gmra.mrb[0].mxu0 %v4025
    %v5736 = vpop.f32.mrb[0].mxu0
    %v5737 = vadd.f32 %v5352, %v5736
    %v5738 = vpop.f32.mrb[0].mxu0
    %5739 = vmatprep.mubr.f32.mxu0 %v3690
    %5740 = vmatmul.mubr.f32.gmra.mrb[0].mxu0 %v4026
    %v5741 = vpop.f32.mrb[0].mxu0
    %v5742 = vadd.f32 %v5357, %v5741
    %v5743 = vpop.f32.mrb[0].mxu0
    %5744 = vmatprep.mubr.f32.mxu0 %v3691
    %5745 = vmatmul.mubr.f32.gmra.mrb[0].mxu0 %v4027
    %v5746 = vpop.f32.mrb[0].mxu0
    %v5747 = vadd.f32 %v5362, %v5746
    %v5748 = vpop.f32.mrb[0].mxu0
    %5749 = vmatprep.mubr.f32.mxu0 0.0
    %5750 = vmatmul.mubr.f32.gmra.mrb[0].mxu0 0.0
    %v5751 = vpop.f32.mrb[0].mxu0
    %v5752 = vadd.f32 %v5367, %v5751
    %v5753 = vpop.f32.mrb[0].mxu0
    %5754 = vmatprep.mubr.f32.mxu0 0.0
    %5755 = vmatmul.mubr.f32.gmra.mrb[0].mxu0 0.0
    %v5756 = vpop.f32.mrb[0].mxu0
    %v5757 = vadd.f32 %v5372, %v5756
    %v5758 = vpop.f32.mrb[0].mxu0
    %5759 = vdwg.mxu0
    %5760 = vmatprep.subr.mxu0 0.0
    %5761 = vmatpush1.msra.mxu0 %v3820
    %5762 = vmatprep.subr.mxu0 0.0
    %5763 = vmatpush1.msra.mxu0 %v3821
    %5764 = vmatprep.subr.mxu0 0.0
    %5765 = vmatpush1.msra.mxu0 %v3822
    %5766 = vmatprep.subr.mxu0 0.0
    %5767 = vmatpush1.msra.mxu0 %v3823
    %5768 = vmatprep.subr.mxu0 0.0
    %5769 = vmatpush1.msra.mxu0 %v3824
    %5770 = vmatprep.subr.mxu0 0.0
    %5771 = vmatpush1.msra.mxu0 %v3825
    %5772 = vmatprep.subr.mxu0 0.0
    %5773 = vmatpush1.msra.mxu0 %v3826
    %5774 = vmatprep.subr.mxu0 0.0
    %5775 = vmatpush1.msra.mxu0 %v3827
    %5776 = vmatprep.subr.mxu0 0.0
    %5777 = vmatpush1.msra.mxu0 %v3828
    %5778 = vmatprep.subr.mxu0 0.0
    %5779 = vmatpush1.msra.mxu0 %v3829
    %5780 = vmatprep.subr.mxu0 0.0
    %5781 = vmatpush1.msra.mxu0 %v3830
    %5782 = vmatprep.subr.mxu0 0.0
    %5783 = vmatpush1.msra.mxu0 %v3831
    %5784 = vmatprep.subr.mxu0 0.0
    %5785 = vmatpush1.msra.mxu0 %v3832
    %5786 = vmatprep.subr.mxu0 0.0
    %5787 = vmatpush1.msra.mxu0 %v3833
    %5788 = vmatprep.subr.mxu0 0.0
    %5789 = vmatpush1.msra.mxu0 %v3834
    %5790 = vmatprep.subr.mxu0 0.0
    %5791 = vmatpush1.msra.mxu0 %v3835
    %5792 = vmatprep.subr.mxu0 0.0
    %5793 = vmatpush1.msra.mxu0 0.0
    %5794 = vmatprep.subr.mxu0 0.0
    %5795 = vmatpush1.msra.mxu0 0.0
    %5796 = vmatprep.subr.mxu0 0.0
    %5797 = vmatpush1.msra.mxu0 0.0
    %5798 = vmatprep.subr.mxu0 0.0
    %5799 = vmatpush1.msra.mxu0 0.0
    %5800 = vmatprep.subr.mxu0 0.0
    %5801 = vmatpush1.msra.mxu0 0.0
    %5802 = vmatprep.subr.mxu0 0.0
    %5803 = vmatpush1.msra.mxu0 0.0
    %5804 = vmatprep.subr.mxu0 0.0
    %5805 = vmatpush1.msra.mxu0 0.0
    %5806 = vmatprep.subr.mxu0 0.0
    %5807 = vmatpush1.msra.mxu0 0.0
    %5808 = vmatprep.subr.mxu0 0.0
    %5809 = vmatpush1.msra.mxu0 0.0
    %5810 = vmatprep.subr.mxu0 0.0
    %5811 = vmatpush1.msra.mxu0 0.0
    %5812 = vmatprep.subr.mxu0 0.0
    %5813 = vmatpush1.msra.mxu0 0.0
    %5814 = vmatprep.subr.mxu0 0.0
    %5815 = vmatpush1.msra.mxu0 0.0
    %5816 = vmatprep.subr.mxu0 0.0
    %5817 = vmatpush1.msra.mxu0 0.0
    %5818 = vmatprep.subr.mxu0 0.0
    %5819 = vmatpush1.msra.mxu0 0.0
    %5820 = vmatprep.subr.mxu0 0.0
    %5821 = vmatpush1.msra.mxu0 0.0
    %5822 = vmatprep.subr.mxu0 0.0
    %5823 = vmatpush1.msra.mxu0 0.0
    %5824 = vmatprep.mubr.f32.mxu0 0.0
    %5825 = vmatmul.mubr.f32.gmra.mrb[0].mxu0 %v4158
    %v5826 = vpop.f32.mrb[0].mxu0
    %v5827 = vadd.f32 %v5442, %v5826
    %v5828 = vpop.f32.mrb[0].mxu0
    %5829 = vmatprep.mubr.f32.mxu0 0.0
    %5830 = vmatmul.mubr.f32.gmra.mrb[0].mxu0 %v4159
    %v5831 = vpop.f32.mrb[0].mxu0
    %v5832 = vadd.f32 %v5447, %v5831
    %v5833 = vpop.f32.mrb[0].mxu0
    %5834 = vmatprep.mubr.f32.mxu0 0.0
    %5835 = vmatmul.mubr.f32.gmra.mrb[0].mxu0 %v4160
    %v5836 = vpop.f32.mrb[0].mxu0
    %v5837 = vadd.f32 %v5452, %v5836
    %v5838 = vpop.f32.mrb[0].mxu0
    %5839 = vmatprep.mubr.f32.mxu0 0.0
    %5840 = vmatmul.mubr.f32.gmra.mrb[0].mxu0 %v4161
    %v5841 = vpop.f32.mrb[0].mxu0
    %v5842 = vadd.f32 %v5457, %v5841
    %v5843 = vpop.f32.mrb[0].mxu0
    %5844 = vmatprep.mubr.f32.mxu0 0.0
    %5845 = vmatmul.mubr.f32.gmra.mrb[0].mxu0 %v4162
    %v5846 = vpop.f32.mrb[0].mxu0
    %v5847 = vadd.f32 %v5462, %v5846
    %v5848 = vpop.f32.mrb[0].mxu0
    %5849 = vmatprep.mubr.f32.mxu0 0.0
    %5850 = vmatmul.mubr.f32.gmra.mrb[0].mxu0 %v4163
    %v5851 = vpop.f32.mrb[0].mxu0
    %v5852 = vadd.f32 %v5467, %v5851
    %v5853 = vpop.f32.mrb[0].mxu0
    %5854 = vmatprep.mubr.f32.mxu0 0.0
    %5855 = vmatmul.mubr.f32.gmra.mrb[0].mxu0 %v4164
    %v5856 = vpop.f32.mrb[0].mxu0
    %v5857 = vadd.f32 %v5472, %v5856
    %v5858 = vpop.f32.mrb[0].mxu0
    %5859 = vmatprep.mubr.f32.mxu0 0.0
    %5860 = vmatmul.mubr.f32.gmra.mrb[0].mxu0 %v4165
    %v5861 = vpop.f32.mrb[0].mxu0
    %v5862 = vadd.f32 %v5477, %v5861
    %v5863 = vpop.f32.mrb[0].mxu0
    %5864 = vmatprep.mubr.f32.mxu0 0.0
    %5865 = vmatmul.mubr.f32.gmra.mrb[0].mxu0 %v4166
    %v5866 = vpop.f32.mrb[0].mxu0
    %v5867 = vadd.f32 %v5482, %v5866
    %v5868 = vpop.f32.mrb[0].mxu0
    %5869 = vmatprep.mubr.f32.mxu0 0.0
    %5870 = vmatmul.mubr.f32.gmra.mrb[0].mxu0 %v4167
    %v5871 = vpop.f32.mrb[0].mxu0
    %v5872 = vadd.f32 %v5487, %v5871
    %v5873 = vpop.f32.mrb[0].mxu0
    %5874 = vmatprep.mubr.f32.mxu0 0.0
    %5875 = vmatmul.mubr.f32.gmra.mrb[0].mxu0 %v4168
    %v5876 = vpop.f32.mrb[0].mxu0
    %v5877 = vadd.f32 %v5492, %v5876
    %v5878 = vpop.f32.mrb[0].mxu0
    %5879 = vmatprep.mubr.f32.mxu0 0.0
    %5880 = vmatmul.mubr.f32.gmra.mrb[0].mxu0 %v4169
    %v5881 = vpop.f32.mrb[0].mxu0
    %v5882 = vadd.f32 %v5497, %v5881
    %v5883 = vpop.f32.mrb[0].mxu0
    %5884 = vmatprep.mubr.f32.mxu0 0.0
    %5885 = vmatmul.mubr.f32.gmra.mrb[0].mxu0 %v4170
    %v5886 = vpop.f32.mrb[0].mxu0
    %v5887 = vadd.f32 %v5502, %v5886
    %v5888 = vpop.f32.mrb[0].mxu0
    %5889 = vmatprep.mubr.f32.mxu0 0.0
    %5890 = vmatmul.mubr.f32.gmra.mrb[0].mxu0 %v4171
    %v5891 = vpop.f32.mrb[0].mxu0
    %v5892 = vadd.f32 %v5507, %v5891
    %v5893 = vpop.f32.mrb[0].mxu0
    %5894 = vmatprep.mubr.f32.mxu0 0.0
    %5895 = vmatmul.mubr.f32.gmra.mrb[0].mxu0 %v4172
    %v5896 = vpop.f32.mrb[0].mxu0
    %v5897 = vadd.f32 %v5512, %v5896
    %v5898 = vpop.f32.mrb[0].mxu0
    %5899 = vmatprep.mubr.f32.mxu0 0.0
    %5900 = vmatmul.mubr.f32.gmra.mrb[0].mxu0 %v4173
    %v5901 = vpop.f32.mrb[0].mxu0
    %v5902 = vadd.f32 %v5517, %v5901
    %v5903 = vpop.f32.mrb[0].mxu0
    %5904 = vmatprep.mubr.f32.mxu0 0.0
    %5905 = vmatmul.mubr.f32.gmra.mrb[0].mxu0 %v4174
    %v5906 = vpop.f32.mrb[0].mxu0
    %v5907 = vadd.f32 %v5522, %v5906
    %v5908 = vpop.f32.mrb[0].mxu0
    %5909 = vmatprep.mubr.f32.mxu0 0.0
    %5910 = vmatmul.mubr.f32.gmra.mrb[0].mxu0 %v4175
    %v5911 = vpop.f32.mrb[0].mxu0
    %v5912 = vadd.f32 %v5527, %v5911
    %v5913 = vpop.f32.mrb[0].mxu0
    %5914 = vmatprep.mubr.f32.mxu0 0.0
    %5915 = vmatmul.mubr.f32.gmra.mrb[0].mxu0 %v4176
    %v5916 = vpop.f32.mrb[0].mxu0
    %v5917 = vadd.f32 %v5532, %v5916
    %v5918 = vpop.f32.mrb[0].mxu0
    %5919 = vmatprep.mubr.f32.mxu0 0.0
    %5920 = vmatmul.mubr.f32.gmra.mrb[0].mxu0 %v4177
    %v5921 = vpop.f32.mrb[0].mxu0
    %v5922 = vadd.f32 %v5537, %v5921
    %v5923 = vpop.f32.mrb[0].mxu0
    %5924 = vmatprep.mubr.f32.mxu0 0.0
    %5925 = vmatmul.mubr.f32.gmra.mrb[0].mxu0 %v4178
    %v5926 = vpop.f32.mrb[0].mxu0
    %v5927 = vadd.f32 %v5542, %v5926
    %v5928 = vpop.f32.mrb[0].mxu0
    %5929 = vmatprep.mubr.f32.mxu0 0.0
    %5930 = vmatmul.mubr.f32.gmra.mrb[0].mxu0 %v4179
    %v5931 = vpop.f32.mrb[0].mxu0
    %v5932 = vadd.f32 %v5547, %v5931
    %v5933 = vpop.f32.mrb[0].mxu0
    %5934 = vmatprep.mubr.f32.mxu0 0.0
    %5935 = vmatmul.mubr.f32.gmra.mrb[0].mxu0 %v4180
    %v5936 = vpop.f32.mrb[0].mxu0
    %v5937 = vadd.f32 %v5552, %v5936
    %v5938 = vpop.f32.mrb[0].mxu0
    %5939 = vmatprep.mubr.f32.mxu0 0.0
    %5940 = vmatmul.mubr.f32.gmra.mrb[0].mxu0 %v4181
    %v5941 = vpop.f32.mrb[0].mxu0
    %v5942 = vadd.f32 %v5557, %v5941
    %v5943 = vpop.f32.mrb[0].mxu0
    %5944 = vmatprep.mubr.f32.mxu0 0.0
    %5945 = vmatmul.mubr.f32.gmra.mrb[0].mxu0 %v4182
    %v5946 = vpop.f32.mrb[0].mxu0
    %v5947 = vadd.f32 %v5562, %v5946
    %v5948 = vpop.f32.mrb[0].mxu0
    %5949 = vmatprep.mubr.f32.mxu0 0.0
    %5950 = vmatmul.mubr.f32.gmra.mrb[0].mxu0 %v4183
    %v5951 = vpop.f32.mrb[0].mxu0
    %v5952 = vadd.f32 %v5567, %v5951
    %v5953 = vpop.f32.mrb[0].mxu0
    %5954 = vmatprep.mubr.f32.mxu0 0.0
    %5955 = vmatmul.mubr.f32.gmra.mrb[0].mxu0 %v4184
    %v5956 = vpop.f32.mrb[0].mxu0
    %v5957 = vadd.f32 %v5572, %v5956
    %v5958 = vpop.f32.mrb[0].mxu0
    %5959 = vmatprep.mubr.f32.mxu0 0.0
    %5960 = vmatmul.mubr.f32.gmra.mrb[0].mxu0 %v4185
    %v5961 = vpop.f32.mrb[0].mxu0
    %v5962 = vadd.f32 %v5577, %v5961
    %v5963 = vpop.f32.mrb[0].mxu0
    %5964 = vmatprep.mubr.f32.mxu0 0.0
    %5965 = vmatmul.mubr.f32.gmra.mrb[0].mxu0 %v4186
    %v5966 = vpop.f32.mrb[0].mxu0
    %v5967 = vadd.f32 %v5582, %v5966
    %v5968 = vpop.f32.mrb[0].mxu0
    %5969 = vmatprep.mubr.f32.mxu0 0.0
    %5970 = vmatmul.mubr.f32.gmra.mrb[0].mxu0 %v4187
    %v5971 = vpop.f32.mrb[0].mxu0
    %v5972 = vadd.f32 %v5587, %v5971
    %v5973 = vpop.f32.mrb[0].mxu0
    %5974 = vmatprep.mubr.f32.mxu0 0.0
    %5975 = vmatmul.mubr.f32.gmra.mrb[0].mxu0 0.0
    %v5976 = vpop.f32.mrb[0].mxu0
    %v5977 = vadd.f32 %v5592, %v5976
    %v5978 = vpop.f32.mrb[0].mxu0
    %5979 = vmatprep.mubr.f32.mxu0 0.0
    %5980 = vmatmul.mubr.f32.gmra.mrb[0].mxu0 0.0
    %v5981 = vpop.f32.mrb[0].mxu0
    %v5982 = vadd.f32 %v5597, %v5981
    %v5983 = vpop.f32.mrb[0].mxu0
    %5984 = vmatprep.mubr.f32.mxu0 0.0
    %5985 = vmatmul.mubr.f32.gmra.mrb[0].mxu0 %v4190
    %v5986 = vpop.f32.mrb[0].mxu0
    %v5987 = vadd.f32 %v5602, %v5986
    %v5988 = vpop.f32.mrb[0].mxu0
    %5989 = vmatprep.mubr.f32.mxu0 0.0
    %5990 = vmatmul.mubr.f32.gmra.mrb[0].mxu0 %v4191
    %v5991 = vpop.f32.mrb[0].mxu0
    %v5992 = vadd.f32 %v5607, %v5991
    %v5993 = vpop.f32.mrb[0].mxu0
    %5994 = vmatprep.mubr.f32.mxu0 0.0
    %5995 = vmatmul.mubr.f32.gmra.mrb[0].mxu0 %v4192
    %v5996 = vpop.f32.mrb[0].mxu0
    %v5997 = vadd.f32 %v5612, %v5996
    %v5998 = vpop.f32.mrb[0].mxu0
    %5999 = vmatprep.mubr.f32.mxu0 0.0
    %6000 = vmatmul.mubr.f32.gmra.mrb[0].mxu0 %v4193
    %v6001 = vpop.f32.mrb[0].mxu0
    %v6002 = vadd.f32 %v5617, %v6001
    %v6003 = vpop.f32.mrb[0].mxu0
    %6004 = vmatprep.mubr.f32.mxu0 0.0
    %6005 = vmatmul.mubr.f32.gmra.mrb[0].mxu0 %v4194
    %v6006 = vpop.f32.mrb[0].mxu0
    %v6007 = vadd.f32 %v5622, %v6006
    %v6008 = vpop.f32.mrb[0].mxu0
    %6009 = vmatprep.mubr.f32.mxu0 0.0
    %6010 = vmatmul.mubr.f32.gmra.mrb[0].mxu0 %v4195
    %v6011 = vpop.f32.mrb[0].mxu0
    %v6012 = vadd.f32 %v5627, %v6011
    %v6013 = vpop.f32.mrb[0].mxu0
    %6014 = vmatprep.mubr.f32.mxu0 0.0
    %6015 = vmatmul.mubr.f32.gmra.mrb[0].mxu0 %v4196
    %v6016 = vpop.f32.mrb[0].mxu0
    %v6017 = vadd.f32 %v5632, %v6016
    %v6018 = vpop.f32.mrb[0].mxu0
    %6019 = vmatprep.mubr.f32.mxu0 0.0
    %6020 = vmatmul.mubr.f32.gmra.mrb[0].mxu0 %v4197
    %v6021 = vpop.f32.mrb[0].mxu0
    %v6022 = vadd.f32 %v5637, %v6021
    %v6023 = vpop.f32.mrb[0].mxu0
    %6024 = vmatprep.mubr.f32.mxu0 0.0
    %6025 = vmatmul.mubr.f32.gmra.mrb[0].mxu0 %v4198
    %v6026 = vpop.f32.mrb[0].mxu0
    %v6027 = vadd.f32 %v5642, %v6026
    %v6028 = vpop.f32.mrb[0].mxu0
    %6029 = vmatprep.mubr.f32.mxu0 0.0
    %6030 = vmatmul.mubr.f32.gmra.mrb[0].mxu0 %v4199
    %v6031 = vpop.f32.mrb[0].mxu0
    %v6032 = vadd.f32 %v5647, %v6031
    %v6033 = vpop.f32.mrb[0].mxu0
    %6034 = vmatprep.mubr.f32.mxu0 0.0
    %6035 = vmatmul.mubr.f32.gmra.mrb[0].mxu0 %v4200
    %v6036 = vpop.f32.mrb[0].mxu0
    %v6037 = vadd.f32 %v5652, %v6036
    %v6038 = vpop.f32.mrb[0].mxu0
    %6039 = vmatprep.mubr.f32.mxu0 0.0
    %6040 = vmatmul.mubr.f32.gmra.mrb[0].mxu0 %v4201
    %v6041 = vpop.f32.mrb[0].mxu0
    %v6042 = vadd.f32 %v5657, %v6041
    %v6043 = vpop.f32.mrb[0].mxu0
    %6044 = vmatprep.mubr.f32.mxu0 0.0
    %6045 = vmatmul.mubr.f32.gmra.mrb[0].mxu0 %v4202
    %v6046 = vpop.f32.mrb[0].mxu0
    %v6047 = vadd.f32 %v5662, %v6046
    %v6048 = vpop.f32.mrb[0].mxu0
    %6049 = vmatprep.mubr.f32.mxu0 0.0
    %6050 = vmatmul.mubr.f32.gmra.mrb[0].mxu0 %v4203
    %v6051 = vpop.f32.mrb[0].mxu0
    %v6052 = vadd.f32 %v5667, %v6051
    %v6053 = vpop.f32.mrb[0].mxu0
    %6054 = vmatprep.mubr.f32.mxu0 0.0
    %6055 = vmatmul.mubr.f32.gmra.mrb[0].mxu0 %v4204
    %v6056 = vpop.f32.mrb[0].mxu0
    %v6057 = vadd.f32 %v5672, %v6056
    %v6058 = vpop.f32.mrb[0].mxu0
    %6059 = vmatprep.mubr.f32.mxu0 0.0
    %6060 = vmatmul.mubr.f32.gmra.mrb[0].mxu0 %v4205
    %v6061 = vpop.f32.mrb[0].mxu0
    %v6062 = vadd.f32 %v5677, %v6061
    %v6063 = vpop.f32.mrb[0].mxu0
    %6064 = vmatprep.mubr.f32.mxu0 0.0
    %6065 = vmatmul.mubr.f32.gmra.mrb[0].mxu0 %v4206
    %v6066 = vpop.f32.mrb[0].mxu0
    %v6067 = vadd.f32 %v5682, %v6066
    %v6068 = vpop.f32.mrb[0].mxu0
    %6069 = vmatprep.mubr.f32.mxu0 0.0
    %6070 = vmatmul.mubr.f32.gmra.mrb[0].mxu0 %v4207
    %v6071 = vpop.f32.mrb[0].mxu0
    %v6072 = vadd.f32 %v5687, %v6071
    %v6073 = vpop.f32.mrb[0].mxu0
    %6074 = vmatprep.mubr.f32.mxu0 0.0
    %6075 = vmatmul.mubr.f32.gmra.mrb[0].mxu0 %v4208
    %v6076 = vpop.f32.mrb[0].mxu0
    %v6077 = vadd.f32 %v5692, %v6076
    %v6078 = vpop.f32.mrb[0].mxu0
    %6079 = vmatprep.mubr.f32.mxu0 0.0
    %6080 = vmatmul.mubr.f32.gmra.mrb[0].mxu0 %v4209
    %v6081 = vpop.f32.mrb[0].mxu0
    %v6082 = vadd.f32 %v5697, %v6081
    %v6083 = vpop.f32.mrb[0].mxu0
    %6084 = vmatprep.mubr.f32.mxu0 0.0
    %6085 = vmatmul.mubr.f32.gmra.mrb[0].mxu0 %v4210
    %v6086 = vpop.f32.mrb[0].mxu0
    %v6087 = vadd.f32 %v5702, %v6086
    %v6088 = vpop.f32.mrb[0].mxu0
    %6089 = vmatprep.mubr.f32.mxu0 0.0
    %6090 = vmatmul.mubr.f32.gmra.mrb[0].mxu0 %v4211
    %v6091 = vpop.f32.mrb[0].mxu0
    %v6092 = vadd.f32 %v5707, %v6091
    %v6093 = vpop.f32.mrb[0].mxu0
    %6094 = vmatprep.mubr.f32.mxu0 0.0
    %6095 = vmatmul.mubr.f32.gmra.mrb[0].mxu0 %v4212
    %v6096 = vpop.f32.mrb[0].mxu0
    %v6097 = vadd.f32 %v5712, %v6096
    %v6098 = vpop.f32.mrb[0].mxu0
    %6099 = vmatprep.mubr.f32.mxu0 0.0
    %6100 = vmatmul.mubr.f32.gmra.mrb[0].mxu0 %v4213
    %v6101 = vpop.f32.mrb[0].mxu0
    %v6102 = vadd.f32 %v5717, %v6101
    %v6103 = vpop.f32.mrb[0].mxu0
    %6104 = vmatprep.mubr.f32.mxu0 0.0
    %6105 = vmatmul.mubr.f32.gmra.mrb[0].mxu0 %v4214
    %v6106 = vpop.f32.mrb[0].mxu0
    %v6107 = vadd.f32 %v5722, %v6106
    %v6108 = vpop.f32.mrb[0].mxu0
    %6109 = vmatprep.mubr.f32.mxu0 0.0
    %6110 = vmatmul.mubr.f32.gmra.mrb[0].mxu0 %v4215
    %v6111 = vpop.f32.mrb[0].mxu0
    %v6112 = vadd.f32 %v5727, %v6111
    %v6113 = vpop.f32.mrb[0].mxu0
    %6114 = vmatprep.mubr.f32.mxu0 0.0
    %6115 = vmatmul.mubr.f32.gmra.mrb[0].mxu0 %v4216
    %v6116 = vpop.f32.mrb[0].mxu0
    %v6117 = vadd.f32 %v5732, %v6116
    %v6118 = vpop.f32.mrb[0].mxu0
    %6119 = vmatprep.mubr.f32.mxu0 0.0
    %6120 = vmatmul.mubr.f32.gmra.mrb[0].mxu0 %v4217
    %v6121 = vpop.f32.mrb[0].mxu0
    %v6122 = vadd.f32 %v5737, %v6121
    %v6123 = vpop.f32.mrb[0].mxu0
    %6124 = vmatprep.mubr.f32.mxu0 0.0
    %6125 = vmatmul.mubr.f32.gmra.mrb[0].mxu0 %v4218
    %v6126 = vpop.f32.mrb[0].mxu0
    %v6127 = vadd.f32 %v5742, %v6126
    %v6128 = vpop.f32.mrb[0].mxu0
    %6129 = vmatprep.mubr.f32.mxu0 0.0
    %6130 = vmatmul.mubr.f32.gmra.mrb[0].mxu0 %v4219
    %v6131 = vpop.f32.mrb[0].mxu0
    %v6132 = vadd.f32 %v5747, %v6131
    %v6133 = vpop.f32.mrb[0].mxu0
    %6134 = vmatprep.mubr.f32.mxu0 0.0
    %6135 = vmatmul.mubr.f32.gmra.mrb[0].mxu0 0.0
    %v6136 = vpop.f32.mrb[0].mxu0
    %v6137 = vadd.f32 %v5752, %v6136
    %v6138 = vpop.f32.mrb[0].mxu0
    %6139 = vmatprep.mubr.f32.mxu0 0.0
    %6140 = vmatmul.mubr.f32.gmra.mrb[0].mxu0 0.0
    %v6141 = vpop.f32.mrb[0].mxu0
    %v6142 = vadd.f32 %v5757, %v6141
    %v6143 = vpop.f32.mrb[0].mxu0
    %6144 = vdwg.mxu0
    %6145 = vst [vmem:[#allocation8] sm:$0xff] %v5827
    %6146 = vst [vmem:[#allocation8 + $0x8] sm:$0xff] %v5832
    %6147 = vst [vmem:[#allocation8 + $0x10] sm:$0xff] %v5837
    %6148 = vst [vmem:[#allocation8 + $0x18] sm:$0xff] %v5842
    %6149 = vst [vmem:[#allocation8 + $0x20] sm:$0xff] %v5847
    %6150 = vst [vmem:[#allocation8 + $0x28] sm:$0xff] %v5852
    %6151 = vst [vmem:[#allocation8 + $0x30] sm:$0xff] %v5857
    %6152 = vst [vmem:[#allocation8 + $0x38] sm:$0xff] %v5862
    %6153 = vst [vmem:[#allocation8 + $0x40] sm:$0xff] %v5867
    %6154 = vst [vmem:[#allocation8 + $0x48] sm:$0xff] %v5872
    %6155 = vst [vmem:[#allocation8 + $0x50] sm:$0xff] %v5877
    %6156 = vst [vmem:[#allocation8 + $0x58] sm:$0xff] %v5882
    %6157 = vst [vmem:[#allocation8 + $0x60] sm:$0xff] %v5887
    %6158 = vst [vmem:[#allocation8 + $0x68] sm:$0xff] %v5892
    %6159 = vst [vmem:[#allocation8 + $0x70] sm:$0xff] %v5897
    %6160 = vst [vmem:[#allocation8 + $0x78] sm:$0xff] %v5902
    %6161 = vst [vmem:[#allocation8 + $0x80] sm:$0xff] %v5907
    %6162 = vst [vmem:[#allocation8 + $0x88] sm:$0xff] %v5912
    %6163 = vst [vmem:[#allocation8 + $0x90] sm:$0xff] %v5917
    %6164 = vst [vmem:[#allocation8 + $0x98] sm:$0xff] %v5922
    %6165 = vst [vmem:[#allocation8 + $0xa0] sm:$0xff] %v5927
    %6166 = vst [vmem:[#allocation8 + $0xa8] sm:$0xff] %v5932
    %6167 = vst [vmem:[#allocation8 + $0xb0] sm:$0xff] %v5937
    %6168 = vst [vmem:[#allocation8 + $0xb8] sm:$0xff] %v5942
    %6169 = vst [vmem:[#allocation8 + $0xc0] sm:$0xff] %v5947
    %6170 = vst [vmem:[#allocation8 + $0xc8] sm:$0xff] %v5952
    %6171 = vst [vmem:[#allocation8 + $0xd0] sm:$0xff] %v5957
    %6172 = vst [vmem:[#allocation8 + $0xd8] sm:$0xff] %v5962
    %6173 = vst [vmem:[#allocation8 + $0xe0] sm:$0xff] %v5967
    %6174 = vst [vmem:[#allocation8 + $0xe8] sm:$0xff] %v5972
    %6175 = vst [vmem:[#allocation8 + $0xf0] sm:$0xff] %v5977
    %6176 = vst [vmem:[#allocation8 + $0xf8] sm:$0xff] %v5982
    %6177 = vst [vmem:[#allocation8 + $0x100] sm:$0xff] %v5987
    %6178 = vst [vmem:[#allocation8 + $0x108] sm:$0xff] %v5992
    %6179 = vst [vmem:[#allocation8 + $0x110] sm:$0xff] %v5997
    %6180 = vst [vmem:[#allocation8 + $0x118] sm:$0xff] %v6002
    %6181 = vst [vmem:[#allocation8 + $0x120] sm:$0xff] %v6007
    %6182 = vst [vmem:[#allocation8 + $0x128] sm:$0xff] %v6012
    %6183 = vst [vmem:[#allocation8 + $0x130] sm:$0xff] %v6017
    %6184 = vst [vmem:[#allocation8 + $0x138] sm:$0xff] %v6022
    %6185 = vst [vmem:[#allocation8 + $0x140] sm:$0xff] %v6027
    %6186 = vst [vmem:[#allocation8 + $0x148] sm:$0xff] %v6032
    %6187 = vst [vmem:[#allocation8 + $0x150] sm:$0xff] %v6037
    %6188 = vst [vmem:[#allocation8 + $0x158] sm:$0xff] %v6042
    %6189 = vst [vmem:[#allocation8 + $0x160] sm:$0xff] %v6047
    %6190 = vst [vmem:[#allocation8 + $0x168] sm:$0xff] %v6052
    %6191 = vst [vmem:[#allocation8 + $0x170] sm:$0xff] %v6057
    %6192 = vst [vmem:[#allocation8 + $0x178] sm:$0xff] %v6062
    %6193 = vst [vmem:[#allocation8 + $0x180] sm:$0xff] %v6067
    %6194 = vst [vmem:[#allocation8 + $0x188] sm:$0xff] %v6072
    %6195 = vst [vmem:[#allocation8 + $0x190] sm:$0xff] %v6077
    %6196 = vst [vmem:[#allocation8 + $0x198] sm:$0xff] %v6082
    %6197 = vst [vmem:[#allocation8 + $0x1a0] sm:$0xff] %v6087
    %6198 = vst [vmem:[#allocation8 + $0x1a8] sm:$0xff] %v6092
    %6199 = vst [vmem:[#allocation8 + $0x1b0] sm:$0xff] %v6097
    %6200 = vst [vmem:[#allocation8 + $0x1b8] sm:$0xff] %v6102
    %6201 = vst [vmem:[#allocation8 + $0x1c0] sm:$0xff] %v6107
    %6202 = vst [vmem:[#allocation8 + $0x1c8] sm:$0xff] %v6112
    %6203 = vst [vmem:[#allocation8 + $0x1d0] sm:$0xff] %v6117
    %6204 = vst [vmem:[#allocation8 + $0x1d8] sm:$0xff] %v6122
    %6205 = vst [vmem:[#allocation8 + $0x1e0] sm:$0xff] %v6127
    %6206 = vst [vmem:[#allocation8 + $0x1e8] sm:$0xff] %v6132
    %6207 = vst [vmem:[#allocation8 + $0x1f0] sm:$0xff] %v6137
    %6208 = vst [vmem:[#allocation8 + $0x1f8] sm:$0xff] %v6142
    // Predicated region
    $region42: #{tpu_custom_call.1} parent=1 // pred_check
      _
    $region43: #{tpu_custom_call.1} parent=1 // pred_check_branch
      %6210 = sbr.rel (0) target = $region45
    $region44: #{tpu_custom_call.1} parent=1 // pred_region
      %s6212 = ssub.s32 8192, 8192
      %6213 = vsyncadd [#allocation4], %s6212
      %s6214 = sshll.u32 [#allocation8], 4
      %s6215 = int_to_ptr.vmem [resolvable:$true] %s6214
      %6220 = dma.vmem_to_hbm [thread:$0]  %s6215, 8192, %s7, [#allocation4], 128, 128, 8
    $region45: #{tpu_custom_call.1} parent=1 // pred_fallthru
      _
    // Predicated region
    $region46: #{tpu_custom_call.1} parent=1 // pred_check
      _
    $region47: #{tpu_custom_call.1} parent=1 // pred_check_branch
      %6222 = sbr.rel (0) target = $region49
    $region48: #{tpu_custom_call.1} parent=1 // pred_region
      %6223 = dma.done [#allocation4], 8192
    $region49: #{tpu_custom_call.1} parent=1 // pred_fallthru
      _
    %6224 = vsyncpa [#allocation3], 1
    %6225 = vsyncpa [#allocation6], 1
    %6226 = vsyncpa [#allocation4], 1

</llo_original>
